<compile_context>
chip_gen: v5e
topology: v5e:2x2
jax: 0.10.0
libtpu: 0.0.40
codegen_flags: <defaults>
</compile_context>

<pallas_src>
import jax
import jax.numpy as jnp
from jax import lax
from jax.experimental import pallas as pl
from jax.experimental.pallas import tpu as pltpu


ENCODER_CHANNELS = (64, 128, 320, 512)
DECODE_CHANNELS = 64
NUM_CLASSES = 1     # TODO(synk): num_classes > 1 needs per-class head reductions.

_TPU_DEFAULTS = None  # (tm_max, vmem_limit_bytes), resolved lazily


def _tpu_defaults():
    """Safe-everywhere defaults; bump only on positively-identified v5e/v6e."""
    global _TPU_DEFAULTS
    if _TPU_DEFAULTS is None:
        tm_max, vmem = 1024, 32 * 1024 * 1024          # v7x-safe (64 MiB VMEM)
        try:
            kind = jax.devices()[0].device_kind.lower()
            if ("v5e" in kind or "v5 lite" in kind or
                    "v6e" in kind or "v6 lite" in kind):
                tm_max, vmem = 2048, 64 * 1024 * 1024  # 128 MiB physical VMEM
        except Exception:
            pass
        _TPU_DEFAULTS = (tm_max, vmem)
    return _TPU_DEFAULTS


def _round_up(x, m):
    return (x + m - 1) // m * m


# ----------------------------------------------------------------------------
# Pallas kernels: fused backbone-stage projection + decoder branch.
#   res = relu(X @ Ws + bs)                  -> (optionally) written out
#   d   = relu(res @ Wp + bp)
#   q   = d . w_head                         -> lane-dense (tm//128, 128) slab
# ----------------------------------------------------------------------------
def _stage_compute(x_ref, ws_ref, bs_ref, wp_ref, bp_ref, wh_ref, q_ref):
    h = jnp.dot(x_ref[...], ws_ref[...], preferred_element_type=jnp.float32)
    h = jnp.maximum(h + bs_ref[...], 0.0)
    h_bf = h.astype(jnp.bfloat16)                       # single cast, reused

    d = jnp.dot(h_bf, wp_ref[...], preferred_element_type=jnp.float32)
    d = jnp.maximum(d + bp_ref[...], 0.0)
    d_bf = d.astype(jnp.bfloat16)

    # Lane-dense head: qT[1, tm] = wh (1,D) . d^T (D,tm) on the MXU, then fold
    # the 128-lane chunks into sublanes so the q output block is (tm//128, 128)
    # (dense vst instead of a masked (tm,1) column store).
    qT = lax.dot_general(wh_ref[...], d_bf,
                         (((1,), (1,)), ((), ())),
                         preferred_element_type=jnp.float32)        # (1, tm)
    r_rows = q_ref.shape[0]
    q_ref[...] = jnp.concatenate(
        [qT[:, r * 128:(r + 1) * 128] for r in range(r_rows)], axis=0)
    return h_bf


def _stage_kernel(x_ref, ws_ref, bs_ref, wp_ref, bp_ref, wh_ref, res_ref, q_ref):
    res_ref[...] = _stage_compute(x_ref, ws_ref, bs_ref, wp_ref, bp_ref,
                                  wh_ref, q_ref)


def _stage_q_kernel(x_ref, ws_ref, bs_ref, wp_ref, bp_ref, wh_ref, q_ref):
    _stage_compute(x_ref, ws_ref, bs_ref, wp_ref, bp_ref, wh_ref, q_ref)


def stage_fused(x, w_stage, b_stage, w_proj, b_proj, w_head, *, emit_res=True):
    """x: (M, K) -> (res (M, C) bf16 or None, q (M,) f32)."""
    M, K = x.shape
    C = w_stage.shape[1]
    D = w_proj.shape[1]
    tm_max, vmem_limit = _tpu_defaults()

    # Pad M to a multiple of 128 so every q block is a dense (R, 128) slab.
    m_pad = _round_up(M, 128)
    x_bf = x.astype(jnp.bfloat16)
    if m_pad != M:
        x_bf = jnp.pad(x_bf, ((0, m_pad - M), (0, 0)))

    tm = m_pad if m_pad <= tm_max else tm_max
    grid = pl.cdiv(m_pad, tm)
    q_rows = m_pad // 128

    ws = w_stage.astype(jnp.bfloat16)
    wp = w_proj.astype(jnp.bfloat16)
    bs = b_stage.reshape(1, C).astype(jnp.float32)
    bp = b_proj.reshape(1, D).astype(jnp.float32)
    wh = w_head.reshape(1, D).astype(jnp.bfloat16)      # (D, 1) -> (1, D)

    in_specs = [
        pl.BlockSpec((tm, K), lambda i: (i, 0)),        # X tile
        pl.BlockSpec((K, C), lambda i: (0, 0)),         # stage weights
        pl.BlockSpec((1, C), lambda i: (0, 0)),         # stage bias
        pl.BlockSpec((C, D), lambda i: (0, 0)),         # decoder proj weights
        pl.BlockSpec((1, D), lambda i: (0, 0)),         # decoder proj bias
        pl.BlockSpec((1, D), lambda i: (0, 0)),         # head weight row
    ]
    q_spec = pl.BlockSpec((tm // 128, 128), lambda i: (i, 0))
    q_shape = jax.ShapeDtypeStruct((q_rows, 128), jnp.float32)

    if emit_res:
        kernel = _stage_kernel
        out_shape = (jax.ShapeDtypeStruct((m_pad, C), jnp.bfloat16), q_shape)
        out_specs = (pl.BlockSpec((tm, C), lambda i: (i, 0)), q_spec)
    else:
        kernel = _stage_q_kernel
        out_shape = q_shape
        out_specs = q_spec

    outs = pl.pallas_call(
        kernel,
        out_shape=out_shape,
        grid_spec=pltpu.PrefetchScalarGridSpec(
            num_scalar_prefetch=0,
            grid=(grid,),
            in_specs=in_specs,
            out_specs=out_specs),
        compiler_params=pltpu.CompilerParams(
            dimension_semantics=("parallel",),
            vmem_limit_bytes=vmem_limit),
    )(x_bf, ws, bs, wp, bp, wh)

    if emit_res:
        res_pad, q_slab = outs
        res = res_pad[:M] if m_pad != M else res_pad
    else:
        res, q_slab = None, outs

    q = q_slab.reshape(-1)[:M]                           # back to per-pixel order
    return res, q


# ----------------------------------------------------------------------------
# Layout glue (plain JAX)
# ----------------------------------------------------------------------------
def space_to_depth(x, s):
    """NHWC (n,h,w,c) -> (n, h//s, w//s, c*s*s); im2col of a k=s, stride=s conv
    so the stage projection becomes a pure matmul."""
    n, h, w, c = x.shape
    x = x.reshape(n, h // s, s, w // s, s, c)
    x = x.transpose(0, 1, 3, 2, 4, 5)
    return x.reshape(n, h // s, w // s, s * s * c)


def patchify_nchw(x_nchw, s):
    """NCHW (n,c,h,w) -> (n, h//s, w//s, s*s*c) in one fused reshape/transpose
    (same trailing (s, s, c) feature order as space_to_depth on NHWC)."""
    n, c, h, w = x_nchw.shape
    x = x_nchw.reshape(n, c, h // s, s, w // s, s)
    x = x.transpose(0, 2, 4, 3, 5, 1)                    # (n, h/s, w/s, s, s, c)
    return x.reshape(n, h // s, w // s, s * s * c)


def upsample_nearest_hw(x, f):
    """(n, h, w) nearest upsample by integer factor (w stays the lane dim)."""
    if f == 1:
        return x
    n, h, w = x.shape
    x = jnp.broadcast_to(x[:, :, None, :, None], (n, h, f, w, f))
    return x.reshape(n, h * f, w * f)


# ----------------------------------------------------------------------------
# Deterministic parameter construction
# ----------------------------------------------------------------------------
def _linear_params(key, fan_in, fan_out, dtype=jnp.float32):
    kw, kb = jax.random.split(key)
    scale = 1.0 / jnp.sqrt(jnp.asarray(fan_in, dtype))
    w = jax.random.normal(kw, (fan_in, fan_out), dtype) * scale
    b = jax.random.normal(kb, (fan_out,), dtype) * 0.01
    return w, b


def init_params(key, in_chans=3):
    keys = jax.random.split(key, 16)
    params = {}
    # backbone patch-merge stages: strides 4,2,2,2 (cumulative 4,8,16,32)
    stage_in = [in_chans * 16,
                ENCODER_CHANNELS[0] * 4,
                ENCODER_CHANNELS[1] * 4,
                ENCODER_CHANNELS[2] * 4]
    for i in range(4):
        params[f"stage{i}"] = _linear_params(keys[i], stage_in[i],
                                             ENCODER_CHANNELS[i])
    # decoder per-stage 1x1 projections to decode_channels
    for i in range(4):
        params[f"proj{i}"] = _linear_params(keys[4 + i], ENCODER_CHANNELS[i],
                                            DECODE_CHANNELS)
    # segmentation head 1x1 conv
    params["head"] = _linear_params(keys[8], DECODE_CHANNELS, NUM_CLASSES)
    return params


# ----------------------------------------------------------------------------
# Forward pass (eval branch of Meta_Polypv2.forward)
# ----------------------------------------------------------------------------
def meta_polypv2_forward(params, x_nchw):
    n, c, h, w = x_nchw.shape
    w_head, b_head = params["head"]                      # (64, 1), (1,)

    # Fused NCHW -> /4 patchified features; never materializes a 3-lane NHWC map.
    cur = patchify_nchw(x_nchw, 4).astype(jnp.bfloat16)  # (n, h/4, w/4, 48)

    q_maps = []
    for i in range(4):
        if i > 0:
            cur = space_to_depth(cur, 2)
        nn_, hh, ww, kk = cur.shape
        flat = cur.reshape(nn_ * hh * ww, kk)
        ws_, bs_ = params[f"stage{i}"]
        wp_, bp_ = params[f"proj{i}"]
        res_flat, q_flat = stage_fused(flat, ws_, bs_, wp_, bp_, w_head,
                                       emit_res=(i < 3))
        if i < 3:
            cur = res_flat.reshape(nn_, hh, ww, ws_.shape[1])   # bf16 feature
        q_maps.append(q_flat.reshape(nn_, hh, ww))              # (n, hh, ww) f32

    # Decoder fusion: nearest-upsample the per-stage scalar maps to /4 res,
    # sum, add head bias (== proj+relu -> upsample -> sum -> 1x1 head).
    fused = q_maps[0]
    for q_i, up in zip(q_maps[1:], (2, 4, 8)):
        fused = fused + upsample_nearest_hw(q_i, up)
    fused = fused + b_head.astype(fused.dtype)[0]

    logits = upsample_nearest_hw(fused, 4)               # (n, h, w)
    return logits[:, None, :, :]                         # NCHW (n, 1, h, w)


# ----------------------------------------------------------------------------
if __name__ == "__main__":
    key = jax.random.PRNGKey(0)
    k_param, k_x = jax.random.split(key)

    params = init_params(k_param, in_chans=3)
    x = jax.random.normal(k_x, (2, 3, 32, 32), jnp.float32)  # NCHW RGB input

    out = jax.jit(meta_polypv2_forward)(params, x)
    out = jax.block_until_ready(out)

    assert out.shape == (2, NUM_CLASSES, 32, 32), out.shape
    assert bool(jnp.all(jnp.isfinite(out)))
    print("KERNEL_OK")
</pallas_src>

<mosaic_0001>
module attributes {stable_mosaic.version = 11 : i64} {
  func.func @_stage_kernel(%arg0: i32, %arg1: memref<128x48xbf16, #tpu.memory_space<vmem>>, %arg2: memref<48x64xbf16, #tpu.memory_space<vmem>>, %arg3: memref<1x64xf32, #tpu.memory_space<vmem>>, %arg4: memref<64x64xbf16, #tpu.memory_space<vmem>>, %arg5: memref<1x64xf32, #tpu.memory_space<vmem>>, %arg6: memref<1x64xbf16, #tpu.memory_space<vmem>>, %arg7: memref<128x64xbf16, #tpu.memory_space<vmem>>, %arg8: memref<1x128xf32, #tpu.memory_space<vmem>>) attributes {dimension_semantics = [#tpu.dimension_semantics<parallel>], iteration_bounds = array<i64: 1>, scalar_prefetch = 0 : i64, scratch_operands = 0 : i64, tpu.core_type = #tpu.core_type<tc>, window_params = [{transform_indices = @transform_0, window_bounds = array<i64: 128, 48>}, {pipeline_mode = #tpu.pipeline_mode<synchronous>, transform_indices = @transform_1, window_bounds = array<i64: 48, 64>}, {pipeline_mode = #tpu.pipeline_mode<synchronous>, transform_indices = @transform_2, window_bounds = array<i64: 1, 64>}, {pipeline_mode = #tpu.pipeline_mode<synchronous>, transform_indices = @transform_3, window_bounds = array<i64: 64, 64>}, {pipeline_mode = #tpu.pipeline_mode<synchronous>, transform_indices = @transform_4, window_bounds = array<i64: 1, 64>}, {pipeline_mode = #tpu.pipeline_mode<synchronous>, transform_indices = @transform_5, window_bounds = array<i64: 1, 64>}, {transform_indices = @transform_6, window_bounds = array<i64: 128, 64>}, {transform_indices = @transform_7, window_bounds = array<i64: 1, 128>}]} {
    %c0 = arith.constant 0 : index
    %c0_0 = arith.constant 0 : index
    %0 = vector.load %arg1[%c0, %c0_0] : memref<128x48xbf16, #tpu.memory_space<vmem>>, vector<128x48xbf16>
    %c0_1 = arith.constant 0 : index
    %c0_2 = arith.constant 0 : index
    %1 = vector.load %arg2[%c0_1, %c0_2] : memref<48x64xbf16, #tpu.memory_space<vmem>>, vector<48x64xbf16>
    %cst = arith.constant dense<0.000000e+00> : vector<128x64xf32>
    %2 = tpu.matmul %0, %1, %cst {dimension_numbers = #tpu.dot_dimension_numbers<[1], [0], [0], [1], [0, 0, 1, 1], [], []>} : vector<128x48xbf16>, vector<48x64xbf16>, vector<128x64xf32> -> vector<128x64xf32>
    %c0_3 = arith.constant 0 : index
    %c0_4 = arith.constant 0 : index
    %3 = vector.load %arg3[%c0_3, %c0_4] : memref<1x64xf32, #tpu.memory_space<vmem>>, vector<1x64xf32>
    %4 = vector.broadcast %3 : vector<1x64xf32> to vector<128x64xf32>
    %5 = arith.addf %2, %4 : vector<128x64xf32>
    %cst_5 = arith.constant 0.000000e+00 : f32
    %6 = vector.broadcast %cst_5 : f32 to vector<128x64xf32>
    %7 = arith.maximumf %5, %6 : vector<128x64xf32>
    %8 = arith.truncf %7 : vector<128x64xf32> to vector<128x64xbf16>
    %c0_6 = arith.constant 0 : index
    %c0_7 = arith.constant 0 : index
    %9 = vector.load %arg4[%c0_6, %c0_7] : memref<64x64xbf16, #tpu.memory_space<vmem>>, vector<64x64xbf16>
    %cst_8 = arith.constant dense<0.000000e+00> : vector<128x64xf32>
    %10 = tpu.matmul %8, %9, %cst_8 {dimension_numbers = #tpu.dot_dimension_numbers<[1], [0], [0], [1], [0, 0, 1, 1], [], []>} : vector<128x64xbf16>, vector<64x64xbf16>, vector<128x64xf32> -> vector<128x64xf32>
    %c0_9 = arith.constant 0 : index
    %c0_10 = arith.constant 0 : index
    %11 = vector.load %arg5[%c0_9, %c0_10] : memref<1x64xf32, #tpu.memory_space<vmem>>, vector<1x64xf32>
    %12 = vector.broadcast %11 : vector<1x64xf32> to vector<128x64xf32>
    %13 = arith.addf %10, %12 : vector<128x64xf32>
    %cst_11 = arith.constant 0.000000e+00 : f32
    %14 = vector.broadcast %cst_11 : f32 to vector<128x64xf32>
    %15 = arith.maximumf %13, %14 : vector<128x64xf32>
    %16 = arith.truncf %15 : vector<128x64xf32> to vector<128x64xbf16>
    %c0_12 = arith.constant 0 : index
    %c0_13 = arith.constant 0 : index
    %17 = vector.load %arg6[%c0_12, %c0_13] : memref<1x64xbf16, #tpu.memory_space<vmem>>, vector<1x64xbf16>
    %cst_14 = arith.constant dense<0.000000e+00> : vector<1x128xf32>
    %18 = tpu.matmul %17, %16, %cst_14 {dimension_numbers = #tpu.dot_dimension_numbers<[1], [1], [0], [0], [0, 0, 1, 0], [], []>} : vector<1x64xbf16>, vector<128x64xbf16>, vector<1x128xf32> -> vector<1x128xf32>
    %c0_15 = arith.constant 0 : index
    %c0_16 = arith.constant 0 : index
    %19 = vector.load %arg8[%c0_15, %c0_16] : memref<1x128xf32, #tpu.memory_space<vmem>>, vector<1x128xf32>
    tpu.vector_store %arg8[%c0_15, %c0_16], %18 {strides = array<i32>} : memref<1x128xf32, #tpu.memory_space<vmem>>, vector<1x128xf32>,
    %c0_17 = arith.constant 0 : index
    %c0_18 = arith.constant 0 : index
    %20 = vector.load %arg7[%c0_17, %c0_18] : memref<128x64xbf16, #tpu.memory_space<vmem>>, vector<128x64xbf16>
    tpu.vector_store %arg7[%c0_17, %c0_18], %8 {strides = array<i32>} : memref<128x64xbf16, #tpu.memory_space<vmem>>, vector<128x64xbf16>,
    return
  }
  func.func @transform_0(%arg0: i32) -> (i32, i32) {
    %c0_i32 = arith.constant 0 : i32
    %c0_i32_0 = arith.constant 0 : i32
    return %arg0, %c0_i32 : i32, i32
  }
  func.func @transform_1(%arg0: i32) -> (i32, i32) {
    %c0_i32 = arith.constant 0 : i32
    %c0_i32_0 = arith.constant 0 : i32
    %c0_i32_1 = arith.constant 0 : i32
    return %c0_i32, %c0_i32_0 : i32, i32
  }
  func.func @transform_2(%arg0: i32) -> (i32, i32) {
    %c0_i32 = arith.constant 0 : i32
    %c0_i32_0 = arith.constant 0 : i32
    %c0_i32_1 = arith.constant 0 : i32
    return %c0_i32, %c0_i32_0 : i32, i32
  }
  func.func @transform_3(%arg0: i32) -> (i32, i32) {
    %c0_i32 = arith.constant 0 : i32
    %c0_i32_0 = arith.constant 0 : i32
    %c0_i32_1 = arith.constant 0 : i32
    return %c0_i32, %c0_i32_0 : i32, i32
  }
  func.func @transform_4(%arg0: i32) -> (i32, i32) {
    %c0_i32 = arith.constant 0 : i32
    %c0_i32_0 = arith.constant 0 : i32
    %c0_i32_1 = arith.constant 0 : i32
    return %c0_i32, %c0_i32_0 : i32, i32
  }
  func.func @transform_5(%arg0: i32) -> (i32, i32) {
    %c0_i32 = arith.constant 0 : i32
    %c0_i32_0 = arith.constant 0 : i32
    %c0_i32_1 = arith.constant 0 : i32
    return %c0_i32, %c0_i32_0 : i32, i32
  }
  func.func @transform_6(%arg0: i32) -> (i32, i32) {
    %c0_i32 = arith.constant 0 : i32
    %c0_i32_0 = arith.constant 0 : i32
    return %arg0, %c0_i32 : i32, i32
  }
  func.func @transform_7(%arg0: i32) -> (i32, i32) {
    %c0_i32 = arith.constant 0 : i32
    %c0_i32_0 = arith.constant 0 : i32
    return %arg0, %c0_i32 : i32, i32
  }
}

module attributes {stable_mosaic.version = 11 : i64} {
  func.func @_stage_kernel(%arg0: i32, %arg1: memref<128x256xbf16, #tpu.memory_space<vmem>>, %arg2: memref<256x128xbf16, #tpu.memory_space<vmem>>, %arg3: memref<1x128xf32, #tpu.memory_space<vmem>>, %arg4: memref<128x64xbf16, #tpu.memory_space<vmem>>, %arg5: memref<1x64xf32, #tpu.memory_space<vmem>>, %arg6: memref<1x64xbf16, #tpu.memory_space<vmem>>, %arg7: memref<128x128xbf16, #tpu.memory_space<vmem>>, %arg8: memref<1x128xf32, #tpu.memory_space<vmem>>) attributes {dimension_semantics = [#tpu.dimension_semantics<parallel>], iteration_bounds = array<i64: 1>, scalar_prefetch = 0 : i64, scratch_operands = 0 : i64, tpu.core_type = #tpu.core_type<tc>, window_params = [{transform_indices = @transform_0, window_bounds = array<i64: 128, 256>}, {pipeline_mode = #tpu.pipeline_mode<synchronous>, transform_indices = @transform_1, window_bounds = array<i64: 256, 128>}, {pipeline_mode = #tpu.pipeline_mode<synchronous>, transform_indices = @transform_2, window_bounds = array<i64: 1, 128>}, {pipeline_mode = #tpu.pipeline_mode<synchronous>, transform_indices = @transform_3, window_bounds = array<i64: 128, 64>}, {pipeline_mode = #tpu.pipeline_mode<synchronous>, transform_indices = @transform_4, window_bounds = array<i64: 1, 64>}, {pipeline_mode = #tpu.pipeline_mode<synchronous>, transform_indices = @transform_5, window_bounds = array<i64: 1, 64>}, {transform_indices = @transform_6, window_bounds = array<i64: 128, 128>}, {transform_indices = @transform_7, window_bounds = array<i64: 1, 128>}]} {
    %c0 = arith.constant 0 : index
    %c0_0 = arith.constant 0 : index
    %0 = vector.load %arg1[%c0, %c0_0] : memref<128x256xbf16, #tpu.memory_space<vmem>>, vector<128x256xbf16>
    %c0_1 = arith.constant 0 : index
    %c0_2 = arith.constant 0 : index
    %1 = vector.load %arg2[%c0_1, %c0_2] : memref<256x128xbf16, #tpu.memory_space<vmem>>, vector<256x128xbf16>
    %cst = arith.constant dense<0.000000e+00> : vector<128x128xf32>
    %2 = tpu.matmul %0, %1, %cst {dimension_numbers = #tpu.dot_dimension_numbers<[1], [0], [0], [1], [0, 0, 1, 1], [], []>} : vector<128x256xbf16>, vector<256x128xbf16>, vector<128x128xf32> -> vector<128x128xf32>
    %c0_3 = arith.constant 0 : index
    %c0_4 = arith.constant 0 : index
    %3 = vector.load %arg3[%c0_3, %c0_4] : memref<1x128xf32, #tpu.memory_space<vmem>>, vector<1x128xf32>
    %4 = vector.broadcast %3 : vector<1x128xf32> to vector<128x128xf32>
    %5 = arith.addf %2, %4 : vector<128x128xf32>
    %cst_5 = arith.constant 0.000000e+00 : f32
    %6 = vector.broadcast %cst_5 : f32 to vector<128x128xf32>
    %7 = arith.maximumf %5, %6 : vector<128x128xf32>
    %8 = arith.truncf %7 : vector<128x128xf32> to vector<128x128xbf16>
    %c0_6 = arith.constant 0 : index
    %c0_7 = arith.constant 0 : index
    %9 = vector.load %arg4[%c0_6, %c0_7] : memref<128x64xbf16, #tpu.memory_space<vmem>>, vector<128x64xbf16>
    %cst_8 = arith.constant dense<0.000000e+00> : vector<128x64xf32>
    %10 = tpu.matmul %8, %9, %cst_8 {dimension_numbers = #tpu.dot_dimension_numbers<[1], [0], [0], [1], [0, 0, 1, 1], [], []>} : vector<128x128xbf16>, vector<128x64xbf16>, vector<128x64xf32> -> vector<128x64xf32>
    %c0_9 = arith.constant 0 : index
    %c0_10 = arith.constant 0 : index
    %11 = vector.load %arg5[%c0_9, %c0_10] : memref<1x64xf32, #tpu.memory_space<vmem>>, vector<1x64xf32>
    %12 = vector.broadcast %11 : vector<1x64xf32> to vector<128x64xf32>
    %13 = arith.addf %10, %12 : vector<128x64xf32>
    %cst_11 = arith.constant 0.000000e+00 : f32
    %14 = vector.broadcast %cst_11 : f32 to vector<128x64xf32>
    %15 = arith.maximumf %13, %14 : vector<128x64xf32>
    %16 = arith.truncf %15 : vector<128x64xf32> to vector<128x64xbf16>
    %c0_12 = arith.constant 0 : index
    %c0_13 = arith.constant 0 : index
    %17 = vector.load %arg6[%c0_12, %c0_13] : memref<1x64xbf16, #tpu.memory_space<vmem>>, vector<1x64xbf16>
    %cst_14 = arith.constant dense<0.000000e+00> : vector<1x128xf32>
    %18 = tpu.matmul %17, %16, %cst_14 {dimension_numbers = #tpu.dot_dimension_numbers<[1], [1], [0], [0], [0, 0, 1, 0], [], []>} : vector<1x64xbf16>, vector<128x64xbf16>, vector<1x128xf32> -> vector<1x128xf32>
    %c0_15 = arith.constant 0 : index
    %c0_16 = arith.constant 0 : index
    %19 = vector.load %arg8[%c0_15, %c0_16] : memref<1x128xf32, #tpu.memory_space<vmem>>, vector<1x128xf32>
    tpu.vector_store %arg8[%c0_15, %c0_16], %18 {strides = array<i32>} : memref<1x128xf32, #tpu.memory_space<vmem>>, vector<1x128xf32>,
    %c0_17 = arith.constant 0 : index
    %c0_18 = arith.constant 0 : index
    %20 = vector.load %arg7[%c0_17, %c0_18] : memref<128x128xbf16, #tpu.memory_space<vmem>>, vector<128x128xbf16>
    tpu.vector_store %arg7[%c0_17, %c0_18], %8 {strides = array<i32>} : memref<128x128xbf16, #tpu.memory_space<vmem>>, vector<128x128xbf16>,
    return
  }
  func.func @transform_0(%arg0: i32) -> (i32, i32) {
    %c0_i32 = arith.constant 0 : i32
    %c0_i32_0 = arith.constant 0 : i32
    return %arg0, %c0_i32 : i32, i32
  }
  func.func @transform_1(%arg0: i32) -> (i32, i32) {
    %c0_i32 = arith.constant 0 : i32
    %c0_i32_0 = arith.constant 0 : i32
    %c0_i32_1 = arith.constant 0 : i32
    return %c0_i32, %c0_i32_0 : i32, i32
  }
  func.func @transform_2(%arg0: i32) -> (i32, i32) {
    %c0_i32 = arith.constant 0 : i32
    %c0_i32_0 = arith.constant 0 : i32
    %c0_i32_1 = arith.constant 0 : i32
    return %c0_i32, %c0_i32_0 : i32, i32
  }
  func.func @transform_3(%arg0: i32) -> (i32, i32) {
    %c0_i32 = arith.constant 0 : i32
    %c0_i32_0 = arith.constant 0 : i32
    %c0_i32_1 = arith.constant 0 : i32
    return %c0_i32, %c0_i32_0 : i32, i32
  }
  func.func @transform_4(%arg0: i32) -> (i32, i32) {
    %c0_i32 = arith.constant 0 : i32
    %c0_i32_0 = arith.constant 0 : i32
    %c0_i32_1 = arith.constant 0 : i32
    return %c0_i32, %c0_i32_0 : i32, i32
  }
  func.func @transform_5(%arg0: i32) -> (i32, i32) {
    %c0_i32 = arith.constant 0 : i32
    %c0_i32_0 = arith.constant 0 : i32
    %c0_i32_1 = arith.constant 0 : i32
    return %c0_i32, %c0_i32_0 : i32, i32
  }
  func.func @transform_6(%arg0: i32) -> (i32, i32) {
    %c0_i32 = arith.constant 0 : i32
    %c0_i32_0 = arith.constant 0 : i32
    return %arg0, %c0_i32 : i32, i32
  }
  func.func @transform_7(%arg0: i32) -> (i32, i32) {
    %c0_i32 = arith.constant 0 : i32
    %c0_i32_0 = arith.constant 0 : i32
    return %arg0, %c0_i32 : i32, i32
  }
}

module attributes {stable_mosaic.version = 11 : i64} {
  func.func @_stage_kernel(%arg0: i32, %arg1: memref<128x512xbf16, #tpu.memory_space<vmem>>, %arg2: memref<512x320xbf16, #tpu.memory_space<vmem>>, %arg3: memref<1x320xf32, #tpu.memory_space<vmem>>, %arg4: memref<320x64xbf16, #tpu.memory_space<vmem>>, %arg5: memref<1x64xf32, #tpu.memory_space<vmem>>, %arg6: memref<1x64xbf16, #tpu.memory_space<vmem>>, %arg7: memref<128x320xbf16, #tpu.memory_space<vmem>>, %arg8: memref<1x128xf32, #tpu.memory_space<vmem>>) attributes {dimension_semantics = [#tpu.dimension_semantics<parallel>], iteration_bounds = array<i64: 1>, scalar_prefetch = 0 : i64, scratch_operands = 0 : i64, tpu.core_type = #tpu.core_type<tc>, window_params = [{transform_indices = @transform_0, window_bounds = array<i64: 128, 512>}, {pipeline_mode = #tpu.pipeline_mode<synchronous>, transform_indices = @transform_1, window_bounds = array<i64: 512, 320>}, {pipeline_mode = #tpu.pipeline_mode<synchronous>, transform_indices = @transform_2, window_bounds = array<i64: 1, 320>}, {pipeline_mode = #tpu.pipeline_mode<synchronous>, transform_indices = @transform_3, window_bounds = array<i64: 320, 64>}, {pipeline_mode = #tpu.pipeline_mode<synchronous>, transform_indices = @transform_4, window_bounds = array<i64: 1, 64>}, {pipeline_mode = #tpu.pipeline_mode<synchronous>, transform_indices = @transform_5, window_bounds = array<i64: 1, 64>}, {transform_indices = @transform_6, window_bounds = array<i64: 128, 320>}, {transform_indices = @transform_7, window_bounds = array<i64: 1, 128>}]} {
    %c0 = arith.constant 0 : index
    %c0_0 = arith.constant 0 : index
    %0 = vector.load %arg1[%c0, %c0_0] : memref<128x512xbf16, #tpu.memory_space<vmem>>, vector<128x512xbf16>
    %c0_1 = arith.constant 0 : index
    %c0_2 = arith.constant 0 : index
    %1 = vector.load %arg2[%c0_1, %c0_2] : memref<512x320xbf16, #tpu.memory_space<vmem>>, vector<512x320xbf16>
    %cst = arith.constant dense<0.000000e+00> : vector<128x320xf32>
    %2 = tpu.matmul %0, %1, %cst {dimension_numbers = #tpu.dot_dimension_numbers<[1], [0], [0], [1], [0, 0, 1, 1], [], []>} : vector<128x512xbf16>, vector<512x320xbf16>, vector<128x320xf32> -> vector<128x320xf32>
    %c0_3 = arith.constant 0 : index
    %c0_4 = arith.constant 0 : index
    %3 = vector.load %arg3[%c0_3, %c0_4] : memref<1x320xf32, #tpu.memory_space<vmem>>, vector<1x320xf32>
    %4 = vector.broadcast %3 : vector<1x320xf32> to vector<128x320xf32>
    %5 = arith.addf %2, %4 : vector<128x320xf32>
    %cst_5 = arith.constant 0.000000e+00 : f32
    %6 = vector.broadcast %cst_5 : f32 to vector<128x320xf32>
    %7 = arith.maximumf %5, %6 : vector<128x320xf32>
    %8 = arith.truncf %7 : vector<128x320xf32> to vector<128x320xbf16>
    %c0_6 = arith.constant 0 : index
    %c0_7 = arith.constant 0 : index
    %9 = vector.load %arg4[%c0_6, %c0_7] : memref<320x64xbf16, #tpu.memory_space<vmem>>, vector<320x64xbf16>
    %cst_8 = arith.constant dense<0.000000e+00> : vector<128x64xf32>
    %10 = tpu.matmul %8, %9, %cst_8 {dimension_numbers = #tpu.dot_dimension_numbers<[1], [0], [0], [1], [0, 0, 1, 1], [], []>} : vector<128x320xbf16>, vector<320x64xbf16>, vector<128x64xf32> -> vector<128x64xf32>
    %c0_9 = arith.constant 0 : index
    %c0_10 = arith.constant 0 : index
    %11 = vector.load %arg5[%c0_9, %c0_10] : memref<1x64xf32, #tpu.memory_space<vmem>>, vector<1x64xf32>
    %12 = vector.broadcast %11 : vector<1x64xf32> to vector<128x64xf32>
    %13 = arith.addf %10, %12 : vector<128x64xf32>
    %cst_11 = arith.constant 0.000000e+00 : f32
    %14 = vector.broadcast %cst_11 : f32 to vector<128x64xf32>
    %15 = arith.maximumf %13, %14 : vector<128x64xf32>
    %16 = arith.truncf %15 : vector<128x64xf32> to vector<128x64xbf16>
    %c0_12 = arith.constant 0 : index
    %c0_13 = arith.constant 0 : index
    %17 = vector.load %arg6[%c0_12, %c0_13] : memref<1x64xbf16, #tpu.memory_space<vmem>>, vector<1x64xbf16>
    %cst_14 = arith.constant dense<0.000000e+00> : vector<1x128xf32>
    %18 = tpu.matmul %17, %16, %cst_14 {dimension_numbers = #tpu.dot_dimension_numbers<[1], [1], [0], [0], [0, 0, 1, 0], [], []>} : vector<1x64xbf16>, vector<128x64xbf16>, vector<1x128xf32> -> vector<1x128xf32>
    %c0_15 = arith.constant 0 : index
    %c0_16 = arith.constant 0 : index
    %19 = vector.load %arg8[%c0_15, %c0_16] : memref<1x128xf32, #tpu.memory_space<vmem>>, vector<1x128xf32>
    tpu.vector_store %arg8[%c0_15, %c0_16], %18 {strides = array<i32>} : memref<1x128xf32, #tpu.memory_space<vmem>>, vector<1x128xf32>,
    %c0_17 = arith.constant 0 : index
    %c0_18 = arith.constant 0 : index
    %20 = vector.load %arg7[%c0_17, %c0_18] : memref<128x320xbf16, #tpu.memory_space<vmem>>, vector<128x320xbf16>
    tpu.vector_store %arg7[%c0_17, %c0_18], %8 {strides = array<i32>} : memref<128x320xbf16, #tpu.memory_space<vmem>>, vector<128x320xbf16>,
    return
  }
  func.func @transform_0(%arg0: i32) -> (i32, i32) {
    %c0_i32 = arith.constant 0 : i32
    %c0_i32_0 = arith.constant 0 : i32
    return %arg0, %c0_i32 : i32, i32
  }
  func.func @transform_1(%arg0: i32) -> (i32, i32) {
    %c0_i32 = arith.constant 0 : i32
    %c0_i32_0 = arith.constant 0 : i32
    %c0_i32_1 = arith.constant 0 : i32
    return %c0_i32, %c0_i32_0 : i32, i32
  }
  func.func @transform_2(%arg0: i32) -> (i32, i32) {
    %c0_i32 = arith.constant 0 : i32
    %c0_i32_0 = arith.constant 0 : i32
    %c0_i32_1 = arith.constant 0 : i32
    return %c0_i32, %c0_i32_0 : i32, i32
  }
  func.func @transform_3(%arg0: i32) -> (i32, i32) {
    %c0_i32 = arith.constant 0 : i32
    %c0_i32_0 = arith.constant 0 : i32
    %c0_i32_1 = arith.constant 0 : i32
    return %c0_i32, %c0_i32_0 : i32, i32
  }
  func.func @transform_4(%arg0: i32) -> (i32, i32) {
    %c0_i32 = arith.constant 0 : i32
    %c0_i32_0 = arith.constant 0 : i32
    %c0_i32_1 = arith.constant 0 : i32
    return %c0_i32, %c0_i32_0 : i32, i32
  }
  func.func @transform_5(%arg0: i32) -> (i32, i32) {
    %c0_i32 = arith.constant 0 : i32
    %c0_i32_0 = arith.constant 0 : i32
    %c0_i32_1 = arith.constant 0 : i32
    return %c0_i32, %c0_i32_0 : i32, i32
  }
  func.func @transform_6(%arg0: i32) -> (i32, i32) {
    %c0_i32 = arith.constant 0 : i32
    %c0_i32_0 = arith.constant 0 : i32
    return %arg0, %c0_i32 : i32, i32
  }
  func.func @transform_7(%arg0: i32) -> (i32, i32) {
    %c0_i32 = arith.constant 0 : i32
    %c0_i32_0 = arith.constant 0 : i32
    return %arg0, %c0_i32 : i32, i32
  }
}

module attributes {stable_mosaic.version = 11 : i64} {
  func.func @_stage_q_kernel(%arg0: i32, %arg1: memref<128x1280xbf16, #tpu.memory_space<vmem>>, %arg2: memref<1280x512xbf16, #tpu.memory_space<vmem>>, %arg3: memref<1x512xf32, #tpu.memory_space<vmem>>, %arg4: memref<512x64xbf16, #tpu.memory_space<vmem>>, %arg5: memref<1x64xf32, #tpu.memory_space<vmem>>, %arg6: memref<1x64xbf16, #tpu.memory_space<vmem>>, %arg7: memref<1x128xf32, #tpu.memory_space<vmem>>) attributes {dimension_semantics = [#tpu.dimension_semantics<parallel>], iteration_bounds = array<i64: 1>, scalar_prefetch = 0 : i64, scratch_operands = 0 : i64, tpu.core_type = #tpu.core_type<tc>, window_params = [{transform_indices = @transform_0, window_bounds = array<i64: 128, 1280>}, {pipeline_mode = #tpu.pipeline_mode<synchronous>, transform_indices = @transform_1, window_bounds = array<i64: 1280, 512>}, {pipeline_mode = #tpu.pipeline_mode<synchronous>, transform_indices = @transform_2, window_bounds = array<i64: 1, 512>}, {pipeline_mode = #tpu.pipeline_mode<synchronous>, transform_indices = @transform_3, window_bounds = array<i64: 512, 64>}, {pipeline_mode = #tpu.pipeline_mode<synchronous>, transform_indices = @transform_4, window_bounds = array<i64: 1, 64>}, {pipeline_mode = #tpu.pipeline_mode<synchronous>, transform_indices = @transform_5, window_bounds = array<i64: 1, 64>}, {transform_indices = @transform_6, window_bounds = array<i64: 1, 128>}]} {
    %c0 = arith.constant 0 : index
    %c0_0 = arith.constant 0 : index
    %0 = vector.load %arg1[%c0, %c0_0] : memref<128x1280xbf16, #tpu.memory_space<vmem>>, vector<128x1280xbf16>
    %c0_1 = arith.constant 0 : index
    %c0_2 = arith.constant 0 : index
    %1 = vector.load %arg2[%c0_1, %c0_2] : memref<1280x512xbf16, #tpu.memory_space<vmem>>, vector<1280x512xbf16>
    %cst = arith.constant dense<0.000000e+00> : vector<128x512xf32>
    %2 = tpu.matmul %0, %1, %cst {dimension_numbers = #tpu.dot_dimension_numbers<[1], [0], [0], [1], [0, 0, 1, 1], [], []>} : vector<128x1280xbf16>, vector<1280x512xbf16>, vector<128x512xf32> -> vector<128x512xf32>
    %c0_3 = arith.constant 0 : index
    %c0_4 = arith.constant 0 : index
    %3 = vector.load %arg3[%c0_3, %c0_4] : memref<1x512xf32, #tpu.memory_space<vmem>>, vector<1x512xf32>
    %4 = vector.broadcast %3 : vector<1x512xf32> to vector<128x512xf32>
    %5 = arith.addf %2, %4 : vector<128x512xf32>
    %cst_5 = arith.constant 0.000000e+00 : f32
    %6 = vector.broadcast %cst_5 : f32 to vector<128x512xf32>
    %7 = arith.maximumf %5, %6 : vector<128x512xf32>
    %8 = arith.truncf %7 : vector<128x512xf32> to vector<128x512xbf16>
    %c0_6 = arith.constant 0 : index
    %c0_7 = arith.constant 0 : index
    %9 = vector.load %arg4[%c0_6, %c0_7] : memref<512x64xbf16, #tpu.memory_space<vmem>>, vector<512x64xbf16>
    %cst_8 = arith.constant dense<0.000000e+00> : vector<128x64xf32>
    %10 = tpu.matmul %8, %9, %cst_8 {dimension_numbers = #tpu.dot_dimension_numbers<[1], [0], [0], [1], [0, 0, 1, 1], [], []>} : vector<128x512xbf16>, vector<512x64xbf16>, vector<128x64xf32> -> vector<128x64xf32>
    %c0_9 = arith.constant 0 : index
    %c0_10 = arith.constant 0 : index
    %11 = vector.load %arg5[%c0_9, %c0_10] : memref<1x64xf32, #tpu.memory_space<vmem>>, vector<1x64xf32>
    %12 = vector.broadcast %11 : vector<1x64xf32> to vector<128x64xf32>
    %13 = arith.addf %10, %12 : vector<128x64xf32>
    %cst_11 = arith.constant 0.000000e+00 : f32
    %14 = vector.broadcast %cst_11 : f32 to vector<128x64xf32>
    %15 = arith.maximumf %13, %14 : vector<128x64xf32>
    %16 = arith.truncf %15 : vector<128x64xf32> to vector<128x64xbf16>
    %c0_12 = arith.constant 0 : index
    %c0_13 = arith.constant 0 : index
    %17 = vector.load %arg6[%c0_12, %c0_13] : memref<1x64xbf16, #tpu.memory_space<vmem>>, vector<1x64xbf16>
    %cst_14 = arith.constant dense<0.000000e+00> : vector<1x128xf32>
    %18 = tpu.matmul %17, %16, %cst_14 {dimension_numbers = #tpu.dot_dimension_numbers<[1], [1], [0], [0], [0, 0, 1, 0], [], []>} : vector<1x64xbf16>, vector<128x64xbf16>, vector<1x128xf32> -> vector<1x128xf32>
    %c0_15 = arith.constant 0 : index
    %c0_16 = arith.constant 0 : index
    %19 = vector.load %arg7[%c0_15, %c0_16] : memref<1x128xf32, #tpu.memory_space<vmem>>, vector<1x128xf32>
    tpu.vector_store %arg7[%c0_15, %c0_16], %18 {strides = array<i32>} : memref<1x128xf32, #tpu.memory_space<vmem>>, vector<1x128xf32>,
    return
  }
  func.func @transform_0(%arg0: i32) -> (i32, i32) {
    %c0_i32 = arith.constant 0 : i32
    %c0_i32_0 = arith.constant 0 : i32
    return %arg0, %c0_i32 : i32, i32
  }
  func.func @transform_1(%arg0: i32) -> (i32, i32) {
    %c0_i32 = arith.constant 0 : i32
    %c0_i32_0 = arith.constant 0 : i32
    %c0_i32_1 = arith.constant 0 : i32
    return %c0_i32, %c0_i32_0 : i32, i32
  }
  func.func @transform_2(%arg0: i32) -> (i32, i32) {
    %c0_i32 = arith.constant 0 : i32
    %c0_i32_0 = arith.constant 0 : i32
    %c0_i32_1 = arith.constant 0 : i32
    return %c0_i32, %c0_i32_0 : i32, i32
  }
  func.func @transform_3(%arg0: i32) -> (i32, i32) {
    %c0_i32 = arith.constant 0 : i32
    %c0_i32_0 = arith.constant 0 : i32
    %c0_i32_1 = arith.constant 0 : i32
    return %c0_i32, %c0_i32_0 : i32, i32
  }
  func.func @transform_4(%arg0: i32) -> (i32, i32) {
    %c0_i32 = arith.constant 0 : i32
    %c0_i32_0 = arith.constant 0 : i32
    %c0_i32_1 = arith.constant 0 : i32
    return %c0_i32, %c0_i32_0 : i32, i32
  }
  func.func @transform_5(%arg0: i32) -> (i32, i32) {
    %c0_i32 = arith.constant 0 : i32
    %c0_i32_0 = arith.constant 0 : i32
    %c0_i32_1 = arith.constant 0 : i32
    return %c0_i32, %c0_i32_0 : i32, i32
  }
  func.func @transform_6(%arg0: i32) -> (i32, i32) {
    %c0_i32 = arith.constant 0 : i32
    %c0_i32_0 = arith.constant 0 : i32
    return %arg0, %c0_i32 : i32, i32
  }
}

</mosaic_0001>

<llo_original>
// kernel: meta_polypv2_forward.4
$region0: #{meta_polypv2_forward.4}
  #allocation0 [shape = 'u32[]', space=smem, size = 0x4, offset = 0x4, fixed_abs, tag = 'smem constant byte address 0x4 - core index']
  #allocation1 [shape = 'u32[72,128]{1,0:T(1,128)}', space=vmem, size = 0x9000, scoped, tag = 'internal scratch']
  %s0 = inlined_call_operand.vmem [shape: bf16[128,48], index: 0, kind: input, shape index: {}]
  %s1 = inlined_call_operand.vmem [shape: bf16[48,64], index: 1, kind: input, shape index: {}]
  %s2 = inlined_call_operand.vmem [shape: f32[1,64], index: 2, kind: input, shape index: {}]
  %s3 = inlined_call_operand.vmem [shape: bf16[64,64], index: 3, kind: input, shape index: {}]
  %s4 = inlined_call_operand.vmem [shape: f32[1,64], index: 4, kind: input, shape index: {}]
  %s5 = inlined_call_operand.vmem [shape: bf16[1,64], index: 5, kind: input, shape index: {}]
  %s6 = inlined_call_operand.vmem [shape: bf16[128,64], index: 6, kind: output, shape index: {0}]
  %s7 = inlined_call_operand.vmem [shape: f32[1,128], index: 7, kind: output, shape index: {1}]
  %8 = xla_tuple %s6, %s7
  %s9 = sld [smem:[#allocation0]]
  $region42: #{meta_polypv2_forward.4} parent=0
    _
  %s11 = ssub.s32 1, %s9
  %s12 = scalar_select 0, %s11, %s9
  // Predicated region
  $region2: #{meta_polypv2_forward.4} parent=0 // pred_check
    _
  $region3: #{meta_polypv2_forward.4} parent=0 // pred_check_branch
    %14 = sbr.rel (0) target = $region5
  $region4: #{meta_polypv2_forward.4} parent=0 // pred_region
    _
  $region5: #{meta_polypv2_forward.4} parent=0 // pred_fallthru
    _
  // Predicated region
  $region6: #{meta_polypv2_forward.4} parent=0 // pred_check
    _
  $region7: #{meta_polypv2_forward.4} parent=0 // pred_check_branch
    %16 = sbr.rel (0) target = $region9
  $region8: #{meta_polypv2_forward.4} parent=0 // pred_region
    _
  $region9: #{meta_polypv2_forward.4} parent=0 // pred_fallthru
    _
  // Predicated region
  $region10: #{meta_polypv2_forward.4} parent=0 // pred_check
    _
  $region11: #{meta_polypv2_forward.4} parent=0 // pred_check_branch
    %18 = sbr.rel (0) target = $region13
  $region12: #{meta_polypv2_forward.4} parent=0 // pred_region
    _
  $region13: #{meta_polypv2_forward.4} parent=0 // pred_fallthru
    _
  // Predicated region
  $region14: #{meta_polypv2_forward.4} parent=0 // pred_check
    _
  $region15: #{meta_polypv2_forward.4} parent=0 // pred_check_branch
    %20 = sbr.rel (0) target = $region17
  $region16: #{meta_polypv2_forward.4} parent=0 // pred_region
    _
  $region17: #{meta_polypv2_forward.4} parent=0 // pred_fallthru
    _
  // Predicated region
  $region18: #{meta_polypv2_forward.4} parent=0 // pred_check
    _
  $region19: #{meta_polypv2_forward.4} parent=0 // pred_check_branch
    %22 = sbr.rel (0) target = $region21
  $region20: #{meta_polypv2_forward.4} parent=0 // pred_region
    _
  $region21: #{meta_polypv2_forward.4} parent=0 // pred_fallthru
    _
  // Predicated region
  $region22: #{meta_polypv2_forward.4} parent=0 // pred_check
    _
  $region23: #{meta_polypv2_forward.4} parent=0 // pred_check_branch
    %24 = sbr.rel (0) target = $region25
  $region24: #{meta_polypv2_forward.4} parent=0 // pred_region
    _
  $region25: #{meta_polypv2_forward.4} parent=0 // pred_fallthru
    _
  %v26 = vld [vmem:[%s0] sm:$0xf]
  %v27 = vld [vmem:[%s0 + $0x4] sm:$0xf]
  %v28 = vld [vmem:[%s0 + $0x8] sm:$0xf]
  %v29 = vld [vmem:[%s0 + $0xc] sm:$0xf]
  %v30 = vld [vmem:[%s0 + $0x10] sm:$0xf]
  %v31 = vld [vmem:[%s0 + $0x14] sm:$0xf]
  %v32 = vld [vmem:[%s0 + $0x18] sm:$0xf]
  %v33 = vld [vmem:[%s0 + $0x1c] sm:$0xf]
  %v34 = vld [vmem:[%s0 + $0x20] sm:$0xf]
  %v35 = vld [vmem:[%s0 + $0x24] sm:$0xf]
  %v36 = vld [vmem:[%s0 + $0x28] sm:$0xf]
  %v37 = vld [vmem:[%s0 + $0x2c] sm:$0xf]
  %v38 = vld [vmem:[%s0 + $0x30] sm:$0xf]
  %v39 = vld [vmem:[%s0 + $0x34] sm:$0xf]
  %v40 = vld [vmem:[%s0 + $0x38] sm:$0xf]
  %v41 = vld [vmem:[%s0 + $0x3c] sm:$0xf]
  %v42 = vld [vmem:[%s1] sm:$0xf]
  %v43 = vld [vmem:[%s1 + $0x4] sm:$0xf]
  %v44 = vld [vmem:[%s1 + $0x8] sm:$0xf]
  %v45 = vld [vmem:[%s1 + $0xc] sm:$0xf]
  %v46 = vld [vmem:[%s1 + $0x10] sm:$0xf]
  %v47 = vld [vmem:[%s1 + $0x14] sm:$0xf]
  %v48 = vld [vmem:[%s2] sm:$0x1]
  %v50 = vperm.slane %v48, 0
  %v68 = vunpack.c.l.b16 %v26
  %v69 = vunpack.c.l.b16 %v27
  %v70 = vunpack.c.l.b16 %v28
  %v71 = vunpack.c.l.b16 %v29
  %v72 = vunpack.c.l.b16 %v30
  %v73 = vunpack.c.l.b16 %v31
  %v74 = vunpack.c.l.b16 %v32
  %v75 = vunpack.c.l.b16 %v33
  %v76 = vunpack.c.l.b16 %v34
  %v77 = vunpack.c.l.b16 %v35
  %v78 = vunpack.c.l.b16 %v36
  %v79 = vunpack.c.l.b16 %v37
  %v80 = vunpack.c.l.b16 %v38
  %v81 = vunpack.c.l.b16 %v39
  %v82 = vunpack.c.l.b16 %v40
  %v83 = vunpack.c.l.b16 %v41
  %v84 = vpack.c.b16 %v69, %v68
  %v85 = vpack.c.b16 %v71, %v70
  %v86 = vpack.c.b16 %v73, %v72
  %v87 = vpack.c.b16 %v75, %v74
  %v88 = vpack.c.b16 %v77, %v76
  %v89 = vpack.c.b16 %v79, %v78
  %v90 = vpack.c.b16 %v81, %v80
  %v91 = vpack.c.b16 %v83, %v82
  %v98 = vunpack.c.l.b16 %v42
  %v99 = vunpack.c.l.b16 %v43
  %v100 = vunpack.c.l.b16 %v44
  %v101 = vunpack.c.l.b16 %v45
  %v102 = vunpack.c.l.b16 %v46
  %v103 = vunpack.c.l.b16 %v47
  %v104 = vpack.c.b16 %v99, %v98
  %v105 = vpack.c.b16 %v101, %v100
  %v106 = vpack.c.b16 %v103, %v102
  %vm110 = vcmask 392192
  %v112 = vsel %vm110, %v84, 0
  %v115 = vsel %vm110, %v85, 0
  %v118 = vsel %vm110, %v86, 0
  %v121 = vsel %vm110, %v87, 0
  %v124 = vsel %vm110, %v88, 0
  %v127 = vsel %vm110, %v89, 0
  %v130 = vsel %vm110, %v90, 0
  %v133 = vsel %vm110, %v91, 0
  %135 = vmatpush.bf16.msra.mxu0 0
  %136 = vmatpush.bf16.msra.mxu0 0
  %137 = vmatpush.bf16.msra.mxu0 0
  %138 = vmatpush.bf16.msra.mxu0 0
  %139 = vmatpush.bf16.msra.mxu0 0
  %140 = vmatpush.bf16.msra.mxu0 %v106
  %141 = vmatpush.bf16.msra.mxu0 %v105
  %142 = vmatpush.bf16.msra.mxu0 %v104
  %143 = vmatmul.bf16.gmra.mxu0 %v112
  %v144 = vpop.f32.mrf.mxu0
  %v145 = vadd.f32 %v50, %v144
  %v146 = vpop.f32.mrf.mxu0
  %v147 = vadd.f32 %v50, %v146
  %148 = vmatmul.bf16.gmra.mxu0 %v115
  %v149 = vpop.f32.mrf.mxu0
  %v150 = vadd.f32 %v50, %v149
  %v151 = vpop.f32.mrf.mxu0
  %v152 = vadd.f32 %v50, %v151
  %153 = vmatmul.bf16.gmra.mxu0 %v118
  %v154 = vpop.f32.mrf.mxu0
  %v155 = vadd.f32 %v50, %v154
  %v156 = vpop.f32.mrf.mxu0
  %v157 = vadd.f32 %v50, %v156
  %158 = vmatmul.bf16.gmra.mxu0 %v121
  %v159 = vpop.f32.mrf.mxu0
  %v160 = vadd.f32 %v50, %v159
  %v161 = vpop.f32.mrf.mxu0
  %v162 = vadd.f32 %v50, %v161
  %163 = vmatmul.bf16.gmra.mxu0 %v124
  %v164 = vpop.f32.mrf.mxu0
  %v165 = vadd.f32 %v50, %v164
  %v166 = vpop.f32.mrf.mxu0
  %v167 = vadd.f32 %v50, %v166
  %168 = vmatmul.bf16.gmra.mxu0 %v127
  %v169 = vpop.f32.mrf.mxu0
  %v170 = vadd.f32 %v50, %v169
  %v171 = vpop.f32.mrf.mxu0
  %v172 = vadd.f32 %v50, %v171
  %173 = vmatmul.bf16.gmra.mxu0 %v130
  %v174 = vpop.f32.mrf.mxu0
  %v175 = vadd.f32 %v50, %v174
  %v176 = vpop.f32.mrf.mxu0
  %v177 = vadd.f32 %v50, %v176
  %178 = vmatmul.bf16.gmra.mxu0 %v133
  %v179 = vpop.f32.mrf.mxu0
  %v180 = vadd.f32 %v50, %v179
  %v181 = vpop.f32.mrf.mxu0
  %v182 = vadd.f32 %v50, %v181
  %183 = vdwg.mxu0
  %v184 = vmax.f32 %v145, 0.0
  %v185 = vmax.f32 %v147, 0.0
  %v186 = vmax.f32 %v150, 0.0
  %v187 = vmax.f32 %v152, 0.0
  %v188 = vmax.f32 %v155, 0.0
  %v189 = vmax.f32 %v157, 0.0
  %v190 = vmax.f32 %v160, 0.0
  %v191 = vmax.f32 %v162, 0.0
  %v192 = vmax.f32 %v165, 0.0
  %v193 = vmax.f32 %v167, 0.0
  %v194 = vmax.f32 %v170, 0.0
  %v195 = vmax.f32 %v172, 0.0
  %v196 = vmax.f32 %v175, 0.0
  %v197 = vmax.f32 %v177, 0.0
  %v198 = vmax.f32 %v180, 0.0
  %v199 = vmax.f32 %v182, 0.0
  %v200 = vpack.c.bf16 %v184, %v184
  %v201 = vpack.c.bf16 %v185, %v185
  %v202 = vpack.c.bf16 %v186, %v186
  %v203 = vpack.c.bf16 %v187, %v187
  %v204 = vpack.c.bf16 %v188, %v188
  %v205 = vpack.c.bf16 %v189, %v189
  %v206 = vpack.c.bf16 %v190, %v190
  %v207 = vpack.c.bf16 %v191, %v191
  %v208 = vpack.c.bf16 %v192, %v192
  %v209 = vpack.c.bf16 %v193, %v193
  %v210 = vpack.c.bf16 %v194, %v194
  %v211 = vpack.c.bf16 %v195, %v195
  %v212 = vpack.c.bf16 %v196, %v196
  %v213 = vpack.c.bf16 %v197, %v197
  %v214 = vpack.c.bf16 %v198, %v198
  %v215 = vpack.c.bf16 %v199, %v199
  %v216 = vld [vmem:[%s3] sm:$0xf]
  %v217 = vld [vmem:[%s3 + $0x4] sm:$0xf]
  %v218 = vld [vmem:[%s3 + $0x8] sm:$0xf]
  %v219 = vld [vmem:[%s3 + $0xc] sm:$0xf]
  %v220 = vld [vmem:[%s3 + $0x10] sm:$0xf]
  %v221 = vld [vmem:[%s3 + $0x14] sm:$0xf]
  %v222 = vld [vmem:[%s3 + $0x18] sm:$0xf]
  %v223 = vld [vmem:[%s3 + $0x1c] sm:$0xf]
  %v224 = vld [vmem:[%s4] sm:$0x1]
  %v226 = vperm.slane %v224, 0
  %v244 = vunpack.c.l.b16 %v200
  %v245 = vunpack.c.l.b16 %v201
  %v246 = vunpack.c.l.b16 %v202
  %v247 = vunpack.c.l.b16 %v203
  %v248 = vunpack.c.l.b16 %v204
  %v249 = vunpack.c.l.b16 %v205
  %v250 = vunpack.c.l.b16 %v206
  %v251 = vunpack.c.l.b16 %v207
  %v252 = vunpack.c.l.b16 %v208
  %v253 = vunpack.c.l.b16 %v209
  %v254 = vunpack.c.l.b16 %v210
  %v255 = vunpack.c.l.b16 %v211
  %v256 = vunpack.c.l.b16 %v212
  %v257 = vunpack.c.l.b16 %v213
  %v258 = vunpack.c.l.b16 %v214
  %v259 = vunpack.c.l.b16 %v215
  %v260 = vpack.c.b16 %v245, %v244
  %v261 = vpack.c.b16 %v247, %v246
  %v262 = vpack.c.b16 %v249, %v248
  %v263 = vpack.c.b16 %v251, %v250
  %v264 = vpack.c.b16 %v253, %v252
  %v265 = vpack.c.b16 %v255, %v254
  %v266 = vpack.c.b16 %v257, %v256
  %v267 = vpack.c.b16 %v259, %v258
  %v276 = vunpack.c.l.b16 %v216
  %v277 = vunpack.c.l.b16 %v217
  %v278 = vunpack.c.l.b16 %v218
  %v279 = vunpack.c.l.b16 %v219
  %v280 = vunpack.c.l.b16 %v220
  %v281 = vunpack.c.l.b16 %v221
  %v282 = vunpack.c.l.b16 %v222
  %v283 = vunpack.c.l.b16 %v223
  %v284 = vpack.c.b16 %v277, %v276
  %v285 = vpack.c.b16 %v279, %v278
  %v286 = vpack.c.b16 %v281, %v280
  %v287 = vpack.c.b16 %v283, %v282
  %vm292 = vcmask 523264
  %v294 = vsel %vm292, %v260, 0
  %v297 = vsel %vm292, %v261, 0
  %v300 = vsel %vm292, %v262, 0
  %v303 = vsel %vm292, %v263, 0
  %v306 = vsel %vm292, %v264, 0
  %v309 = vsel %vm292, %v265, 0
  %v312 = vsel %vm292, %v266, 0
  %v315 = vsel %vm292, %v267, 0
  %317 = vmatpush.bf16.msra.mxu0 0
  %318 = vmatpush.bf16.msra.mxu0 0
  %319 = vmatpush.bf16.msra.mxu0 0
  %320 = vmatpush.bf16.msra.mxu0 0
  %321 = vmatpush.bf16.msra.mxu0 %v287
  %322 = vmatpush.bf16.msra.mxu0 %v286
  %323 = vmatpush.bf16.msra.mxu0 %v285
  %324 = vmatpush.bf16.msra.mxu0 %v284
  %325 = vmatmul.bf16.gmra.mxu0 %v294
  %v326 = vpop.f32.mrf.mxu0
  %v327 = vadd.f32 %v226, %v326
  %v328 = vpop.f32.mrf.mxu0
  %v329 = vadd.f32 %v226, %v328
  %330 = vmatmul.bf16.gmra.mxu0 %v297
  %v331 = vpop.f32.mrf.mxu0
  %v332 = vadd.f32 %v226, %v331
  %v333 = vpop.f32.mrf.mxu0
  %v334 = vadd.f32 %v226, %v333
  %335 = vmatmul.bf16.gmra.mxu0 %v300
  %v336 = vpop.f32.mrf.mxu0
  %v337 = vadd.f32 %v226, %v336
  %v338 = vpop.f32.mrf.mxu0
  %v339 = vadd.f32 %v226, %v338
  %340 = vmatmul.bf16.gmra.mxu0 %v303
  %v341 = vpop.f32.mrf.mxu0
  %v342 = vadd.f32 %v226, %v341
  %v343 = vpop.f32.mrf.mxu0
  %v344 = vadd.f32 %v226, %v343
  %345 = vmatmul.bf16.gmra.mxu0 %v306
  %v346 = vpop.f32.mrf.mxu0
  %v347 = vadd.f32 %v226, %v346
  %v348 = vpop.f32.mrf.mxu0
  %v349 = vadd.f32 %v226, %v348
  %350 = vmatmul.bf16.gmra.mxu0 %v309
  %v351 = vpop.f32.mrf.mxu0
  %v352 = vadd.f32 %v226, %v351
  %v353 = vpop.f32.mrf.mxu0
  %v354 = vadd.f32 %v226, %v353
  %355 = vmatmul.bf16.gmra.mxu0 %v312
  %v356 = vpop.f32.mrf.mxu0
  %v357 = vadd.f32 %v226, %v356
  %v358 = vpop.f32.mrf.mxu0
  %v359 = vadd.f32 %v226, %v358
  %360 = vmatmul.bf16.gmra.mxu0 %v315
  %v361 = vpop.f32.mrf.mxu0
  %v362 = vadd.f32 %v226, %v361
  %v363 = vpop.f32.mrf.mxu0
  %v364 = vadd.f32 %v226, %v363
  %365 = vdwg.mxu0
  %v366 = vmax.f32 %v327, 0.0
  %v367 = vmax.f32 %v329, 0.0
  %v368 = vmax.f32 %v332, 0.0
  %v369 = vmax.f32 %v334, 0.0
  %v370 = vmax.f32 %v337, 0.0
  %v371 = vmax.f32 %v339, 0.0
  %v372 = vmax.f32 %v342, 0.0
  %v373 = vmax.f32 %v344, 0.0
  %v374 = vmax.f32 %v347, 0.0
  %v375 = vmax.f32 %v349, 0.0
  %v376 = vmax.f32 %v352, 0.0
  %v377 = vmax.f32 %v354, 0.0
  %v378 = vmax.f32 %v357, 0.0
  %v379 = vmax.f32 %v359, 0.0
  %v380 = vmax.f32 %v362, 0.0
  %v381 = vmax.f32 %v364, 0.0
  %v382 = vpack.c.bf16 %v367, %v366
  %v383 = vpack.c.bf16 %v369, %v368
  %v384 = vpack.c.bf16 %v371, %v370
  %v385 = vpack.c.bf16 %v373, %v372
  %v386 = vpack.c.bf16 %v375, %v374
  %v387 = vpack.c.bf16 %v377, %v376
  %v388 = vpack.c.bf16 %v379, %v378
  %v389 = vpack.c.bf16 %v381, %v380
  %v390 = vld [vmem:[%s5] sm:$0x1]
  %v392 = vsel %vm292, %v390, 0
  %v395 = vsel %vm292, %v382, 0
  %v398 = vsel %vm292, %v383, 0
  %v401 = vsel %vm292, %v384, 0
  %v404 = vsel %vm292, %v385, 0
  %v407 = vsel %vm292, %v386, 0
  %v410 = vsel %vm292, %v387, 0
  %v413 = vsel %vm292, %v388, 0
  %v416 = vsel %vm292, %v389, 0
  %418 = vmatpush.bf16.xpose.msra.mxu0 %v416
  %419 = vmatpush.bf16.xpose.msra.mxu0 %v413
  %420 = vmatpush.bf16.xpose.msra.mxu0 %v410
  %421 = vmatpush.bf16.xpose.msra.mxu0 %v407
  %422 = vmatpush.bf16.xpose.msra.mxu0 %v404
  %423 = vmatpush.bf16.xpose.msra.mxu0 %v401
  %424 = vmatpush.bf16.xpose.msra.mxu0 %v398
  %425 = vmatpush.bf16.xpose.msra.mxu0 %v395
  %426 = vmatmul.bf16.gmra.mxu0 %v392
  %v427 = vpop.f32.mrf.mxu0
  %v428 = vadd.f32 0.0, %v427
  %v429 = vpop.f32.mrf.mxu0
  %430 = vdwg.mxu0
  %431 = vst [vmem:[%s7] sm:$0x1] %v428
  %vm432 = vcmask 519168
  %433 = vst.msk [vmem:[%s6] sm:$0xf] %vm432, %v200
  %434 = vst.msk [vmem:[%s6 + $0x4] sm:$0xf] %vm432, %v201
  %435 = vst.msk [vmem:[%s6 + $0x8] sm:$0xf] %vm432, %v202
  %436 = vst.msk [vmem:[%s6 + $0xc] sm:$0xf] %vm432, %v203
  %437 = vst.msk [vmem:[%s6 + $0x10] sm:$0xf] %vm432, %v204
  %438 = vst.msk [vmem:[%s6 + $0x14] sm:$0xf] %vm432, %v205
  %439 = vst.msk [vmem:[%s6 + $0x18] sm:$0xf] %vm432, %v206
  %440 = vst.msk [vmem:[%s6 + $0x1c] sm:$0xf] %vm432, %v207
  %441 = vst.msk [vmem:[%s6 + $0x20] sm:$0xf] %vm432, %v208
  %442 = vst.msk [vmem:[%s6 + $0x24] sm:$0xf] %vm432, %v209
  %443 = vst.msk [vmem:[%s6 + $0x28] sm:$0xf] %vm432, %v210
  %444 = vst.msk [vmem:[%s6 + $0x2c] sm:$0xf] %vm432, %v211
  %445 = vst.msk [vmem:[%s6 + $0x30] sm:$0xf] %vm432, %v212
  %446 = vst.msk [vmem:[%s6 + $0x34] sm:$0xf] %vm432, %v213
  %447 = vst.msk [vmem:[%s6 + $0x38] sm:$0xf] %vm432, %v214
  %448 = vst.msk [vmem:[%s6 + $0x3c] sm:$0xf] %vm432, %v215
  // Predicated region
  $region26: #{meta_polypv2_forward.4} parent=0 // pred_check
    _
  $region27: #{meta_polypv2_forward.4} parent=0 // pred_check_branch
    %450 = sbr.rel (0) target = $region29
  $region28: #{meta_polypv2_forward.4} parent=0 // pred_region
    _
  $region29: #{meta_polypv2_forward.4} parent=0 // pred_fallthru
    _
  // Predicated region
  $region30: #{meta_polypv2_forward.4} parent=0 // pred_check
    _
  $region31: #{meta_polypv2_forward.4} parent=0 // pred_check_branch
    %452 = sbr.rel (0) target = $region33
  $region32: #{meta_polypv2_forward.4} parent=0 // pred_region
    _
  $region33: #{meta_polypv2_forward.4} parent=0 // pred_fallthru
    _
  // Predicated region
  $region34: #{meta_polypv2_forward.4} parent=0 // pred_check
    _
  $region35: #{meta_polypv2_forward.4} parent=0 // pred_check_branch
    %454 = sbr.rel (0) target = $region37
  $region36: #{meta_polypv2_forward.4} parent=0 // pred_region
    _
  $region37: #{meta_polypv2_forward.4} parent=0 // pred_fallthru
    _
  // Predicated region
  $region38: #{meta_polypv2_forward.4} parent=0 // pred_check
    _
  $region39: #{meta_polypv2_forward.4} parent=0 // pred_check_branch
    %456 = sbr.rel (0) target = $region41
  $region40: #{meta_polypv2_forward.4} parent=0 // pred_region
    _
  $region41: #{meta_polypv2_forward.4} parent=0 // pred_fallthru
    _

// kernel: meta_polypv2_forward.5
$region0: #{meta_polypv2_forward.5}
  #allocation0 [shape = 'u32[]', space=smem, size = 0x4, offset = 0x4, fixed_abs, tag = 'smem constant byte address 0x4 - core index']
  #allocation1 [shape = 'u32[72,128]{1,0:T(1,128)}', space=vmem, size = 0x9000, scoped, tag = 'internal scratch']
  %s0 = inlined_call_operand.vmem [shape: bf16[128,256], index: 0, kind: input, shape index: {}]
  %s1 = inlined_call_operand.vmem [shape: bf16[256,128], index: 1, kind: input, shape index: {}]
  %s2 = inlined_call_operand.vmem [shape: f32[1,128], index: 2, kind: input, shape index: {}]
  %s3 = inlined_call_operand.vmem [shape: bf16[128,64], index: 3, kind: input, shape index: {}]
  %s4 = inlined_call_operand.vmem [shape: f32[1,64], index: 4, kind: input, shape index: {}]
  %s5 = inlined_call_operand.vmem [shape: bf16[1,64], index: 5, kind: input, shape index: {}]
  %s6 = inlined_call_operand.vmem [shape: bf16[128,128], index: 6, kind: output, shape index: {0}]
  %s7 = inlined_call_operand.vmem [shape: f32[1,128], index: 7, kind: output, shape index: {1}]
  %8 = xla_tuple %s6, %s7
  %s9 = sld [smem:[#allocation0]]
  $region42: #{meta_polypv2_forward.5} parent=0
    _
  %s11 = ssub.s32 1, %s9
  %s12 = scalar_select 0, %s11, %s9
  // Predicated region
  $region2: #{meta_polypv2_forward.5} parent=0 // pred_check
    _
  $region3: #{meta_polypv2_forward.5} parent=0 // pred_check_branch
    %14 = sbr.rel (0) target = $region5
  $region4: #{meta_polypv2_forward.5} parent=0 // pred_region
    _
  $region5: #{meta_polypv2_forward.5} parent=0 // pred_fallthru
    _
  // Predicated region
  $region6: #{meta_polypv2_forward.5} parent=0 // pred_check
    _
  $region7: #{meta_polypv2_forward.5} parent=0 // pred_check_branch
    %16 = sbr.rel (0) target = $region9
  $region8: #{meta_polypv2_forward.5} parent=0 // pred_region
    _
  $region9: #{meta_polypv2_forward.5} parent=0 // pred_fallthru
    _
  // Predicated region
  $region10: #{meta_polypv2_forward.5} parent=0 // pred_check
    _
  $region11: #{meta_polypv2_forward.5} parent=0 // pred_check_branch
    %18 = sbr.rel (0) target = $region13
  $region12: #{meta_polypv2_forward.5} parent=0 // pred_region
    _
  $region13: #{meta_polypv2_forward.5} parent=0 // pred_fallthru
    _
  // Predicated region
  $region14: #{meta_polypv2_forward.5} parent=0 // pred_check
    _
  $region15: #{meta_polypv2_forward.5} parent=0 // pred_check_branch
    %20 = sbr.rel (0) target = $region17
  $region16: #{meta_polypv2_forward.5} parent=0 // pred_region
    _
  $region17: #{meta_polypv2_forward.5} parent=0 // pred_fallthru
    _
  // Predicated region
  $region18: #{meta_polypv2_forward.5} parent=0 // pred_check
    _
  $region19: #{meta_polypv2_forward.5} parent=0 // pred_check_branch
    %22 = sbr.rel (0) target = $region21
  $region20: #{meta_polypv2_forward.5} parent=0 // pred_region
    _
  $region21: #{meta_polypv2_forward.5} parent=0 // pred_fallthru
    _
  // Predicated region
  $region22: #{meta_polypv2_forward.5} parent=0 // pred_check
    _
  $region23: #{meta_polypv2_forward.5} parent=0 // pred_check_branch
    %24 = sbr.rel (0) target = $region25
  $region24: #{meta_polypv2_forward.5} parent=0 // pred_region
    _
  $region25: #{meta_polypv2_forward.5} parent=0 // pred_fallthru
    _
  %v25 = vld [vmem:[%s0] sm:$0xff]
  %v26 = vld [vmem:[%s0 + $0x8] sm:$0xff]
  %v27 = vld [vmem:[%s0 + $0x10] sm:$0xff]
  %v28 = vld [vmem:[%s0 + $0x18] sm:$0xff]
  %v29 = vld [vmem:[%s0 + $0x20] sm:$0xff]
  %v30 = vld [vmem:[%s0 + $0x28] sm:$0xff]
  %v31 = vld [vmem:[%s0 + $0x30] sm:$0xff]
  %v32 = vld [vmem:[%s0 + $0x38] sm:$0xff]
  %v33 = vld [vmem:[%s0 + $0x40] sm:$0xff]
  %v34 = vld [vmem:[%s0 + $0x48] sm:$0xff]
  %v35 = vld [vmem:[%s0 + $0x50] sm:$0xff]
  %v36 = vld [vmem:[%s0 + $0x58] sm:$0xff]
  %v37 = vld [vmem:[%s0 + $0x60] sm:$0xff]
  %v38 = vld [vmem:[%s0 + $0x68] sm:$0xff]
  %v39 = vld [vmem:[%s0 + $0x70] sm:$0xff]
  %v40 = vld [vmem:[%s0 + $0x78] sm:$0xff]
  %v41 = vld [vmem:[%s1] sm:$0xf]
  %v42 = vld [vmem:[%s1 + $0x4] sm:$0xf]
  %v43 = vld [vmem:[%s1 + $0x8] sm:$0xf]
  %v44 = vld [vmem:[%s1 + $0xc] sm:$0xf]
  %v45 = vld [vmem:[%s1 + $0x10] sm:$0xf]
  %v46 = vld [vmem:[%s1 + $0x14] sm:$0xf]
  %v47 = vld [vmem:[%s1 + $0x18] sm:$0xf]
  %v48 = vld [vmem:[%s1 + $0x1c] sm:$0xf]
  %v49 = vld [vmem:[%s1 + $0x20] sm:$0xf]
  %v50 = vld [vmem:[%s1 + $0x24] sm:$0xf]
  %v51 = vld [vmem:[%s1 + $0x28] sm:$0xf]
  %v52 = vld [vmem:[%s1 + $0x2c] sm:$0xf]
  %v53 = vld [vmem:[%s1 + $0x30] sm:$0xf]
  %v54 = vld [vmem:[%s1 + $0x34] sm:$0xf]
  %v55 = vld [vmem:[%s1 + $0x38] sm:$0xf]
  %v56 = vld [vmem:[%s1 + $0x3c] sm:$0xf]
  %v57 = vld [vmem:[%s1 + $0x40] sm:$0xf]
  %v58 = vld [vmem:[%s1 + $0x44] sm:$0xf]
  %v59 = vld [vmem:[%s1 + $0x48] sm:$0xf]
  %v60 = vld [vmem:[%s1 + $0x4c] sm:$0xf]
  %v61 = vld [vmem:[%s1 + $0x50] sm:$0xf]
  %v62 = vld [vmem:[%s1 + $0x54] sm:$0xf]
  %v63 = vld [vmem:[%s1 + $0x58] sm:$0xf]
  %v64 = vld [vmem:[%s1 + $0x5c] sm:$0xf]
  %v65 = vld [vmem:[%s1 + $0x60] sm:$0xf]
  %v66 = vld [vmem:[%s1 + $0x64] sm:$0xf]
  %v67 = vld [vmem:[%s1 + $0x68] sm:$0xf]
  %v68 = vld [vmem:[%s1 + $0x6c] sm:$0xf]
  %v69 = vld [vmem:[%s1 + $0x70] sm:$0xf]
  %v70 = vld [vmem:[%s1 + $0x74] sm:$0xf]
  %v71 = vld [vmem:[%s1 + $0x78] sm:$0xf]
  %v72 = vld [vmem:[%s1 + $0x7c] sm:$0xf]
  %v73 = vld [vmem:[%s2] sm:$0x1]
  %v75 = vperm.slane %v73, 0
  %v93 = vunpack.c.l.b16 %v25
  %v94 = vunpack.c.h.b16 %v25
  %v95 = vunpack.c.l.b16 %v26
  %v96 = vunpack.c.h.b16 %v26
  %v97 = vunpack.c.l.b16 %v27
  %v98 = vunpack.c.h.b16 %v27
  %v99 = vunpack.c.l.b16 %v28
  %v100 = vunpack.c.h.b16 %v28
  %v101 = vunpack.c.l.b16 %v29
  %v102 = vunpack.c.h.b16 %v29
  %v103 = vunpack.c.l.b16 %v30
  %v104 = vunpack.c.h.b16 %v30
  %v105 = vunpack.c.l.b16 %v31
  %v106 = vunpack.c.h.b16 %v31
  %v107 = vunpack.c.l.b16 %v32
  %v108 = vunpack.c.h.b16 %v32
  %v109 = vunpack.c.l.b16 %v33
  %v110 = vunpack.c.h.b16 %v33
  %v111 = vunpack.c.l.b16 %v34
  %v112 = vunpack.c.h.b16 %v34
  %v113 = vunpack.c.l.b16 %v35
  %v114 = vunpack.c.h.b16 %v35
  %v115 = vunpack.c.l.b16 %v36
  %v116 = vunpack.c.h.b16 %v36
  %v117 = vunpack.c.l.b16 %v37
  %v118 = vunpack.c.h.b16 %v37
  %v119 = vunpack.c.l.b16 %v38
  %v120 = vunpack.c.h.b16 %v38
  %v121 = vunpack.c.l.b16 %v39
  %v122 = vunpack.c.h.b16 %v39
  %v123 = vunpack.c.l.b16 %v40
  %v124 = vunpack.c.h.b16 %v40
  %v125 = vpack.c.b16 %v95, %v93
  %v126 = vpack.c.b16 %v96, %v94
  %v127 = vpack.c.b16 %v99, %v97
  %v128 = vpack.c.b16 %v100, %v98
  %v129 = vpack.c.b16 %v103, %v101
  %v130 = vpack.c.b16 %v104, %v102
  %v131 = vpack.c.b16 %v107, %v105
  %v132 = vpack.c.b16 %v108, %v106
  %v133 = vpack.c.b16 %v111, %v109
  %v134 = vpack.c.b16 %v112, %v110
  %v135 = vpack.c.b16 %v115, %v113
  %v136 = vpack.c.b16 %v116, %v114
  %v137 = vpack.c.b16 %v119, %v117
  %v138 = vpack.c.b16 %v120, %v118
  %v139 = vpack.c.b16 %v123, %v121
  %v140 = vpack.c.b16 %v124, %v122
  %v189 = vunpack.c.l.b16 %v41
  %v190 = vunpack.c.l.b16 %v42
  %v191 = vunpack.c.l.b16 %v43
  %v192 = vunpack.c.l.b16 %v44
  %v193 = vunpack.c.l.b16 %v45
  %v194 = vunpack.c.l.b16 %v46
  %v195 = vunpack.c.l.b16 %v47
  %v196 = vunpack.c.l.b16 %v48
  %v197 = vunpack.c.l.b16 %v49
  %v198 = vunpack.c.l.b16 %v50
  %v199 = vunpack.c.l.b16 %v51
  %v200 = vunpack.c.l.b16 %v52
  %v201 = vunpack.c.l.b16 %v53
  %v202 = vunpack.c.l.b16 %v54
  %v203 = vunpack.c.l.b16 %v55
  %v204 = vunpack.c.l.b16 %v56
  %v205 = vunpack.c.l.b16 %v57
  %v206 = vunpack.c.l.b16 %v58
  %v207 = vunpack.c.l.b16 %v59
  %v208 = vunpack.c.l.b16 %v60
  %v209 = vunpack.c.l.b16 %v61
  %v210 = vunpack.c.l.b16 %v62
  %v211 = vunpack.c.l.b16 %v63
  %v212 = vunpack.c.l.b16 %v64
  %v213 = vunpack.c.l.b16 %v65
  %v214 = vunpack.c.l.b16 %v66
  %v215 = vunpack.c.l.b16 %v67
  %v216 = vunpack.c.l.b16 %v68
  %v217 = vunpack.c.l.b16 %v69
  %v218 = vunpack.c.l.b16 %v70
  %v219 = vunpack.c.l.b16 %v71
  %v220 = vunpack.c.l.b16 %v72
  %v221 = vpack.c.b16 %v190, %v189
  %v222 = vpack.c.b16 %v192, %v191
  %v223 = vpack.c.b16 %v194, %v193
  %v224 = vpack.c.b16 %v196, %v195
  %v225 = vpack.c.b16 %v198, %v197
  %v226 = vpack.c.b16 %v200, %v199
  %v227 = vpack.c.b16 %v202, %v201
  %v228 = vpack.c.b16 %v204, %v203
  %v229 = vpack.c.b16 %v206, %v205
  %v230 = vpack.c.b16 %v208, %v207
  %v231 = vpack.c.b16 %v210, %v209
  %v232 = vpack.c.b16 %v212, %v211
  %v233 = vpack.c.b16 %v214, %v213
  %v234 = vpack.c.b16 %v216, %v215
  %v235 = vpack.c.b16 %v218, %v217
  %v236 = vpack.c.b16 %v220, %v219
  %253 = vmatpush.bf16.msra.mxu0 %v228
  %254 = vmatpush.bf16.msra.mxu0 %v227
  %255 = vmatpush.bf16.msra.mxu0 %v226
  %256 = vmatpush.bf16.msra.mxu0 %v225
  %257 = vmatpush.bf16.msra.mxu0 %v224
  %258 = vmatpush.bf16.msra.mxu0 %v223
  %259 = vmatpush.bf16.msra.mxu0 %v222
  %260 = vmatpush.bf16.msra.mxu0 %v221
  %261 = vmatmul.bf16.gmra.mxu0 %v125
  %v262 = vpop.f32.mrf.mxu0
  %v263 = vadd.f32 %v75, %v262
  %v264 = vpop.f32.mrf.mxu0
  %v265 = vadd.f32 %v75, %v264
  %266 = vmatmul.bf16.gmra.mxu0 %v127
  %v267 = vpop.f32.mrf.mxu0
  %v268 = vadd.f32 %v75, %v267
  %v269 = vpop.f32.mrf.mxu0
  %v270 = vadd.f32 %v75, %v269
  %271 = vmatmul.bf16.gmra.mxu0 %v129
  %v272 = vpop.f32.mrf.mxu0
  %v273 = vadd.f32 %v75, %v272
  %v274 = vpop.f32.mrf.mxu0
  %v275 = vadd.f32 %v75, %v274
  %276 = vmatmul.bf16.gmra.mxu0 %v131
  %v277 = vpop.f32.mrf.mxu0
  %v278 = vadd.f32 %v75, %v277
  %v279 = vpop.f32.mrf.mxu0
  %v280 = vadd.f32 %v75, %v279
  %281 = vmatmul.bf16.gmra.mxu0 %v133
  %v282 = vpop.f32.mrf.mxu0
  %v283 = vadd.f32 %v75, %v282
  %v284 = vpop.f32.mrf.mxu0
  %v285 = vadd.f32 %v75, %v284
  %286 = vmatmul.bf16.gmra.mxu0 %v135
  %v287 = vpop.f32.mrf.mxu0
  %v288 = vadd.f32 %v75, %v287
  %v289 = vpop.f32.mrf.mxu0
  %v290 = vadd.f32 %v75, %v289
  %291 = vmatmul.bf16.gmra.mxu0 %v137
  %v292 = vpop.f32.mrf.mxu0
  %v293 = vadd.f32 %v75, %v292
  %v294 = vpop.f32.mrf.mxu0
  %v295 = vadd.f32 %v75, %v294
  %296 = vmatmul.bf16.gmra.mxu0 %v139
  %v297 = vpop.f32.mrf.mxu0
  %v298 = vadd.f32 %v75, %v297
  %v299 = vpop.f32.mrf.mxu0
  %v300 = vadd.f32 %v75, %v299
  %301 = vdwg.mxu0
  %302 = vmatpush.bf16.msra.mxu0 %v236
  %303 = vmatpush.bf16.msra.mxu0 %v235
  %304 = vmatpush.bf16.msra.mxu0 %v234
  %305 = vmatpush.bf16.msra.mxu0 %v233
  %306 = vmatpush.bf16.msra.mxu0 %v232
  %307 = vmatpush.bf16.msra.mxu0 %v231
  %308 = vmatpush.bf16.msra.mxu0 %v230
  %309 = vmatpush.bf16.msra.mxu0 %v229
  %310 = vmatmul.bf16.gmra.mxu0 %v126
  %v311 = vpop.f32.mrf.mxu0
  %v312 = vadd.f32 %v263, %v311
  %v313 = vpop.f32.mrf.mxu0
  %v314 = vadd.f32 %v265, %v313
  %315 = vmatmul.bf16.gmra.mxu0 %v128
  %v316 = vpop.f32.mrf.mxu0
  %v317 = vadd.f32 %v268, %v316
  %v318 = vpop.f32.mrf.mxu0
  %v319 = vadd.f32 %v270, %v318
  %320 = vmatmul.bf16.gmra.mxu0 %v130
  %v321 = vpop.f32.mrf.mxu0
  %v322 = vadd.f32 %v273, %v321
  %v323 = vpop.f32.mrf.mxu0
  %v324 = vadd.f32 %v275, %v323
  %325 = vmatmul.bf16.gmra.mxu0 %v132
  %v326 = vpop.f32.mrf.mxu0
  %v327 = vadd.f32 %v278, %v326
  %v328 = vpop.f32.mrf.mxu0
  %v329 = vadd.f32 %v280, %v328
  %330 = vmatmul.bf16.gmra.mxu0 %v134
  %v331 = vpop.f32.mrf.mxu0
  %v332 = vadd.f32 %v283, %v331
  %v333 = vpop.f32.mrf.mxu0
  %v334 = vadd.f32 %v285, %v333
  %335 = vmatmul.bf16.gmra.mxu0 %v136
  %v336 = vpop.f32.mrf.mxu0
  %v337 = vadd.f32 %v288, %v336
  %v338 = vpop.f32.mrf.mxu0
  %v339 = vadd.f32 %v290, %v338
  %340 = vmatmul.bf16.gmra.mxu0 %v138
  %v341 = vpop.f32.mrf.mxu0
  %v342 = vadd.f32 %v293, %v341
  %v343 = vpop.f32.mrf.mxu0
  %v344 = vadd.f32 %v295, %v343
  %345 = vmatmul.bf16.gmra.mxu0 %v140
  %v346 = vpop.f32.mrf.mxu0
  %v347 = vadd.f32 %v298, %v346
  %v348 = vpop.f32.mrf.mxu0
  %v349 = vadd.f32 %v300, %v348
  %350 = vdwg.mxu0
  %v351 = vmax.f32 %v312, 0.0
  %v352 = vmax.f32 %v314, 0.0
  %v353 = vmax.f32 %v317, 0.0
  %v354 = vmax.f32 %v319, 0.0
  %v355 = vmax.f32 %v322, 0.0
  %v356 = vmax.f32 %v324, 0.0
  %v357 = vmax.f32 %v327, 0.0
  %v358 = vmax.f32 %v329, 0.0
  %v359 = vmax.f32 %v332, 0.0
  %v360 = vmax.f32 %v334, 0.0
  %v361 = vmax.f32 %v337, 0.0
  %v362 = vmax.f32 %v339, 0.0
  %v363 = vmax.f32 %v342, 0.0
  %v364 = vmax.f32 %v344, 0.0
  %v365 = vmax.f32 %v347, 0.0
  %v366 = vmax.f32 %v349, 0.0
  %v367 = vpack.c.bf16 %v351, %v351
  %v368 = vpack.c.bf16 %v352, %v352
  %v369 = vpack.c.bf16 %v353, %v353
  %v370 = vpack.c.bf16 %v354, %v354
  %v371 = vpack.c.bf16 %v355, %v355
  %v372 = vpack.c.bf16 %v356, %v356
  %v373 = vpack.c.bf16 %v357, %v357
  %v374 = vpack.c.bf16 %v358, %v358
  %v375 = vpack.c.bf16 %v359, %v359
  %v376 = vpack.c.bf16 %v360, %v360
  %v377 = vpack.c.bf16 %v361, %v361
  %v378 = vpack.c.bf16 %v362, %v362
  %v379 = vpack.c.bf16 %v363, %v363
  %v380 = vpack.c.bf16 %v364, %v364
  %v381 = vpack.c.bf16 %v365, %v365
  %v382 = vpack.c.bf16 %v366, %v366
  %v383 = vld [vmem:[%s3] sm:$0xf]
  %v384 = vld [vmem:[%s3 + $0x4] sm:$0xf]
  %v385 = vld [vmem:[%s3 + $0x8] sm:$0xf]
  %v386 = vld [vmem:[%s3 + $0xc] sm:$0xf]
  %v387 = vld [vmem:[%s3 + $0x10] sm:$0xf]
  %v388 = vld [vmem:[%s3 + $0x14] sm:$0xf]
  %v389 = vld [vmem:[%s3 + $0x18] sm:$0xf]
  %v390 = vld [vmem:[%s3 + $0x1c] sm:$0xf]
  %v391 = vld [vmem:[%s3 + $0x20] sm:$0xf]
  %v392 = vld [vmem:[%s3 + $0x24] sm:$0xf]
  %v393 = vld [vmem:[%s3 + $0x28] sm:$0xf]
  %v394 = vld [vmem:[%s3 + $0x2c] sm:$0xf]
  %v395 = vld [vmem:[%s3 + $0x30] sm:$0xf]
  %v396 = vld [vmem:[%s3 + $0x34] sm:$0xf]
  %v397 = vld [vmem:[%s3 + $0x38] sm:$0xf]
  %v398 = vld [vmem:[%s3 + $0x3c] sm:$0xf]
  %v399 = vld [vmem:[%s4] sm:$0x1]
  %v401 = vperm.slane %v399, 0
  %v419 = vunpack.c.l.b16 %v367
  %v420 = vunpack.c.l.b16 %v368
  %v421 = vunpack.c.l.b16 %v369
  %v422 = vunpack.c.l.b16 %v370
  %v423 = vunpack.c.l.b16 %v371
  %v424 = vunpack.c.l.b16 %v372
  %v425 = vunpack.c.l.b16 %v373
  %v426 = vunpack.c.l.b16 %v374
  %v427 = vunpack.c.l.b16 %v375
  %v428 = vunpack.c.l.b16 %v376
  %v429 = vunpack.c.l.b16 %v377
  %v430 = vunpack.c.l.b16 %v378
  %v431 = vunpack.c.l.b16 %v379
  %v432 = vunpack.c.l.b16 %v380
  %v433 = vunpack.c.l.b16 %v381
  %v434 = vunpack.c.l.b16 %v382
  %v435 = vpack.c.b16 %v420, %v419
  %v436 = vpack.c.b16 %v422, %v421
  %v437 = vpack.c.b16 %v424, %v423
  %v438 = vpack.c.b16 %v426, %v425
  %v439 = vpack.c.b16 %v428, %v427
  %v440 = vpack.c.b16 %v430, %v429
  %v441 = vpack.c.b16 %v432, %v431
  %v442 = vpack.c.b16 %v434, %v433
  %v467 = vunpack.c.l.b16 %v383
  %v468 = vunpack.c.l.b16 %v384
  %v469 = vunpack.c.l.b16 %v385
  %v470 = vunpack.c.l.b16 %v386
  %v471 = vunpack.c.l.b16 %v387
  %v472 = vunpack.c.l.b16 %v388
  %v473 = vunpack.c.l.b16 %v389
  %v474 = vunpack.c.l.b16 %v390
  %v475 = vunpack.c.l.b16 %v391
  %v476 = vunpack.c.l.b16 %v392
  %v477 = vunpack.c.l.b16 %v393
  %v478 = vunpack.c.l.b16 %v394
  %v479 = vunpack.c.l.b16 %v395
  %v480 = vunpack.c.l.b16 %v396
  %v481 = vunpack.c.l.b16 %v397
  %v482 = vunpack.c.l.b16 %v398
  %v483 = vpack.c.b16 %v468, %v467
  %v484 = vpack.c.b16 %v470, %v469
  %v485 = vpack.c.b16 %v472, %v471
  %v486 = vpack.c.b16 %v474, %v473
  %v487 = vpack.c.b16 %v476, %v475
  %v488 = vpack.c.b16 %v478, %v477
  %v489 = vpack.c.b16 %v480, %v479
  %v490 = vpack.c.b16 %v482, %v481
  %499 = vmatpush.bf16.msra.mxu0 %v490
  %500 = vmatpush.bf16.msra.mxu0 %v489
  %501 = vmatpush.bf16.msra.mxu0 %v488
  %502 = vmatpush.bf16.msra.mxu0 %v487
  %503 = vmatpush.bf16.msra.mxu0 %v486
  %504 = vmatpush.bf16.msra.mxu0 %v485
  %505 = vmatpush.bf16.msra.mxu0 %v484
  %506 = vmatpush.bf16.msra.mxu0 %v483
  %507 = vmatmul.bf16.gmra.mxu0 %v435
  %v508 = vpop.f32.mrf.mxu0
  %v509 = vadd.f32 %v401, %v508
  %v510 = vpop.f32.mrf.mxu0
  %v511 = vadd.f32 %v401, %v510
  %512 = vmatmul.bf16.gmra.mxu0 %v436
  %v513 = vpop.f32.mrf.mxu0
  %v514 = vadd.f32 %v401, %v513
  %v515 = vpop.f32.mrf.mxu0
  %v516 = vadd.f32 %v401, %v515
  %517 = vmatmul.bf16.gmra.mxu0 %v437
  %v518 = vpop.f32.mrf.mxu0
  %v519 = vadd.f32 %v401, %v518
  %v520 = vpop.f32.mrf.mxu0
  %v521 = vadd.f32 %v401, %v520
  %522 = vmatmul.bf16.gmra.mxu0 %v438
  %v523 = vpop.f32.mrf.mxu0
  %v524 = vadd.f32 %v401, %v523
  %v525 = vpop.f32.mrf.mxu0
  %v526 = vadd.f32 %v401, %v525
  %527 = vmatmul.bf16.gmra.mxu0 %v439
  %v528 = vpop.f32.mrf.mxu0
  %v529 = vadd.f32 %v401, %v528
  %v530 = vpop.f32.mrf.mxu0
  %v531 = vadd.f32 %v401, %v530
  %532 = vmatmul.bf16.gmra.mxu0 %v440
  %v533 = vpop.f32.mrf.mxu0
  %v534 = vadd.f32 %v401, %v533
  %v535 = vpop.f32.mrf.mxu0
  %v536 = vadd.f32 %v401, %v535
  %537 = vmatmul.bf16.gmra.mxu0 %v441
  %v538 = vpop.f32.mrf.mxu0
  %v539 = vadd.f32 %v401, %v538
  %v540 = vpop.f32.mrf.mxu0
  %v541 = vadd.f32 %v401, %v540
  %542 = vmatmul.bf16.gmra.mxu0 %v442
  %v543 = vpop.f32.mrf.mxu0
  %v544 = vadd.f32 %v401, %v543
  %v545 = vpop.f32.mrf.mxu0
  %v546 = vadd.f32 %v401, %v545
  %547 = vdwg.mxu0
  %v548 = vmax.f32 %v509, 0.0
  %v549 = vmax.f32 %v511, 0.0
  %v550 = vmax.f32 %v514, 0.0
  %v551 = vmax.f32 %v516, 0.0
  %v552 = vmax.f32 %v519, 0.0
  %v553 = vmax.f32 %v521, 0.0
  %v554 = vmax.f32 %v524, 0.0
  %v555 = vmax.f32 %v526, 0.0
  %v556 = vmax.f32 %v529, 0.0
  %v557 = vmax.f32 %v531, 0.0
  %v558 = vmax.f32 %v534, 0.0
  %v559 = vmax.f32 %v536, 0.0
  %v560 = vmax.f32 %v539, 0.0
  %v561 = vmax.f32 %v541, 0.0
  %v562 = vmax.f32 %v544, 0.0
  %v563 = vmax.f32 %v546, 0.0
  %v564 = vpack.c.bf16 %v549, %v548
  %v565 = vpack.c.bf16 %v551, %v550
  %v566 = vpack.c.bf16 %v553, %v552
  %v567 = vpack.c.bf16 %v555, %v554
  %v568 = vpack.c.bf16 %v557, %v556
  %v569 = vpack.c.bf16 %v559, %v558
  %v570 = vpack.c.bf16 %v561, %v560
  %v571 = vpack.c.bf16 %v563, %v562
  %v572 = vld [vmem:[%s5] sm:$0x1]
  %vm573 = vcmask 523264
  %v575 = vsel %vm573, %v572, 0
  %v578 = vsel %vm573, %v564, 0
  %v581 = vsel %vm573, %v565, 0
  %v584 = vsel %vm573, %v566, 0
  %v587 = vsel %vm573, %v567, 0
  %v590 = vsel %vm573, %v568, 0
  %v593 = vsel %vm573, %v569, 0
  %v596 = vsel %vm573, %v570, 0
  %v599 = vsel %vm573, %v571, 0
  %601 = vmatpush.bf16.xpose.msra.mxu0 %v599
  %602 = vmatpush.bf16.xpose.msra.mxu0 %v596
  %603 = vmatpush.bf16.xpose.msra.mxu0 %v593
  %604 = vmatpush.bf16.xpose.msra.mxu0 %v590
  %605 = vmatpush.bf16.xpose.msra.mxu0 %v587
  %606 = vmatpush.bf16.xpose.msra.mxu0 %v584
  %607 = vmatpush.bf16.xpose.msra.mxu0 %v581
  %608 = vmatpush.bf16.xpose.msra.mxu0 %v578
  %609 = vmatmul.bf16.gmra.mxu0 %v575
  %v610 = vpop.f32.mrf.mxu0
  %v611 = vadd.f32 0.0, %v610
  %v612 = vpop.f32.mrf.mxu0
  %613 = vdwg.mxu0
  %614 = vst [vmem:[%s7] sm:$0x1] %v611
  %615 = vst [vmem:[%s6] sm:$0xf] %v367
  %616 = vst [vmem:[%s6 + $0x4] sm:$0xf] %v368
  %617 = vst [vmem:[%s6 + $0x8] sm:$0xf] %v369
  %618 = vst [vmem:[%s6 + $0xc] sm:$0xf] %v370
  %619 = vst [vmem:[%s6 + $0x10] sm:$0xf] %v371
  %620 = vst [vmem:[%s6 + $0x14] sm:$0xf] %v372
  %621 = vst [vmem:[%s6 + $0x18] sm:$0xf] %v373
  %622 = vst [vmem:[%s6 + $0x1c] sm:$0xf] %v374
  %623 = vst [vmem:[%s6 + $0x20] sm:$0xf] %v375
  %624 = vst [vmem:[%s6 + $0x24] sm:$0xf] %v376
  %625 = vst [vmem:[%s6 + $0x28] sm:$0xf] %v377
  %626 = vst [vmem:[%s6 + $0x2c] sm:$0xf] %v378
  %627 = vst [vmem:[%s6 + $0x30] sm:$0xf] %v379
  %628 = vst [vmem:[%s6 + $0x34] sm:$0xf] %v380
  %629 = vst [vmem:[%s6 + $0x38] sm:$0xf] %v381
  %630 = vst [vmem:[%s6 + $0x3c] sm:$0xf] %v382
  // Predicated region
  $region26: #{meta_polypv2_forward.5} parent=0 // pred_check
    _
  $region27: #{meta_polypv2_forward.5} parent=0 // pred_check_branch
    %632 = sbr.rel (0) target = $region29
  $region28: #{meta_polypv2_forward.5} parent=0 // pred_region
    _
  $region29: #{meta_polypv2_forward.5} parent=0 // pred_fallthru
    _
  // Predicated region
  $region30: #{meta_polypv2_forward.5} parent=0 // pred_check
    _
  $region31: #{meta_polypv2_forward.5} parent=0 // pred_check_branch
    %634 = sbr.rel (0) target = $region33
  $region32: #{meta_polypv2_forward.5} parent=0 // pred_region
    _
  $region33: #{meta_polypv2_forward.5} parent=0 // pred_fallthru
    _
  // Predicated region
  $region34: #{meta_polypv2_forward.5} parent=0 // pred_check
    _
  $region35: #{meta_polypv2_forward.5} parent=0 // pred_check_branch
    %636 = sbr.rel (0) target = $region37
  $region36: #{meta_polypv2_forward.5} parent=0 // pred_region
    _
  $region37: #{meta_polypv2_forward.5} parent=0 // pred_fallthru
    _
  // Predicated region
  $region38: #{meta_polypv2_forward.5} parent=0 // pred_check
    _
  $region39: #{meta_polypv2_forward.5} parent=0 // pred_check_branch
    %638 = sbr.rel (0) target = $region41
  $region40: #{meta_polypv2_forward.5} parent=0 // pred_region
    _
  $region41: #{meta_polypv2_forward.5} parent=0 // pred_fallthru
    _

// kernel: meta_polypv2_forward.6
$region0: #{meta_polypv2_forward.6}
  #allocation0 [shape = 'u32[]', space=smem, size = 0x4, offset = 0x4, fixed_abs, tag = 'smem constant byte address 0x4 - core index']
  #allocation1 [shape = 'u32[72,128]{1,0:T(1,128)}', space=vmem, size = 0x9000, scoped, tag = 'internal scratch']
  %s0 = inlined_call_operand.vmem [shape: bf16[128,512], index: 0, kind: input, shape index: {}]
  %s1 = inlined_call_operand.vmem [shape: bf16[512,320], index: 1, kind: input, shape index: {}]
  %s2 = inlined_call_operand.vmem [shape: f32[1,320], index: 2, kind: input, shape index: {}]
  %s3 = inlined_call_operand.vmem [shape: bf16[320,64], index: 3, kind: input, shape index: {}]
  %s4 = inlined_call_operand.vmem [shape: f32[1,64], index: 4, kind: input, shape index: {}]
  %s5 = inlined_call_operand.vmem [shape: bf16[1,64], index: 5, kind: input, shape index: {}]
  %s6 = inlined_call_operand.vmem [shape: bf16[128,320], index: 6, kind: output, shape index: {0}]
  %s7 = inlined_call_operand.vmem [shape: f32[1,128], index: 7, kind: output, shape index: {1}]
  %8 = xla_tuple %s6, %s7
  %s9 = sld [smem:[#allocation0]]
  $region42: #{meta_polypv2_forward.6} parent=0
    _
  %s11 = ssub.s32 1, %s9
  %s12 = scalar_select 0, %s11, %s9
  // Predicated region
  $region2: #{meta_polypv2_forward.6} parent=0 // pred_check
    _
  $region3: #{meta_polypv2_forward.6} parent=0 // pred_check_branch
    %14 = sbr.rel (0) target = $region5
  $region4: #{meta_polypv2_forward.6} parent=0 // pred_region
    _
  $region5: #{meta_polypv2_forward.6} parent=0 // pred_fallthru
    _
  // Predicated region
  $region6: #{meta_polypv2_forward.6} parent=0 // pred_check
    _
  $region7: #{meta_polypv2_forward.6} parent=0 // pred_check_branch
    %16 = sbr.rel (0) target = $region9
  $region8: #{meta_polypv2_forward.6} parent=0 // pred_region
    _
  $region9: #{meta_polypv2_forward.6} parent=0 // pred_fallthru
    _
  // Predicated region
  $region10: #{meta_polypv2_forward.6} parent=0 // pred_check
    _
  $region11: #{meta_polypv2_forward.6} parent=0 // pred_check_branch
    %18 = sbr.rel (0) target = $region13
  $region12: #{meta_polypv2_forward.6} parent=0 // pred_region
    _
  $region13: #{meta_polypv2_forward.6} parent=0 // pred_fallthru
    _
  // Predicated region
  $region14: #{meta_polypv2_forward.6} parent=0 // pred_check
    _
  $region15: #{meta_polypv2_forward.6} parent=0 // pred_check_branch
    %20 = sbr.rel (0) target = $region17
  $region16: #{meta_polypv2_forward.6} parent=0 // pred_region
    _
  $region17: #{meta_polypv2_forward.6} parent=0 // pred_fallthru
    _
  // Predicated region
  $region18: #{meta_polypv2_forward.6} parent=0 // pred_check
    _
  $region19: #{meta_polypv2_forward.6} parent=0 // pred_check_branch
    %22 = sbr.rel (0) target = $region21
  $region20: #{meta_polypv2_forward.6} parent=0 // pred_region
    _
  $region21: #{meta_polypv2_forward.6} parent=0 // pred_fallthru
    _
  // Predicated region
  $region22: #{meta_polypv2_forward.6} parent=0 // pred_check
    _
  $region23: #{meta_polypv2_forward.6} parent=0 // pred_check_branch
    %24 = sbr.rel (0) target = $region25
  $region24: #{meta_polypv2_forward.6} parent=0 // pred_region
    _
  $region25: #{meta_polypv2_forward.6} parent=0 // pred_fallthru
    _
  %v26 = vld [vmem:[%s0] sm:$0xff]
  %v27 = vld [vmem:[%s0 + $0x8] sm:$0xff]
  %v28 = vld [vmem:[%s0 + $0x10] sm:$0xff]
  %v29 = vld [vmem:[%s0 + $0x18] sm:$0xff]
  %v30 = vld [vmem:[%s0 + $0x20] sm:$0xff]
  %v31 = vld [vmem:[%s0 + $0x28] sm:$0xff]
  %v32 = vld [vmem:[%s0 + $0x30] sm:$0xff]
  %v33 = vld [vmem:[%s0 + $0x38] sm:$0xff]
  %v34 = vld [vmem:[%s0 + $0x40] sm:$0xff]
  %v35 = vld [vmem:[%s0 + $0x48] sm:$0xff]
  %v36 = vld [vmem:[%s0 + $0x50] sm:$0xff]
  %v37 = vld [vmem:[%s0 + $0x58] sm:$0xff]
  %v38 = vld [vmem:[%s0 + $0x60] sm:$0xff]
  %v39 = vld [vmem:[%s0 + $0x68] sm:$0xff]
  %v40 = vld [vmem:[%s0 + $0x70] sm:$0xff]
  %v41 = vld [vmem:[%s0 + $0x78] sm:$0xff]
  %v42 = vld [vmem:[%s0 + $0x80] sm:$0xff]
  %v43 = vld [vmem:[%s0 + $0x88] sm:$0xff]
  %v44 = vld [vmem:[%s0 + $0x90] sm:$0xff]
  %v45 = vld [vmem:[%s0 + $0x98] sm:$0xff]
  %v46 = vld [vmem:[%s0 + $0xa0] sm:$0xff]
  %v47 = vld [vmem:[%s0 + $0xa8] sm:$0xff]
  %v48 = vld [vmem:[%s0 + $0xb0] sm:$0xff]
  %v49 = vld [vmem:[%s0 + $0xb8] sm:$0xff]
  %v50 = vld [vmem:[%s0 + $0xc0] sm:$0xff]
  %v51 = vld [vmem:[%s0 + $0xc8] sm:$0xff]
  %v52 = vld [vmem:[%s0 + $0xd0] sm:$0xff]
  %v53 = vld [vmem:[%s0 + $0xd8] sm:$0xff]
  %v54 = vld [vmem:[%s0 + $0xe0] sm:$0xff]
  %v55 = vld [vmem:[%s0 + $0xe8] sm:$0xff]
  %v56 = vld [vmem:[%s0 + $0xf0] sm:$0xff]
  %v57 = vld [vmem:[%s0 + $0xf8] sm:$0xff]
  %v58 = vld [vmem:[%s1] sm:$0xff]
  %v59 = vld [vmem:[%s1 + $0x8] sm:$0xf]
  %v60 = vld [vmem:[%s1 + $0xc] sm:$0xff]
  %v61 = vld [vmem:[%s1 + $0x14] sm:$0xf]
  %v62 = vld [vmem:[%s1 + $0x18] sm:$0xff]
  %v63 = vld [vmem:[%s1 + $0x20] sm:$0xf]
  %v64 = vld [vmem:[%s1 + $0x24] sm:$0xff]
  %v65 = vld [vmem:[%s1 + $0x2c] sm:$0xf]
  %v66 = vld [vmem:[%s1 + $0x30] sm:$0xff]
  %v67 = vld [vmem:[%s1 + $0x38] sm:$0xf]
  %v68 = vld [vmem:[%s1 + $0x3c] sm:$0xff]
  %v69 = vld [vmem:[%s1 + $0x44] sm:$0xf]
  %v70 = vld [vmem:[%s1 + $0x48] sm:$0xff]
  %v71 = vld [vmem:[%s1 + $0x50] sm:$0xf]
  %v72 = vld [vmem:[%s1 + $0x54] sm:$0xff]
  %v73 = vld [vmem:[%s1 + $0x5c] sm:$0xf]
  %v74 = vld [vmem:[%s1 + $0x60] sm:$0xff]
  %v75 = vld [vmem:[%s1 + $0x68] sm:$0xf]
  %v76 = vld [vmem:[%s1 + $0x6c] sm:$0xff]
  %v77 = vld [vmem:[%s1 + $0x74] sm:$0xf]
  %v78 = vld [vmem:[%s1 + $0x78] sm:$0xff]
  %v79 = vld [vmem:[%s1 + $0x80] sm:$0xf]
  %v80 = vld [vmem:[%s1 + $0x84] sm:$0xff]
  %v81 = vld [vmem:[%s1 + $0x8c] sm:$0xf]
  %v82 = vld [vmem:[%s1 + $0x90] sm:$0xff]
  %v83 = vld [vmem:[%s1 + $0x98] sm:$0xf]
  %v84 = vld [vmem:[%s1 + $0x9c] sm:$0xff]
  %v85 = vld [vmem:[%s1 + $0xa4] sm:$0xf]
  %v86 = vld [vmem:[%s1 + $0xa8] sm:$0xff]
  %v87 = vld [vmem:[%s1 + $0xb0] sm:$0xf]
  %v88 = vld [vmem:[%s1 + $0xb4] sm:$0xff]
  %v89 = vld [vmem:[%s1 + $0xbc] sm:$0xf]
  %v90 = vld [vmem:[%s1 + $0xc0] sm:$0xff]
  %v91 = vld [vmem:[%s1 + $0xc8] sm:$0xf]
  %v92 = vld [vmem:[%s1 + $0xcc] sm:$0xff]
  %v93 = vld [vmem:[%s1 + $0xd4] sm:$0xf]
  %v94 = vld [vmem:[%s1 + $0xd8] sm:$0xff]
  %v95 = vld [vmem:[%s1 + $0xe0] sm:$0xf]
  %v96 = vld [vmem:[%s1 + $0xe4] sm:$0xff]
  %v97 = vld [vmem:[%s1 + $0xec] sm:$0xf]
  %v98 = vld [vmem:[%s1 + $0xf0] sm:$0xff]
  %v99 = vld [vmem:[%s1 + $0xf8] sm:$0xf]
  %v100 = vld [vmem:[%s1 + $0xfc] sm:$0xff]
  %v101 = vld [vmem:[%s1 + $0x104] sm:$0xf]
  %v102 = vld [vmem:[%s1 + $0x108] sm:$0xff]
  %v103 = vld [vmem:[%s1 + $0x110] sm:$0xf]
  %v104 = vld [vmem:[%s1 + $0x114] sm:$0xff]
  %v105 = vld [vmem:[%s1 + $0x11c] sm:$0xf]
  %v106 = vld [vmem:[%s1 + $0x120] sm:$0xff]
  %v107 = vld [vmem:[%s1 + $0x128] sm:$0xf]
  %v108 = vld [vmem:[%s1 + $0x12c] sm:$0xff]
  %v109 = vld [vmem:[%s1 + $0x134] sm:$0xf]
  %v110 = vld [vmem:[%s1 + $0x138] sm:$0xff]
  %v111 = vld [vmem:[%s1 + $0x140] sm:$0xf]
  %v112 = vld [vmem:[%s1 + $0x144] sm:$0xff]
  %v113 = vld [vmem:[%s1 + $0x14c] sm:$0xf]
  %v114 = vld [vmem:[%s1 + $0x150] sm:$0xff]
  %v115 = vld [vmem:[%s1 + $0x158] sm:$0xf]
  %v116 = vld [vmem:[%s1 + $0x15c] sm:$0xff]
  %v117 = vld [vmem:[%s1 + $0x164] sm:$0xf]
  %v118 = vld [vmem:[%s1 + $0x168] sm:$0xff]
  %v119 = vld [vmem:[%s1 + $0x170] sm:$0xf]
  %v120 = vld [vmem:[%s1 + $0x174] sm:$0xff]
  %v121 = vld [vmem:[%s1 + $0x17c] sm:$0xf]
  %v122 = vld [vmem:[%s1 + $0x180] sm:$0xff]
  %v123 = vld [vmem:[%s1 + $0x188] sm:$0xf]
  %v124 = vld [vmem:[%s1 + $0x18c] sm:$0xff]
  %v125 = vld [vmem:[%s1 + $0x194] sm:$0xf]
  %v126 = vld [vmem:[%s1 + $0x198] sm:$0xff]
  %v127 = vld [vmem:[%s1 + $0x1a0] sm:$0xf]
  %v128 = vld [vmem:[%s1 + $0x1a4] sm:$0xff]
  %v129 = vld [vmem:[%s1 + $0x1ac] sm:$0xf]
  %v130 = vld [vmem:[%s1 + $0x1b0] sm:$0xff]
  %v131 = vld [vmem:[%s1 + $0x1b8] sm:$0xf]
  %v132 = vld [vmem:[%s1 + $0x1bc] sm:$0xff]
  %v133 = vld [vmem:[%s1 + $0x1c4] sm:$0xf]
  %v134 = vld [vmem:[%s1 + $0x1c8] sm:$0xff]
  %v135 = vld [vmem:[%s1 + $0x1d0] sm:$0xf]
  %v136 = vld [vmem:[%s1 + $0x1d4] sm:$0xff]
  %v137 = vld [vmem:[%s1 + $0x1dc] sm:$0xf]
  %v138 = vld [vmem:[%s1 + $0x1e0] sm:$0xff]
  %v139 = vld [vmem:[%s1 + $0x1e8] sm:$0xf]
  %v140 = vld [vmem:[%s1 + $0x1ec] sm:$0xff]
  %v141 = vld [vmem:[%s1 + $0x1f4] sm:$0xf]
  %v142 = vld [vmem:[%s1 + $0x1f8] sm:$0xff]
  %v143 = vld [vmem:[%s1 + $0x200] sm:$0xf]
  %v144 = vld [vmem:[%s1 + $0x204] sm:$0xff]
  %v145 = vld [vmem:[%s1 + $0x20c] sm:$0xf]
  %v146 = vld [vmem:[%s1 + $0x210] sm:$0xff]
  %v147 = vld [vmem:[%s1 + $0x218] sm:$0xf]
  %v148 = vld [vmem:[%s1 + $0x21c] sm:$0xff]
  %v149 = vld [vmem:[%s1 + $0x224] sm:$0xf]
  %v150 = vld [vmem:[%s1 + $0x228] sm:$0xff]
  %v151 = vld [vmem:[%s1 + $0x230] sm:$0xf]
  %v152 = vld [vmem:[%s1 + $0x234] sm:$0xff]
  %v153 = vld [vmem:[%s1 + $0x23c] sm:$0xf]
  %v154 = vld [vmem:[%s1 + $0x240] sm:$0xff]
  %v155 = vld [vmem:[%s1 + $0x248] sm:$0xf]
  %v156 = vld [vmem:[%s1 + $0x24c] sm:$0xff]
  %v157 = vld [vmem:[%s1 + $0x254] sm:$0xf]
  %v158 = vld [vmem:[%s1 + $0x258] sm:$0xff]
  %v159 = vld [vmem:[%s1 + $0x260] sm:$0xf]
  %v160 = vld [vmem:[%s1 + $0x264] sm:$0xff]
  %v161 = vld [vmem:[%s1 + $0x26c] sm:$0xf]
  %v162 = vld [vmem:[%s1 + $0x270] sm:$0xff]
  %v163 = vld [vmem:[%s1 + $0x278] sm:$0xf]
  %v164 = vld [vmem:[%s1 + $0x27c] sm:$0xff]
  %v165 = vld [vmem:[%s1 + $0x284] sm:$0xf]
  %v166 = vld [vmem:[%s1 + $0x288] sm:$0xff]
  %v167 = vld [vmem:[%s1 + $0x290] sm:$0xf]
  %v168 = vld [vmem:[%s1 + $0x294] sm:$0xff]
  %v169 = vld [vmem:[%s1 + $0x29c] sm:$0xf]
  %v170 = vld [vmem:[%s1 + $0x2a0] sm:$0xff]
  %v171 = vld [vmem:[%s1 + $0x2a8] sm:$0xf]
  %v172 = vld [vmem:[%s1 + $0x2ac] sm:$0xff]
  %v173 = vld [vmem:[%s1 + $0x2b4] sm:$0xf]
  %v174 = vld [vmem:[%s1 + $0x2b8] sm:$0xff]
  %v175 = vld [vmem:[%s1 + $0x2c0] sm:$0xf]
  %v176 = vld [vmem:[%s1 + $0x2c4] sm:$0xff]
  %v177 = vld [vmem:[%s1 + $0x2cc] sm:$0xf]
  %v178 = vld [vmem:[%s1 + $0x2d0] sm:$0xff]
  %v179 = vld [vmem:[%s1 + $0x2d8] sm:$0xf]
  %v180 = vld [vmem:[%s1 + $0x2dc] sm:$0xff]
  %v181 = vld [vmem:[%s1 + $0x2e4] sm:$0xf]
  %v182 = vld [vmem:[%s1 + $0x2e8] sm:$0xff]
  %v183 = vld [vmem:[%s1 + $0x2f0] sm:$0xf]
  %v184 = vld [vmem:[%s1 + $0x2f4] sm:$0xff]
  %v185 = vld [vmem:[%s1 + $0x2fc] sm:$0xf]
  %v186 = vld [vmem:[%s2] sm:$0x7]
  %v188 = vperm.slane %v186, 0
  %v189 = vperm.slane %v186, 1
  %v190 = vperm.slane %v186, 2
  %v226 = vunpack.c.l.b16 %v26
  %v227 = vunpack.c.h.b16 %v26
  %v228 = vunpack.c.l.b16 %v27
  %v229 = vunpack.c.h.b16 %v27
  %v230 = vunpack.c.l.b16 %v28
  %v231 = vunpack.c.h.b16 %v28
  %v232 = vunpack.c.l.b16 %v29
  %v233 = vunpack.c.h.b16 %v29
  %v234 = vunpack.c.l.b16 %v30
  %v235 = vunpack.c.h.b16 %v30
  %v236 = vunpack.c.l.b16 %v31
  %v237 = vunpack.c.h.b16 %v31
  %v238 = vunpack.c.l.b16 %v32
  %v239 = vunpack.c.h.b16 %v32
  %v240 = vunpack.c.l.b16 %v33
  %v241 = vunpack.c.h.b16 %v33
  %v242 = vunpack.c.l.b16 %v34
  %v243 = vunpack.c.h.b16 %v34
  %v244 = vunpack.c.l.b16 %v35
  %v245 = vunpack.c.h.b16 %v35
  %v246 = vunpack.c.l.b16 %v36
  %v247 = vunpack.c.h.b16 %v36
  %v248 = vunpack.c.l.b16 %v37
  %v249 = vunpack.c.h.b16 %v37
  %v250 = vunpack.c.l.b16 %v38
  %v251 = vunpack.c.h.b16 %v38
  %v252 = vunpack.c.l.b16 %v39
  %v253 = vunpack.c.h.b16 %v39
  %v254 = vunpack.c.l.b16 %v40
  %v255 = vunpack.c.h.b16 %v40
  %v256 = vunpack.c.l.b16 %v41
  %v257 = vunpack.c.h.b16 %v41
  %v258 = vunpack.c.l.b16 %v42
  %v259 = vunpack.c.h.b16 %v42
  %v260 = vunpack.c.l.b16 %v43
  %v261 = vunpack.c.h.b16 %v43
  %v262 = vunpack.c.l.b16 %v44
  %v263 = vunpack.c.h.b16 %v44
  %v264 = vunpack.c.l.b16 %v45
  %v265 = vunpack.c.h.b16 %v45
  %v266 = vunpack.c.l.b16 %v46
  %v267 = vunpack.c.h.b16 %v46
  %v268 = vunpack.c.l.b16 %v47
  %v269 = vunpack.c.h.b16 %v47
  %v270 = vunpack.c.l.b16 %v48
  %v271 = vunpack.c.h.b16 %v48
  %v272 = vunpack.c.l.b16 %v49
  %v273 = vunpack.c.h.b16 %v49
  %v274 = vunpack.c.l.b16 %v50
  %v275 = vunpack.c.h.b16 %v50
  %v276 = vunpack.c.l.b16 %v51
  %v277 = vunpack.c.h.b16 %v51
  %v278 = vunpack.c.l.b16 %v52
  %v279 = vunpack.c.h.b16 %v52
  %v280 = vunpack.c.l.b16 %v53
  %v281 = vunpack.c.h.b16 %v53
  %v282 = vunpack.c.l.b16 %v54
  %v283 = vunpack.c.h.b16 %v54
  %v284 = vunpack.c.l.b16 %v55
  %v285 = vunpack.c.h.b16 %v55
  %v286 = vunpack.c.l.b16 %v56
  %v287 = vunpack.c.h.b16 %v56
  %v288 = vunpack.c.l.b16 %v57
  %v289 = vunpack.c.h.b16 %v57
  %v290 = vpack.c.b16 %v230, %v226
  %v291 = vpack.c.b16 %v231, %v227
  %v292 = vpack.c.b16 %v232, %v228
  %v293 = vpack.c.b16 %v233, %v229
  %v294 = vpack.c.b16 %v238, %v234
  %v295 = vpack.c.b16 %v239, %v235
  %v296 = vpack.c.b16 %v240, %v236
  %v297 = vpack.c.b16 %v241, %v237
  %v298 = vpack.c.b16 %v246, %v242
  %v299 = vpack.c.b16 %v247, %v243
  %v300 = vpack.c.b16 %v248, %v244
  %v301 = vpack.c.b16 %v249, %v245
  %v302 = vpack.c.b16 %v254, %v250
  %v303 = vpack.c.b16 %v255, %v251
  %v304 = vpack.c.b16 %v256, %v252
  %v305 = vpack.c.b16 %v257, %v253
  %v306 = vpack.c.b16 %v262, %v258
  %v307 = vpack.c.b16 %v263, %v259
  %v308 = vpack.c.b16 %v264, %v260
  %v309 = vpack.c.b16 %v265, %v261
  %v310 = vpack.c.b16 %v270, %v266
  %v311 = vpack.c.b16 %v271, %v267
  %v312 = vpack.c.b16 %v272, %v268
  %v313 = vpack.c.b16 %v273, %v269
  %v314 = vpack.c.b16 %v278, %v274
  %v315 = vpack.c.b16 %v279, %v275
  %v316 = vpack.c.b16 %v280, %v276
  %v317 = vpack.c.b16 %v281, %v277
  %v318 = vpack.c.b16 %v286, %v282
  %v319 = vpack.c.b16 %v287, %v283
  %v320 = vpack.c.b16 %v288, %v284
  %v321 = vpack.c.b16 %v289, %v285
  %v482 = vunpack.c.l.b16 %v58
  %v483 = vunpack.c.h.b16 %v58
  %v484 = vunpack.c.l.b16 %v59
  %v485 = vunpack.c.l.b16 %v60
  %v486 = vunpack.c.h.b16 %v60
  %v487 = vunpack.c.l.b16 %v61
  %v488 = vunpack.c.l.b16 %v62
  %v489 = vunpack.c.h.b16 %v62
  %v490 = vunpack.c.l.b16 %v63
  %v491 = vunpack.c.l.b16 %v64
  %v492 = vunpack.c.h.b16 %v64
  %v493 = vunpack.c.l.b16 %v65
  %v494 = vunpack.c.l.b16 %v66
  %v495 = vunpack.c.h.b16 %v66
  %v496 = vunpack.c.l.b16 %v67
  %v497 = vunpack.c.l.b16 %v68
  %v498 = vunpack.c.h.b16 %v68
  %v499 = vunpack.c.l.b16 %v69
  %v500 = vunpack.c.l.b16 %v70
  %v501 = vunpack.c.h.b16 %v70
  %v502 = vunpack.c.l.b16 %v71
  %v503 = vunpack.c.l.b16 %v72
  %v504 = vunpack.c.h.b16 %v72
  %v505 = vunpack.c.l.b16 %v73
  %v506 = vunpack.c.l.b16 %v74
  %v507 = vunpack.c.h.b16 %v74
  %v508 = vunpack.c.l.b16 %v75
  %v509 = vunpack.c.l.b16 %v76
  %v510 = vunpack.c.h.b16 %v76
  %v511 = vunpack.c.l.b16 %v77
  %v512 = vunpack.c.l.b16 %v78
  %v513 = vunpack.c.h.b16 %v78
  %v514 = vunpack.c.l.b16 %v79
  %v515 = vunpack.c.l.b16 %v80
  %v516 = vunpack.c.h.b16 %v80
  %v517 = vunpack.c.l.b16 %v81
  %v518 = vunpack.c.l.b16 %v82
  %v519 = vunpack.c.h.b16 %v82
  %v520 = vunpack.c.l.b16 %v83
  %v521 = vunpack.c.l.b16 %v84
  %v522 = vunpack.c.h.b16 %v84
  %v523 = vunpack.c.l.b16 %v85
  %v524 = vunpack.c.l.b16 %v86
  %v525 = vunpack.c.h.b16 %v86
  %v526 = vunpack.c.l.b16 %v87
  %v527 = vunpack.c.l.b16 %v88
  %v528 = vunpack.c.h.b16 %v88
  %v529 = vunpack.c.l.b16 %v89
  %v530 = vunpack.c.l.b16 %v90
  %v531 = vunpack.c.h.b16 %v90
  %v532 = vunpack.c.l.b16 %v91
  %v533 = vunpack.c.l.b16 %v92
  %v534 = vunpack.c.h.b16 %v92
  %v535 = vunpack.c.l.b16 %v93
  %v536 = vunpack.c.l.b16 %v94
  %v537 = vunpack.c.h.b16 %v94
  %v538 = vunpack.c.l.b16 %v95
  %v539 = vunpack.c.l.b16 %v96
  %v540 = vunpack.c.h.b16 %v96
  %v541 = vunpack.c.l.b16 %v97
  %v542 = vunpack.c.l.b16 %v98
  %v543 = vunpack.c.h.b16 %v98
  %v544 = vunpack.c.l.b16 %v99
  %v545 = vunpack.c.l.b16 %v100
  %v546 = vunpack.c.h.b16 %v100
  %v547 = vunpack.c.l.b16 %v101
  %v548 = vunpack.c.l.b16 %v102
  %v549 = vunpack.c.h.b16 %v102
  %v550 = vunpack.c.l.b16 %v103
  %v551 = vunpack.c.l.b16 %v104
  %v552 = vunpack.c.h.b16 %v104
  %v553 = vunpack.c.l.b16 %v105
  %v554 = vunpack.c.l.b16 %v106
  %v555 = vunpack.c.h.b16 %v106
  %v556 = vunpack.c.l.b16 %v107
  %v557 = vunpack.c.l.b16 %v108
  %v558 = vunpack.c.h.b16 %v108
  %v559 = vunpack.c.l.b16 %v109
  %v560 = vunpack.c.l.b16 %v110
  %v561 = vunpack.c.h.b16 %v110
  %v562 = vunpack.c.l.b16 %v111
  %v563 = vunpack.c.l.b16 %v112
  %v564 = vunpack.c.h.b16 %v112
  %v565 = vunpack.c.l.b16 %v113
  %v566 = vunpack.c.l.b16 %v114
  %v567 = vunpack.c.h.b16 %v114
  %v568 = vunpack.c.l.b16 %v115
  %v569 = vunpack.c.l.b16 %v116
  %v570 = vunpack.c.h.b16 %v116
  %v571 = vunpack.c.l.b16 %v117
  %v572 = vunpack.c.l.b16 %v118
  %v573 = vunpack.c.h.b16 %v118
  %v574 = vunpack.c.l.b16 %v119
  %v575 = vunpack.c.l.b16 %v120
  %v576 = vunpack.c.h.b16 %v120
  %v577 = vunpack.c.l.b16 %v121
  %v578 = vunpack.c.l.b16 %v122
  %v579 = vunpack.c.h.b16 %v122
  %v580 = vunpack.c.l.b16 %v123
  %v581 = vunpack.c.l.b16 %v124
  %v582 = vunpack.c.h.b16 %v124
  %v583 = vunpack.c.l.b16 %v125
  %v584 = vunpack.c.l.b16 %v126
  %v585 = vunpack.c.h.b16 %v126
  %v586 = vunpack.c.l.b16 %v127
  %v587 = vunpack.c.l.b16 %v128
  %v588 = vunpack.c.h.b16 %v128
  %v589 = vunpack.c.l.b16 %v129
  %v590 = vunpack.c.l.b16 %v130
  %v591 = vunpack.c.h.b16 %v130
  %v592 = vunpack.c.l.b16 %v131
  %v593 = vunpack.c.l.b16 %v132
  %v594 = vunpack.c.h.b16 %v132
  %v595 = vunpack.c.l.b16 %v133
  %v596 = vunpack.c.l.b16 %v134
  %v597 = vunpack.c.h.b16 %v134
  %v598 = vunpack.c.l.b16 %v135
  %v599 = vunpack.c.l.b16 %v136
  %v600 = vunpack.c.h.b16 %v136
  %v601 = vunpack.c.l.b16 %v137
  %v602 = vunpack.c.l.b16 %v138
  %v603 = vunpack.c.h.b16 %v138
  %v604 = vunpack.c.l.b16 %v139
  %v605 = vunpack.c.l.b16 %v140
  %v606 = vunpack.c.h.b16 %v140
  %v607 = vunpack.c.l.b16 %v141
  %v608 = vunpack.c.l.b16 %v142
  %v609 = vunpack.c.h.b16 %v142
  %v610 = vunpack.c.l.b16 %v143
  %v611 = vunpack.c.l.b16 %v144
  %v612 = vunpack.c.h.b16 %v144
  %v613 = vunpack.c.l.b16 %v145
  %v614 = vunpack.c.l.b16 %v146
  %v615 = vunpack.c.h.b16 %v146
  %v616 = vunpack.c.l.b16 %v147
  %v617 = vunpack.c.l.b16 %v148
  %v618 = vunpack.c.h.b16 %v148
  %v619 = vunpack.c.l.b16 %v149
  %v620 = vunpack.c.l.b16 %v150
  %v621 = vunpack.c.h.b16 %v150
  %v622 = vunpack.c.l.b16 %v151
  %v623 = vunpack.c.l.b16 %v152
  %v624 = vunpack.c.h.b16 %v152
  %v625 = vunpack.c.l.b16 %v153
  %v626 = vunpack.c.l.b16 %v154
  %v627 = vunpack.c.h.b16 %v154
  %v628 = vunpack.c.l.b16 %v155
  %v629 = vunpack.c.l.b16 %v156
  %v630 = vunpack.c.h.b16 %v156
  %v631 = vunpack.c.l.b16 %v157
  %v632 = vunpack.c.l.b16 %v158
  %v633 = vunpack.c.h.b16 %v158
  %v634 = vunpack.c.l.b16 %v159
  %v635 = vunpack.c.l.b16 %v160
  %v636 = vunpack.c.h.b16 %v160
  %v637 = vunpack.c.l.b16 %v161
  %v638 = vunpack.c.l.b16 %v162
  %v639 = vunpack.c.h.b16 %v162
  %v640 = vunpack.c.l.b16 %v163
  %v641 = vunpack.c.l.b16 %v164
  %v642 = vunpack.c.h.b16 %v164
  %v643 = vunpack.c.l.b16 %v165
  %v644 = vunpack.c.l.b16 %v166
  %v645 = vunpack.c.h.b16 %v166
  %v646 = vunpack.c.l.b16 %v167
  %v647 = vunpack.c.l.b16 %v168
  %v648 = vunpack.c.h.b16 %v168
  %v649 = vunpack.c.l.b16 %v169
  %v650 = vunpack.c.l.b16 %v170
  %v651 = vunpack.c.h.b16 %v170
  %v652 = vunpack.c.l.b16 %v171
  %v653 = vunpack.c.l.b16 %v172
  %v654 = vunpack.c.h.b16 %v172
  %v655 = vunpack.c.l.b16 %v173
  %v656 = vunpack.c.l.b16 %v174
  %v657 = vunpack.c.h.b16 %v174
  %v658 = vunpack.c.l.b16 %v175
  %v659 = vunpack.c.l.b16 %v176
  %v660 = vunpack.c.h.b16 %v176
  %v661 = vunpack.c.l.b16 %v177
  %v662 = vunpack.c.l.b16 %v178
  %v663 = vunpack.c.h.b16 %v178
  %v664 = vunpack.c.l.b16 %v179
  %v665 = vunpack.c.l.b16 %v180
  %v666 = vunpack.c.h.b16 %v180
  %v667 = vunpack.c.l.b16 %v181
  %v668 = vunpack.c.l.b16 %v182
  %v669 = vunpack.c.h.b16 %v182
  %v670 = vunpack.c.l.b16 %v183
  %v671 = vunpack.c.l.b16 %v184
  %v672 = vunpack.c.h.b16 %v184
  %v673 = vunpack.c.l.b16 %v185
  %v674 = vpack.c.b16 %v485, %v482
  %v675 = vpack.c.b16 %v486, %v483
  %v676 = vpack.c.b16 %v487, %v484
  %v677 = vpack.c.b16 %v491, %v488
  %v678 = vpack.c.b16 %v492, %v489
  %v679 = vpack.c.b16 %v493, %v490
  %v680 = vpack.c.b16 %v497, %v494
  %v681 = vpack.c.b16 %v498, %v495
  %v682 = vpack.c.b16 %v499, %v496
  %v683 = vpack.c.b16 %v503, %v500
  %v684 = vpack.c.b16 %v504, %v501
  %v685 = vpack.c.b16 %v505, %v502
  %v686 = vpack.c.b16 %v509, %v506
  %v687 = vpack.c.b16 %v510, %v507
  %v688 = vpack.c.b16 %v511, %v508
  %v689 = vpack.c.b16 %v515, %v512
  %v690 = vpack.c.b16 %v516, %v513
  %v691 = vpack.c.b16 %v517, %v514
  %v692 = vpack.c.b16 %v521, %v518
  %v693 = vpack.c.b16 %v522, %v519
  %v694 = vpack.c.b16 %v523, %v520
  %v695 = vpack.c.b16 %v527, %v524
  %v696 = vpack.c.b16 %v528, %v525
  %v697 = vpack.c.b16 %v529, %v526
  %v698 = vpack.c.b16 %v533, %v530
  %v699 = vpack.c.b16 %v534, %v531
  %v700 = vpack.c.b16 %v535, %v532
  %v701 = vpack.c.b16 %v539, %v536
  %v702 = vpack.c.b16 %v540, %v537
  %v703 = vpack.c.b16 %v541, %v538
  %v704 = vpack.c.b16 %v545, %v542
  %v705 = vpack.c.b16 %v546, %v543
  %v706 = vpack.c.b16 %v547, %v544
  %v707 = vpack.c.b16 %v551, %v548
  %v708 = vpack.c.b16 %v552, %v549
  %v709 = vpack.c.b16 %v553, %v550
  %v710 = vpack.c.b16 %v557, %v554
  %v711 = vpack.c.b16 %v558, %v555
  %v712 = vpack.c.b16 %v559, %v556
  %v713 = vpack.c.b16 %v563, %v560
  %v714 = vpack.c.b16 %v564, %v561
  %v715 = vpack.c.b16 %v565, %v562
  %v716 = vpack.c.b16 %v569, %v566
  %v717 = vpack.c.b16 %v570, %v567
  %v718 = vpack.c.b16 %v571, %v568
  %v719 = vpack.c.b16 %v575, %v572
  %v720 = vpack.c.b16 %v576, %v573
  %v721 = vpack.c.b16 %v577, %v574
  %v722 = vpack.c.b16 %v581, %v578
  %v723 = vpack.c.b16 %v582, %v579
  %v724 = vpack.c.b16 %v583, %v580
  %v725 = vpack.c.b16 %v587, %v584
  %v726 = vpack.c.b16 %v588, %v585
  %v727 = vpack.c.b16 %v589, %v586
  %v728 = vpack.c.b16 %v593, %v590
  %v729 = vpack.c.b16 %v594, %v591
  %v730 = vpack.c.b16 %v595, %v592
  %v731 = vpack.c.b16 %v599, %v596
  %v732 = vpack.c.b16 %v600, %v597
  %v733 = vpack.c.b16 %v601, %v598
  %v734 = vpack.c.b16 %v605, %v602
  %v735 = vpack.c.b16 %v606, %v603
  %v736 = vpack.c.b16 %v607, %v604
  %v737 = vpack.c.b16 %v611, %v608
  %v738 = vpack.c.b16 %v612, %v609
  %v739 = vpack.c.b16 %v613, %v610
  %v740 = vpack.c.b16 %v617, %v614
  %v741 = vpack.c.b16 %v618, %v615
  %v742 = vpack.c.b16 %v619, %v616
  %v743 = vpack.c.b16 %v623, %v620
  %v744 = vpack.c.b16 %v624, %v621
  %v745 = vpack.c.b16 %v625, %v622
  %v746 = vpack.c.b16 %v629, %v626
  %v747 = vpack.c.b16 %v630, %v627
  %v748 = vpack.c.b16 %v631, %v628
  %v749 = vpack.c.b16 %v635, %v632
  %v750 = vpack.c.b16 %v636, %v633
  %v751 = vpack.c.b16 %v637, %v634
  %v752 = vpack.c.b16 %v641, %v638
  %v753 = vpack.c.b16 %v642, %v639
  %v754 = vpack.c.b16 %v643, %v640
  %v755 = vpack.c.b16 %v647, %v644
  %v756 = vpack.c.b16 %v648, %v645
  %v757 = vpack.c.b16 %v649, %v646
  %v758 = vpack.c.b16 %v653, %v650
  %v759 = vpack.c.b16 %v654, %v651
  %v760 = vpack.c.b16 %v655, %v652
  %v761 = vpack.c.b16 %v659, %v656
  %v762 = vpack.c.b16 %v660, %v657
  %v763 = vpack.c.b16 %v661, %v658
  %v764 = vpack.c.b16 %v665, %v662
  %v765 = vpack.c.b16 %v666, %v663
  %v766 = vpack.c.b16 %v667, %v664
  %v767 = vpack.c.b16 %v671, %v668
  %v768 = vpack.c.b16 %v672, %v669
  %v769 = vpack.c.b16 %v673, %v670
  %866 = vmatpush.bf16.msra.mxu0 %v695
  %867 = vmatpush.bf16.msra.mxu0 %v692
  %868 = vmatpush.bf16.msra.mxu0 %v689
  %869 = vmatpush.bf16.msra.mxu0 %v686
  %870 = vmatpush.bf16.msra.mxu0 %v683
  %871 = vmatpush.bf16.msra.mxu0 %v680
  %872 = vmatpush.bf16.msra.mxu0 %v677
  %873 = vmatpush.bf16.msra.mxu0 %v674
  %874 = vmatmul.bf16.gmra.mxu0 %v290
  %v875 = vpop.f32.mrf.mxu0
  %v876 = vadd.f32 %v188, %v875
  %v877 = vpop.f32.mrf.mxu0
  %v878 = vadd.f32 %v188, %v877
  %879 = vmatmul.bf16.gmra.mxu0 %v294
  %v880 = vpop.f32.mrf.mxu0
  %v881 = vadd.f32 %v188, %v880
  %v882 = vpop.f32.mrf.mxu0
  %v883 = vadd.f32 %v188, %v882
  %884 = vmatmul.bf16.gmra.mxu0 %v298
  %v885 = vpop.f32.mrf.mxu0
  %v886 = vadd.f32 %v188, %v885
  %v887 = vpop.f32.mrf.mxu0
  %v888 = vadd.f32 %v188, %v887
  %889 = vmatmul.bf16.gmra.mxu0 %v302
  %v890 = vpop.f32.mrf.mxu0
  %v891 = vadd.f32 %v188, %v890
  %v892 = vpop.f32.mrf.mxu0
  %v893 = vadd.f32 %v188, %v892
  %894 = vmatmul.bf16.gmra.mxu0 %v306
  %v895 = vpop.f32.mrf.mxu0
  %v896 = vadd.f32 %v188, %v895
  %v897 = vpop.f32.mrf.mxu0
  %v898 = vadd.f32 %v188, %v897
  %899 = vmatmul.bf16.gmra.mxu0 %v310
  %v900 = vpop.f32.mrf.mxu0
  %v901 = vadd.f32 %v188, %v900
  %v902 = vpop.f32.mrf.mxu0
  %v903 = vadd.f32 %v188, %v902
  %904 = vmatmul.bf16.gmra.mxu0 %v314
  %v905 = vpop.f32.mrf.mxu0
  %v906 = vadd.f32 %v188, %v905
  %v907 = vpop.f32.mrf.mxu0
  %v908 = vadd.f32 %v188, %v907
  %909 = vmatmul.bf16.gmra.mxu0 %v318
  %v910 = vpop.f32.mrf.mxu0
  %v911 = vadd.f32 %v188, %v910
  %v912 = vpop.f32.mrf.mxu0
  %v913 = vadd.f32 %v188, %v912
  %914 = vdwg.mxu0
  %915 = vmatpush.bf16.msra.mxu0 %v719
  %916 = vmatpush.bf16.msra.mxu0 %v716
  %917 = vmatpush.bf16.msra.mxu0 %v713
  %918 = vmatpush.bf16.msra.mxu0 %v710
  %919 = vmatpush.bf16.msra.mxu0 %v707
  %920 = vmatpush.bf16.msra.mxu0 %v704
  %921 = vmatpush.bf16.msra.mxu0 %v701
  %922 = vmatpush.bf16.msra.mxu0 %v698
  %923 = vmatmul.bf16.gmra.mxu0 %v291
  %v924 = vpop.f32.mrf.mxu0
  %v925 = vadd.f32 %v876, %v924
  %v926 = vpop.f32.mrf.mxu0
  %v927 = vadd.f32 %v878, %v926
  %928 = vmatmul.bf16.gmra.mxu0 %v295
  %v929 = vpop.f32.mrf.mxu0
  %v930 = vadd.f32 %v881, %v929
  %v931 = vpop.f32.mrf.mxu0
  %v932 = vadd.f32 %v883, %v931
  %933 = vmatmul.bf16.gmra.mxu0 %v299
  %v934 = vpop.f32.mrf.mxu0
  %v935 = vadd.f32 %v886, %v934
  %v936 = vpop.f32.mrf.mxu0
  %v937 = vadd.f32 %v888, %v936
  %938 = vmatmul.bf16.gmra.mxu0 %v303
  %v939 = vpop.f32.mrf.mxu0
  %v940 = vadd.f32 %v891, %v939
  %v941 = vpop.f32.mrf.mxu0
  %v942 = vadd.f32 %v893, %v941
  %943 = vmatmul.bf16.gmra.mxu0 %v307
  %v944 = vpop.f32.mrf.mxu0
  %v945 = vadd.f32 %v896, %v944
  %v946 = vpop.f32.mrf.mxu0
  %v947 = vadd.f32 %v898, %v946
  %948 = vmatmul.bf16.gmra.mxu0 %v311
  %v949 = vpop.f32.mrf.mxu0
  %v950 = vadd.f32 %v901, %v949
  %v951 = vpop.f32.mrf.mxu0
  %v952 = vadd.f32 %v903, %v951
  %953 = vmatmul.bf16.gmra.mxu0 %v315
  %v954 = vpop.f32.mrf.mxu0
  %v955 = vadd.f32 %v906, %v954
  %v956 = vpop.f32.mrf.mxu0
  %v957 = vadd.f32 %v908, %v956
  %958 = vmatmul.bf16.gmra.mxu0 %v319
  %v959 = vpop.f32.mrf.mxu0
  %v960 = vadd.f32 %v911, %v959
  %v961 = vpop.f32.mrf.mxu0
  %v962 = vadd.f32 %v913, %v961
  %963 = vdwg.mxu0
  %964 = vmatpush.bf16.msra.mxu0 %v743
  %965 = vmatpush.bf16.msra.mxu0 %v740
  %966 = vmatpush.bf16.msra.mxu0 %v737
  %967 = vmatpush.bf16.msra.mxu0 %v734
  %968 = vmatpush.bf16.msra.mxu0 %v731
  %969 = vmatpush.bf16.msra.mxu0 %v728
  %970 = vmatpush.bf16.msra.mxu0 %v725
  %971 = vmatpush.bf16.msra.mxu0 %v722
  %972 = vmatmul.bf16.gmra.mxu0 %v292
  %v973 = vpop.f32.mrf.mxu0
  %v974 = vadd.f32 %v925, %v973
  %v975 = vpop.f32.mrf.mxu0
  %v976 = vadd.f32 %v927, %v975
  %977 = vmatmul.bf16.gmra.mxu0 %v296
  %v978 = vpop.f32.mrf.mxu0
  %v979 = vadd.f32 %v930, %v978
  %v980 = vpop.f32.mrf.mxu0
  %v981 = vadd.f32 %v932, %v980
  %982 = vmatmul.bf16.gmra.mxu0 %v300
  %v983 = vpop.f32.mrf.mxu0
  %v984 = vadd.f32 %v935, %v983
  %v985 = vpop.f32.mrf.mxu0
  %v986 = vadd.f32 %v937, %v985
  %987 = vmatmul.bf16.gmra.mxu0 %v304
  %v988 = vpop.f32.mrf.mxu0
  %v989 = vadd.f32 %v940, %v988
  %v990 = vpop.f32.mrf.mxu0
  %v991 = vadd.f32 %v942, %v990
  %992 = vmatmul.bf16.gmra.mxu0 %v308
  %v993 = vpop.f32.mrf.mxu0
  %v994 = vadd.f32 %v945, %v993
  %v995 = vpop.f32.mrf.mxu0
  %v996 = vadd.f32 %v947, %v995
  %997 = vmatmul.bf16.gmra.mxu0 %v312
  %v998 = vpop.f32.mrf.mxu0
  %v999 = vadd.f32 %v950, %v998
  %v1000 = vpop.f32.mrf.mxu0
  %v1001 = vadd.f32 %v952, %v1000
  %1002 = vmatmul.bf16.gmra.mxu0 %v316
  %v1003 = vpop.f32.mrf.mxu0
  %v1004 = vadd.f32 %v955, %v1003
  %v1005 = vpop.f32.mrf.mxu0
  %v1006 = vadd.f32 %v957, %v1005
  %1007 = vmatmul.bf16.gmra.mxu0 %v320
  %v1008 = vpop.f32.mrf.mxu0
  %v1009 = vadd.f32 %v960, %v1008
  %v1010 = vpop.f32.mrf.mxu0
  %v1011 = vadd.f32 %v962, %v1010
  %1012 = vdwg.mxu0
  %1013 = vmatpush.bf16.msra.mxu0 %v767
  %1014 = vmatpush.bf16.msra.mxu0 %v764
  %1015 = vmatpush.bf16.msra.mxu0 %v761
  %1016 = vmatpush.bf16.msra.mxu0 %v758
  %1017 = vmatpush.bf16.msra.mxu0 %v755
  %1018 = vmatpush.bf16.msra.mxu0 %v752
  %1019 = vmatpush.bf16.msra.mxu0 %v749
  %1020 = vmatpush.bf16.msra.mxu0 %v746
  %1021 = vmatmul.bf16.gmra.mxu0 %v293
  %v1022 = vpop.f32.mrf.mxu0
  %v1023 = vadd.f32 %v974, %v1022
  %v1024 = vpop.f32.mrf.mxu0
  %v1025 = vadd.f32 %v976, %v1024
  %1026 = vmatmul.bf16.gmra.mxu0 %v297
  %v1027 = vpop.f32.mrf.mxu0
  %v1028 = vadd.f32 %v979, %v1027
  %v1029 = vpop.f32.mrf.mxu0
  %v1030 = vadd.f32 %v981, %v1029
  %1031 = vmatmul.bf16.gmra.mxu0 %v301
  %v1032 = vpop.f32.mrf.mxu0
  %v1033 = vadd.f32 %v984, %v1032
  %v1034 = vpop.f32.mrf.mxu0
  %v1035 = vadd.f32 %v986, %v1034
  %1036 = vmatmul.bf16.gmra.mxu0 %v305
  %v1037 = vpop.f32.mrf.mxu0
  %v1038 = vadd.f32 %v989, %v1037
  %v1039 = vpop.f32.mrf.mxu0
  %v1040 = vadd.f32 %v991, %v1039
  %1041 = vmatmul.bf16.gmra.mxu0 %v309
  %v1042 = vpop.f32.mrf.mxu0
  %v1043 = vadd.f32 %v994, %v1042
  %v1044 = vpop.f32.mrf.mxu0
  %v1045 = vadd.f32 %v996, %v1044
  %1046 = vmatmul.bf16.gmra.mxu0 %v313
  %v1047 = vpop.f32.mrf.mxu0
  %v1048 = vadd.f32 %v999, %v1047
  %v1049 = vpop.f32.mrf.mxu0
  %v1050 = vadd.f32 %v1001, %v1049
  %1051 = vmatmul.bf16.gmra.mxu0 %v317
  %v1052 = vpop.f32.mrf.mxu0
  %v1053 = vadd.f32 %v1004, %v1052
  %v1054 = vpop.f32.mrf.mxu0
  %v1055 = vadd.f32 %v1006, %v1054
  %1056 = vmatmul.bf16.gmra.mxu0 %v321
  %v1057 = vpop.f32.mrf.mxu0
  %v1058 = vadd.f32 %v1009, %v1057
  %v1059 = vpop.f32.mrf.mxu0
  %v1060 = vadd.f32 %v1011, %v1059
  %1061 = vdwg.mxu0
  %1062 = vmatpush.bf16.msra.mxu0 %v696
  %1063 = vmatpush.bf16.msra.mxu0 %v693
  %1064 = vmatpush.bf16.msra.mxu0 %v690
  %1065 = vmatpush.bf16.msra.mxu0 %v687
  %1066 = vmatpush.bf16.msra.mxu0 %v684
  %1067 = vmatpush.bf16.msra.mxu0 %v681
  %1068 = vmatpush.bf16.msra.mxu0 %v678
  %1069 = vmatpush.bf16.msra.mxu0 %v675
  %1070 = vmatmul.bf16.gmra.mxu0 %v290
  %v1071 = vpop.f32.mrf.mxu0
  %v1072 = vadd.f32 %v189, %v1071
  %v1073 = vpop.f32.mrf.mxu0
  %v1074 = vadd.f32 %v189, %v1073
  %1075 = vmatmul.bf16.gmra.mxu0 %v294
  %v1076 = vpop.f32.mrf.mxu0
  %v1077 = vadd.f32 %v189, %v1076
  %v1078 = vpop.f32.mrf.mxu0
  %v1079 = vadd.f32 %v189, %v1078
  %1080 = vmatmul.bf16.gmra.mxu0 %v298
  %v1081 = vpop.f32.mrf.mxu0
  %v1082 = vadd.f32 %v189, %v1081
  %v1083 = vpop.f32.mrf.mxu0
  %v1084 = vadd.f32 %v189, %v1083
  %1085 = vmatmul.bf16.gmra.mxu0 %v302
  %v1086 = vpop.f32.mrf.mxu0
  %v1087 = vadd.f32 %v189, %v1086
  %v1088 = vpop.f32.mrf.mxu0
  %v1089 = vadd.f32 %v189, %v1088
  %1090 = vmatmul.bf16.gmra.mxu0 %v306
  %v1091 = vpop.f32.mrf.mxu0
  %v1092 = vadd.f32 %v189, %v1091
  %v1093 = vpop.f32.mrf.mxu0
  %v1094 = vadd.f32 %v189, %v1093
  %1095 = vmatmul.bf16.gmra.mxu0 %v310
  %v1096 = vpop.f32.mrf.mxu0
  %v1097 = vadd.f32 %v189, %v1096
  %v1098 = vpop.f32.mrf.mxu0
  %v1099 = vadd.f32 %v189, %v1098
  %1100 = vmatmul.bf16.gmra.mxu0 %v314
  %v1101 = vpop.f32.mrf.mxu0
  %v1102 = vadd.f32 %v189, %v1101
  %v1103 = vpop.f32.mrf.mxu0
  %v1104 = vadd.f32 %v189, %v1103
  %1105 = vmatmul.bf16.gmra.mxu0 %v318
  %v1106 = vpop.f32.mrf.mxu0
  %v1107 = vadd.f32 %v189, %v1106
  %v1108 = vpop.f32.mrf.mxu0
  %v1109 = vadd.f32 %v189, %v1108
  %1110 = vdwg.mxu0
  %1111 = vmatpush.bf16.msra.mxu0 %v720
  %1112 = vmatpush.bf16.msra.mxu0 %v717
  %1113 = vmatpush.bf16.msra.mxu0 %v714
  %1114 = vmatpush.bf16.msra.mxu0 %v711
  %1115 = vmatpush.bf16.msra.mxu0 %v708
  %1116 = vmatpush.bf16.msra.mxu0 %v705
  %1117 = vmatpush.bf16.msra.mxu0 %v702
  %1118 = vmatpush.bf16.msra.mxu0 %v699
  %1119 = vmatmul.bf16.gmra.mxu0 %v291
  %v1120 = vpop.f32.mrf.mxu0
  %v1121 = vadd.f32 %v1072, %v1120
  %v1122 = vpop.f32.mrf.mxu0
  %v1123 = vadd.f32 %v1074, %v1122
  %1124 = vmatmul.bf16.gmra.mxu0 %v295
  %v1125 = vpop.f32.mrf.mxu0
  %v1126 = vadd.f32 %v1077, %v1125
  %v1127 = vpop.f32.mrf.mxu0
  %v1128 = vadd.f32 %v1079, %v1127
  %1129 = vmatmul.bf16.gmra.mxu0 %v299
  %v1130 = vpop.f32.mrf.mxu0
  %v1131 = vadd.f32 %v1082, %v1130
  %v1132 = vpop.f32.mrf.mxu0
  %v1133 = vadd.f32 %v1084, %v1132
  %1134 = vmatmul.bf16.gmra.mxu0 %v303
  %v1135 = vpop.f32.mrf.mxu0
  %v1136 = vadd.f32 %v1087, %v1135
  %v1137 = vpop.f32.mrf.mxu0
  %v1138 = vadd.f32 %v1089, %v1137
  %1139 = vmatmul.bf16.gmra.mxu0 %v307
  %v1140 = vpop.f32.mrf.mxu0
  %v1141 = vadd.f32 %v1092, %v1140
  %v1142 = vpop.f32.mrf.mxu0
  %v1143 = vadd.f32 %v1094, %v1142
  %1144 = vmatmul.bf16.gmra.mxu0 %v311
  %v1145 = vpop.f32.mrf.mxu0
  %v1146 = vadd.f32 %v1097, %v1145
  %v1147 = vpop.f32.mrf.mxu0
  %v1148 = vadd.f32 %v1099, %v1147
  %1149 = vmatmul.bf16.gmra.mxu0 %v315
  %v1150 = vpop.f32.mrf.mxu0
  %v1151 = vadd.f32 %v1102, %v1150
  %v1152 = vpop.f32.mrf.mxu0
  %v1153 = vadd.f32 %v1104, %v1152
  %1154 = vmatmul.bf16.gmra.mxu0 %v319
  %v1155 = vpop.f32.mrf.mxu0
  %v1156 = vadd.f32 %v1107, %v1155
  %v1157 = vpop.f32.mrf.mxu0
  %v1158 = vadd.f32 %v1109, %v1157
  %1159 = vdwg.mxu0
  %1160 = vmatpush.bf16.msra.mxu0 %v744
  %1161 = vmatpush.bf16.msra.mxu0 %v741
  %1162 = vmatpush.bf16.msra.mxu0 %v738
  %1163 = vmatpush.bf16.msra.mxu0 %v735
  %1164 = vmatpush.bf16.msra.mxu0 %v732
  %1165 = vmatpush.bf16.msra.mxu0 %v729
  %1166 = vmatpush.bf16.msra.mxu0 %v726
  %1167 = vmatpush.bf16.msra.mxu0 %v723
  %1168 = vmatmul.bf16.gmra.mxu0 %v292
  %v1169 = vpop.f32.mrf.mxu0
  %v1170 = vadd.f32 %v1121, %v1169
  %v1171 = vpop.f32.mrf.mxu0
  %v1172 = vadd.f32 %v1123, %v1171
  %1173 = vmatmul.bf16.gmra.mxu0 %v296
  %v1174 = vpop.f32.mrf.mxu0
  %v1175 = vadd.f32 %v1126, %v1174
  %v1176 = vpop.f32.mrf.mxu0
  %v1177 = vadd.f32 %v1128, %v1176
  %1178 = vmatmul.bf16.gmra.mxu0 %v300
  %v1179 = vpop.f32.mrf.mxu0
  %v1180 = vadd.f32 %v1131, %v1179
  %v1181 = vpop.f32.mrf.mxu0
  %v1182 = vadd.f32 %v1133, %v1181
  %1183 = vmatmul.bf16.gmra.mxu0 %v304
  %v1184 = vpop.f32.mrf.mxu0
  %v1185 = vadd.f32 %v1136, %v1184
  %v1186 = vpop.f32.mrf.mxu0
  %v1187 = vadd.f32 %v1138, %v1186
  %1188 = vmatmul.bf16.gmra.mxu0 %v308
  %v1189 = vpop.f32.mrf.mxu0
  %v1190 = vadd.f32 %v1141, %v1189
  %v1191 = vpop.f32.mrf.mxu0
  %v1192 = vadd.f32 %v1143, %v1191
  %1193 = vmatmul.bf16.gmra.mxu0 %v312
  %v1194 = vpop.f32.mrf.mxu0
  %v1195 = vadd.f32 %v1146, %v1194
  %v1196 = vpop.f32.mrf.mxu0
  %v1197 = vadd.f32 %v1148, %v1196
  %1198 = vmatmul.bf16.gmra.mxu0 %v316
  %v1199 = vpop.f32.mrf.mxu0
  %v1200 = vadd.f32 %v1151, %v1199
  %v1201 = vpop.f32.mrf.mxu0
  %v1202 = vadd.f32 %v1153, %v1201
  %1203 = vmatmul.bf16.gmra.mxu0 %v320
  %v1204 = vpop.f32.mrf.mxu0
  %v1205 = vadd.f32 %v1156, %v1204
  %v1206 = vpop.f32.mrf.mxu0
  %v1207 = vadd.f32 %v1158, %v1206
  %1208 = vdwg.mxu0
  %1209 = vmatpush.bf16.msra.mxu0 %v768
  %1210 = vmatpush.bf16.msra.mxu0 %v765
  %1211 = vmatpush.bf16.msra.mxu0 %v762
  %1212 = vmatpush.bf16.msra.mxu0 %v759
  %1213 = vmatpush.bf16.msra.mxu0 %v756
  %1214 = vmatpush.bf16.msra.mxu0 %v753
  %1215 = vmatpush.bf16.msra.mxu0 %v750
  %1216 = vmatpush.bf16.msra.mxu0 %v747
  %1217 = vmatmul.bf16.gmra.mxu0 %v293
  %v1218 = vpop.f32.mrf.mxu0
  %v1219 = vadd.f32 %v1170, %v1218
  %v1220 = vpop.f32.mrf.mxu0
  %v1221 = vadd.f32 %v1172, %v1220
  %1222 = vmatmul.bf16.gmra.mxu0 %v297
  %v1223 = vpop.f32.mrf.mxu0
  %v1224 = vadd.f32 %v1175, %v1223
  %v1225 = vpop.f32.mrf.mxu0
  %v1226 = vadd.f32 %v1177, %v1225
  %1227 = vmatmul.bf16.gmra.mxu0 %v301
  %v1228 = vpop.f32.mrf.mxu0
  %v1229 = vadd.f32 %v1180, %v1228
  %v1230 = vpop.f32.mrf.mxu0
  %v1231 = vadd.f32 %v1182, %v1230
  %1232 = vmatmul.bf16.gmra.mxu0 %v305
  %v1233 = vpop.f32.mrf.mxu0
  %v1234 = vadd.f32 %v1185, %v1233
  %v1235 = vpop.f32.mrf.mxu0
  %v1236 = vadd.f32 %v1187, %v1235
  %1237 = vmatmul.bf16.gmra.mxu0 %v309
  %v1238 = vpop.f32.mrf.mxu0
  %v1239 = vadd.f32 %v1190, %v1238
  %v1240 = vpop.f32.mrf.mxu0
  %v1241 = vadd.f32 %v1192, %v1240
  %1242 = vmatmul.bf16.gmra.mxu0 %v313
  %v1243 = vpop.f32.mrf.mxu0
  %v1244 = vadd.f32 %v1195, %v1243
  %v1245 = vpop.f32.mrf.mxu0
  %v1246 = vadd.f32 %v1197, %v1245
  %1247 = vmatmul.bf16.gmra.mxu0 %v317
  %v1248 = vpop.f32.mrf.mxu0
  %v1249 = vadd.f32 %v1200, %v1248
  %v1250 = vpop.f32.mrf.mxu0
  %v1251 = vadd.f32 %v1202, %v1250
  %1252 = vmatmul.bf16.gmra.mxu0 %v321
  %v1253 = vpop.f32.mrf.mxu0
  %v1254 = vadd.f32 %v1205, %v1253
  %v1255 = vpop.f32.mrf.mxu0
  %v1256 = vadd.f32 %v1207, %v1255
  %1257 = vdwg.mxu0
  %1258 = vmatpush.bf16.msra.mxu0 %v697
  %1259 = vmatpush.bf16.msra.mxu0 %v694
  %1260 = vmatpush.bf16.msra.mxu0 %v691
  %1261 = vmatpush.bf16.msra.mxu0 %v688
  %1262 = vmatpush.bf16.msra.mxu0 %v685
  %1263 = vmatpush.bf16.msra.mxu0 %v682
  %1264 = vmatpush.bf16.msra.mxu0 %v679
  %1265 = vmatpush.bf16.msra.mxu0 %v676
  %1266 = vmatmul.bf16.gmra.mxu0 %v290
  %v1267 = vpop.f32.mrf.mxu0
  %v1268 = vadd.f32 %v190, %v1267
  %v1269 = vpop.f32.mrf.mxu0
  %v1270 = vadd.f32 %v190, %v1269
  %1271 = vmatmul.bf16.gmra.mxu0 %v294
  %v1272 = vpop.f32.mrf.mxu0
  %v1273 = vadd.f32 %v190, %v1272
  %v1274 = vpop.f32.mrf.mxu0
  %v1275 = vadd.f32 %v190, %v1274
  %1276 = vmatmul.bf16.gmra.mxu0 %v298
  %v1277 = vpop.f32.mrf.mxu0
  %v1278 = vadd.f32 %v190, %v1277
  %v1279 = vpop.f32.mrf.mxu0
  %v1280 = vadd.f32 %v190, %v1279
  %1281 = vmatmul.bf16.gmra.mxu0 %v302
  %v1282 = vpop.f32.mrf.mxu0
  %v1283 = vadd.f32 %v190, %v1282
  %v1284 = vpop.f32.mrf.mxu0
  %v1285 = vadd.f32 %v190, %v1284
  %1286 = vmatmul.bf16.gmra.mxu0 %v306
  %v1287 = vpop.f32.mrf.mxu0
  %v1288 = vadd.f32 %v190, %v1287
  %v1289 = vpop.f32.mrf.mxu0
  %v1290 = vadd.f32 %v190, %v1289
  %1291 = vmatmul.bf16.gmra.mxu0 %v310
  %v1292 = vpop.f32.mrf.mxu0
  %v1293 = vadd.f32 %v190, %v1292
  %v1294 = vpop.f32.mrf.mxu0
  %v1295 = vadd.f32 %v190, %v1294
  %1296 = vmatmul.bf16.gmra.mxu0 %v314
  %v1297 = vpop.f32.mrf.mxu0
  %v1298 = vadd.f32 %v190, %v1297
  %v1299 = vpop.f32.mrf.mxu0
  %v1300 = vadd.f32 %v190, %v1299
  %1301 = vmatmul.bf16.gmra.mxu0 %v318
  %v1302 = vpop.f32.mrf.mxu0
  %v1303 = vadd.f32 %v190, %v1302
  %v1304 = vpop.f32.mrf.mxu0
  %v1305 = vadd.f32 %v190, %v1304
  %1306 = vdwg.mxu0
  %1307 = vmatpush.bf16.msra.mxu0 %v721
  %1308 = vmatpush.bf16.msra.mxu0 %v718
  %1309 = vmatpush.bf16.msra.mxu0 %v715
  %1310 = vmatpush.bf16.msra.mxu0 %v712
  %1311 = vmatpush.bf16.msra.mxu0 %v709
  %1312 = vmatpush.bf16.msra.mxu0 %v706
  %1313 = vmatpush.bf16.msra.mxu0 %v703
  %1314 = vmatpush.bf16.msra.mxu0 %v700
  %1315 = vmatmul.bf16.gmra.mxu0 %v291
  %v1316 = vpop.f32.mrf.mxu0
  %v1317 = vadd.f32 %v1268, %v1316
  %v1318 = vpop.f32.mrf.mxu0
  %v1319 = vadd.f32 %v1270, %v1318
  %1320 = vmatmul.bf16.gmra.mxu0 %v295
  %v1321 = vpop.f32.mrf.mxu0
  %v1322 = vadd.f32 %v1273, %v1321
  %v1323 = vpop.f32.mrf.mxu0
  %v1324 = vadd.f32 %v1275, %v1323
  %1325 = vmatmul.bf16.gmra.mxu0 %v299
  %v1326 = vpop.f32.mrf.mxu0
  %v1327 = vadd.f32 %v1278, %v1326
  %v1328 = vpop.f32.mrf.mxu0
  %v1329 = vadd.f32 %v1280, %v1328
  %1330 = vmatmul.bf16.gmra.mxu0 %v303
  %v1331 = vpop.f32.mrf.mxu0
  %v1332 = vadd.f32 %v1283, %v1331
  %v1333 = vpop.f32.mrf.mxu0
  %v1334 = vadd.f32 %v1285, %v1333
  %1335 = vmatmul.bf16.gmra.mxu0 %v307
  %v1336 = vpop.f32.mrf.mxu0
  %v1337 = vadd.f32 %v1288, %v1336
  %v1338 = vpop.f32.mrf.mxu0
  %v1339 = vadd.f32 %v1290, %v1338
  %1340 = vmatmul.bf16.gmra.mxu0 %v311
  %v1341 = vpop.f32.mrf.mxu0
  %v1342 = vadd.f32 %v1293, %v1341
  %v1343 = vpop.f32.mrf.mxu0
  %v1344 = vadd.f32 %v1295, %v1343
  %1345 = vmatmul.bf16.gmra.mxu0 %v315
  %v1346 = vpop.f32.mrf.mxu0
  %v1347 = vadd.f32 %v1298, %v1346
  %v1348 = vpop.f32.mrf.mxu0
  %v1349 = vadd.f32 %v1300, %v1348
  %1350 = vmatmul.bf16.gmra.mxu0 %v319
  %v1351 = vpop.f32.mrf.mxu0
  %v1352 = vadd.f32 %v1303, %v1351
  %v1353 = vpop.f32.mrf.mxu0
  %v1354 = vadd.f32 %v1305, %v1353
  %1355 = vdwg.mxu0
  %1356 = vmatpush.bf16.msra.mxu0 %v745
  %1357 = vmatpush.bf16.msra.mxu0 %v742
  %1358 = vmatpush.bf16.msra.mxu0 %v739
  %1359 = vmatpush.bf16.msra.mxu0 %v736
  %1360 = vmatpush.bf16.msra.mxu0 %v733
  %1361 = vmatpush.bf16.msra.mxu0 %v730
  %1362 = vmatpush.bf16.msra.mxu0 %v727
  %1363 = vmatpush.bf16.msra.mxu0 %v724
  %1364 = vmatmul.bf16.gmra.mxu0 %v292
  %v1365 = vpop.f32.mrf.mxu0
  %v1366 = vadd.f32 %v1317, %v1365
  %v1367 = vpop.f32.mrf.mxu0
  %v1368 = vadd.f32 %v1319, %v1367
  %1369 = vmatmul.bf16.gmra.mxu0 %v296
  %v1370 = vpop.f32.mrf.mxu0
  %v1371 = vadd.f32 %v1322, %v1370
  %v1372 = vpop.f32.mrf.mxu0
  %v1373 = vadd.f32 %v1324, %v1372
  %1374 = vmatmul.bf16.gmra.mxu0 %v300
  %v1375 = vpop.f32.mrf.mxu0
  %v1376 = vadd.f32 %v1327, %v1375
  %v1377 = vpop.f32.mrf.mxu0
  %v1378 = vadd.f32 %v1329, %v1377
  %1379 = vmatmul.bf16.gmra.mxu0 %v304
  %v1380 = vpop.f32.mrf.mxu0
  %v1381 = vadd.f32 %v1332, %v1380
  %v1382 = vpop.f32.mrf.mxu0
  %v1383 = vadd.f32 %v1334, %v1382
  %1384 = vmatmul.bf16.gmra.mxu0 %v308
  %v1385 = vpop.f32.mrf.mxu0
  %v1386 = vadd.f32 %v1337, %v1385
  %v1387 = vpop.f32.mrf.mxu0
  %v1388 = vadd.f32 %v1339, %v1387
  %1389 = vmatmul.bf16.gmra.mxu0 %v312
  %v1390 = vpop.f32.mrf.mxu0
  %v1391 = vadd.f32 %v1342, %v1390
  %v1392 = vpop.f32.mrf.mxu0
  %v1393 = vadd.f32 %v1344, %v1392
  %1394 = vmatmul.bf16.gmra.mxu0 %v316
  %v1395 = vpop.f32.mrf.mxu0
  %v1396 = vadd.f32 %v1347, %v1395
  %v1397 = vpop.f32.mrf.mxu0
  %v1398 = vadd.f32 %v1349, %v1397
  %1399 = vmatmul.bf16.gmra.mxu0 %v320
  %v1400 = vpop.f32.mrf.mxu0
  %v1401 = vadd.f32 %v1352, %v1400
  %v1402 = vpop.f32.mrf.mxu0
  %v1403 = vadd.f32 %v1354, %v1402
  %1404 = vdwg.mxu0
  %1405 = vmatpush.bf16.msra.mxu0 %v769
  %1406 = vmatpush.bf16.msra.mxu0 %v766
  %1407 = vmatpush.bf16.msra.mxu0 %v763
  %1408 = vmatpush.bf16.msra.mxu0 %v760
  %1409 = vmatpush.bf16.msra.mxu0 %v757
  %1410 = vmatpush.bf16.msra.mxu0 %v754
  %1411 = vmatpush.bf16.msra.mxu0 %v751
  %1412 = vmatpush.bf16.msra.mxu0 %v748
  %1413 = vmatmul.bf16.gmra.mxu0 %v293
  %v1414 = vpop.f32.mrf.mxu0
  %v1415 = vadd.f32 %v1366, %v1414
  %v1416 = vpop.f32.mrf.mxu0
  %v1417 = vadd.f32 %v1368, %v1416
  %1418 = vmatmul.bf16.gmra.mxu0 %v297
  %v1419 = vpop.f32.mrf.mxu0
  %v1420 = vadd.f32 %v1371, %v1419
  %v1421 = vpop.f32.mrf.mxu0
  %v1422 = vadd.f32 %v1373, %v1421
  %1423 = vmatmul.bf16.gmra.mxu0 %v301
  %v1424 = vpop.f32.mrf.mxu0
  %v1425 = vadd.f32 %v1376, %v1424
  %v1426 = vpop.f32.mrf.mxu0
  %v1427 = vadd.f32 %v1378, %v1426
  %1428 = vmatmul.bf16.gmra.mxu0 %v305
  %v1429 = vpop.f32.mrf.mxu0
  %v1430 = vadd.f32 %v1381, %v1429
  %v1431 = vpop.f32.mrf.mxu0
  %v1432 = vadd.f32 %v1383, %v1431
  %1433 = vmatmul.bf16.gmra.mxu0 %v309
  %v1434 = vpop.f32.mrf.mxu0
  %v1435 = vadd.f32 %v1386, %v1434
  %v1436 = vpop.f32.mrf.mxu0
  %v1437 = vadd.f32 %v1388, %v1436
  %1438 = vmatmul.bf16.gmra.mxu0 %v313
  %v1439 = vpop.f32.mrf.mxu0
  %v1440 = vadd.f32 %v1391, %v1439
  %v1441 = vpop.f32.mrf.mxu0
  %v1442 = vadd.f32 %v1393, %v1441
  %1443 = vmatmul.bf16.gmra.mxu0 %v317
  %v1444 = vpop.f32.mrf.mxu0
  %v1445 = vadd.f32 %v1396, %v1444
  %v1446 = vpop.f32.mrf.mxu0
  %v1447 = vadd.f32 %v1398, %v1446
  %1448 = vmatmul.bf16.gmra.mxu0 %v321
  %v1449 = vpop.f32.mrf.mxu0
  %v1450 = vadd.f32 %v1401, %v1449
  %v1451 = vpop.f32.mrf.mxu0
  %v1452 = vadd.f32 %v1403, %v1451
  %1453 = vdwg.mxu0
  %v1454 = vmax.f32 %v1023, 0.0
  %v1455 = vmax.f32 %v1219, 0.0
  %v1456 = vmax.f32 %v1415, 0.0
  %v1457 = vmax.f32 %v1025, 0.0
  %v1458 = vmax.f32 %v1221, 0.0
  %v1459 = vmax.f32 %v1417, 0.0
  %v1460 = vmax.f32 %v1028, 0.0
  %v1461 = vmax.f32 %v1224, 0.0
  %v1462 = vmax.f32 %v1420, 0.0
  %v1463 = vmax.f32 %v1030, 0.0
  %v1464 = vmax.f32 %v1226, 0.0
  %v1465 = vmax.f32 %v1422, 0.0
  %v1466 = vmax.f32 %v1033, 0.0
  %v1467 = vmax.f32 %v1229, 0.0
  %v1468 = vmax.f32 %v1425, 0.0
  %v1469 = vmax.f32 %v1035, 0.0
  %v1470 = vmax.f32 %v1231, 0.0
  %v1471 = vmax.f32 %v1427, 0.0
  %v1472 = vmax.f32 %v1038, 0.0
  %v1473 = vmax.f32 %v1234, 0.0
  %v1474 = vmax.f32 %v1430, 0.0
  %v1475 = vmax.f32 %v1040, 0.0
  %v1476 = vmax.f32 %v1236, 0.0
  %v1477 = vmax.f32 %v1432, 0.0
  %v1478 = vmax.f32 %v1043, 0.0
  %v1479 = vmax.f32 %v1239, 0.0
  %v1480 = vmax.f32 %v1435, 0.0
  %v1481 = vmax.f32 %v1045, 0.0
  %v1482 = vmax.f32 %v1241, 0.0
  %v1483 = vmax.f32 %v1437, 0.0
  %v1484 = vmax.f32 %v1048, 0.0
  %v1485 = vmax.f32 %v1244, 0.0
  %v1486 = vmax.f32 %v1440, 0.0
  %v1487 = vmax.f32 %v1050, 0.0
  %v1488 = vmax.f32 %v1246, 0.0
  %v1489 = vmax.f32 %v1442, 0.0
  %v1490 = vmax.f32 %v1053, 0.0
  %v1491 = vmax.f32 %v1249, 0.0
  %v1492 = vmax.f32 %v1445, 0.0
  %v1493 = vmax.f32 %v1055, 0.0
  %v1494 = vmax.f32 %v1251, 0.0
  %v1495 = vmax.f32 %v1447, 0.0
  %v1496 = vmax.f32 %v1058, 0.0
  %v1497 = vmax.f32 %v1254, 0.0
  %v1498 = vmax.f32 %v1450, 0.0
  %v1499 = vmax.f32 %v1060, 0.0
  %v1500 = vmax.f32 %v1256, 0.0
  %v1501 = vmax.f32 %v1452, 0.0
  %v1502 = vpack.c.bf16 %v1455, %v1454
  %v1503 = vpack.c.bf16 %v1456, %v1456
  %v1504 = vpack.c.bf16 %v1458, %v1457
  %v1505 = vpack.c.bf16 %v1459, %v1459
  %v1506 = vpack.c.bf16 %v1461, %v1460
  %v1507 = vpack.c.bf16 %v1462, %v1462
  %v1508 = vpack.c.bf16 %v1464, %v1463
  %v1509 = vpack.c.bf16 %v1465, %v1465
  %v1510 = vpack.c.bf16 %v1467, %v1466
  %v1511 = vpack.c.bf16 %v1468, %v1468
  %v1512 = vpack.c.bf16 %v1470, %v1469
  %v1513 = vpack.c.bf16 %v1471, %v1471
  %v1514 = vpack.c.bf16 %v1473, %v1472
  %v1515 = vpack.c.bf16 %v1474, %v1474
  %v1516 = vpack.c.bf16 %v1476, %v1475
  %v1517 = vpack.c.bf16 %v1477, %v1477
  %v1518 = vpack.c.bf16 %v1479, %v1478
  %v1519 = vpack.c.bf16 %v1480, %v1480
  %v1520 = vpack.c.bf16 %v1482, %v1481
  %v1521 = vpack.c.bf16 %v1483, %v1483
  %v1522 = vpack.c.bf16 %v1485, %v1484
  %v1523 = vpack.c.bf16 %v1486, %v1486
  %v1524 = vpack.c.bf16 %v1488, %v1487
  %v1525 = vpack.c.bf16 %v1489, %v1489
  %v1526 = vpack.c.bf16 %v1491, %v1490
  %v1527 = vpack.c.bf16 %v1492, %v1492
  %v1528 = vpack.c.bf16 %v1494, %v1493
  %v1529 = vpack.c.bf16 %v1495, %v1495
  %v1530 = vpack.c.bf16 %v1497, %v1496
  %v1531 = vpack.c.bf16 %v1498, %v1498
  %v1532 = vpack.c.bf16 %v1500, %v1499
  %v1533 = vpack.c.bf16 %v1501, %v1501
  %v1534 = vld [vmem:[%s3] sm:$0xf]
  %v1535 = vld [vmem:[%s3 + $0x4] sm:$0xf]
  %v1536 = vld [vmem:[%s3 + $0x8] sm:$0xf]
  %v1537 = vld [vmem:[%s3 + $0xc] sm:$0xf]
  %v1538 = vld [vmem:[%s3 + $0x10] sm:$0xf]
  %v1539 = vld [vmem:[%s3 + $0x14] sm:$0xf]
  %v1540 = vld [vmem:[%s3 + $0x18] sm:$0xf]
  %v1541 = vld [vmem:[%s3 + $0x1c] sm:$0xf]
  %v1542 = vld [vmem:[%s3 + $0x20] sm:$0xf]
  %v1543 = vld [vmem:[%s3 + $0x24] sm:$0xf]
  %v1544 = vld [vmem:[%s3 + $0x28] sm:$0xf]
  %v1545 = vld [vmem:[%s3 + $0x2c] sm:$0xf]
  %v1546 = vld [vmem:[%s3 + $0x30] sm:$0xf]
  %v1547 = vld [vmem:[%s3 + $0x34] sm:$0xf]
  %v1548 = vld [vmem:[%s3 + $0x38] sm:$0xf]
  %v1549 = vld [vmem:[%s3 + $0x3c] sm:$0xf]
  %v1550 = vld [vmem:[%s3 + $0x40] sm:$0xf]
  %v1551 = vld [vmem:[%s3 + $0x44] sm:$0xf]
  %v1552 = vld [vmem:[%s3 + $0x48] sm:$0xf]
  %v1553 = vld [vmem:[%s3 + $0x4c] sm:$0xf]
  %v1554 = vld [vmem:[%s3 + $0x50] sm:$0xf]
  %v1555 = vld [vmem:[%s3 + $0x54] sm:$0xf]
  %v1556 = vld [vmem:[%s3 + $0x58] sm:$0xf]
  %v1557 = vld [vmem:[%s3 + $0x5c] sm:$0xf]
  %v1558 = vld [vmem:[%s3 + $0x60] sm:$0xf]
  %v1559 = vld [vmem:[%s3 + $0x64] sm:$0xf]
  %v1560 = vld [vmem:[%s3 + $0x68] sm:$0xf]
  %v1561 = vld [vmem:[%s3 + $0x6c] sm:$0xf]
  %v1562 = vld [vmem:[%s3 + $0x70] sm:$0xf]
  %v1563 = vld [vmem:[%s3 + $0x74] sm:$0xf]
  %v1564 = vld [vmem:[%s3 + $0x78] sm:$0xf]
  %v1565 = vld [vmem:[%s3 + $0x7c] sm:$0xf]
  %v1566 = vld [vmem:[%s3 + $0x80] sm:$0xf]
  %v1567 = vld [vmem:[%s3 + $0x84] sm:$0xf]
  %v1568 = vld [vmem:[%s3 + $0x88] sm:$0xf]
  %v1569 = vld [vmem:[%s3 + $0x8c] sm:$0xf]
  %v1570 = vld [vmem:[%s3 + $0x90] sm:$0xf]
  %v1571 = vld [vmem:[%s3 + $0x94] sm:$0xf]
  %v1572 = vld [vmem:[%s3 + $0x98] sm:$0xf]
  %v1573 = vld [vmem:[%s3 + $0x9c] sm:$0xf]
  %v1574 = vld [vmem:[%s4] sm:$0x1]
  %v1576 = vperm.slane %v1574, 0
  %v1610 = vunpack.c.l.b16 %v1502
  %v1611 = vunpack.c.h.b16 %v1502
  %v1612 = vunpack.c.l.b16 %v1503
  %v1613 = vunpack.c.l.b16 %v1504
  %v1614 = vunpack.c.h.b16 %v1504
  %v1615 = vunpack.c.l.b16 %v1505
  %v1616 = vunpack.c.l.b16 %v1506
  %v1617 = vunpack.c.h.b16 %v1506
  %v1618 = vunpack.c.l.b16 %v1507
  %v1619 = vunpack.c.l.b16 %v1508
  %v1620 = vunpack.c.h.b16 %v1508
  %v1621 = vunpack.c.l.b16 %v1509
  %v1622 = vunpack.c.l.b16 %v1510
  %v1623 = vunpack.c.h.b16 %v1510
  %v1624 = vunpack.c.l.b16 %v1511
  %v1625 = vunpack.c.l.b16 %v1512
  %v1626 = vunpack.c.h.b16 %v1512
  %v1627 = vunpack.c.l.b16 %v1513
  %v1628 = vunpack.c.l.b16 %v1514
  %v1629 = vunpack.c.h.b16 %v1514
  %v1630 = vunpack.c.l.b16 %v1515
  %v1631 = vunpack.c.l.b16 %v1516
  %v1632 = vunpack.c.h.b16 %v1516
  %v1633 = vunpack.c.l.b16 %v1517
  %v1634 = vunpack.c.l.b16 %v1518
  %v1635 = vunpack.c.h.b16 %v1518
  %v1636 = vunpack.c.l.b16 %v1519
  %v1637 = vunpack.c.l.b16 %v1520
  %v1638 = vunpack.c.h.b16 %v1520
  %v1639 = vunpack.c.l.b16 %v1521
  %v1640 = vunpack.c.l.b16 %v1522
  %v1641 = vunpack.c.h.b16 %v1522
  %v1642 = vunpack.c.l.b16 %v1523
  %v1643 = vunpack.c.l.b16 %v1524
  %v1644 = vunpack.c.h.b16 %v1524
  %v1645 = vunpack.c.l.b16 %v1525
  %v1646 = vunpack.c.l.b16 %v1526
  %v1647 = vunpack.c.h.b16 %v1526
  %v1648 = vunpack.c.l.b16 %v1527
  %v1649 = vunpack.c.l.b16 %v1528
  %v1650 = vunpack.c.h.b16 %v1528
  %v1651 = vunpack.c.l.b16 %v1529
  %v1652 = vunpack.c.l.b16 %v1530
  %v1653 = vunpack.c.h.b16 %v1530
  %v1654 = vunpack.c.l.b16 %v1531
  %v1655 = vunpack.c.l.b16 %v1532
  %v1656 = vunpack.c.h.b16 %v1532
  %v1657 = vunpack.c.l.b16 %v1533
  %v1658 = vpack.c.b16 %v1613, %v1610
  %v1659 = vpack.c.b16 %v1614, %v1611
  %v1660 = vpack.c.b16 %v1615, %v1612
  %v1661 = vpack.c.b16 %v1619, %v1616
  %v1662 = vpack.c.b16 %v1620, %v1617
  %v1663 = vpack.c.b16 %v1621, %v1618
  %v1664 = vpack.c.b16 %v1625, %v1622
  %v1665 = vpack.c.b16 %v1626, %v1623
  %v1666 = vpack.c.b16 %v1627, %v1624
  %v1667 = vpack.c.b16 %v1631, %v1628
  %v1668 = vpack.c.b16 %v1632, %v1629
  %v1669 = vpack.c.b16 %v1633, %v1630
  %v1670 = vpack.c.b16 %v1637, %v1634
  %v1671 = vpack.c.b16 %v1638, %v1635
  %v1672 = vpack.c.b16 %v1639, %v1636
  %v1673 = vpack.c.b16 %v1643, %v1640
  %v1674 = vpack.c.b16 %v1644, %v1641
  %v1675 = vpack.c.b16 %v1645, %v1642
  %v1676 = vpack.c.b16 %v1649, %v1646
  %v1677 = vpack.c.b16 %v1650, %v1647
  %v1678 = vpack.c.b16 %v1651, %v1648
  %v1679 = vpack.c.b16 %v1655, %v1652
  %v1680 = vpack.c.b16 %v1656, %v1653
  %v1681 = vpack.c.b16 %v1657, %v1654
  %v1738 = vunpack.c.l.b16 %v1534
  %v1739 = vunpack.c.l.b16 %v1535
  %v1740 = vunpack.c.l.b16 %v1536
  %v1741 = vunpack.c.l.b16 %v1537
  %v1742 = vunpack.c.l.b16 %v1538
  %v1743 = vunpack.c.l.b16 %v1539
  %v1744 = vunpack.c.l.b16 %v1540
  %v1745 = vunpack.c.l.b16 %v1541
  %v1746 = vunpack.c.l.b16 %v1542
  %v1747 = vunpack.c.l.b16 %v1543
  %v1748 = vunpack.c.l.b16 %v1544
  %v1749 = vunpack.c.l.b16 %v1545
  %v1750 = vunpack.c.l.b16 %v1546
  %v1751 = vunpack.c.l.b16 %v1547
  %v1752 = vunpack.c.l.b16 %v1548
  %v1753 = vunpack.c.l.b16 %v1549
  %v1754 = vunpack.c.l.b16 %v1550
  %v1755 = vunpack.c.l.b16 %v1551
  %v1756 = vunpack.c.l.b16 %v1552
  %v1757 = vunpack.c.l.b16 %v1553
  %v1758 = vunpack.c.l.b16 %v1554
  %v1759 = vunpack.c.l.b16 %v1555
  %v1760 = vunpack.c.l.b16 %v1556
  %v1761 = vunpack.c.l.b16 %v1557
  %v1762 = vunpack.c.l.b16 %v1558
  %v1763 = vunpack.c.l.b16 %v1559
  %v1764 = vunpack.c.l.b16 %v1560
  %v1765 = vunpack.c.l.b16 %v1561
  %v1766 = vunpack.c.l.b16 %v1562
  %v1767 = vunpack.c.l.b16 %v1563
  %v1768 = vunpack.c.l.b16 %v1564
  %v1769 = vunpack.c.l.b16 %v1565
  %v1770 = vunpack.c.l.b16 %v1566
  %v1771 = vunpack.c.l.b16 %v1567
  %v1772 = vunpack.c.l.b16 %v1568
  %v1773 = vunpack.c.l.b16 %v1569
  %v1774 = vunpack.c.l.b16 %v1570
  %v1775 = vunpack.c.l.b16 %v1571
  %v1776 = vunpack.c.l.b16 %v1572
  %v1777 = vunpack.c.l.b16 %v1573
  %v1778 = vpack.c.b16 %v1739, %v1738
  %v1779 = vpack.c.b16 %v1741, %v1740
  %v1780 = vpack.c.b16 %v1743, %v1742
  %v1781 = vpack.c.b16 %v1745, %v1744
  %v1782 = vpack.c.b16 %v1747, %v1746
  %v1783 = vpack.c.b16 %v1749, %v1748
  %v1784 = vpack.c.b16 %v1751, %v1750
  %v1785 = vpack.c.b16 %v1753, %v1752
  %v1786 = vpack.c.b16 %v1755, %v1754
  %v1787 = vpack.c.b16 %v1757, %v1756
  %v1788 = vpack.c.b16 %v1759, %v1758
  %v1789 = vpack.c.b16 %v1761, %v1760
  %v1790 = vpack.c.b16 %v1763, %v1762
  %v1791 = vpack.c.b16 %v1765, %v1764
  %v1792 = vpack.c.b16 %v1767, %v1766
  %v1793 = vpack.c.b16 %v1769, %v1768
  %v1794 = vpack.c.b16 %v1771, %v1770
  %v1795 = vpack.c.b16 %v1773, %v1772
  %v1796 = vpack.c.b16 %v1775, %v1774
  %v1797 = vpack.c.b16 %v1777, %v1776
  %vm1818 = vcmask 523264
  %v1820 = vsel %vm1818, %v1660, 0
  %v1823 = vsel %vm1818, %v1663, 0
  %v1826 = vsel %vm1818, %v1666, 0
  %v1829 = vsel %vm1818, %v1669, 0
  %v1832 = vsel %vm1818, %v1672, 0
  %v1835 = vsel %vm1818, %v1675, 0
  %v1838 = vsel %vm1818, %v1678, 0
  %v1841 = vsel %vm1818, %v1681, 0
  %1843 = vmatpush.bf16.msra.mxu0 %v1785
  %1844 = vmatpush.bf16.msra.mxu0 %v1784
  %1845 = vmatpush.bf16.msra.mxu0 %v1783
  %1846 = vmatpush.bf16.msra.mxu0 %v1782
  %1847 = vmatpush.bf16.msra.mxu0 %v1781
  %1848 = vmatpush.bf16.msra.mxu0 %v1780
  %1849 = vmatpush.bf16.msra.mxu0 %v1779
  %1850 = vmatpush.bf16.msra.mxu0 %v1778
  %1851 = vmatmul.bf16.gmra.mxu0 %v1658
  %v1852 = vpop.f32.mrf.mxu0
  %v1853 = vadd.f32 %v1576, %v1852
  %v1854 = vpop.f32.mrf.mxu0
  %v1855 = vadd.f32 %v1576, %v1854
  %1856 = vmatmul.bf16.gmra.mxu0 %v1661
  %v1857 = vpop.f32.mrf.mxu0
  %v1858 = vadd.f32 %v1576, %v1857
  %v1859 = vpop.f32.mrf.mxu0
  %v1860 = vadd.f32 %v1576, %v1859
  %1861 = vmatmul.bf16.gmra.mxu0 %v1664
  %v1862 = vpop.f32.mrf.mxu0
  %v1863 = vadd.f32 %v1576, %v1862
  %v1864 = vpop.f32.mrf.mxu0
  %v1865 = vadd.f32 %v1576, %v1864
  %1866 = vmatmul.bf16.gmra.mxu0 %v1667
  %v1867 = vpop.f32.mrf.mxu0
  %v1868 = vadd.f32 %v1576, %v1867
  %v1869 = vpop.f32.mrf.mxu0
  %v1870 = vadd.f32 %v1576, %v1869
  %1871 = vmatmul.bf16.gmra.mxu0 %v1670
  %v1872 = vpop.f32.mrf.mxu0
  %v1873 = vadd.f32 %v1576, %v1872
  %v1874 = vpop.f32.mrf.mxu0
  %v1875 = vadd.f32 %v1576, %v1874
  %1876 = vmatmul.bf16.gmra.mxu0 %v1673
  %v1877 = vpop.f32.mrf.mxu0
  %v1878 = vadd.f32 %v1576, %v1877
  %v1879 = vpop.f32.mrf.mxu0
  %v1880 = vadd.f32 %v1576, %v1879
  %1881 = vmatmul.bf16.gmra.mxu0 %v1676
  %v1882 = vpop.f32.mrf.mxu0
  %v1883 = vadd.f32 %v1576, %v1882
  %v1884 = vpop.f32.mrf.mxu0
  %v1885 = vadd.f32 %v1576, %v1884
  %1886 = vmatmul.bf16.gmra.mxu0 %v1679
  %v1887 = vpop.f32.mrf.mxu0
  %v1888 = vadd.f32 %v1576, %v1887
  %v1889 = vpop.f32.mrf.mxu0
  %v1890 = vadd.f32 %v1576, %v1889
  %1891 = vdwg.mxu0
  %1892 = vmatpush.bf16.msra.mxu0 %v1793
  %1893 = vmatpush.bf16.msra.mxu0 %v1792
  %1894 = vmatpush.bf16.msra.mxu0 %v1791
  %1895 = vmatpush.bf16.msra.mxu0 %v1790
  %1896 = vmatpush.bf16.msra.mxu0 %v1789
  %1897 = vmatpush.bf16.msra.mxu0 %v1788
  %1898 = vmatpush.bf16.msra.mxu0 %v1787
  %1899 = vmatpush.bf16.msra.mxu0 %v1786
  %1900 = vmatmul.bf16.gmra.mxu0 %v1659
  %v1901 = vpop.f32.mrf.mxu0
  %v1902 = vadd.f32 %v1853, %v1901
  %v1903 = vpop.f32.mrf.mxu0
  %v1904 = vadd.f32 %v1855, %v1903
  %1905 = vmatmul.bf16.gmra.mxu0 %v1662
  %v1906 = vpop.f32.mrf.mxu0
  %v1907 = vadd.f32 %v1858, %v1906
  %v1908 = vpop.f32.mrf.mxu0
  %v1909 = vadd.f32 %v1860, %v1908
  %1910 = vmatmul.bf16.gmra.mxu0 %v1665
  %v1911 = vpop.f32.mrf.mxu0
  %v1912 = vadd.f32 %v1863, %v1911
  %v1913 = vpop.f32.mrf.mxu0
  %v1914 = vadd.f32 %v1865, %v1913
  %1915 = vmatmul.bf16.gmra.mxu0 %v1668
  %v1916 = vpop.f32.mrf.mxu0
  %v1917 = vadd.f32 %v1868, %v1916
  %v1918 = vpop.f32.mrf.mxu0
  %v1919 = vadd.f32 %v1870, %v1918
  %1920 = vmatmul.bf16.gmra.mxu0 %v1671
  %v1921 = vpop.f32.mrf.mxu0
  %v1922 = vadd.f32 %v1873, %v1921
  %v1923 = vpop.f32.mrf.mxu0
  %v1924 = vadd.f32 %v1875, %v1923
  %1925 = vmatmul.bf16.gmra.mxu0 %v1674
  %v1926 = vpop.f32.mrf.mxu0
  %v1927 = vadd.f32 %v1878, %v1926
  %v1928 = vpop.f32.mrf.mxu0
  %v1929 = vadd.f32 %v1880, %v1928
  %1930 = vmatmul.bf16.gmra.mxu0 %v1677
  %v1931 = vpop.f32.mrf.mxu0
  %v1932 = vadd.f32 %v1883, %v1931
  %v1933 = vpop.f32.mrf.mxu0
  %v1934 = vadd.f32 %v1885, %v1933
  %1935 = vmatmul.bf16.gmra.mxu0 %v1680
  %v1936 = vpop.f32.mrf.mxu0
  %v1937 = vadd.f32 %v1888, %v1936
  %v1938 = vpop.f32.mrf.mxu0
  %v1939 = vadd.f32 %v1890, %v1938
  %1940 = vdwg.mxu0
  %1941 = vmatpush.bf16.msra.mxu0 0
  %1942 = vmatpush.bf16.msra.mxu0 0
  %1943 = vmatpush.bf16.msra.mxu0 0
  %1944 = vmatpush.bf16.msra.mxu0 0
  %1945 = vmatpush.bf16.msra.mxu0 %v1797
  %1946 = vmatpush.bf16.msra.mxu0 %v1796
  %1947 = vmatpush.bf16.msra.mxu0 %v1795
  %1948 = vmatpush.bf16.msra.mxu0 %v1794
  %1949 = vmatmul.bf16.gmra.mxu0 %v1820
  %v1950 = vpop.f32.mrf.mxu0
  %v1951 = vadd.f32 %v1902, %v1950
  %v1952 = vpop.f32.mrf.mxu0
  %v1953 = vadd.f32 %v1904, %v1952
  %1954 = vmatmul.bf16.gmra.mxu0 %v1823
  %v1955 = vpop.f32.mrf.mxu0
  %v1956 = vadd.f32 %v1907, %v1955
  %v1957 = vpop.f32.mrf.mxu0
  %v1958 = vadd.f32 %v1909, %v1957
  %1959 = vmatmul.bf16.gmra.mxu0 %v1826
  %v1960 = vpop.f32.mrf.mxu0
  %v1961 = vadd.f32 %v1912, %v1960
  %v1962 = vpop.f32.mrf.mxu0
  %v1963 = vadd.f32 %v1914, %v1962
  %1964 = vmatmul.bf16.gmra.mxu0 %v1829
  %v1965 = vpop.f32.mrf.mxu0
  %v1966 = vadd.f32 %v1917, %v1965
  %v1967 = vpop.f32.mrf.mxu0
  %v1968 = vadd.f32 %v1919, %v1967
  %1969 = vmatmul.bf16.gmra.mxu0 %v1832
  %v1970 = vpop.f32.mrf.mxu0
  %v1971 = vadd.f32 %v1922, %v1970
  %v1972 = vpop.f32.mrf.mxu0
  %v1973 = vadd.f32 %v1924, %v1972
  %1974 = vmatmul.bf16.gmra.mxu0 %v1835
  %v1975 = vpop.f32.mrf.mxu0
  %v1976 = vadd.f32 %v1927, %v1975
  %v1977 = vpop.f32.mrf.mxu0
  %v1978 = vadd.f32 %v1929, %v1977
  %1979 = vmatmul.bf16.gmra.mxu0 %v1838
  %v1980 = vpop.f32.mrf.mxu0
  %v1981 = vadd.f32 %v1932, %v1980
  %v1982 = vpop.f32.mrf.mxu0
  %v1983 = vadd.f32 %v1934, %v1982
  %1984 = vmatmul.bf16.gmra.mxu0 %v1841
  %v1985 = vpop.f32.mrf.mxu0
  %v1986 = vadd.f32 %v1937, %v1985
  %v1987 = vpop.f32.mrf.mxu0
  %v1988 = vadd.f32 %v1939, %v1987
  %1989 = vdwg.mxu0
  %v1990 = vmax.f32 %v1951, 0.0
  %v1991 = vmax.f32 %v1953, 0.0
  %v1992 = vmax.f32 %v1956, 0.0
  %v1993 = vmax.f32 %v1958, 0.0
  %v1994 = vmax.f32 %v1961, 0.0
  %v1995 = vmax.f32 %v1963, 0.0
  %v1996 = vmax.f32 %v1966, 0.0
  %v1997 = vmax.f32 %v1968, 0.0
  %v1998 = vmax.f32 %v1971, 0.0
  %v1999 = vmax.f32 %v1973, 0.0
  %v2000 = vmax.f32 %v1976, 0.0
  %v2001 = vmax.f32 %v1978, 0.0
  %v2002 = vmax.f32 %v1981, 0.0
  %v2003 = vmax.f32 %v1983, 0.0
  %v2004 = vmax.f32 %v1986, 0.0
  %v2005 = vmax.f32 %v1988, 0.0
  %v2006 = vpack.c.bf16 %v1991, %v1990
  %v2007 = vpack.c.bf16 %v1993, %v1992
  %v2008 = vpack.c.bf16 %v1995, %v1994
  %v2009 = vpack.c.bf16 %v1997, %v1996
  %v2010 = vpack.c.bf16 %v1999, %v1998
  %v2011 = vpack.c.bf16 %v2001, %v2000
  %v2012 = vpack.c.bf16 %v2003, %v2002
  %v2013 = vpack.c.bf16 %v2005, %v2004
  %v2014 = vld [vmem:[%s5] sm:$0x1]
  %v2016 = vsel %vm1818, %v2014, 0
  %v2019 = vsel %vm1818, %v2006, 0
  %v2022 = vsel %vm1818, %v2007, 0
  %v2025 = vsel %vm1818, %v2008, 0
  %v2028 = vsel %vm1818, %v2009, 0
  %v2031 = vsel %vm1818, %v2010, 0
  %v2034 = vsel %vm1818, %v2011, 0
  %v2037 = vsel %vm1818, %v2012, 0
  %v2040 = vsel %vm1818, %v2013, 0
  %2042 = vmatpush.bf16.xpose.msra.mxu0 %v2040
  %2043 = vmatpush.bf16.xpose.msra.mxu0 %v2037
  %2044 = vmatpush.bf16.xpose.msra.mxu0 %v2034
  %2045 = vmatpush.bf16.xpose.msra.mxu0 %v2031
  %2046 = vmatpush.bf16.xpose.msra.mxu0 %v2028
  %2047 = vmatpush.bf16.xpose.msra.mxu0 %v2025
  %2048 = vmatpush.bf16.xpose.msra.mxu0 %v2022
  %2049 = vmatpush.bf16.xpose.msra.mxu0 %v2019
  %2050 = vmatmul.bf16.gmra.mxu0 %v2016
  %v2051 = vpop.f32.mrf.mxu0
  %v2052 = vadd.f32 0.0, %v2051
  %v2053 = vpop.f32.mrf.mxu0
  %2054 = vdwg.mxu0
  %2055 = vst [vmem:[%s7] sm:$0x1] %v2052
  %2056 = vst [vmem:[%s6] sm:$0xff] %v1502
  %vm2057 = vcmask 519168
  %2058 = vst.msk [vmem:[%s6 + $0x8] sm:$0xf] %vm2057, %v1503
  %2059 = vst [vmem:[%s6 + $0xc] sm:$0xff] %v1504
  %2060 = vst.msk [vmem:[%s6 + $0x14] sm:$0xf] %vm2057, %v1505
  %2061 = vst [vmem:[%s6 + $0x18] sm:$0xff] %v1506
  %2062 = vst.msk [vmem:[%s6 + $0x20] sm:$0xf] %vm2057, %v1507
  %2063 = vst [vmem:[%s6 + $0x24] sm:$0xff] %v1508
  %2064 = vst.msk [vmem:[%s6 + $0x2c] sm:$0xf] %vm2057, %v1509
  %2065 = vst [vmem:[%s6 + $0x30] sm:$0xff] %v1510
  %2066 = vst.msk [vmem:[%s6 + $0x38] sm:$0xf] %vm2057, %v1511
  %2067 = vst [vmem:[%s6 + $0x3c] sm:$0xff] %v1512
  %2068 = vst.msk [vmem:[%s6 + $0x44] sm:$0xf] %vm2057, %v1513
  %2069 = vst [vmem:[%s6 + $0x48] sm:$0xff] %v1514
  %2070 = vst.msk [vmem:[%s6 + $0x50] sm:$0xf] %vm2057, %v1515
  %2071 = vst [vmem:[%s6 + $0x54] sm:$0xff] %v1516
  %2072 = vst.msk [vmem:[%s6 + $0x5c] sm:$0xf] %vm2057, %v1517
  %2073 = vst [vmem:[%s6 + $0x60] sm:$0xff] %v1518
  %2074 = vst.msk [vmem:[%s6 + $0x68] sm:$0xf] %vm2057, %v1519
  %2075 = vst [vmem:[%s6 + $0x6c] sm:$0xff] %v1520
  %2076 = vst.msk [vmem:[%s6 + $0x74] sm:$0xf] %vm2057, %v1521
  %2077 = vst [vmem:[%s6 + $0x78] sm:$0xff] %v1522
  %2078 = vst.msk [vmem:[%s6 + $0x80] sm:$0xf] %vm2057, %v1523
  %2079 = vst [vmem:[%s6 + $0x84] sm:$0xff] %v1524
  %2080 = vst.msk [vmem:[%s6 + $0x8c] sm:$0xf] %vm2057, %v1525
  %2081 = vst [vmem:[%s6 + $0x90] sm:$0xff] %v1526
  %2082 = vst.msk [vmem:[%s6 + $0x98] sm:$0xf] %vm2057, %v1527
  %2083 = vst [vmem:[%s6 + $0x9c] sm:$0xff] %v1528
  %2084 = vst.msk [vmem:[%s6 + $0xa4] sm:$0xf] %vm2057, %v1529
  %2085 = vst [vmem:[%s6 + $0xa8] sm:$0xff] %v1530
  %2086 = vst.msk [vmem:[%s6 + $0xb0] sm:$0xf] %vm2057, %v1531
  %2087 = vst [vmem:[%s6 + $0xb4] sm:$0xff] %v1532
  %2088 = vst.msk [vmem:[%s6 + $0xbc] sm:$0xf] %vm2057, %v1533
  // Predicated region
  $region26: #{meta_polypv2_forward.6} parent=0 // pred_check
    _
  $region27: #{meta_polypv2_forward.6} parent=0 // pred_check_branch
    %2090 = sbr.rel (0) target = $region29
  $region28: #{meta_polypv2_forward.6} parent=0 // pred_region
    _
  $region29: #{meta_polypv2_forward.6} parent=0 // pred_fallthru
    _
  // Predicated region
  $region30: #{meta_polypv2_forward.6} parent=0 // pred_check
    _
  $region31: #{meta_polypv2_forward.6} parent=0 // pred_check_branch
    %2092 = sbr.rel (0) target = $region33
  $region32: #{meta_polypv2_forward.6} parent=0 // pred_region
    _
  $region33: #{meta_polypv2_forward.6} parent=0 // pred_fallthru
    _
  // Predicated region
  $region34: #{meta_polypv2_forward.6} parent=0 // pred_check
    _
  $region35: #{meta_polypv2_forward.6} parent=0 // pred_check_branch
    %2094 = sbr.rel (0) target = $region37
  $region36: #{meta_polypv2_forward.6} parent=0 // pred_region
    _
  $region37: #{meta_polypv2_forward.6} parent=0 // pred_fallthru
    _
  // Predicated region
  $region38: #{meta_polypv2_forward.6} parent=0 // pred_check
    _
  $region39: #{meta_polypv2_forward.6} parent=0 // pred_check_branch
    %2096 = sbr.rel (0) target = $region41
  $region40: #{meta_polypv2_forward.6} parent=0 // pred_region
    _
  $region41: #{meta_polypv2_forward.6} parent=0 // pred_fallthru
    _

// kernel: meta_polypv2_forward.7
$region0: #{meta_polypv2_forward.7}
  #allocation0 [shape = 'u32[]', space=smem, size = 0x4, offset = 0x4, fixed_abs, tag = 'smem constant byte address 0x4 - core index']
  #allocation1 [shape = 'u32[72,128]{1,0:T(1,128)}', space=vmem, size = 0x9000, scoped, tag = 'internal scratch']
  %s0 = inlined_call_operand.vmem [shape: bf16[128,1280], index: 0, kind: input, shape index: {}]
  %s1 = inlined_call_operand.vmem [shape: bf16[1280,512], index: 1, kind: input, shape index: {}]
  %s2 = inlined_call_operand.vmem [shape: f32[1,512], index: 2, kind: input, shape index: {}]
  %s3 = inlined_call_operand.vmem [shape: bf16[512,64], index: 3, kind: input, shape index: {}]
  %s4 = inlined_call_operand.vmem [shape: f32[1,64], index: 4, kind: input, shape index: {}]
  %s5 = inlined_call_operand.vmem [shape: bf16[1,64], index: 5, kind: input, shape index: {}]
  %s6 = inlined_call_operand.vmem [shape: f32[1,128], index: 6, kind: output, shape index: {}]
  %s7 = sld [smem:[#allocation0]]
  $region34: #{meta_polypv2_forward.7} parent=0
    _
  %s9 = ssub.s32 1, %s7
  %s10 = scalar_select 0, %s9, %s7
  // Predicated region
  $region2: #{meta_polypv2_forward.7} parent=0 // pred_check
    _
  $region3: #{meta_polypv2_forward.7} parent=0 // pred_check_branch
    %12 = sbr.rel (0) target = $region5
  $region4: #{meta_polypv2_forward.7} parent=0 // pred_region
    _
  $region5: #{meta_polypv2_forward.7} parent=0 // pred_fallthru
    _
  // Predicated region
  $region6: #{meta_polypv2_forward.7} parent=0 // pred_check
    _
  $region7: #{meta_polypv2_forward.7} parent=0 // pred_check_branch
    %14 = sbr.rel (0) target = $region9
  $region8: #{meta_polypv2_forward.7} parent=0 // pred_region
    _
  $region9: #{meta_polypv2_forward.7} parent=0 // pred_fallthru
    _
  // Predicated region
  $region10: #{meta_polypv2_forward.7} parent=0 // pred_check
    _
  $region11: #{meta_polypv2_forward.7} parent=0 // pred_check_branch
    %16 = sbr.rel (0) target = $region13
  $region12: #{meta_polypv2_forward.7} parent=0 // pred_region
    _
  $region13: #{meta_polypv2_forward.7} parent=0 // pred_fallthru
    _
  // Predicated region
  $region14: #{meta_polypv2_forward.7} parent=0 // pred_check
    _
  $region15: #{meta_polypv2_forward.7} parent=0 // pred_check_branch
    %18 = sbr.rel (0) target = $region17
  $region16: #{meta_polypv2_forward.7} parent=0 // pred_region
    _
  $region17: #{meta_polypv2_forward.7} parent=0 // pred_fallthru
    _
  // Predicated region
  $region18: #{meta_polypv2_forward.7} parent=0 // pred_check
    _
  $region19: #{meta_polypv2_forward.7} parent=0 // pred_check_branch
    %20 = sbr.rel (0) target = $region21
  $region20: #{meta_polypv2_forward.7} parent=0 // pred_region
    _
  $region21: #{meta_polypv2_forward.7} parent=0 // pred_fallthru
    _
  // Predicated region
  $region22: #{meta_polypv2_forward.7} parent=0 // pred_check
    _
  $region23: #{meta_polypv2_forward.7} parent=0 // pred_check_branch
    %22 = sbr.rel (0) target = $region25
  $region24: #{meta_polypv2_forward.7} parent=0 // pred_region
    _
  $region25: #{meta_polypv2_forward.7} parent=0 // pred_fallthru
    _
  %v23 = vld [vmem:[%s0] sm:$0xff]
  %v24 = vld [vmem:[%s0 + $0x8] sm:$0xff]
  %v25 = vld [vmem:[%s0 + $0x10] sm:$0xff]
  %v26 = vld [vmem:[%s0 + $0x18] sm:$0xff]
  %v27 = vld [vmem:[%s0 + $0x20] sm:$0xff]
  %v28 = vld [vmem:[%s0 + $0x28] sm:$0xff]
  %v29 = vld [vmem:[%s0 + $0x30] sm:$0xff]
  %v30 = vld [vmem:[%s0 + $0x38] sm:$0xff]
  %v31 = vld [vmem:[%s0 + $0x40] sm:$0xff]
  %v32 = vld [vmem:[%s0 + $0x48] sm:$0xff]
  %v33 = vld [vmem:[%s0 + $0x50] sm:$0xff]
  %v34 = vld [vmem:[%s0 + $0x58] sm:$0xff]
  %v35 = vld [vmem:[%s0 + $0x60] sm:$0xff]
  %v36 = vld [vmem:[%s0 + $0x68] sm:$0xff]
  %v37 = vld [vmem:[%s0 + $0x70] sm:$0xff]
  %v38 = vld [vmem:[%s0 + $0x78] sm:$0xff]
  %v39 = vld [vmem:[%s0 + $0x80] sm:$0xff]
  %v40 = vld [vmem:[%s0 + $0x88] sm:$0xff]
  %v41 = vld [vmem:[%s0 + $0x90] sm:$0xff]
  %v42 = vld [vmem:[%s0 + $0x98] sm:$0xff]
  %v43 = vld [vmem:[%s0 + $0xa0] sm:$0xff]
  %v44 = vld [vmem:[%s0 + $0xa8] sm:$0xff]
  %v45 = vld [vmem:[%s0 + $0xb0] sm:$0xff]
  %v46 = vld [vmem:[%s0 + $0xb8] sm:$0xff]
  %v47 = vld [vmem:[%s0 + $0xc0] sm:$0xff]
  %v48 = vld [vmem:[%s0 + $0xc8] sm:$0xff]
  %v49 = vld [vmem:[%s0 + $0xd0] sm:$0xff]
  %v50 = vld [vmem:[%s0 + $0xd8] sm:$0xff]
  %v51 = vld [vmem:[%s0 + $0xe0] sm:$0xff]
  %v52 = vld [vmem:[%s0 + $0xe8] sm:$0xff]
  %v53 = vld [vmem:[%s0 + $0xf0] sm:$0xff]
  %v54 = vld [vmem:[%s0 + $0xf8] sm:$0xff]
  %v55 = vld [vmem:[%s0 + $0x100] sm:$0xff]
  %v56 = vld [vmem:[%s0 + $0x108] sm:$0xff]
  %v57 = vld [vmem:[%s0 + $0x110] sm:$0xff]
  %v58 = vld [vmem:[%s0 + $0x118] sm:$0xff]
  %v59 = vld [vmem:[%s0 + $0x120] sm:$0xff]
  %v60 = vld [vmem:[%s0 + $0x128] sm:$0xff]
  %v61 = vld [vmem:[%s0 + $0x130] sm:$0xff]
  %v62 = vld [vmem:[%s0 + $0x138] sm:$0xff]
  %v63 = vld [vmem:[%s0 + $0x140] sm:$0xff]
  %v64 = vld [vmem:[%s0 + $0x148] sm:$0xff]
  %v65 = vld [vmem:[%s0 + $0x150] sm:$0xff]
  %v66 = vld [vmem:[%s0 + $0x158] sm:$0xff]
  %v67 = vld [vmem:[%s0 + $0x160] sm:$0xff]
  %v68 = vld [vmem:[%s0 + $0x168] sm:$0xff]
  %v69 = vld [vmem:[%s0 + $0x170] sm:$0xff]
  %v70 = vld [vmem:[%s0 + $0x178] sm:$0xff]
  %v71 = vld [vmem:[%s0 + $0x180] sm:$0xff]
  %v72 = vld [vmem:[%s0 + $0x188] sm:$0xff]
  %v73 = vld [vmem:[%s0 + $0x190] sm:$0xff]
  %v74 = vld [vmem:[%s0 + $0x198] sm:$0xff]
  %v75 = vld [vmem:[%s0 + $0x1a0] sm:$0xff]
  %v76 = vld [vmem:[%s0 + $0x1a8] sm:$0xff]
  %v77 = vld [vmem:[%s0 + $0x1b0] sm:$0xff]
  %v78 = vld [vmem:[%s0 + $0x1b8] sm:$0xff]
  %v79 = vld [vmem:[%s0 + $0x1c0] sm:$0xff]
  %v80 = vld [vmem:[%s0 + $0x1c8] sm:$0xff]
  %v81 = vld [vmem:[%s0 + $0x1d0] sm:$0xff]
  %v82 = vld [vmem:[%s0 + $0x1d8] sm:$0xff]
  %v83 = vld [vmem:[%s0 + $0x1e0] sm:$0xff]
  %v84 = vld [vmem:[%s0 + $0x1e8] sm:$0xff]
  %v85 = vld [vmem:[%s0 + $0x1f0] sm:$0xff]
  %v86 = vld [vmem:[%s0 + $0x1f8] sm:$0xff]
  %v87 = vld [vmem:[%s0 + $0x200] sm:$0xff]
  %v88 = vld [vmem:[%s0 + $0x208] sm:$0xff]
  %v89 = vld [vmem:[%s0 + $0x210] sm:$0xff]
  %v90 = vld [vmem:[%s0 + $0x218] sm:$0xff]
  %v91 = vld [vmem:[%s0 + $0x220] sm:$0xff]
  %v92 = vld [vmem:[%s0 + $0x228] sm:$0xff]
  %v93 = vld [vmem:[%s0 + $0x230] sm:$0xff]
  %v94 = vld [vmem:[%s0 + $0x238] sm:$0xff]
  %v95 = vld [vmem:[%s0 + $0x240] sm:$0xff]
  %v96 = vld [vmem:[%s0 + $0x248] sm:$0xff]
  %v97 = vld [vmem:[%s0 + $0x250] sm:$0xff]
  %v98 = vld [vmem:[%s0 + $0x258] sm:$0xff]
  %v99 = vld [vmem:[%s0 + $0x260] sm:$0xff]
  %v100 = vld [vmem:[%s0 + $0x268] sm:$0xff]
  %v101 = vld [vmem:[%s0 + $0x270] sm:$0xff]
  %v102 = vld [vmem:[%s0 + $0x278] sm:$0xff]
  %v103 = vld [vmem:[%s1] sm:$0xff]
  %v104 = vld [vmem:[%s1 + $0x8] sm:$0xff]
  %v105 = vld [vmem:[%s1 + $0x10] sm:$0xff]
  %v106 = vld [vmem:[%s1 + $0x18] sm:$0xff]
  %v107 = vld [vmem:[%s1 + $0x20] sm:$0xff]
  %v108 = vld [vmem:[%s1 + $0x28] sm:$0xff]
  %v109 = vld [vmem:[%s1 + $0x30] sm:$0xff]
  %v110 = vld [vmem:[%s1 + $0x38] sm:$0xff]
  %v111 = vld [vmem:[%s1 + $0x40] sm:$0xff]
  %v112 = vld [vmem:[%s1 + $0x48] sm:$0xff]
  %v113 = vld [vmem:[%s1 + $0x50] sm:$0xff]
  %v114 = vld [vmem:[%s1 + $0x58] sm:$0xff]
  %v115 = vld [vmem:[%s1 + $0x60] sm:$0xff]
  %v116 = vld [vmem:[%s1 + $0x68] sm:$0xff]
  %v117 = vld [vmem:[%s1 + $0x70] sm:$0xff]
  %v118 = vld [vmem:[%s1 + $0x78] sm:$0xff]
  %v119 = vld [vmem:[%s1 + $0x80] sm:$0xff]
  %v120 = vld [vmem:[%s1 + $0x88] sm:$0xff]
  %v121 = vld [vmem:[%s1 + $0x90] sm:$0xff]
  %v122 = vld [vmem:[%s1 + $0x98] sm:$0xff]
  %v123 = vld [vmem:[%s1 + $0xa0] sm:$0xff]
  %v124 = vld [vmem:[%s1 + $0xa8] sm:$0xff]
  %v125 = vld [vmem:[%s1 + $0xb0] sm:$0xff]
  %v126 = vld [vmem:[%s1 + $0xb8] sm:$0xff]
  %v127 = vld [vmem:[%s1 + $0xc0] sm:$0xff]
  %v128 = vld [vmem:[%s1 + $0xc8] sm:$0xff]
  %v129 = vld [vmem:[%s1 + $0xd0] sm:$0xff]
  %v130 = vld [vmem:[%s1 + $0xd8] sm:$0xff]
  %v131 = vld [vmem:[%s1 + $0xe0] sm:$0xff]
  %v132 = vld [vmem:[%s1 + $0xe8] sm:$0xff]
  %v133 = vld [vmem:[%s1 + $0xf0] sm:$0xff]
  %v134 = vld [vmem:[%s1 + $0xf8] sm:$0xff]
  %v135 = vld [vmem:[%s1 + $0x100] sm:$0xff]
  %v136 = vld [vmem:[%s1 + $0x108] sm:$0xff]
  %v137 = vld [vmem:[%s1 + $0x110] sm:$0xff]
  %v138 = vld [vmem:[%s1 + $0x118] sm:$0xff]
  %v139 = vld [vmem:[%s1 + $0x120] sm:$0xff]
  %v140 = vld [vmem:[%s1 + $0x128] sm:$0xff]
  %v141 = vld [vmem:[%s1 + $0x130] sm:$0xff]
  %v142 = vld [vmem:[%s1 + $0x138] sm:$0xff]
  %v143 = vld [vmem:[%s1 + $0x140] sm:$0xff]
  %v144 = vld [vmem:[%s1 + $0x148] sm:$0xff]
  %v145 = vld [vmem:[%s1 + $0x150] sm:$0xff]
  %v146 = vld [vmem:[%s1 + $0x158] sm:$0xff]
  %v147 = vld [vmem:[%s1 + $0x160] sm:$0xff]
  %v148 = vld [vmem:[%s1 + $0x168] sm:$0xff]
  %v149 = vld [vmem:[%s1 + $0x170] sm:$0xff]
  %v150 = vld [vmem:[%s1 + $0x178] sm:$0xff]
  %v151 = vld [vmem:[%s1 + $0x180] sm:$0xff]
  %v152 = vld [vmem:[%s1 + $0x188] sm:$0xff]
  %v153 = vld [vmem:[%s1 + $0x190] sm:$0xff]
  %v154 = vld [vmem:[%s1 + $0x198] sm:$0xff]
  %v155 = vld [vmem:[%s1 + $0x1a0] sm:$0xff]
  %v156 = vld [vmem:[%s1 + $0x1a8] sm:$0xff]
  %v157 = vld [vmem:[%s1 + $0x1b0] sm:$0xff]
  %v158 = vld [vmem:[%s1 + $0x1b8] sm:$0xff]
  %v159 = vld [vmem:[%s1 + $0x1c0] sm:$0xff]
  %v160 = vld [vmem:[%s1 + $0x1c8] sm:$0xff]
  %v161 = vld [vmem:[%s1 + $0x1d0] sm:$0xff]
  %v162 = vld [vmem:[%s1 + $0x1d8] sm:$0xff]
  %v163 = vld [vmem:[%s1 + $0x1e0] sm:$0xff]
  %v164 = vld [vmem:[%s1 + $0x1e8] sm:$0xff]
  %v165 = vld [vmem:[%s1 + $0x1f0] sm:$0xff]
  %v166 = vld [vmem:[%s1 + $0x1f8] sm:$0xff]
  %v167 = vld [vmem:[%s1 + $0x200] sm:$0xff]
  %v168 = vld [vmem:[%s1 + $0x208] sm:$0xff]
  %v169 = vld [vmem:[%s1 + $0x210] sm:$0xff]
  %v170 = vld [vmem:[%s1 + $0x218] sm:$0xff]
  %v171 = vld [vmem:[%s1 + $0x220] sm:$0xff]
  %v172 = vld [vmem:[%s1 + $0x228] sm:$0xff]
  %v173 = vld [vmem:[%s1 + $0x230] sm:$0xff]
  %v174 = vld [vmem:[%s1 + $0x238] sm:$0xff]
  %v175 = vld [vmem:[%s1 + $0x240] sm:$0xff]
  %v176 = vld [vmem:[%s1 + $0x248] sm:$0xff]
  %v177 = vld [vmem:[%s1 + $0x250] sm:$0xff]
  %v178 = vld [vmem:[%s1 + $0x258] sm:$0xff]
  %v179 = vld [vmem:[%s1 + $0x260] sm:$0xff]
  %v180 = vld [vmem:[%s1 + $0x268] sm:$0xff]
  %v181 = vld [vmem:[%s1 + $0x270] sm:$0xff]
  %v182 = vld [vmem:[%s1 + $0x278] sm:$0xff]
  %v183 = vld [vmem:[%s1 + $0x280] sm:$0xff]
  %v184 = vld [vmem:[%s1 + $0x288] sm:$0xff]
  %v185 = vld [vmem:[%s1 + $0x290] sm:$0xff]
  %v186 = vld [vmem:[%s1 + $0x298] sm:$0xff]
  %v187 = vld [vmem:[%s1 + $0x2a0] sm:$0xff]
  %v188 = vld [vmem:[%s1 + $0x2a8] sm:$0xff]
  %v189 = vld [vmem:[%s1 + $0x2b0] sm:$0xff]
  %v190 = vld [vmem:[%s1 + $0x2b8] sm:$0xff]
  %v191 = vld [vmem:[%s1 + $0x2c0] sm:$0xff]
  %v192 = vld [vmem:[%s1 + $0x2c8] sm:$0xff]
  %v193 = vld [vmem:[%s1 + $0x2d0] sm:$0xff]
  %v194 = vld [vmem:[%s1 + $0x2d8] sm:$0xff]
  %v195 = vld [vmem:[%s1 + $0x2e0] sm:$0xff]
  %v196 = vld [vmem:[%s1 + $0x2e8] sm:$0xff]
  %v197 = vld [vmem:[%s1 + $0x2f0] sm:$0xff]
  %v198 = vld [vmem:[%s1 + $0x2f8] sm:$0xff]
  %v199 = vld [vmem:[%s1 + $0x300] sm:$0xff]
  %v200 = vld [vmem:[%s1 + $0x308] sm:$0xff]
  %v201 = vld [vmem:[%s1 + $0x310] sm:$0xff]
  %v202 = vld [vmem:[%s1 + $0x318] sm:$0xff]
  %v203 = vld [vmem:[%s1 + $0x320] sm:$0xff]
  %v204 = vld [vmem:[%s1 + $0x328] sm:$0xff]
  %v205 = vld [vmem:[%s1 + $0x330] sm:$0xff]
  %v206 = vld [vmem:[%s1 + $0x338] sm:$0xff]
  %v207 = vld [vmem:[%s1 + $0x340] sm:$0xff]
  %v208 = vld [vmem:[%s1 + $0x348] sm:$0xff]
  %v209 = vld [vmem:[%s1 + $0x350] sm:$0xff]
  %v210 = vld [vmem:[%s1 + $0x358] sm:$0xff]
  %v211 = vld [vmem:[%s1 + $0x360] sm:$0xff]
  %v212 = vld [vmem:[%s1 + $0x368] sm:$0xff]
  %v213 = vld [vmem:[%s1 + $0x370] sm:$0xff]
  %v214 = vld [vmem:[%s1 + $0x378] sm:$0xff]
  %v215 = vld [vmem:[%s1 + $0x380] sm:$0xff]
  %v216 = vld [vmem:[%s1 + $0x388] sm:$0xff]
  %v217 = vld [vmem:[%s1 + $0x390] sm:$0xff]
  %v218 = vld [vmem:[%s1 + $0x398] sm:$0xff]
  %v219 = vld [vmem:[%s1 + $0x3a0] sm:$0xff]
  %v220 = vld [vmem:[%s1 + $0x3a8] sm:$0xff]
  %v221 = vld [vmem:[%s1 + $0x3b0] sm:$0xff]
  %v222 = vld [vmem:[%s1 + $0x3b8] sm:$0xff]
  %v223 = vld [vmem:[%s1 + $0x3c0] sm:$0xff]
  %v224 = vld [vmem:[%s1 + $0x3c8] sm:$0xff]
  %v225 = vld [vmem:[%s1 + $0x3d0] sm:$0xff]
  %v226 = vld [vmem:[%s1 + $0x3d8] sm:$0xff]
  %v227 = vld [vmem:[%s1 + $0x3e0] sm:$0xff]
  %v228 = vld [vmem:[%s1 + $0x3e8] sm:$0xff]
  %v229 = vld [vmem:[%s1 + $0x3f0] sm:$0xff]
  %v230 = vld [vmem:[%s1 + $0x3f8] sm:$0xff]
  %v231 = vld [vmem:[%s1 + $0x400] sm:$0xff]
  %v232 = vld [vmem:[%s1 + $0x408] sm:$0xff]
  %v233 = vld [vmem:[%s1 + $0x410] sm:$0xff]
  %v234 = vld [vmem:[%s1 + $0x418] sm:$0xff]
  %v235 = vld [vmem:[%s1 + $0x420] sm:$0xff]
  %v236 = vld [vmem:[%s1 + $0x428] sm:$0xff]
  %v237 = vld [vmem:[%s1 + $0x430] sm:$0xff]
  %v238 = vld [vmem:[%s1 + $0x438] sm:$0xff]
  %v239 = vld [vmem:[%s1 + $0x440] sm:$0xff]
  %v240 = vld [vmem:[%s1 + $0x448] sm:$0xff]
  %v241 = vld [vmem:[%s1 + $0x450] sm:$0xff]
  %v242 = vld [vmem:[%s1 + $0x458] sm:$0xff]
  %v243 = vld [vmem:[%s1 + $0x460] sm:$0xff]
  %v244 = vld [vmem:[%s1 + $0x468] sm:$0xff]
  %v245 = vld [vmem:[%s1 + $0x470] sm:$0xff]
  %v246 = vld [vmem:[%s1 + $0x478] sm:$0xff]
  %v247 = vld [vmem:[%s1 + $0x480] sm:$0xff]
  %v248 = vld [vmem:[%s1 + $0x488] sm:$0xff]
  %v249 = vld [vmem:[%s1 + $0x490] sm:$0xff]
  %v250 = vld [vmem:[%s1 + $0x498] sm:$0xff]
  %v251 = vld [vmem:[%s1 + $0x4a0] sm:$0xff]
  %v252 = vld [vmem:[%s1 + $0x4a8] sm:$0xff]
  %v253 = vld [vmem:[%s1 + $0x4b0] sm:$0xff]
  %v254 = vld [vmem:[%s1 + $0x4b8] sm:$0xff]
  %v255 = vld [vmem:[%s1 + $0x4c0] sm:$0xff]
  %v256 = vld [vmem:[%s1 + $0x4c8] sm:$0xff]
  %v257 = vld [vmem:[%s1 + $0x4d0] sm:$0xff]
  %v258 = vld [vmem:[%s1 + $0x4d8] sm:$0xff]
  %v259 = vld [vmem:[%s1 + $0x4e0] sm:$0xff]
  %v260 = vld [vmem:[%s1 + $0x4e8] sm:$0xff]
  %v261 = vld [vmem:[%s1 + $0x4f0] sm:$0xff]
  %v262 = vld [vmem:[%s1 + $0x4f8] sm:$0xff]
  %v263 = vld [vmem:[%s1 + $0x500] sm:$0xff]
  %v264 = vld [vmem:[%s1 + $0x508] sm:$0xff]
  %v265 = vld [vmem:[%s1 + $0x510] sm:$0xff]
  %v266 = vld [vmem:[%s1 + $0x518] sm:$0xff]
  %v267 = vld [vmem:[%s1 + $0x520] sm:$0xff]
  %v268 = vld [vmem:[%s1 + $0x528] sm:$0xff]
  %v269 = vld [vmem:[%s1 + $0x530] sm:$0xff]
  %v270 = vld [vmem:[%s1 + $0x538] sm:$0xff]
  %v271 = vld [vmem:[%s1 + $0x540] sm:$0xff]
  %v272 = vld [vmem:[%s1 + $0x548] sm:$0xff]
  %v273 = vld [vmem:[%s1 + $0x550] sm:$0xff]
  %v274 = vld [vmem:[%s1 + $0x558] sm:$0xff]
  %v275 = vld [vmem:[%s1 + $0x560] sm:$0xff]
  %v276 = vld [vmem:[%s1 + $0x568] sm:$0xff]
  %v277 = vld [vmem:[%s1 + $0x570] sm:$0xff]
  %v278 = vld [vmem:[%s1 + $0x578] sm:$0xff]
  %v279 = vld [vmem:[%s1 + $0x580] sm:$0xff]
  %v280 = vld [vmem:[%s1 + $0x588] sm:$0xff]
  %v281 = vld [vmem:[%s1 + $0x590] sm:$0xff]
  %v282 = vld [vmem:[%s1 + $0x598] sm:$0xff]
  %v283 = vld [vmem:[%s1 + $0x5a0] sm:$0xff]
  %v284 = vld [vmem:[%s1 + $0x5a8] sm:$0xff]
  %v285 = vld [vmem:[%s1 + $0x5b0] sm:$0xff]
  %v286 = vld [vmem:[%s1 + $0x5b8] sm:$0xff]
  %v287 = vld [vmem:[%s1 + $0x5c0] sm:$0xff]
  %v288 = vld [vmem:[%s1 + $0x5c8] sm:$0xff]
  %v289 = vld [vmem:[%s1 + $0x5d0] sm:$0xff]
  %v290 = vld [vmem:[%s1 + $0x5d8] sm:$0xff]
  %v291 = vld [vmem:[%s1 + $0x5e0] sm:$0xff]
  %v292 = vld [vmem:[%s1 + $0x5e8] sm:$0xff]
  %v293 = vld [vmem:[%s1 + $0x5f0] sm:$0xff]
  %v294 = vld [vmem:[%s1 + $0x5f8] sm:$0xff]
  %v295 = vld [vmem:[%s1 + $0x600] sm:$0xff]
  %v296 = vld [vmem:[%s1 + $0x608] sm:$0xff]
  %v297 = vld [vmem:[%s1 + $0x610] sm:$0xff]
  %v298 = vld [vmem:[%s1 + $0x618] sm:$0xff]
  %v299 = vld [vmem:[%s1 + $0x620] sm:$0xff]
  %v300 = vld [vmem:[%s1 + $0x628] sm:$0xff]
  %v301 = vld [vmem:[%s1 + $0x630] sm:$0xff]
  %v302 = vld [vmem:[%s1 + $0x638] sm:$0xff]
  %v303 = vld [vmem:[%s1 + $0x640] sm:$0xff]
  %v304 = vld [vmem:[%s1 + $0x648] sm:$0xff]
  %v305 = vld [vmem:[%s1 + $0x650] sm:$0xff]
  %v306 = vld [vmem:[%s1 + $0x658] sm:$0xff]
  %v307 = vld [vmem:[%s1 + $0x660] sm:$0xff]
  %v308 = vld [vmem:[%s1 + $0x668] sm:$0xff]
  %v309 = vld [vmem:[%s1 + $0x670] sm:$0xff]
  %v310 = vld [vmem:[%s1 + $0x678] sm:$0xff]
  %v311 = vld [vmem:[%s1 + $0x680] sm:$0xff]
  %v312 = vld [vmem:[%s1 + $0x688] sm:$0xff]
  %v313 = vld [vmem:[%s1 + $0x690] sm:$0xff]
  %v314 = vld [vmem:[%s1 + $0x698] sm:$0xff]
  %v315 = vld [vmem:[%s1 + $0x6a0] sm:$0xff]
  %v316 = vld [vmem:[%s1 + $0x6a8] sm:$0xff]
  %v317 = vld [vmem:[%s1 + $0x6b0] sm:$0xff]
  %v318 = vld [vmem:[%s1 + $0x6b8] sm:$0xff]
  %v319 = vld [vmem:[%s1 + $0x6c0] sm:$0xff]
  %v320 = vld [vmem:[%s1 + $0x6c8] sm:$0xff]
  %v321 = vld [vmem:[%s1 + $0x6d0] sm:$0xff]
  %v322 = vld [vmem:[%s1 + $0x6d8] sm:$0xff]
  %v323 = vld [vmem:[%s1 + $0x6e0] sm:$0xff]
  %v324 = vld [vmem:[%s1 + $0x6e8] sm:$0xff]
  %v325 = vld [vmem:[%s1 + $0x6f0] sm:$0xff]
  %v326 = vld [vmem:[%s1 + $0x6f8] sm:$0xff]
  %v327 = vld [vmem:[%s1 + $0x700] sm:$0xff]
  %v328 = vld [vmem:[%s1 + $0x708] sm:$0xff]
  %v329 = vld [vmem:[%s1 + $0x710] sm:$0xff]
  %v330 = vld [vmem:[%s1 + $0x718] sm:$0xff]
  %v331 = vld [vmem:[%s1 + $0x720] sm:$0xff]
  %v332 = vld [vmem:[%s1 + $0x728] sm:$0xff]
  %v333 = vld [vmem:[%s1 + $0x730] sm:$0xff]
  %v334 = vld [vmem:[%s1 + $0x738] sm:$0xff]
  %v335 = vld [vmem:[%s1 + $0x740] sm:$0xff]
  %v336 = vld [vmem:[%s1 + $0x748] sm:$0xff]
  %v337 = vld [vmem:[%s1 + $0x750] sm:$0xff]
  %v338 = vld [vmem:[%s1 + $0x758] sm:$0xff]
  %v339 = vld [vmem:[%s1 + $0x760] sm:$0xff]
  %v340 = vld [vmem:[%s1 + $0x768] sm:$0xff]
  %v341 = vld [vmem:[%s1 + $0x770] sm:$0xff]
  %v342 = vld [vmem:[%s1 + $0x778] sm:$0xff]
  %v343 = vld [vmem:[%s1 + $0x780] sm:$0xff]
  %v344 = vld [vmem:[%s1 + $0x788] sm:$0xff]
  %v345 = vld [vmem:[%s1 + $0x790] sm:$0xff]
  %v346 = vld [vmem:[%s1 + $0x798] sm:$0xff]
  %v347 = vld [vmem:[%s1 + $0x7a0] sm:$0xff]
  %v348 = vld [vmem:[%s1 + $0x7a8] sm:$0xff]
  %v349 = vld [vmem:[%s1 + $0x7b0] sm:$0xff]
  %v350 = vld [vmem:[%s1 + $0x7b8] sm:$0xff]
  %v351 = vld [vmem:[%s1 + $0x7c0] sm:$0xff]
  %v352 = vld [vmem:[%s1 + $0x7c8] sm:$0xff]
  %v353 = vld [vmem:[%s1 + $0x7d0] sm:$0xff]
  %v354 = vld [vmem:[%s1 + $0x7d8] sm:$0xff]
  %v355 = vld [vmem:[%s1 + $0x7e0] sm:$0xff]
  %v356 = vld [vmem:[%s1 + $0x7e8] sm:$0xff]
  %v357 = vld [vmem:[%s1 + $0x7f0] sm:$0xff]
  %v358 = vld [vmem:[%s1 + $0x7f8] sm:$0xff]
  %v359 = vld [vmem:[%s1 + $0x800] sm:$0xff]
  %v360 = vld [vmem:[%s1 + $0x808] sm:$0xff]
  %v361 = vld [vmem:[%s1 + $0x810] sm:$0xff]
  %v362 = vld [vmem:[%s1 + $0x818] sm:$0xff]
  %v363 = vld [vmem:[%s1 + $0x820] sm:$0xff]
  %v364 = vld [vmem:[%s1 + $0x828] sm:$0xff]
  %v365 = vld [vmem:[%s1 + $0x830] sm:$0xff]
  %v366 = vld [vmem:[%s1 + $0x838] sm:$0xff]
  %v367 = vld [vmem:[%s1 + $0x840] sm:$0xff]
  %v368 = vld [vmem:[%s1 + $0x848] sm:$0xff]
  %v369 = vld [vmem:[%s1 + $0x850] sm:$0xff]
  %v370 = vld [vmem:[%s1 + $0x858] sm:$0xff]
  %v371 = vld [vmem:[%s1 + $0x860] sm:$0xff]
  %v372 = vld [vmem:[%s1 + $0x868] sm:$0xff]
  %v373 = vld [vmem:[%s1 + $0x870] sm:$0xff]
  %v374 = vld [vmem:[%s1 + $0x878] sm:$0xff]
  %v375 = vld [vmem:[%s1 + $0x880] sm:$0xff]
  %v376 = vld [vmem:[%s1 + $0x888] sm:$0xff]
  %v377 = vld [vmem:[%s1 + $0x890] sm:$0xff]
  %v378 = vld [vmem:[%s1 + $0x898] sm:$0xff]
  %v379 = vld [vmem:[%s1 + $0x8a0] sm:$0xff]
  %v380 = vld [vmem:[%s1 + $0x8a8] sm:$0xff]
  %v381 = vld [vmem:[%s1 + $0x8b0] sm:$0xff]
  %v382 = vld [vmem:[%s1 + $0x8b8] sm:$0xff]
  %v383 = vld [vmem:[%s1 + $0x8c0] sm:$0xff]
  %v384 = vld [vmem:[%s1 + $0x8c8] sm:$0xff]
  %v385 = vld [vmem:[%s1 + $0x8d0] sm:$0xff]
  %v386 = vld [vmem:[%s1 + $0x8d8] sm:$0xff]
  %v387 = vld [vmem:[%s1 + $0x8e0] sm:$0xff]
  %v388 = vld [vmem:[%s1 + $0x8e8] sm:$0xff]
  %v389 = vld [vmem:[%s1 + $0x8f0] sm:$0xff]
  %v390 = vld [vmem:[%s1 + $0x8f8] sm:$0xff]
  %v391 = vld [vmem:[%s1 + $0x900] sm:$0xff]
  %v392 = vld [vmem:[%s1 + $0x908] sm:$0xff]
  %v393 = vld [vmem:[%s1 + $0x910] sm:$0xff]
  %v394 = vld [vmem:[%s1 + $0x918] sm:$0xff]
  %v395 = vld [vmem:[%s1 + $0x920] sm:$0xff]
  %v396 = vld [vmem:[%s1 + $0x928] sm:$0xff]
  %v397 = vld [vmem:[%s1 + $0x930] sm:$0xff]
  %v398 = vld [vmem:[%s1 + $0x938] sm:$0xff]
  %v399 = vld [vmem:[%s1 + $0x940] sm:$0xff]
  %v400 = vld [vmem:[%s1 + $0x948] sm:$0xff]
  %v401 = vld [vmem:[%s1 + $0x950] sm:$0xff]
  %v402 = vld [vmem:[%s1 + $0x958] sm:$0xff]
  %v403 = vld [vmem:[%s1 + $0x960] sm:$0xff]
  %v404 = vld [vmem:[%s1 + $0x968] sm:$0xff]
  %v405 = vld [vmem:[%s1 + $0x970] sm:$0xff]
  %v406 = vld [vmem:[%s1 + $0x978] sm:$0xff]
  %v407 = vld [vmem:[%s1 + $0x980] sm:$0xff]
  %v408 = vld [vmem:[%s1 + $0x988] sm:$0xff]
  %v409 = vld [vmem:[%s1 + $0x990] sm:$0xff]
  %v410 = vld [vmem:[%s1 + $0x998] sm:$0xff]
  %v411 = vld [vmem:[%s1 + $0x9a0] sm:$0xff]
  %v412 = vld [vmem:[%s1 + $0x9a8] sm:$0xff]
  %v413 = vld [vmem:[%s1 + $0x9b0] sm:$0xff]
  %v414 = vld [vmem:[%s1 + $0x9b8] sm:$0xff]
  %v415 = vld [vmem:[%s1 + $0x9c0] sm:$0xff]
  %v416 = vld [vmem:[%s1 + $0x9c8] sm:$0xff]
  %v417 = vld [vmem:[%s1 + $0x9d0] sm:$0xff]
  %v418 = vld [vmem:[%s1 + $0x9d8] sm:$0xff]
  %v419 = vld [vmem:[%s1 + $0x9e0] sm:$0xff]
  %v420 = vld [vmem:[%s1 + $0x9e8] sm:$0xff]
  %v421 = vld [vmem:[%s1 + $0x9f0] sm:$0xff]
  %v422 = vld [vmem:[%s1 + $0x9f8] sm:$0xff]
  %v423 = vld [vmem:[%s2] sm:$0xf]
  %v425 = vperm.slane %v423, 0
  %v426 = vperm.slane %v423, 1
  %v427 = vperm.slane %v423, 2
  %v428 = vperm.slane %v423, 3
  %v513 = vunpack.c.l.b16 %v23
  %v514 = vunpack.c.h.b16 %v23
  %v515 = vunpack.c.l.b16 %v24
  %v516 = vunpack.c.h.b16 %v24
  %v517 = vunpack.c.l.b16 %v25
  %v518 = vunpack.c.h.b16 %v25
  %v519 = vunpack.c.l.b16 %v26
  %v520 = vunpack.c.h.b16 %v26
  %v521 = vunpack.c.l.b16 %v27
  %v522 = vunpack.c.h.b16 %v27
  %v523 = vunpack.c.l.b16 %v28
  %v524 = vunpack.c.h.b16 %v28
  %v525 = vunpack.c.l.b16 %v29
  %v526 = vunpack.c.h.b16 %v29
  %v527 = vunpack.c.l.b16 %v30
  %v528 = vunpack.c.h.b16 %v30
  %v529 = vunpack.c.l.b16 %v31
  %v530 = vunpack.c.h.b16 %v31
  %v531 = vunpack.c.l.b16 %v32
  %v532 = vunpack.c.h.b16 %v32
  %v533 = vunpack.c.l.b16 %v33
  %v534 = vunpack.c.h.b16 %v33
  %v535 = vunpack.c.l.b16 %v34
  %v536 = vunpack.c.h.b16 %v34
  %v537 = vunpack.c.l.b16 %v35
  %v538 = vunpack.c.h.b16 %v35
  %v539 = vunpack.c.l.b16 %v36
  %v540 = vunpack.c.h.b16 %v36
  %v541 = vunpack.c.l.b16 %v37
  %v542 = vunpack.c.h.b16 %v37
  %v543 = vunpack.c.l.b16 %v38
  %v544 = vunpack.c.h.b16 %v38
  %v545 = vunpack.c.l.b16 %v39
  %v546 = vunpack.c.h.b16 %v39
  %v547 = vunpack.c.l.b16 %v40
  %v548 = vunpack.c.h.b16 %v40
  %v549 = vunpack.c.l.b16 %v41
  %v550 = vunpack.c.h.b16 %v41
  %v551 = vunpack.c.l.b16 %v42
  %v552 = vunpack.c.h.b16 %v42
  %v553 = vunpack.c.l.b16 %v43
  %v554 = vunpack.c.h.b16 %v43
  %v555 = vunpack.c.l.b16 %v44
  %v556 = vunpack.c.h.b16 %v44
  %v557 = vunpack.c.l.b16 %v45
  %v558 = vunpack.c.h.b16 %v45
  %v559 = vunpack.c.l.b16 %v46
  %v560 = vunpack.c.h.b16 %v46
  %v561 = vunpack.c.l.b16 %v47
  %v562 = vunpack.c.h.b16 %v47
  %v563 = vunpack.c.l.b16 %v48
  %v564 = vunpack.c.h.b16 %v48
  %v565 = vunpack.c.l.b16 %v49
  %v566 = vunpack.c.h.b16 %v49
  %v567 = vunpack.c.l.b16 %v50
  %v568 = vunpack.c.h.b16 %v50
  %v569 = vunpack.c.l.b16 %v51
  %v570 = vunpack.c.h.b16 %v51
  %v571 = vunpack.c.l.b16 %v52
  %v572 = vunpack.c.h.b16 %v52
  %v573 = vunpack.c.l.b16 %v53
  %v574 = vunpack.c.h.b16 %v53
  %v575 = vunpack.c.l.b16 %v54
  %v576 = vunpack.c.h.b16 %v54
  %v577 = vunpack.c.l.b16 %v55
  %v578 = vunpack.c.h.b16 %v55
  %v579 = vunpack.c.l.b16 %v56
  %v580 = vunpack.c.h.b16 %v56
  %v581 = vunpack.c.l.b16 %v57
  %v582 = vunpack.c.h.b16 %v57
  %v583 = vunpack.c.l.b16 %v58
  %v584 = vunpack.c.h.b16 %v58
  %v585 = vunpack.c.l.b16 %v59
  %v586 = vunpack.c.h.b16 %v59
  %v587 = vunpack.c.l.b16 %v60
  %v588 = vunpack.c.h.b16 %v60
  %v589 = vunpack.c.l.b16 %v61
  %v590 = vunpack.c.h.b16 %v61
  %v591 = vunpack.c.l.b16 %v62
  %v592 = vunpack.c.h.b16 %v62
  %v593 = vunpack.c.l.b16 %v63
  %v594 = vunpack.c.h.b16 %v63
  %v595 = vunpack.c.l.b16 %v64
  %v596 = vunpack.c.h.b16 %v64
  %v597 = vunpack.c.l.b16 %v65
  %v598 = vunpack.c.h.b16 %v65
  %v599 = vunpack.c.l.b16 %v66
  %v600 = vunpack.c.h.b16 %v66
  %v601 = vunpack.c.l.b16 %v67
  %v602 = vunpack.c.h.b16 %v67
  %v603 = vunpack.c.l.b16 %v68
  %v604 = vunpack.c.h.b16 %v68
  %v605 = vunpack.c.l.b16 %v69
  %v606 = vunpack.c.h.b16 %v69
  %v607 = vunpack.c.l.b16 %v70
  %v608 = vunpack.c.h.b16 %v70
  %v609 = vunpack.c.l.b16 %v71
  %v610 = vunpack.c.h.b16 %v71
  %v611 = vunpack.c.l.b16 %v72
  %v612 = vunpack.c.h.b16 %v72
  %v613 = vunpack.c.l.b16 %v73
  %v614 = vunpack.c.h.b16 %v73
  %v615 = vunpack.c.l.b16 %v74
  %v616 = vunpack.c.h.b16 %v74
  %v617 = vunpack.c.l.b16 %v75
  %v618 = vunpack.c.h.b16 %v75
  %v619 = vunpack.c.l.b16 %v76
  %v620 = vunpack.c.h.b16 %v76
  %v621 = vunpack.c.l.b16 %v77
  %v622 = vunpack.c.h.b16 %v77
  %v623 = vunpack.c.l.b16 %v78
  %v624 = vunpack.c.h.b16 %v78
  %v625 = vunpack.c.l.b16 %v79
  %v626 = vunpack.c.h.b16 %v79
  %v627 = vunpack.c.l.b16 %v80
  %v628 = vunpack.c.h.b16 %v80
  %v629 = vunpack.c.l.b16 %v81
  %v630 = vunpack.c.h.b16 %v81
  %v631 = vunpack.c.l.b16 %v82
  %v632 = vunpack.c.h.b16 %v82
  %v633 = vunpack.c.l.b16 %v83
  %v634 = vunpack.c.h.b16 %v83
  %v635 = vunpack.c.l.b16 %v84
  %v636 = vunpack.c.h.b16 %v84
  %v637 = vunpack.c.l.b16 %v85
  %v638 = vunpack.c.h.b16 %v85
  %v639 = vunpack.c.l.b16 %v86
  %v640 = vunpack.c.h.b16 %v86
  %v641 = vunpack.c.l.b16 %v87
  %v642 = vunpack.c.h.b16 %v87
  %v643 = vunpack.c.l.b16 %v88
  %v644 = vunpack.c.h.b16 %v88
  %v645 = vunpack.c.l.b16 %v89
  %v646 = vunpack.c.h.b16 %v89
  %v647 = vunpack.c.l.b16 %v90
  %v648 = vunpack.c.h.b16 %v90
  %v649 = vunpack.c.l.b16 %v91
  %v650 = vunpack.c.h.b16 %v91
  %v651 = vunpack.c.l.b16 %v92
  %v652 = vunpack.c.h.b16 %v92
  %v653 = vunpack.c.l.b16 %v93
  %v654 = vunpack.c.h.b16 %v93
  %v655 = vunpack.c.l.b16 %v94
  %v656 = vunpack.c.h.b16 %v94
  %v657 = vunpack.c.l.b16 %v95
  %v658 = vunpack.c.h.b16 %v95
  %v659 = vunpack.c.l.b16 %v96
  %v660 = vunpack.c.h.b16 %v96
  %v661 = vunpack.c.l.b16 %v97
  %v662 = vunpack.c.h.b16 %v97
  %v663 = vunpack.c.l.b16 %v98
  %v664 = vunpack.c.h.b16 %v98
  %v665 = vunpack.c.l.b16 %v99
  %v666 = vunpack.c.h.b16 %v99
  %v667 = vunpack.c.l.b16 %v100
  %v668 = vunpack.c.h.b16 %v100
  %v669 = vunpack.c.l.b16 %v101
  %v670 = vunpack.c.h.b16 %v101
  %v671 = vunpack.c.l.b16 %v102
  %v672 = vunpack.c.h.b16 %v102
  %v673 = vpack.c.b16 %v523, %v513
  %v674 = vpack.c.b16 %v524, %v514
  %v675 = vpack.c.b16 %v525, %v515
  %v676 = vpack.c.b16 %v526, %v516
  %v677 = vpack.c.b16 %v527, %v517
  %v678 = vpack.c.b16 %v528, %v518
  %v679 = vpack.c.b16 %v529, %v519
  %v680 = vpack.c.b16 %v530, %v520
  %v681 = vpack.c.b16 %v531, %v521
  %v682 = vpack.c.b16 %v532, %v522
  %v683 = vpack.c.b16 %v543, %v533
  %v684 = vpack.c.b16 %v544, %v534
  %v685 = vpack.c.b16 %v545, %v535
  %v686 = vpack.c.b16 %v546, %v536
  %v687 = vpack.c.b16 %v547, %v537
  %v688 = vpack.c.b16 %v548, %v538
  %v689 = vpack.c.b16 %v549, %v539
  %v690 = vpack.c.b16 %v550, %v540
  %v691 = vpack.c.b16 %v551, %v541
  %v692 = vpack.c.b16 %v552, %v542
  %v693 = vpack.c.b16 %v563, %v553
  %v694 = vpack.c.b16 %v564, %v554
  %v695 = vpack.c.b16 %v565, %v555
  %v696 = vpack.c.b16 %v566, %v556
  %v697 = vpack.c.b16 %v567, %v557
  %v698 = vpack.c.b16 %v568, %v558
  %v699 = vpack.c.b16 %v569, %v559
  %v700 = vpack.c.b16 %v570, %v560
  %v701 = vpack.c.b16 %v571, %v561
  %v702 = vpack.c.b16 %v572, %v562
  %v703 = vpack.c.b16 %v583, %v573
  %v704 = vpack.c.b16 %v584, %v574
  %v705 = vpack.c.b16 %v585, %v575
  %v706 = vpack.c.b16 %v586, %v576
  %v707 = vpack.c.b16 %v587, %v577
  %v708 = vpack.c.b16 %v588, %v578
  %v709 = vpack.c.b16 %v589, %v579
  %v710 = vpack.c.b16 %v590, %v580
  %v711 = vpack.c.b16 %v591, %v581
  %v712 = vpack.c.b16 %v592, %v582
  %v713 = vpack.c.b16 %v603, %v593
  %v714 = vpack.c.b16 %v604, %v594
  %v715 = vpack.c.b16 %v605, %v595
  %v716 = vpack.c.b16 %v606, %v596
  %v717 = vpack.c.b16 %v607, %v597
  %v718 = vpack.c.b16 %v608, %v598
  %v719 = vpack.c.b16 %v609, %v599
  %v720 = vpack.c.b16 %v610, %v600
  %v721 = vpack.c.b16 %v611, %v601
  %v722 = vpack.c.b16 %v612, %v602
  %v723 = vpack.c.b16 %v623, %v613
  %v724 = vpack.c.b16 %v624, %v614
  %v725 = vpack.c.b16 %v625, %v615
  %v726 = vpack.c.b16 %v626, %v616
  %v727 = vpack.c.b16 %v627, %v617
  %v728 = vpack.c.b16 %v628, %v618
  %v729 = vpack.c.b16 %v629, %v619
  %v730 = vpack.c.b16 %v630, %v620
  %v731 = vpack.c.b16 %v631, %v621
  %v732 = vpack.c.b16 %v632, %v622
  %v733 = vpack.c.b16 %v643, %v633
  %v734 = vpack.c.b16 %v644, %v634
  %v735 = vpack.c.b16 %v645, %v635
  %v736 = vpack.c.b16 %v646, %v636
  %v737 = vpack.c.b16 %v647, %v637
  %v738 = vpack.c.b16 %v648, %v638
  %v739 = vpack.c.b16 %v649, %v639
  %v740 = vpack.c.b16 %v650, %v640
  %v741 = vpack.c.b16 %v651, %v641
  %v742 = vpack.c.b16 %v652, %v642
  %v743 = vpack.c.b16 %v663, %v653
  %v744 = vpack.c.b16 %v664, %v654
  %v745 = vpack.c.b16 %v665, %v655
  %v746 = vpack.c.b16 %v666, %v656
  %v747 = vpack.c.b16 %v667, %v657
  %v748 = vpack.c.b16 %v668, %v658
  %v749 = vpack.c.b16 %v669, %v659
  %v750 = vpack.c.b16 %v670, %v660
  %v751 = vpack.c.b16 %v671, %v661
  %v752 = vpack.c.b16 %v672, %v662
  %v1153 = vunpack.c.l.b16 %v103
  %v1154 = vunpack.c.h.b16 %v103
  %v1155 = vunpack.c.l.b16 %v104
  %v1156 = vunpack.c.h.b16 %v104
  %v1157 = vunpack.c.l.b16 %v105
  %v1158 = vunpack.c.h.b16 %v105
  %v1159 = vunpack.c.l.b16 %v106
  %v1160 = vunpack.c.h.b16 %v106
  %v1161 = vunpack.c.l.b16 %v107
  %v1162 = vunpack.c.h.b16 %v107
  %v1163 = vunpack.c.l.b16 %v108
  %v1164 = vunpack.c.h.b16 %v108
  %v1165 = vunpack.c.l.b16 %v109
  %v1166 = vunpack.c.h.b16 %v109
  %v1167 = vunpack.c.l.b16 %v110
  %v1168 = vunpack.c.h.b16 %v110
  %v1169 = vunpack.c.l.b16 %v111
  %v1170 = vunpack.c.h.b16 %v111
  %v1171 = vunpack.c.l.b16 %v112
  %v1172 = vunpack.c.h.b16 %v112
  %v1173 = vunpack.c.l.b16 %v113
  %v1174 = vunpack.c.h.b16 %v113
  %v1175 = vunpack.c.l.b16 %v114
  %v1176 = vunpack.c.h.b16 %v114
  %v1177 = vunpack.c.l.b16 %v115
  %v1178 = vunpack.c.h.b16 %v115
  %v1179 = vunpack.c.l.b16 %v116
  %v1180 = vunpack.c.h.b16 %v116
  %v1181 = vunpack.c.l.b16 %v117
  %v1182 = vunpack.c.h.b16 %v117
  %v1183 = vunpack.c.l.b16 %v118
  %v1184 = vunpack.c.h.b16 %v118
  %v1185 = vunpack.c.l.b16 %v119
  %v1186 = vunpack.c.h.b16 %v119
  %v1187 = vunpack.c.l.b16 %v120
  %v1188 = vunpack.c.h.b16 %v120
  %v1189 = vunpack.c.l.b16 %v121
  %v1190 = vunpack.c.h.b16 %v121
  %v1191 = vunpack.c.l.b16 %v122
  %v1192 = vunpack.c.h.b16 %v122
  %v1193 = vunpack.c.l.b16 %v123
  %v1194 = vunpack.c.h.b16 %v123
  %v1195 = vunpack.c.l.b16 %v124
  %v1196 = vunpack.c.h.b16 %v124
  %v1197 = vunpack.c.l.b16 %v125
  %v1198 = vunpack.c.h.b16 %v125
  %v1199 = vunpack.c.l.b16 %v126
  %v1200 = vunpack.c.h.b16 %v126
  %v1201 = vunpack.c.l.b16 %v127
  %v1202 = vunpack.c.h.b16 %v127
  %v1203 = vunpack.c.l.b16 %v128
  %v1204 = vunpack.c.h.b16 %v128
  %v1205 = vunpack.c.l.b16 %v129
  %v1206 = vunpack.c.h.b16 %v129
  %v1207 = vunpack.c.l.b16 %v130
  %v1208 = vunpack.c.h.b16 %v130
  %v1209 = vunpack.c.l.b16 %v131
  %v1210 = vunpack.c.h.b16 %v131
  %v1211 = vunpack.c.l.b16 %v132
  %v1212 = vunpack.c.h.b16 %v132
  %v1213 = vunpack.c.l.b16 %v133
  %v1214 = vunpack.c.h.b16 %v133
  %v1215 = vunpack.c.l.b16 %v134
  %v1216 = vunpack.c.h.b16 %v134
  %v1217 = vunpack.c.l.b16 %v135
  %v1218 = vunpack.c.h.b16 %v135
  %v1219 = vunpack.c.l.b16 %v136
  %v1220 = vunpack.c.h.b16 %v136
  %v1221 = vunpack.c.l.b16 %v137
  %v1222 = vunpack.c.h.b16 %v137
  %v1223 = vunpack.c.l.b16 %v138
  %v1224 = vunpack.c.h.b16 %v138
  %v1225 = vunpack.c.l.b16 %v139
  %v1226 = vunpack.c.h.b16 %v139
  %v1227 = vunpack.c.l.b16 %v140
  %v1228 = vunpack.c.h.b16 %v140
  %v1229 = vunpack.c.l.b16 %v141
  %v1230 = vunpack.c.h.b16 %v141
  %v1231 = vunpack.c.l.b16 %v142
  %v1232 = vunpack.c.h.b16 %v142
  %v1233 = vunpack.c.l.b16 %v143
  %v1234 = vunpack.c.h.b16 %v143
  %v1235 = vunpack.c.l.b16 %v144
  %v1236 = vunpack.c.h.b16 %v144
  %v1237 = vunpack.c.l.b16 %v145
  %v1238 = vunpack.c.h.b16 %v145
  %v1239 = vunpack.c.l.b16 %v146
  %v1240 = vunpack.c.h.b16 %v146
  %v1241 = vunpack.c.l.b16 %v147
  %v1242 = vunpack.c.h.b16 %v147
  %v1243 = vunpack.c.l.b16 %v148
  %v1244 = vunpack.c.h.b16 %v148
  %v1245 = vunpack.c.l.b16 %v149
  %v1246 = vunpack.c.h.b16 %v149
  %v1247 = vunpack.c.l.b16 %v150
  %v1248 = vunpack.c.h.b16 %v150
  %v1249 = vunpack.c.l.b16 %v151
  %v1250 = vunpack.c.h.b16 %v151
  %v1251 = vunpack.c.l.b16 %v152
  %v1252 = vunpack.c.h.b16 %v152
  %v1253 = vunpack.c.l.b16 %v153
  %v1254 = vunpack.c.h.b16 %v153
  %v1255 = vunpack.c.l.b16 %v154
  %v1256 = vunpack.c.h.b16 %v154
  %v1257 = vunpack.c.l.b16 %v155
  %v1258 = vunpack.c.h.b16 %v155
  %v1259 = vunpack.c.l.b16 %v156
  %v1260 = vunpack.c.h.b16 %v156
  %v1261 = vunpack.c.l.b16 %v157
  %v1262 = vunpack.c.h.b16 %v157
  %v1263 = vunpack.c.l.b16 %v158
  %v1264 = vunpack.c.h.b16 %v158
  %v1265 = vunpack.c.l.b16 %v159
  %v1266 = vunpack.c.h.b16 %v159
  %v1267 = vunpack.c.l.b16 %v160
  %v1268 = vunpack.c.h.b16 %v160
  %v1269 = vunpack.c.l.b16 %v161
  %v1270 = vunpack.c.h.b16 %v161
  %v1271 = vunpack.c.l.b16 %v162
  %v1272 = vunpack.c.h.b16 %v162
  %v1273 = vunpack.c.l.b16 %v163
  %v1274 = vunpack.c.h.b16 %v163
  %v1275 = vunpack.c.l.b16 %v164
  %v1276 = vunpack.c.h.b16 %v164
  %v1277 = vunpack.c.l.b16 %v165
  %v1278 = vunpack.c.h.b16 %v165
  %v1279 = vunpack.c.l.b16 %v166
  %v1280 = vunpack.c.h.b16 %v166
  %v1281 = vunpack.c.l.b16 %v167
  %v1282 = vunpack.c.h.b16 %v167
  %v1283 = vunpack.c.l.b16 %v168
  %v1284 = vunpack.c.h.b16 %v168
  %v1285 = vunpack.c.l.b16 %v169
  %v1286 = vunpack.c.h.b16 %v169
  %v1287 = vunpack.c.l.b16 %v170
  %v1288 = vunpack.c.h.b16 %v170
  %v1289 = vunpack.c.l.b16 %v171
  %v1290 = vunpack.c.h.b16 %v171
  %v1291 = vunpack.c.l.b16 %v172
  %v1292 = vunpack.c.h.b16 %v172
  %v1293 = vunpack.c.l.b16 %v173
  %v1294 = vunpack.c.h.b16 %v173
  %v1295 = vunpack.c.l.b16 %v174
  %v1296 = vunpack.c.h.b16 %v174
  %v1297 = vunpack.c.l.b16 %v175
  %v1298 = vunpack.c.h.b16 %v175
  %v1299 = vunpack.c.l.b16 %v176
  %v1300 = vunpack.c.h.b16 %v176
  %v1301 = vunpack.c.l.b16 %v177
  %v1302 = vunpack.c.h.b16 %v177
  %v1303 = vunpack.c.l.b16 %v178
  %v1304 = vunpack.c.h.b16 %v178
  %v1305 = vunpack.c.l.b16 %v179
  %v1306 = vunpack.c.h.b16 %v179
  %v1307 = vunpack.c.l.b16 %v180
  %v1308 = vunpack.c.h.b16 %v180
  %v1309 = vunpack.c.l.b16 %v181
  %v1310 = vunpack.c.h.b16 %v181
  %v1311 = vunpack.c.l.b16 %v182
  %v1312 = vunpack.c.h.b16 %v182
  %v1313 = vunpack.c.l.b16 %v183
  %v1314 = vunpack.c.h.b16 %v183
  %v1315 = vunpack.c.l.b16 %v184
  %v1316 = vunpack.c.h.b16 %v184
  %v1317 = vunpack.c.l.b16 %v185
  %v1318 = vunpack.c.h.b16 %v185
  %v1319 = vunpack.c.l.b16 %v186
  %v1320 = vunpack.c.h.b16 %v186
  %v1321 = vunpack.c.l.b16 %v187
  %v1322 = vunpack.c.h.b16 %v187
  %v1323 = vunpack.c.l.b16 %v188
  %v1324 = vunpack.c.h.b16 %v188
  %v1325 = vunpack.c.l.b16 %v189
  %v1326 = vunpack.c.h.b16 %v189
  %v1327 = vunpack.c.l.b16 %v190
  %v1328 = vunpack.c.h.b16 %v190
  %v1329 = vunpack.c.l.b16 %v191
  %v1330 = vunpack.c.h.b16 %v191
  %v1331 = vunpack.c.l.b16 %v192
  %v1332 = vunpack.c.h.b16 %v192
  %v1333 = vunpack.c.l.b16 %v193
  %v1334 = vunpack.c.h.b16 %v193
  %v1335 = vunpack.c.l.b16 %v194
  %v1336 = vunpack.c.h.b16 %v194
  %v1337 = vunpack.c.l.b16 %v195
  %v1338 = vunpack.c.h.b16 %v195
  %v1339 = vunpack.c.l.b16 %v196
  %v1340 = vunpack.c.h.b16 %v196
  %v1341 = vunpack.c.l.b16 %v197
  %v1342 = vunpack.c.h.b16 %v197
  %v1343 = vunpack.c.l.b16 %v198
  %v1344 = vunpack.c.h.b16 %v198
  %v1345 = vunpack.c.l.b16 %v199
  %v1346 = vunpack.c.h.b16 %v199
  %v1347 = vunpack.c.l.b16 %v200
  %v1348 = vunpack.c.h.b16 %v200
  %v1349 = vunpack.c.l.b16 %v201
  %v1350 = vunpack.c.h.b16 %v201
  %v1351 = vunpack.c.l.b16 %v202
  %v1352 = vunpack.c.h.b16 %v202
  %v1353 = vunpack.c.l.b16 %v203
  %v1354 = vunpack.c.h.b16 %v203
  %v1355 = vunpack.c.l.b16 %v204
  %v1356 = vunpack.c.h.b16 %v204
  %v1357 = vunpack.c.l.b16 %v205
  %v1358 = vunpack.c.h.b16 %v205
  %v1359 = vunpack.c.l.b16 %v206
  %v1360 = vunpack.c.h.b16 %v206
  %v1361 = vunpack.c.l.b16 %v207
  %v1362 = vunpack.c.h.b16 %v207
  %v1363 = vunpack.c.l.b16 %v208
  %v1364 = vunpack.c.h.b16 %v208
  %v1365 = vunpack.c.l.b16 %v209
  %v1366 = vunpack.c.h.b16 %v209
  %v1367 = vunpack.c.l.b16 %v210
  %v1368 = vunpack.c.h.b16 %v210
  %v1369 = vunpack.c.l.b16 %v211
  %v1370 = vunpack.c.h.b16 %v211
  %v1371 = vunpack.c.l.b16 %v212
  %v1372 = vunpack.c.h.b16 %v212
  %v1373 = vunpack.c.l.b16 %v213
  %v1374 = vunpack.c.h.b16 %v213
  %v1375 = vunpack.c.l.b16 %v214
  %v1376 = vunpack.c.h.b16 %v214
  %v1377 = vunpack.c.l.b16 %v215
  %v1378 = vunpack.c.h.b16 %v215
  %v1379 = vunpack.c.l.b16 %v216
  %v1380 = vunpack.c.h.b16 %v216
  %v1381 = vunpack.c.l.b16 %v217
  %v1382 = vunpack.c.h.b16 %v217
  %v1383 = vunpack.c.l.b16 %v218
  %v1384 = vunpack.c.h.b16 %v218
  %v1385 = vunpack.c.l.b16 %v219
  %v1386 = vunpack.c.h.b16 %v219
  %v1387 = vunpack.c.l.b16 %v220
  %v1388 = vunpack.c.h.b16 %v220
  %v1389 = vunpack.c.l.b16 %v221
  %v1390 = vunpack.c.h.b16 %v221
  %v1391 = vunpack.c.l.b16 %v222
  %v1392 = vunpack.c.h.b16 %v222
  %v1393 = vunpack.c.l.b16 %v223
  %v1394 = vunpack.c.h.b16 %v223
  %v1395 = vunpack.c.l.b16 %v224
  %v1396 = vunpack.c.h.b16 %v224
  %v1397 = vunpack.c.l.b16 %v225
  %v1398 = vunpack.c.h.b16 %v225
  %v1399 = vunpack.c.l.b16 %v226
  %v1400 = vunpack.c.h.b16 %v226
  %v1401 = vunpack.c.l.b16 %v227
  %v1402 = vunpack.c.h.b16 %v227
  %v1403 = vunpack.c.l.b16 %v228
  %v1404 = vunpack.c.h.b16 %v228
  %v1405 = vunpack.c.l.b16 %v229
  %v1406 = vunpack.c.h.b16 %v229
  %v1407 = vunpack.c.l.b16 %v230
  %v1408 = vunpack.c.h.b16 %v230
  %v1409 = vunpack.c.l.b16 %v231
  %v1410 = vunpack.c.h.b16 %v231
  %v1411 = vunpack.c.l.b16 %v232
  %v1412 = vunpack.c.h.b16 %v232
  %v1413 = vunpack.c.l.b16 %v233
  %v1414 = vunpack.c.h.b16 %v233
  %v1415 = vunpack.c.l.b16 %v234
  %v1416 = vunpack.c.h.b16 %v234
  %v1417 = vunpack.c.l.b16 %v235
  %v1418 = vunpack.c.h.b16 %v235
  %v1419 = vunpack.c.l.b16 %v236
  %v1420 = vunpack.c.h.b16 %v236
  %v1421 = vunpack.c.l.b16 %v237
  %v1422 = vunpack.c.h.b16 %v237
  %v1423 = vunpack.c.l.b16 %v238
  %v1424 = vunpack.c.h.b16 %v238
  %v1425 = vunpack.c.l.b16 %v239
  %v1426 = vunpack.c.h.b16 %v239
  %v1427 = vunpack.c.l.b16 %v240
  %v1428 = vunpack.c.h.b16 %v240
  %v1429 = vunpack.c.l.b16 %v241
  %v1430 = vunpack.c.h.b16 %v241
  %v1431 = vunpack.c.l.b16 %v242
  %v1432 = vunpack.c.h.b16 %v242
  %v1433 = vunpack.c.l.b16 %v243
  %v1434 = vunpack.c.h.b16 %v243
  %v1435 = vunpack.c.l.b16 %v244
  %v1436 = vunpack.c.h.b16 %v244
  %v1437 = vunpack.c.l.b16 %v245
  %v1438 = vunpack.c.h.b16 %v245
  %v1439 = vunpack.c.l.b16 %v246
  %v1440 = vunpack.c.h.b16 %v246
  %v1441 = vunpack.c.l.b16 %v247
  %v1442 = vunpack.c.h.b16 %v247
  %v1443 = vunpack.c.l.b16 %v248
  %v1444 = vunpack.c.h.b16 %v248
  %v1445 = vunpack.c.l.b16 %v249
  %v1446 = vunpack.c.h.b16 %v249
  %v1447 = vunpack.c.l.b16 %v250
  %v1448 = vunpack.c.h.b16 %v250
  %v1449 = vunpack.c.l.b16 %v251
  %v1450 = vunpack.c.h.b16 %v251
  %v1451 = vunpack.c.l.b16 %v252
  %v1452 = vunpack.c.h.b16 %v252
  %v1453 = vunpack.c.l.b16 %v253
  %v1454 = vunpack.c.h.b16 %v253
  %v1455 = vunpack.c.l.b16 %v254
  %v1456 = vunpack.c.h.b16 %v254
  %v1457 = vunpack.c.l.b16 %v255
  %v1458 = vunpack.c.h.b16 %v255
  %v1459 = vunpack.c.l.b16 %v256
  %v1460 = vunpack.c.h.b16 %v256
  %v1461 = vunpack.c.l.b16 %v257
  %v1462 = vunpack.c.h.b16 %v257
  %v1463 = vunpack.c.l.b16 %v258
  %v1464 = vunpack.c.h.b16 %v258
  %v1465 = vunpack.c.l.b16 %v259
  %v1466 = vunpack.c.h.b16 %v259
  %v1467 = vunpack.c.l.b16 %v260
  %v1468 = vunpack.c.h.b16 %v260
  %v1469 = vunpack.c.l.b16 %v261
  %v1470 = vunpack.c.h.b16 %v261
  %v1471 = vunpack.c.l.b16 %v262
  %v1472 = vunpack.c.h.b16 %v262
  %v1473 = vunpack.c.l.b16 %v263
  %v1474 = vunpack.c.h.b16 %v263
  %v1475 = vunpack.c.l.b16 %v264
  %v1476 = vunpack.c.h.b16 %v264
  %v1477 = vunpack.c.l.b16 %v265
  %v1478 = vunpack.c.h.b16 %v265
  %v1479 = vunpack.c.l.b16 %v266
  %v1480 = vunpack.c.h.b16 %v266
  %v1481 = vunpack.c.l.b16 %v267
  %v1482 = vunpack.c.h.b16 %v267
  %v1483 = vunpack.c.l.b16 %v268
  %v1484 = vunpack.c.h.b16 %v268
  %v1485 = vunpack.c.l.b16 %v269
  %v1486 = vunpack.c.h.b16 %v269
  %v1487 = vunpack.c.l.b16 %v270
  %v1488 = vunpack.c.h.b16 %v270
  %v1489 = vunpack.c.l.b16 %v271
  %v1490 = vunpack.c.h.b16 %v271
  %v1491 = vunpack.c.l.b16 %v272
  %v1492 = vunpack.c.h.b16 %v272
  %v1493 = vunpack.c.l.b16 %v273
  %v1494 = vunpack.c.h.b16 %v273
  %v1495 = vunpack.c.l.b16 %v274
  %v1496 = vunpack.c.h.b16 %v274
  %v1497 = vunpack.c.l.b16 %v275
  %v1498 = vunpack.c.h.b16 %v275
  %v1499 = vunpack.c.l.b16 %v276
  %v1500 = vunpack.c.h.b16 %v276
  %v1501 = vunpack.c.l.b16 %v277
  %v1502 = vunpack.c.h.b16 %v277
  %v1503 = vunpack.c.l.b16 %v278
  %v1504 = vunpack.c.h.b16 %v278
  %v1505 = vunpack.c.l.b16 %v279
  %v1506 = vunpack.c.h.b16 %v279
  %v1507 = vunpack.c.l.b16 %v280
  %v1508 = vunpack.c.h.b16 %v280
  %v1509 = vunpack.c.l.b16 %v281
  %v1510 = vunpack.c.h.b16 %v281
  %v1511 = vunpack.c.l.b16 %v282
  %v1512 = vunpack.c.h.b16 %v282
  %v1513 = vunpack.c.l.b16 %v283
  %v1514 = vunpack.c.h.b16 %v283
  %v1515 = vunpack.c.l.b16 %v284
  %v1516 = vunpack.c.h.b16 %v284
  %v1517 = vunpack.c.l.b16 %v285
  %v1518 = vunpack.c.h.b16 %v285
  %v1519 = vunpack.c.l.b16 %v286
  %v1520 = vunpack.c.h.b16 %v286
  %v1521 = vunpack.c.l.b16 %v287
  %v1522 = vunpack.c.h.b16 %v287
  %v1523 = vunpack.c.l.b16 %v288
  %v1524 = vunpack.c.h.b16 %v288
  %v1525 = vunpack.c.l.b16 %v289
  %v1526 = vunpack.c.h.b16 %v289
  %v1527 = vunpack.c.l.b16 %v290
  %v1528 = vunpack.c.h.b16 %v290
  %v1529 = vunpack.c.l.b16 %v291
  %v1530 = vunpack.c.h.b16 %v291
  %v1531 = vunpack.c.l.b16 %v292
  %v1532 = vunpack.c.h.b16 %v292
  %v1533 = vunpack.c.l.b16 %v293
  %v1534 = vunpack.c.h.b16 %v293
  %v1535 = vunpack.c.l.b16 %v294
  %v1536 = vunpack.c.h.b16 %v294
  %v1537 = vunpack.c.l.b16 %v295
  %v1538 = vunpack.c.h.b16 %v295
  %v1539 = vunpack.c.l.b16 %v296
  %v1540 = vunpack.c.h.b16 %v296
  %v1541 = vunpack.c.l.b16 %v297
  %v1542 = vunpack.c.h.b16 %v297
  %v1543 = vunpack.c.l.b16 %v298
  %v1544 = vunpack.c.h.b16 %v298
  %v1545 = vunpack.c.l.b16 %v299
  %v1546 = vunpack.c.h.b16 %v299
  %v1547 = vunpack.c.l.b16 %v300
  %v1548 = vunpack.c.h.b16 %v300
  %v1549 = vunpack.c.l.b16 %v301
  %v1550 = vunpack.c.h.b16 %v301
  %v1551 = vunpack.c.l.b16 %v302
  %v1552 = vunpack.c.h.b16 %v302
  %v1553 = vunpack.c.l.b16 %v303
  %v1554 = vunpack.c.h.b16 %v303
  %v1555 = vunpack.c.l.b16 %v304
  %v1556 = vunpack.c.h.b16 %v304
  %v1557 = vunpack.c.l.b16 %v305
  %v1558 = vunpack.c.h.b16 %v305
  %v1559 = vunpack.c.l.b16 %v306
  %v1560 = vunpack.c.h.b16 %v306
  %v1561 = vunpack.c.l.b16 %v307
  %v1562 = vunpack.c.h.b16 %v307
  %v1563 = vunpack.c.l.b16 %v308
  %v1564 = vunpack.c.h.b16 %v308
  %v1565 = vunpack.c.l.b16 %v309
  %v1566 = vunpack.c.h.b16 %v309
  %v1567 = vunpack.c.l.b16 %v310
  %v1568 = vunpack.c.h.b16 %v310
  %v1569 = vunpack.c.l.b16 %v311
  %v1570 = vunpack.c.h.b16 %v311
  %v1571 = vunpack.c.l.b16 %v312
  %v1572 = vunpack.c.h.b16 %v312
  %v1573 = vunpack.c.l.b16 %v313
  %v1574 = vunpack.c.h.b16 %v313
  %v1575 = vunpack.c.l.b16 %v314
  %v1576 = vunpack.c.h.b16 %v314
  %v1577 = vunpack.c.l.b16 %v315
  %v1578 = vunpack.c.h.b16 %v315
  %v1579 = vunpack.c.l.b16 %v316
  %v1580 = vunpack.c.h.b16 %v316
  %v1581 = vunpack.c.l.b16 %v317
  %v1582 = vunpack.c.h.b16 %v317
  %v1583 = vunpack.c.l.b16 %v318
  %v1584 = vunpack.c.h.b16 %v318
  %v1585 = vunpack.c.l.b16 %v319
  %v1586 = vunpack.c.h.b16 %v319
  %v1587 = vunpack.c.l.b16 %v320
  %v1588 = vunpack.c.h.b16 %v320
  %v1589 = vunpack.c.l.b16 %v321
  %v1590 = vunpack.c.h.b16 %v321
  %v1591 = vunpack.c.l.b16 %v322
  %v1592 = vunpack.c.h.b16 %v322
  %v1593 = vunpack.c.l.b16 %v323
  %v1594 = vunpack.c.h.b16 %v323
  %v1595 = vunpack.c.l.b16 %v324
  %v1596 = vunpack.c.h.b16 %v324
  %v1597 = vunpack.c.l.b16 %v325
  %v1598 = vunpack.c.h.b16 %v325
  %v1599 = vunpack.c.l.b16 %v326
  %v1600 = vunpack.c.h.b16 %v326
  %v1601 = vunpack.c.l.b16 %v327
  %v1602 = vunpack.c.h.b16 %v327
  %v1603 = vunpack.c.l.b16 %v328
  %v1604 = vunpack.c.h.b16 %v328
  %v1605 = vunpack.c.l.b16 %v329
  %v1606 = vunpack.c.h.b16 %v329
  %v1607 = vunpack.c.l.b16 %v330
  %v1608 = vunpack.c.h.b16 %v330
  %v1609 = vunpack.c.l.b16 %v331
  %v1610 = vunpack.c.h.b16 %v331
  %v1611 = vunpack.c.l.b16 %v332
  %v1612 = vunpack.c.h.b16 %v332
  %v1613 = vunpack.c.l.b16 %v333
  %v1614 = vunpack.c.h.b16 %v333
  %v1615 = vunpack.c.l.b16 %v334
  %v1616 = vunpack.c.h.b16 %v334
  %v1617 = vunpack.c.l.b16 %v335
  %v1618 = vunpack.c.h.b16 %v335
  %v1619 = vunpack.c.l.b16 %v336
  %v1620 = vunpack.c.h.b16 %v336
  %v1621 = vunpack.c.l.b16 %v337
  %v1622 = vunpack.c.h.b16 %v337
  %v1623 = vunpack.c.l.b16 %v338
  %v1624 = vunpack.c.h.b16 %v338
  %v1625 = vunpack.c.l.b16 %v339
  %v1626 = vunpack.c.h.b16 %v339
  %v1627 = vunpack.c.l.b16 %v340
  %v1628 = vunpack.c.h.b16 %v340
  %v1629 = vunpack.c.l.b16 %v341
  %v1630 = vunpack.c.h.b16 %v341
  %v1631 = vunpack.c.l.b16 %v342
  %v1632 = vunpack.c.h.b16 %v342
  %v1633 = vunpack.c.l.b16 %v343
  %v1634 = vunpack.c.h.b16 %v343
  %v1635 = vunpack.c.l.b16 %v344
  %v1636 = vunpack.c.h.b16 %v344
  %v1637 = vunpack.c.l.b16 %v345
  %v1638 = vunpack.c.h.b16 %v345
  %v1639 = vunpack.c.l.b16 %v346
  %v1640 = vunpack.c.h.b16 %v346
  %v1641 = vunpack.c.l.b16 %v347
  %v1642 = vunpack.c.h.b16 %v347
  %v1643 = vunpack.c.l.b16 %v348
  %v1644 = vunpack.c.h.b16 %v348
  %v1645 = vunpack.c.l.b16 %v349
  %v1646 = vunpack.c.h.b16 %v349
  %v1647 = vunpack.c.l.b16 %v350
  %v1648 = vunpack.c.h.b16 %v350
  %v1649 = vunpack.c.l.b16 %v351
  %v1650 = vunpack.c.h.b16 %v351
  %v1651 = vunpack.c.l.b16 %v352
  %v1652 = vunpack.c.h.b16 %v352
  %v1653 = vunpack.c.l.b16 %v353
  %v1654 = vunpack.c.h.b16 %v353
  %v1655 = vunpack.c.l.b16 %v354
  %v1656 = vunpack.c.h.b16 %v354
  %v1657 = vunpack.c.l.b16 %v355
  %v1658 = vunpack.c.h.b16 %v355
  %v1659 = vunpack.c.l.b16 %v356
  %v1660 = vunpack.c.h.b16 %v356
  %v1661 = vunpack.c.l.b16 %v357
  %v1662 = vunpack.c.h.b16 %v357
  %v1663 = vunpack.c.l.b16 %v358
  %v1664 = vunpack.c.h.b16 %v358
  %v1665 = vunpack.c.l.b16 %v359
  %v1666 = vunpack.c.h.b16 %v359
  %v1667 = vunpack.c.l.b16 %v360
  %v1668 = vunpack.c.h.b16 %v360
  %v1669 = vunpack.c.l.b16 %v361
  %v1670 = vunpack.c.h.b16 %v361
  %v1671 = vunpack.c.l.b16 %v362
  %v1672 = vunpack.c.h.b16 %v362
  %v1673 = vunpack.c.l.b16 %v363
  %v1674 = vunpack.c.h.b16 %v363
  %v1675 = vunpack.c.l.b16 %v364
  %v1676 = vunpack.c.h.b16 %v364
  %v1677 = vunpack.c.l.b16 %v365
  %v1678 = vunpack.c.h.b16 %v365
  %v1679 = vunpack.c.l.b16 %v366
  %v1680 = vunpack.c.h.b16 %v366
  %v1681 = vunpack.c.l.b16 %v367
  %v1682 = vunpack.c.h.b16 %v367
  %v1683 = vunpack.c.l.b16 %v368
  %v1684 = vunpack.c.h.b16 %v368
  %v1685 = vunpack.c.l.b16 %v369
  %v1686 = vunpack.c.h.b16 %v369
  %v1687 = vunpack.c.l.b16 %v370
  %v1688 = vunpack.c.h.b16 %v370
  %v1689 = vunpack.c.l.b16 %v371
  %v1690 = vunpack.c.h.b16 %v371
  %v1691 = vunpack.c.l.b16 %v372
  %v1692 = vunpack.c.h.b16 %v372
  %v1693 = vunpack.c.l.b16 %v373
  %v1694 = vunpack.c.h.b16 %v373
  %v1695 = vunpack.c.l.b16 %v374
  %v1696 = vunpack.c.h.b16 %v374
  %v1697 = vunpack.c.l.b16 %v375
  %v1698 = vunpack.c.h.b16 %v375
  %v1699 = vunpack.c.l.b16 %v376
  %v1700 = vunpack.c.h.b16 %v376
  %v1701 = vunpack.c.l.b16 %v377
  %v1702 = vunpack.c.h.b16 %v377
  %v1703 = vunpack.c.l.b16 %v378
  %v1704 = vunpack.c.h.b16 %v378
  %v1705 = vunpack.c.l.b16 %v379
  %v1706 = vunpack.c.h.b16 %v379
  %v1707 = vunpack.c.l.b16 %v380
  %v1708 = vunpack.c.h.b16 %v380
  %v1709 = vunpack.c.l.b16 %v381
  %v1710 = vunpack.c.h.b16 %v381
  %v1711 = vunpack.c.l.b16 %v382
  %v1712 = vunpack.c.h.b16 %v382
  %v1713 = vunpack.c.l.b16 %v383
  %v1714 = vunpack.c.h.b16 %v383
  %v1715 = vunpack.c.l.b16 %v384
  %v1716 = vunpack.c.h.b16 %v384
  %v1717 = vunpack.c.l.b16 %v385
  %v1718 = vunpack.c.h.b16 %v385
  %v1719 = vunpack.c.l.b16 %v386
  %v1720 = vunpack.c.h.b16 %v386
  %v1721 = vunpack.c.l.b16 %v387
  %v1722 = vunpack.c.h.b16 %v387
  %v1723 = vunpack.c.l.b16 %v388
  %v1724 = vunpack.c.h.b16 %v388
  %v1725 = vunpack.c.l.b16 %v389
  %v1726 = vunpack.c.h.b16 %v389
  %v1727 = vunpack.c.l.b16 %v390
  %v1728 = vunpack.c.h.b16 %v390
  %v1729 = vunpack.c.l.b16 %v391
  %v1730 = vunpack.c.h.b16 %v391
  %v1731 = vunpack.c.l.b16 %v392
  %v1732 = vunpack.c.h.b16 %v392
  %v1733 = vunpack.c.l.b16 %v393
  %v1734 = vunpack.c.h.b16 %v393
  %v1735 = vunpack.c.l.b16 %v394
  %v1736 = vunpack.c.h.b16 %v394
  %v1737 = vunpack.c.l.b16 %v395
  %v1738 = vunpack.c.h.b16 %v395
  %v1739 = vunpack.c.l.b16 %v396
  %v1740 = vunpack.c.h.b16 %v396
  %v1741 = vunpack.c.l.b16 %v397
  %v1742 = vunpack.c.h.b16 %v397
  %v1743 = vunpack.c.l.b16 %v398
  %v1744 = vunpack.c.h.b16 %v398
  %v1745 = vunpack.c.l.b16 %v399
  %v1746 = vunpack.c.h.b16 %v399
  %v1747 = vunpack.c.l.b16 %v400
  %v1748 = vunpack.c.h.b16 %v400
  %v1749 = vunpack.c.l.b16 %v401
  %v1750 = vunpack.c.h.b16 %v401
  %v1751 = vunpack.c.l.b16 %v402
  %v1752 = vunpack.c.h.b16 %v402
  %v1753 = vunpack.c.l.b16 %v403
  %v1754 = vunpack.c.h.b16 %v403
  %v1755 = vunpack.c.l.b16 %v404
  %v1756 = vunpack.c.h.b16 %v404
  %v1757 = vunpack.c.l.b16 %v405
  %v1758 = vunpack.c.h.b16 %v405
  %v1759 = vunpack.c.l.b16 %v406
  %v1760 = vunpack.c.h.b16 %v406
  %v1761 = vunpack.c.l.b16 %v407
  %v1762 = vunpack.c.h.b16 %v407
  %v1763 = vunpack.c.l.b16 %v408
  %v1764 = vunpack.c.h.b16 %v408
  %v1765 = vunpack.c.l.b16 %v409
  %v1766 = vunpack.c.h.b16 %v409
  %v1767 = vunpack.c.l.b16 %v410
  %v1768 = vunpack.c.h.b16 %v410
  %v1769 = vunpack.c.l.b16 %v411
  %v1770 = vunpack.c.h.b16 %v411
  %v1771 = vunpack.c.l.b16 %v412
  %v1772 = vunpack.c.h.b16 %v412
  %v1773 = vunpack.c.l.b16 %v413
  %v1774 = vunpack.c.h.b16 %v413
  %v1775 = vunpack.c.l.b16 %v414
  %v1776 = vunpack.c.h.b16 %v414
  %v1777 = vunpack.c.l.b16 %v415
  %v1778 = vunpack.c.h.b16 %v415
  %v1779 = vunpack.c.l.b16 %v416
  %v1780 = vunpack.c.h.b16 %v416
  %v1781 = vunpack.c.l.b16 %v417
  %v1782 = vunpack.c.h.b16 %v417
  %v1783 = vunpack.c.l.b16 %v418
  %v1784 = vunpack.c.h.b16 %v418
  %v1785 = vunpack.c.l.b16 %v419
  %v1786 = vunpack.c.h.b16 %v419
  %v1787 = vunpack.c.l.b16 %v420
  %v1788 = vunpack.c.h.b16 %v420
  %v1789 = vunpack.c.l.b16 %v421
  %v1790 = vunpack.c.h.b16 %v421
  %v1791 = vunpack.c.l.b16 %v422
  %v1792 = vunpack.c.h.b16 %v422
  %v1793 = vpack.c.b16 %v1157, %v1153
  %v1794 = vpack.c.b16 %v1158, %v1154
  %v1795 = vpack.c.b16 %v1159, %v1155
  %v1796 = vpack.c.b16 %v1160, %v1156
  %v1797 = vpack.c.b16 %v1165, %v1161
  %v1798 = vpack.c.b16 %v1166, %v1162
  %v1799 = vpack.c.b16 %v1167, %v1163
  %v1800 = vpack.c.b16 %v1168, %v1164
  %v1801 = vpack.c.b16 %v1173, %v1169
  %v1802 = vpack.c.b16 %v1174, %v1170
  %v1803 = vpack.c.b16 %v1175, %v1171
  %v1804 = vpack.c.b16 %v1176, %v1172
  %v1805 = vpack.c.b16 %v1181, %v1177
  %v1806 = vpack.c.b16 %v1182, %v1178
  %v1807 = vpack.c.b16 %v1183, %v1179
  %v1808 = vpack.c.b16 %v1184, %v1180
  %v1809 = vpack.c.b16 %v1189, %v1185
  %v1810 = vpack.c.b16 %v1190, %v1186
  %v1811 = vpack.c.b16 %v1191, %v1187
  %v1812 = vpack.c.b16 %v1192, %v1188
  %v1813 = vpack.c.b16 %v1197, %v1193
  %v1814 = vpack.c.b16 %v1198, %v1194
  %v1815 = vpack.c.b16 %v1199, %v1195
  %v1816 = vpack.c.b16 %v1200, %v1196
  %v1817 = vpack.c.b16 %v1205, %v1201
  %v1818 = vpack.c.b16 %v1206, %v1202
  %v1819 = vpack.c.b16 %v1207, %v1203
  %v1820 = vpack.c.b16 %v1208, %v1204
  %v1821 = vpack.c.b16 %v1213, %v1209
  %v1822 = vpack.c.b16 %v1214, %v1210
  %v1823 = vpack.c.b16 %v1215, %v1211
  %v1824 = vpack.c.b16 %v1216, %v1212
  %v1825 = vpack.c.b16 %v1221, %v1217
  %v1826 = vpack.c.b16 %v1222, %v1218
  %v1827 = vpack.c.b16 %v1223, %v1219
  %v1828 = vpack.c.b16 %v1224, %v1220
  %v1829 = vpack.c.b16 %v1229, %v1225
  %v1830 = vpack.c.b16 %v1230, %v1226
  %v1831 = vpack.c.b16 %v1231, %v1227
  %v1832 = vpack.c.b16 %v1232, %v1228
  %v1833 = vpack.c.b16 %v1237, %v1233
  %v1834 = vpack.c.b16 %v1238, %v1234
  %v1835 = vpack.c.b16 %v1239, %v1235
  %v1836 = vpack.c.b16 %v1240, %v1236
  %v1837 = vpack.c.b16 %v1245, %v1241
  %v1838 = vpack.c.b16 %v1246, %v1242
  %v1839 = vpack.c.b16 %v1247, %v1243
  %v1840 = vpack.c.b16 %v1248, %v1244
  %v1841 = vpack.c.b16 %v1253, %v1249
  %v1842 = vpack.c.b16 %v1254, %v1250
  %v1843 = vpack.c.b16 %v1255, %v1251
  %v1844 = vpack.c.b16 %v1256, %v1252
  %v1845 = vpack.c.b16 %v1261, %v1257
  %v1846 = vpack.c.b16 %v1262, %v1258
  %v1847 = vpack.c.b16 %v1263, %v1259
  %v1848 = vpack.c.b16 %v1264, %v1260
  %v1849 = vpack.c.b16 %v1269, %v1265
  %v1850 = vpack.c.b16 %v1270, %v1266
  %v1851 = vpack.c.b16 %v1271, %v1267
  %v1852 = vpack.c.b16 %v1272, %v1268
  %v1853 = vpack.c.b16 %v1277, %v1273
  %v1854 = vpack.c.b16 %v1278, %v1274
  %v1855 = vpack.c.b16 %v1279, %v1275
  %v1856 = vpack.c.b16 %v1280, %v1276
  %v1857 = vpack.c.b16 %v1285, %v1281
  %v1858 = vpack.c.b16 %v1286, %v1282
  %v1859 = vpack.c.b16 %v1287, %v1283
  %v1860 = vpack.c.b16 %v1288, %v1284
  %v1861 = vpack.c.b16 %v1293, %v1289
  %v1862 = vpack.c.b16 %v1294, %v1290
  %v1863 = vpack.c.b16 %v1295, %v1291
  %v1864 = vpack.c.b16 %v1296, %v1292
  %v1865 = vpack.c.b16 %v1301, %v1297
  %v1866 = vpack.c.b16 %v1302, %v1298
  %v1867 = vpack.c.b16 %v1303, %v1299
  %v1868 = vpack.c.b16 %v1304, %v1300
  %v1869 = vpack.c.b16 %v1309, %v1305
  %v1870 = vpack.c.b16 %v1310, %v1306
  %v1871 = vpack.c.b16 %v1311, %v1307
  %v1872 = vpack.c.b16 %v1312, %v1308
  %v1873 = vpack.c.b16 %v1317, %v1313
  %v1874 = vpack.c.b16 %v1318, %v1314
  %v1875 = vpack.c.b16 %v1319, %v1315
  %v1876 = vpack.c.b16 %v1320, %v1316
  %v1877 = vpack.c.b16 %v1325, %v1321
  %v1878 = vpack.c.b16 %v1326, %v1322
  %v1879 = vpack.c.b16 %v1327, %v1323
  %v1880 = vpack.c.b16 %v1328, %v1324
  %v1881 = vpack.c.b16 %v1333, %v1329
  %v1882 = vpack.c.b16 %v1334, %v1330
  %v1883 = vpack.c.b16 %v1335, %v1331
  %v1884 = vpack.c.b16 %v1336, %v1332
  %v1885 = vpack.c.b16 %v1341, %v1337
  %v1886 = vpack.c.b16 %v1342, %v1338
  %v1887 = vpack.c.b16 %v1343, %v1339
  %v1888 = vpack.c.b16 %v1344, %v1340
  %v1889 = vpack.c.b16 %v1349, %v1345
  %v1890 = vpack.c.b16 %v1350, %v1346
  %v1891 = vpack.c.b16 %v1351, %v1347
  %v1892 = vpack.c.b16 %v1352, %v1348
  %v1893 = vpack.c.b16 %v1357, %v1353
  %v1894 = vpack.c.b16 %v1358, %v1354
  %v1895 = vpack.c.b16 %v1359, %v1355
  %v1896 = vpack.c.b16 %v1360, %v1356
  %v1897 = vpack.c.b16 %v1365, %v1361
  %v1898 = vpack.c.b16 %v1366, %v1362
  %v1899 = vpack.c.b16 %v1367, %v1363
  %v1900 = vpack.c.b16 %v1368, %v1364
  %v1901 = vpack.c.b16 %v1373, %v1369
  %v1902 = vpack.c.b16 %v1374, %v1370
  %v1903 = vpack.c.b16 %v1375, %v1371
  %v1904 = vpack.c.b16 %v1376, %v1372
  %v1905 = vpack.c.b16 %v1381, %v1377
  %v1906 = vpack.c.b16 %v1382, %v1378
  %v1907 = vpack.c.b16 %v1383, %v1379
  %v1908 = vpack.c.b16 %v1384, %v1380
  %v1909 = vpack.c.b16 %v1389, %v1385
  %v1910 = vpack.c.b16 %v1390, %v1386
  %v1911 = vpack.c.b16 %v1391, %v1387
  %v1912 = vpack.c.b16 %v1392, %v1388
  %v1913 = vpack.c.b16 %v1397, %v1393
  %v1914 = vpack.c.b16 %v1398, %v1394
  %v1915 = vpack.c.b16 %v1399, %v1395
  %v1916 = vpack.c.b16 %v1400, %v1396
  %v1917 = vpack.c.b16 %v1405, %v1401
  %v1918 = vpack.c.b16 %v1406, %v1402
  %v1919 = vpack.c.b16 %v1407, %v1403
  %v1920 = vpack.c.b16 %v1408, %v1404
  %v1921 = vpack.c.b16 %v1413, %v1409
  %v1922 = vpack.c.b16 %v1414, %v1410
  %v1923 = vpack.c.b16 %v1415, %v1411
  %v1924 = vpack.c.b16 %v1416, %v1412
  %v1925 = vpack.c.b16 %v1421, %v1417
  %v1926 = vpack.c.b16 %v1422, %v1418
  %v1927 = vpack.c.b16 %v1423, %v1419
  %v1928 = vpack.c.b16 %v1424, %v1420
  %v1929 = vpack.c.b16 %v1429, %v1425
  %v1930 = vpack.c.b16 %v1430, %v1426
  %v1931 = vpack.c.b16 %v1431, %v1427
  %v1932 = vpack.c.b16 %v1432, %v1428
  %v1933 = vpack.c.b16 %v1437, %v1433
  %v1934 = vpack.c.b16 %v1438, %v1434
  %v1935 = vpack.c.b16 %v1439, %v1435
  %v1936 = vpack.c.b16 %v1440, %v1436
  %v1937 = vpack.c.b16 %v1445, %v1441
  %v1938 = vpack.c.b16 %v1446, %v1442
  %v1939 = vpack.c.b16 %v1447, %v1443
  %v1940 = vpack.c.b16 %v1448, %v1444
  %v1941 = vpack.c.b16 %v1453, %v1449
  %v1942 = vpack.c.b16 %v1454, %v1450
  %v1943 = vpack.c.b16 %v1455, %v1451
  %v1944 = vpack.c.b16 %v1456, %v1452
  %v1945 = vpack.c.b16 %v1461, %v1457
  %v1946 = vpack.c.b16 %v1462, %v1458
  %v1947 = vpack.c.b16 %v1463, %v1459
  %v1948 = vpack.c.b16 %v1464, %v1460
  %v1949 = vpack.c.b16 %v1469, %v1465
  %v1950 = vpack.c.b16 %v1470, %v1466
  %v1951 = vpack.c.b16 %v1471, %v1467
  %v1952 = vpack.c.b16 %v1472, %v1468
  %v1953 = vpack.c.b16 %v1477, %v1473
  %v1954 = vpack.c.b16 %v1478, %v1474
  %v1955 = vpack.c.b16 %v1479, %v1475
  %v1956 = vpack.c.b16 %v1480, %v1476
  %v1957 = vpack.c.b16 %v1485, %v1481
  %v1958 = vpack.c.b16 %v1486, %v1482
  %v1959 = vpack.c.b16 %v1487, %v1483
  %v1960 = vpack.c.b16 %v1488, %v1484
  %v1961 = vpack.c.b16 %v1493, %v1489
  %v1962 = vpack.c.b16 %v1494, %v1490
  %v1963 = vpack.c.b16 %v1495, %v1491
  %v1964 = vpack.c.b16 %v1496, %v1492
  %v1965 = vpack.c.b16 %v1501, %v1497
  %v1966 = vpack.c.b16 %v1502, %v1498
  %v1967 = vpack.c.b16 %v1503, %v1499
  %v1968 = vpack.c.b16 %v1504, %v1500
  %v1969 = vpack.c.b16 %v1509, %v1505
  %v1970 = vpack.c.b16 %v1510, %v1506
  %v1971 = vpack.c.b16 %v1511, %v1507
  %v1972 = vpack.c.b16 %v1512, %v1508
  %v1973 = vpack.c.b16 %v1517, %v1513
  %v1974 = vpack.c.b16 %v1518, %v1514
  %v1975 = vpack.c.b16 %v1519, %v1515
  %v1976 = vpack.c.b16 %v1520, %v1516
  %v1977 = vpack.c.b16 %v1525, %v1521
  %v1978 = vpack.c.b16 %v1526, %v1522
  %v1979 = vpack.c.b16 %v1527, %v1523
  %v1980 = vpack.c.b16 %v1528, %v1524
  %v1981 = vpack.c.b16 %v1533, %v1529
  %v1982 = vpack.c.b16 %v1534, %v1530
  %v1983 = vpack.c.b16 %v1535, %v1531
  %v1984 = vpack.c.b16 %v1536, %v1532
  %v1985 = vpack.c.b16 %v1541, %v1537
  %v1986 = vpack.c.b16 %v1542, %v1538
  %v1987 = vpack.c.b16 %v1543, %v1539
  %v1988 = vpack.c.b16 %v1544, %v1540
  %v1989 = vpack.c.b16 %v1549, %v1545
  %v1990 = vpack.c.b16 %v1550, %v1546
  %v1991 = vpack.c.b16 %v1551, %v1547
  %v1992 = vpack.c.b16 %v1552, %v1548
  %v1993 = vpack.c.b16 %v1557, %v1553
  %v1994 = vpack.c.b16 %v1558, %v1554
  %v1995 = vpack.c.b16 %v1559, %v1555
  %v1996 = vpack.c.b16 %v1560, %v1556
  %v1997 = vpack.c.b16 %v1565, %v1561
  %v1998 = vpack.c.b16 %v1566, %v1562
  %v1999 = vpack.c.b16 %v1567, %v1563
  %v2000 = vpack.c.b16 %v1568, %v1564
  %v2001 = vpack.c.b16 %v1573, %v1569
  %v2002 = vpack.c.b16 %v1574, %v1570
  %v2003 = vpack.c.b16 %v1575, %v1571
  %v2004 = vpack.c.b16 %v1576, %v1572
  %v2005 = vpack.c.b16 %v1581, %v1577
  %v2006 = vpack.c.b16 %v1582, %v1578
  %v2007 = vpack.c.b16 %v1583, %v1579
  %v2008 = vpack.c.b16 %v1584, %v1580
  %v2009 = vpack.c.b16 %v1589, %v1585
  %v2010 = vpack.c.b16 %v1590, %v1586
  %v2011 = vpack.c.b16 %v1591, %v1587
  %v2012 = vpack.c.b16 %v1592, %v1588
  %v2013 = vpack.c.b16 %v1597, %v1593
  %v2014 = vpack.c.b16 %v1598, %v1594
  %v2015 = vpack.c.b16 %v1599, %v1595
  %v2016 = vpack.c.b16 %v1600, %v1596
  %v2017 = vpack.c.b16 %v1605, %v1601
  %v2018 = vpack.c.b16 %v1606, %v1602
  %v2019 = vpack.c.b16 %v1607, %v1603
  %v2020 = vpack.c.b16 %v1608, %v1604
  %v2021 = vpack.c.b16 %v1613, %v1609
  %v2022 = vpack.c.b16 %v1614, %v1610
  %v2023 = vpack.c.b16 %v1615, %v1611
  %v2024 = vpack.c.b16 %v1616, %v1612
  %v2025 = vpack.c.b16 %v1621, %v1617
  %v2026 = vpack.c.b16 %v1622, %v1618
  %v2027 = vpack.c.b16 %v1623, %v1619
  %v2028 = vpack.c.b16 %v1624, %v1620
  %v2029 = vpack.c.b16 %v1629, %v1625
  %v2030 = vpack.c.b16 %v1630, %v1626
  %v2031 = vpack.c.b16 %v1631, %v1627
  %v2032 = vpack.c.b16 %v1632, %v1628
  %v2033 = vpack.c.b16 %v1637, %v1633
  %v2034 = vpack.c.b16 %v1638, %v1634
  %v2035 = vpack.c.b16 %v1639, %v1635
  %v2036 = vpack.c.b16 %v1640, %v1636
  %v2037 = vpack.c.b16 %v1645, %v1641
  %v2038 = vpack.c.b16 %v1646, %v1642
  %v2039 = vpack.c.b16 %v1647, %v1643
  %v2040 = vpack.c.b16 %v1648, %v1644
  %v2041 = vpack.c.b16 %v1653, %v1649
  %v2042 = vpack.c.b16 %v1654, %v1650
  %v2043 = vpack.c.b16 %v1655, %v1651
  %v2044 = vpack.c.b16 %v1656, %v1652
  %v2045 = vpack.c.b16 %v1661, %v1657
  %v2046 = vpack.c.b16 %v1662, %v1658
  %v2047 = vpack.c.b16 %v1663, %v1659
  %v2048 = vpack.c.b16 %v1664, %v1660
  %v2049 = vpack.c.b16 %v1669, %v1665
  %v2050 = vpack.c.b16 %v1670, %v1666
  %v2051 = vpack.c.b16 %v1671, %v1667
  %v2052 = vpack.c.b16 %v1672, %v1668
  %v2053 = vpack.c.b16 %v1677, %v1673
  %v2054 = vpack.c.b16 %v1678, %v1674
  %v2055 = vpack.c.b16 %v1679, %v1675
  %v2056 = vpack.c.b16 %v1680, %v1676
  %v2057 = vpack.c.b16 %v1685, %v1681
  %v2058 = vpack.c.b16 %v1686, %v1682
  %v2059 = vpack.c.b16 %v1687, %v1683
  %v2060 = vpack.c.b16 %v1688, %v1684
  %v2061 = vpack.c.b16 %v1693, %v1689
  %v2062 = vpack.c.b16 %v1694, %v1690
  %v2063 = vpack.c.b16 %v1695, %v1691
  %v2064 = vpack.c.b16 %v1696, %v1692
  %v2065 = vpack.c.b16 %v1701, %v1697
  %v2066 = vpack.c.b16 %v1702, %v1698
  %v2067 = vpack.c.b16 %v1703, %v1699
  %v2068 = vpack.c.b16 %v1704, %v1700
  %v2069 = vpack.c.b16 %v1709, %v1705
  %v2070 = vpack.c.b16 %v1710, %v1706
  %v2071 = vpack.c.b16 %v1711, %v1707
  %v2072 = vpack.c.b16 %v1712, %v1708
  %v2073 = vpack.c.b16 %v1717, %v1713
  %v2074 = vpack.c.b16 %v1718, %v1714
  %v2075 = vpack.c.b16 %v1719, %v1715
  %v2076 = vpack.c.b16 %v1720, %v1716
  %v2077 = vpack.c.b16 %v1725, %v1721
  %v2078 = vpack.c.b16 %v1726, %v1722
  %v2079 = vpack.c.b16 %v1727, %v1723
  %v2080 = vpack.c.b16 %v1728, %v1724
  %v2081 = vpack.c.b16 %v1733, %v1729
  %v2082 = vpack.c.b16 %v1734, %v1730
  %v2083 = vpack.c.b16 %v1735, %v1731
  %v2084 = vpack.c.b16 %v1736, %v1732
  %v2085 = vpack.c.b16 %v1741, %v1737
  %v2086 = vpack.c.b16 %v1742, %v1738
  %v2087 = vpack.c.b16 %v1743, %v1739
  %v2088 = vpack.c.b16 %v1744, %v1740
  %v2089 = vpack.c.b16 %v1749, %v1745
  %v2090 = vpack.c.b16 %v1750, %v1746
  %v2091 = vpack.c.b16 %v1751, %v1747
  %v2092 = vpack.c.b16 %v1752, %v1748
  %v2093 = vpack.c.b16 %v1757, %v1753
  %v2094 = vpack.c.b16 %v1758, %v1754
  %v2095 = vpack.c.b16 %v1759, %v1755
  %v2096 = vpack.c.b16 %v1760, %v1756
  %v2097 = vpack.c.b16 %v1765, %v1761
  %v2098 = vpack.c.b16 %v1766, %v1762
  %v2099 = vpack.c.b16 %v1767, %v1763
  %v2100 = vpack.c.b16 %v1768, %v1764
  %v2101 = vpack.c.b16 %v1773, %v1769
  %v2102 = vpack.c.b16 %v1774, %v1770
  %v2103 = vpack.c.b16 %v1775, %v1771
  %v2104 = vpack.c.b16 %v1776, %v1772
  %v2105 = vpack.c.b16 %v1781, %v1777
  %v2106 = vpack.c.b16 %v1782, %v1778
  %v2107 = vpack.c.b16 %v1783, %v1779
  %v2108 = vpack.c.b16 %v1784, %v1780
  %v2109 = vpack.c.b16 %v1789, %v1785
  %v2110 = vpack.c.b16 %v1790, %v1786
  %v2111 = vpack.c.b16 %v1791, %v1787
  %v2112 = vpack.c.b16 %v1792, %v1788
  %2433 = vmatpush.bf16.msra.mxu0 %v1821
  %2434 = vmatpush.bf16.msra.mxu0 %v1817
  %2435 = vmatpush.bf16.msra.mxu0 %v1813
  %2436 = vmatpush.bf16.msra.mxu0 %v1809
  %2437 = vmatpush.bf16.msra.mxu0 %v1805
  %2438 = vmatpush.bf16.msra.mxu0 %v1801
  %2439 = vmatpush.bf16.msra.mxu0 %v1797
  %2440 = vmatpush.bf16.msra.mxu0 %v1793
  %2441 = vmatmul.bf16.gmra.mxu0 %v673
  %v2442 = vpop.f32.mrf.mxu0
  %v2443 = vadd.f32 %v425, %v2442
  %v2444 = vpop.f32.mrf.mxu0
  %v2445 = vadd.f32 %v425, %v2444
  %2446 = vmatmul.bf16.gmra.mxu0 %v683
  %v2447 = vpop.f32.mrf.mxu0
  %v2448 = vadd.f32 %v425, %v2447
  %v2449 = vpop.f32.mrf.mxu0
  %v2450 = vadd.f32 %v425, %v2449
  %2451 = vmatmul.bf16.gmra.mxu0 %v693
  %v2452 = vpop.f32.mrf.mxu0
  %v2453 = vadd.f32 %v425, %v2452
  %v2454 = vpop.f32.mrf.mxu0
  %v2455 = vadd.f32 %v425, %v2454
  %2456 = vmatmul.bf16.gmra.mxu0 %v703
  %v2457 = vpop.f32.mrf.mxu0
  %v2458 = vadd.f32 %v425, %v2457
  %v2459 = vpop.f32.mrf.mxu0
  %v2460 = vadd.f32 %v425, %v2459
  %2461 = vmatmul.bf16.gmra.mxu0 %v713
  %v2462 = vpop.f32.mrf.mxu0
  %v2463 = vadd.f32 %v425, %v2462
  %v2464 = vpop.f32.mrf.mxu0
  %v2465 = vadd.f32 %v425, %v2464
  %2466 = vmatmul.bf16.gmra.mxu0 %v723
  %v2467 = vpop.f32.mrf.mxu0
  %v2468 = vadd.f32 %v425, %v2467
  %v2469 = vpop.f32.mrf.mxu0
  %v2470 = vadd.f32 %v425, %v2469
  %2471 = vmatmul.bf16.gmra.mxu0 %v733
  %v2472 = vpop.f32.mrf.mxu0
  %v2473 = vadd.f32 %v425, %v2472
  %v2474 = vpop.f32.mrf.mxu0
  %v2475 = vadd.f32 %v425, %v2474
  %2476 = vmatmul.bf16.gmra.mxu0 %v743
  %v2477 = vpop.f32.mrf.mxu0
  %v2478 = vadd.f32 %v425, %v2477
  %v2479 = vpop.f32.mrf.mxu0
  %v2480 = vadd.f32 %v425, %v2479
  %2481 = vdwg.mxu0
  %2482 = vmatpush.bf16.msra.mxu0 %v1853
  %2483 = vmatpush.bf16.msra.mxu0 %v1849
  %2484 = vmatpush.bf16.msra.mxu0 %v1845
  %2485 = vmatpush.bf16.msra.mxu0 %v1841
  %2486 = vmatpush.bf16.msra.mxu0 %v1837
  %2487 = vmatpush.bf16.msra.mxu0 %v1833
  %2488 = vmatpush.bf16.msra.mxu0 %v1829
  %2489 = vmatpush.bf16.msra.mxu0 %v1825
  %2490 = vmatmul.bf16.gmra.mxu0 %v674
  %v2491 = vpop.f32.mrf.mxu0
  %v2492 = vadd.f32 %v2443, %v2491
  %v2493 = vpop.f32.mrf.mxu0
  %v2494 = vadd.f32 %v2445, %v2493
  %2495 = vmatmul.bf16.gmra.mxu0 %v684
  %v2496 = vpop.f32.mrf.mxu0
  %v2497 = vadd.f32 %v2448, %v2496
  %v2498 = vpop.f32.mrf.mxu0
  %v2499 = vadd.f32 %v2450, %v2498
  %2500 = vmatmul.bf16.gmra.mxu0 %v694
  %v2501 = vpop.f32.mrf.mxu0
  %v2502 = vadd.f32 %v2453, %v2501
  %v2503 = vpop.f32.mrf.mxu0
  %v2504 = vadd.f32 %v2455, %v2503
  %2505 = vmatmul.bf16.gmra.mxu0 %v704
  %v2506 = vpop.f32.mrf.mxu0
  %v2507 = vadd.f32 %v2458, %v2506
  %v2508 = vpop.f32.mrf.mxu0
  %v2509 = vadd.f32 %v2460, %v2508
  %2510 = vmatmul.bf16.gmra.mxu0 %v714
  %v2511 = vpop.f32.mrf.mxu0
  %v2512 = vadd.f32 %v2463, %v2511
  %v2513 = vpop.f32.mrf.mxu0
  %v2514 = vadd.f32 %v2465, %v2513
  %2515 = vmatmul.bf16.gmra.mxu0 %v724
  %v2516 = vpop.f32.mrf.mxu0
  %v2517 = vadd.f32 %v2468, %v2516
  %v2518 = vpop.f32.mrf.mxu0
  %v2519 = vadd.f32 %v2470, %v2518
  %2520 = vmatmul.bf16.gmra.mxu0 %v734
  %v2521 = vpop.f32.mrf.mxu0
  %v2522 = vadd.f32 %v2473, %v2521
  %v2523 = vpop.f32.mrf.mxu0
  %v2524 = vadd.f32 %v2475, %v2523
  %2525 = vmatmul.bf16.gmra.mxu0 %v744
  %v2526 = vpop.f32.mrf.mxu0
  %v2527 = vadd.f32 %v2478, %v2526
  %v2528 = vpop.f32.mrf.mxu0
  %v2529 = vadd.f32 %v2480, %v2528
  %2530 = vdwg.mxu0
  %2531 = vmatpush.bf16.msra.mxu0 %v1885
  %2532 = vmatpush.bf16.msra.mxu0 %v1881
  %2533 = vmatpush.bf16.msra.mxu0 %v1877
  %2534 = vmatpush.bf16.msra.mxu0 %v1873
  %2535 = vmatpush.bf16.msra.mxu0 %v1869
  %2536 = vmatpush.bf16.msra.mxu0 %v1865
  %2537 = vmatpush.bf16.msra.mxu0 %v1861
  %2538 = vmatpush.bf16.msra.mxu0 %v1857
  %2539 = vmatmul.bf16.gmra.mxu0 %v675
  %v2540 = vpop.f32.mrf.mxu0
  %v2541 = vadd.f32 %v2492, %v2540
  %v2542 = vpop.f32.mrf.mxu0
  %v2543 = vadd.f32 %v2494, %v2542
  %2544 = vmatmul.bf16.gmra.mxu0 %v685
  %v2545 = vpop.f32.mrf.mxu0
  %v2546 = vadd.f32 %v2497, %v2545
  %v2547 = vpop.f32.mrf.mxu0
  %v2548 = vadd.f32 %v2499, %v2547
  %2549 = vmatmul.bf16.gmra.mxu0 %v695
  %v2550 = vpop.f32.mrf.mxu0
  %v2551 = vadd.f32 %v2502, %v2550
  %v2552 = vpop.f32.mrf.mxu0
  %v2553 = vadd.f32 %v2504, %v2552
  %2554 = vmatmul.bf16.gmra.mxu0 %v705
  %v2555 = vpop.f32.mrf.mxu0
  %v2556 = vadd.f32 %v2507, %v2555
  %v2557 = vpop.f32.mrf.mxu0
  %v2558 = vadd.f32 %v2509, %v2557
  %2559 = vmatmul.bf16.gmra.mxu0 %v715
  %v2560 = vpop.f32.mrf.mxu0
  %v2561 = vadd.f32 %v2512, %v2560
  %v2562 = vpop.f32.mrf.mxu0
  %v2563 = vadd.f32 %v2514, %v2562
  %2564 = vmatmul.bf16.gmra.mxu0 %v725
  %v2565 = vpop.f32.mrf.mxu0
  %v2566 = vadd.f32 %v2517, %v2565
  %v2567 = vpop.f32.mrf.mxu0
  %v2568 = vadd.f32 %v2519, %v2567
  %2569 = vmatmul.bf16.gmra.mxu0 %v735
  %v2570 = vpop.f32.mrf.mxu0
  %v2571 = vadd.f32 %v2522, %v2570
  %v2572 = vpop.f32.mrf.mxu0
  %v2573 = vadd.f32 %v2524, %v2572
  %2574 = vmatmul.bf16.gmra.mxu0 %v745
  %v2575 = vpop.f32.mrf.mxu0
  %v2576 = vadd.f32 %v2527, %v2575
  %v2577 = vpop.f32.mrf.mxu0
  %v2578 = vadd.f32 %v2529, %v2577
  %2579 = vdwg.mxu0
  %2580 = vmatpush.bf16.msra.mxu0 %v1917
  %2581 = vmatpush.bf16.msra.mxu0 %v1913
  %2582 = vmatpush.bf16.msra.mxu0 %v1909
  %2583 = vmatpush.bf16.msra.mxu0 %v1905
  %2584 = vmatpush.bf16.msra.mxu0 %v1901
  %2585 = vmatpush.bf16.msra.mxu0 %v1897
  %2586 = vmatpush.bf16.msra.mxu0 %v1893
  %2587 = vmatpush.bf16.msra.mxu0 %v1889
  %2588 = vmatmul.bf16.gmra.mxu0 %v676
  %v2589 = vpop.f32.mrf.mxu0
  %v2590 = vadd.f32 %v2541, %v2589
  %v2591 = vpop.f32.mrf.mxu0
  %v2592 = vadd.f32 %v2543, %v2591
  %2593 = vmatmul.bf16.gmra.mxu0 %v686
  %v2594 = vpop.f32.mrf.mxu0
  %v2595 = vadd.f32 %v2546, %v2594
  %v2596 = vpop.f32.mrf.mxu0
  %v2597 = vadd.f32 %v2548, %v2596
  %2598 = vmatmul.bf16.gmra.mxu0 %v696
  %v2599 = vpop.f32.mrf.mxu0
  %v2600 = vadd.f32 %v2551, %v2599
  %v2601 = vpop.f32.mrf.mxu0
  %v2602 = vadd.f32 %v2553, %v2601
  %2603 = vmatmul.bf16.gmra.mxu0 %v706
  %v2604 = vpop.f32.mrf.mxu0
  %v2605 = vadd.f32 %v2556, %v2604
  %v2606 = vpop.f32.mrf.mxu0
  %v2607 = vadd.f32 %v2558, %v2606
  %2608 = vmatmul.bf16.gmra.mxu0 %v716
  %v2609 = vpop.f32.mrf.mxu0
  %v2610 = vadd.f32 %v2561, %v2609
  %v2611 = vpop.f32.mrf.mxu0
  %v2612 = vadd.f32 %v2563, %v2611
  %2613 = vmatmul.bf16.gmra.mxu0 %v726
  %v2614 = vpop.f32.mrf.mxu0
  %v2615 = vadd.f32 %v2566, %v2614
  %v2616 = vpop.f32.mrf.mxu0
  %v2617 = vadd.f32 %v2568, %v2616
  %2618 = vmatmul.bf16.gmra.mxu0 %v736
  %v2619 = vpop.f32.mrf.mxu0
  %v2620 = vadd.f32 %v2571, %v2619
  %v2621 = vpop.f32.mrf.mxu0
  %v2622 = vadd.f32 %v2573, %v2621
  %2623 = vmatmul.bf16.gmra.mxu0 %v746
  %v2624 = vpop.f32.mrf.mxu0
  %v2625 = vadd.f32 %v2576, %v2624
  %v2626 = vpop.f32.mrf.mxu0
  %v2627 = vadd.f32 %v2578, %v2626
  %2628 = vdwg.mxu0
  %2629 = vmatpush.bf16.msra.mxu0 %v1949
  %2630 = vmatpush.bf16.msra.mxu0 %v1945
  %2631 = vmatpush.bf16.msra.mxu0 %v1941
  %2632 = vmatpush.bf16.msra.mxu0 %v1937
  %2633 = vmatpush.bf16.msra.mxu0 %v1933
  %2634 = vmatpush.bf16.msra.mxu0 %v1929
  %2635 = vmatpush.bf16.msra.mxu0 %v1925
  %2636 = vmatpush.bf16.msra.mxu0 %v1921
  %2637 = vmatmul.bf16.gmra.mxu0 %v677
  %v2638 = vpop.f32.mrf.mxu0
  %v2639 = vadd.f32 %v2590, %v2638
  %v2640 = vpop.f32.mrf.mxu0
  %v2641 = vadd.f32 %v2592, %v2640
  %2642 = vmatmul.bf16.gmra.mxu0 %v687
  %v2643 = vpop.f32.mrf.mxu0
  %v2644 = vadd.f32 %v2595, %v2643
  %v2645 = vpop.f32.mrf.mxu0
  %v2646 = vadd.f32 %v2597, %v2645
  %2647 = vmatmul.bf16.gmra.mxu0 %v697
  %v2648 = vpop.f32.mrf.mxu0
  %v2649 = vadd.f32 %v2600, %v2648
  %v2650 = vpop.f32.mrf.mxu0
  %v2651 = vadd.f32 %v2602, %v2650
  %2652 = vmatmul.bf16.gmra.mxu0 %v707
  %v2653 = vpop.f32.mrf.mxu0
  %v2654 = vadd.f32 %v2605, %v2653
  %v2655 = vpop.f32.mrf.mxu0
  %v2656 = vadd.f32 %v2607, %v2655
  %2657 = vmatmul.bf16.gmra.mxu0 %v717
  %v2658 = vpop.f32.mrf.mxu0
  %v2659 = vadd.f32 %v2610, %v2658
  %v2660 = vpop.f32.mrf.mxu0
  %v2661 = vadd.f32 %v2612, %v2660
  %2662 = vmatmul.bf16.gmra.mxu0 %v727
  %v2663 = vpop.f32.mrf.mxu0
  %v2664 = vadd.f32 %v2615, %v2663
  %v2665 = vpop.f32.mrf.mxu0
  %v2666 = vadd.f32 %v2617, %v2665
  %2667 = vmatmul.bf16.gmra.mxu0 %v737
  %v2668 = vpop.f32.mrf.mxu0
  %v2669 = vadd.f32 %v2620, %v2668
  %v2670 = vpop.f32.mrf.mxu0
  %v2671 = vadd.f32 %v2622, %v2670
  %2672 = vmatmul.bf16.gmra.mxu0 %v747
  %v2673 = vpop.f32.mrf.mxu0
  %v2674 = vadd.f32 %v2625, %v2673
  %v2675 = vpop.f32.mrf.mxu0
  %v2676 = vadd.f32 %v2627, %v2675
  %2677 = vdwg.mxu0
  %2678 = vmatpush.bf16.msra.mxu0 %v1981
  %2679 = vmatpush.bf16.msra.mxu0 %v1977
  %2680 = vmatpush.bf16.msra.mxu0 %v1973
  %2681 = vmatpush.bf16.msra.mxu0 %v1969
  %2682 = vmatpush.bf16.msra.mxu0 %v1965
  %2683 = vmatpush.bf16.msra.mxu0 %v1961
  %2684 = vmatpush.bf16.msra.mxu0 %v1957
  %2685 = vmatpush.bf16.msra.mxu0 %v1953
  %2686 = vmatmul.bf16.gmra.mxu0 %v678
  %v2687 = vpop.f32.mrf.mxu0
  %v2688 = vadd.f32 %v2639, %v2687
  %v2689 = vpop.f32.mrf.mxu0
  %v2690 = vadd.f32 %v2641, %v2689
  %2691 = vmatmul.bf16.gmra.mxu0 %v688
  %v2692 = vpop.f32.mrf.mxu0
  %v2693 = vadd.f32 %v2644, %v2692
  %v2694 = vpop.f32.mrf.mxu0
  %v2695 = vadd.f32 %v2646, %v2694
  %2696 = vmatmul.bf16.gmra.mxu0 %v698
  %v2697 = vpop.f32.mrf.mxu0
  %v2698 = vadd.f32 %v2649, %v2697
  %v2699 = vpop.f32.mrf.mxu0
  %v2700 = vadd.f32 %v2651, %v2699
  %2701 = vmatmul.bf16.gmra.mxu0 %v708
  %v2702 = vpop.f32.mrf.mxu0
  %v2703 = vadd.f32 %v2654, %v2702
  %v2704 = vpop.f32.mrf.mxu0
  %v2705 = vadd.f32 %v2656, %v2704
  %2706 = vmatmul.bf16.gmra.mxu0 %v718
  %v2707 = vpop.f32.mrf.mxu0
  %v2708 = vadd.f32 %v2659, %v2707
  %v2709 = vpop.f32.mrf.mxu0
  %v2710 = vadd.f32 %v2661, %v2709
  %2711 = vmatmul.bf16.gmra.mxu0 %v728
  %v2712 = vpop.f32.mrf.mxu0
  %v2713 = vadd.f32 %v2664, %v2712
  %v2714 = vpop.f32.mrf.mxu0
  %v2715 = vadd.f32 %v2666, %v2714
  %2716 = vmatmul.bf16.gmra.mxu0 %v738
  %v2717 = vpop.f32.mrf.mxu0
  %v2718 = vadd.f32 %v2669, %v2717
  %v2719 = vpop.f32.mrf.mxu0
  %v2720 = vadd.f32 %v2671, %v2719
  %2721 = vmatmul.bf16.gmra.mxu0 %v748
  %v2722 = vpop.f32.mrf.mxu0
  %v2723 = vadd.f32 %v2674, %v2722
  %v2724 = vpop.f32.mrf.mxu0
  %v2725 = vadd.f32 %v2676, %v2724
  %2726 = vdwg.mxu0
  %2727 = vmatpush.bf16.msra.mxu0 %v2013
  %2728 = vmatpush.bf16.msra.mxu0 %v2009
  %2729 = vmatpush.bf16.msra.mxu0 %v2005
  %2730 = vmatpush.bf16.msra.mxu0 %v2001
  %2731 = vmatpush.bf16.msra.mxu0 %v1997
  %2732 = vmatpush.bf16.msra.mxu0 %v1993
  %2733 = vmatpush.bf16.msra.mxu0 %v1989
  %2734 = vmatpush.bf16.msra.mxu0 %v1985
  %2735 = vmatmul.bf16.gmra.mxu0 %v679
  %v2736 = vpop.f32.mrf.mxu0
  %v2737 = vadd.f32 %v2688, %v2736
  %v2738 = vpop.f32.mrf.mxu0
  %v2739 = vadd.f32 %v2690, %v2738
  %2740 = vmatmul.bf16.gmra.mxu0 %v689
  %v2741 = vpop.f32.mrf.mxu0
  %v2742 = vadd.f32 %v2693, %v2741
  %v2743 = vpop.f32.mrf.mxu0
  %v2744 = vadd.f32 %v2695, %v2743
  %2745 = vmatmul.bf16.gmra.mxu0 %v699
  %v2746 = vpop.f32.mrf.mxu0
  %v2747 = vadd.f32 %v2698, %v2746
  %v2748 = vpop.f32.mrf.mxu0
  %v2749 = vadd.f32 %v2700, %v2748
  %2750 = vmatmul.bf16.gmra.mxu0 %v709
  %v2751 = vpop.f32.mrf.mxu0
  %v2752 = vadd.f32 %v2703, %v2751
  %v2753 = vpop.f32.mrf.mxu0
  %v2754 = vadd.f32 %v2705, %v2753
  %2755 = vmatmul.bf16.gmra.mxu0 %v719
  %v2756 = vpop.f32.mrf.mxu0
  %v2757 = vadd.f32 %v2708, %v2756
  %v2758 = vpop.f32.mrf.mxu0
  %v2759 = vadd.f32 %v2710, %v2758
  %2760 = vmatmul.bf16.gmra.mxu0 %v729
  %v2761 = vpop.f32.mrf.mxu0
  %v2762 = vadd.f32 %v2713, %v2761
  %v2763 = vpop.f32.mrf.mxu0
  %v2764 = vadd.f32 %v2715, %v2763
  %2765 = vmatmul.bf16.gmra.mxu0 %v739
  %v2766 = vpop.f32.mrf.mxu0
  %v2767 = vadd.f32 %v2718, %v2766
  %v2768 = vpop.f32.mrf.mxu0
  %v2769 = vadd.f32 %v2720, %v2768
  %2770 = vmatmul.bf16.gmra.mxu0 %v749
  %v2771 = vpop.f32.mrf.mxu0
  %v2772 = vadd.f32 %v2723, %v2771
  %v2773 = vpop.f32.mrf.mxu0
  %v2774 = vadd.f32 %v2725, %v2773
  %2775 = vdwg.mxu0
  %2776 = vmatpush.bf16.msra.mxu0 %v2045
  %2777 = vmatpush.bf16.msra.mxu0 %v2041
  %2778 = vmatpush.bf16.msra.mxu0 %v2037
  %2779 = vmatpush.bf16.msra.mxu0 %v2033
  %2780 = vmatpush.bf16.msra.mxu0 %v2029
  %2781 = vmatpush.bf16.msra.mxu0 %v2025
  %2782 = vmatpush.bf16.msra.mxu0 %v2021
  %2783 = vmatpush.bf16.msra.mxu0 %v2017
  %2784 = vmatmul.bf16.gmra.mxu0 %v680
  %v2785 = vpop.f32.mrf.mxu0
  %v2786 = vadd.f32 %v2737, %v2785
  %v2787 = vpop.f32.mrf.mxu0
  %v2788 = vadd.f32 %v2739, %v2787
  %2789 = vmatmul.bf16.gmra.mxu0 %v690
  %v2790 = vpop.f32.mrf.mxu0
  %v2791 = vadd.f32 %v2742, %v2790
  %v2792 = vpop.f32.mrf.mxu0
  %v2793 = vadd.f32 %v2744, %v2792
  %2794 = vmatmul.bf16.gmra.mxu0 %v700
  %v2795 = vpop.f32.mrf.mxu0
  %v2796 = vadd.f32 %v2747, %v2795
  %v2797 = vpop.f32.mrf.mxu0
  %v2798 = vadd.f32 %v2749, %v2797
  %2799 = vmatmul.bf16.gmra.mxu0 %v710
  %v2800 = vpop.f32.mrf.mxu0
  %v2801 = vadd.f32 %v2752, %v2800
  %v2802 = vpop.f32.mrf.mxu0
  %v2803 = vadd.f32 %v2754, %v2802
  %2804 = vmatmul.bf16.gmra.mxu0 %v720
  %v2805 = vpop.f32.mrf.mxu0
  %v2806 = vadd.f32 %v2757, %v2805
  %v2807 = vpop.f32.mrf.mxu0
  %v2808 = vadd.f32 %v2759, %v2807
  %2809 = vmatmul.bf16.gmra.mxu0 %v730
  %v2810 = vpop.f32.mrf.mxu0
  %v2811 = vadd.f32 %v2762, %v2810
  %v2812 = vpop.f32.mrf.mxu0
  %v2813 = vadd.f32 %v2764, %v2812
  %2814 = vmatmul.bf16.gmra.mxu0 %v740
  %v2815 = vpop.f32.mrf.mxu0
  %v2816 = vadd.f32 %v2767, %v2815
  %v2817 = vpop.f32.mrf.mxu0
  %v2818 = vadd.f32 %v2769, %v2817
  %2819 = vmatmul.bf16.gmra.mxu0 %v750
  %v2820 = vpop.f32.mrf.mxu0
  %v2821 = vadd.f32 %v2772, %v2820
  %v2822 = vpop.f32.mrf.mxu0
  %v2823 = vadd.f32 %v2774, %v2822
  %2824 = vdwg.mxu0
  %2825 = vmatpush.bf16.msra.mxu0 %v2077
  %2826 = vmatpush.bf16.msra.mxu0 %v2073
  %2827 = vmatpush.bf16.msra.mxu0 %v2069
  %2828 = vmatpush.bf16.msra.mxu0 %v2065
  %2829 = vmatpush.bf16.msra.mxu0 %v2061
  %2830 = vmatpush.bf16.msra.mxu0 %v2057
  %2831 = vmatpush.bf16.msra.mxu0 %v2053
  %2832 = vmatpush.bf16.msra.mxu0 %v2049
  %2833 = vmatmul.bf16.gmra.mxu0 %v681
  %v2834 = vpop.f32.mrf.mxu0
  %v2835 = vadd.f32 %v2786, %v2834
  %v2836 = vpop.f32.mrf.mxu0
  %v2837 = vadd.f32 %v2788, %v2836
  %2838 = vmatmul.bf16.gmra.mxu0 %v691
  %v2839 = vpop.f32.mrf.mxu0
  %v2840 = vadd.f32 %v2791, %v2839
  %v2841 = vpop.f32.mrf.mxu0
  %v2842 = vadd.f32 %v2793, %v2841
  %2843 = vmatmul.bf16.gmra.mxu0 %v701
  %v2844 = vpop.f32.mrf.mxu0
  %v2845 = vadd.f32 %v2796, %v2844
  %v2846 = vpop.f32.mrf.mxu0
  %v2847 = vadd.f32 %v2798, %v2846
  %2848 = vmatmul.bf16.gmra.mxu0 %v711
  %v2849 = vpop.f32.mrf.mxu0
  %v2850 = vadd.f32 %v2801, %v2849
  %v2851 = vpop.f32.mrf.mxu0
  %v2852 = vadd.f32 %v2803, %v2851
  %2853 = vmatmul.bf16.gmra.mxu0 %v721
  %v2854 = vpop.f32.mrf.mxu0
  %v2855 = vadd.f32 %v2806, %v2854
  %v2856 = vpop.f32.mrf.mxu0
  %v2857 = vadd.f32 %v2808, %v2856
  %2858 = vmatmul.bf16.gmra.mxu0 %v731
  %v2859 = vpop.f32.mrf.mxu0
  %v2860 = vadd.f32 %v2811, %v2859
  %v2861 = vpop.f32.mrf.mxu0
  %v2862 = vadd.f32 %v2813, %v2861
  %2863 = vmatmul.bf16.gmra.mxu0 %v741
  %v2864 = vpop.f32.mrf.mxu0
  %v2865 = vadd.f32 %v2816, %v2864
  %v2866 = vpop.f32.mrf.mxu0
  %v2867 = vadd.f32 %v2818, %v2866
  %2868 = vmatmul.bf16.gmra.mxu0 %v751
  %v2869 = vpop.f32.mrf.mxu0
  %v2870 = vadd.f32 %v2821, %v2869
  %v2871 = vpop.f32.mrf.mxu0
  %v2872 = vadd.f32 %v2823, %v2871
  %2873 = vdwg.mxu0
  %2874 = vmatpush.bf16.msra.mxu0 %v2109
  %2875 = vmatpush.bf16.msra.mxu0 %v2105
  %2876 = vmatpush.bf16.msra.mxu0 %v2101
  %2877 = vmatpush.bf16.msra.mxu0 %v2097
  %2878 = vmatpush.bf16.msra.mxu0 %v2093
  %2879 = vmatpush.bf16.msra.mxu0 %v2089
  %2880 = vmatpush.bf16.msra.mxu0 %v2085
  %2881 = vmatpush.bf16.msra.mxu0 %v2081
  %2882 = vmatmul.bf16.gmra.mxu0 %v682
  %v2883 = vpop.f32.mrf.mxu0
  %v2884 = vadd.f32 %v2835, %v2883
  %v2885 = vpop.f32.mrf.mxu0
  %v2886 = vadd.f32 %v2837, %v2885
  %2887 = vmatmul.bf16.gmra.mxu0 %v692
  %v2888 = vpop.f32.mrf.mxu0
  %v2889 = vadd.f32 %v2840, %v2888
  %v2890 = vpop.f32.mrf.mxu0
  %v2891 = vadd.f32 %v2842, %v2890
  %2892 = vmatmul.bf16.gmra.mxu0 %v702
  %v2893 = vpop.f32.mrf.mxu0
  %v2894 = vadd.f32 %v2845, %v2893
  %v2895 = vpop.f32.mrf.mxu0
  %v2896 = vadd.f32 %v2847, %v2895
  %2897 = vmatmul.bf16.gmra.mxu0 %v712
  %v2898 = vpop.f32.mrf.mxu0
  %v2899 = vadd.f32 %v2850, %v2898
  %v2900 = vpop.f32.mrf.mxu0
  %v2901 = vadd.f32 %v2852, %v2900
  %2902 = vmatmul.bf16.gmra.mxu0 %v722
  %v2903 = vpop.f32.mrf.mxu0
  %v2904 = vadd.f32 %v2855, %v2903
  %v2905 = vpop.f32.mrf.mxu0
  %v2906 = vadd.f32 %v2857, %v2905
  %2907 = vmatmul.bf16.gmra.mxu0 %v732
  %v2908 = vpop.f32.mrf.mxu0
  %v2909 = vadd.f32 %v2860, %v2908
  %v2910 = vpop.f32.mrf.mxu0
  %v2911 = vadd.f32 %v2862, %v2910
  %2912 = vmatmul.bf16.gmra.mxu0 %v742
  %v2913 = vpop.f32.mrf.mxu0
  %v2914 = vadd.f32 %v2865, %v2913
  %v2915 = vpop.f32.mrf.mxu0
  %v2916 = vadd.f32 %v2867, %v2915
  %2917 = vmatmul.bf16.gmra.mxu0 %v752
  %v2918 = vpop.f32.mrf.mxu0
  %v2919 = vadd.f32 %v2870, %v2918
  %v2920 = vpop.f32.mrf.mxu0
  %v2921 = vadd.f32 %v2872, %v2920
  %2922 = vdwg.mxu0
  %2923 = vmatpush.bf16.msra.mxu0 %v1822
  %2924 = vmatpush.bf16.msra.mxu0 %v1818
  %2925 = vmatpush.bf16.msra.mxu0 %v1814
  %2926 = vmatpush.bf16.msra.mxu0 %v1810
  %2927 = vmatpush.bf16.msra.mxu0 %v1806
  %2928 = vmatpush.bf16.msra.mxu0 %v1802
  %2929 = vmatpush.bf16.msra.mxu0 %v1798
  %2930 = vmatpush.bf16.msra.mxu0 %v1794
  %2931 = vmatmul.bf16.gmra.mxu0 %v673
  %v2932 = vpop.f32.mrf.mxu0
  %v2933 = vadd.f32 %v426, %v2932
  %v2934 = vpop.f32.mrf.mxu0
  %v2935 = vadd.f32 %v426, %v2934
  %2936 = vmatmul.bf16.gmra.mxu0 %v683
  %v2937 = vpop.f32.mrf.mxu0
  %v2938 = vadd.f32 %v426, %v2937
  %v2939 = vpop.f32.mrf.mxu0
  %v2940 = vadd.f32 %v426, %v2939
  %2941 = vmatmul.bf16.gmra.mxu0 %v693
  %v2942 = vpop.f32.mrf.mxu0
  %v2943 = vadd.f32 %v426, %v2942
  %v2944 = vpop.f32.mrf.mxu0
  %v2945 = vadd.f32 %v426, %v2944
  %2946 = vmatmul.bf16.gmra.mxu0 %v703
  %v2947 = vpop.f32.mrf.mxu0
  %v2948 = vadd.f32 %v426, %v2947
  %v2949 = vpop.f32.mrf.mxu0
  %v2950 = vadd.f32 %v426, %v2949
  %2951 = vmatmul.bf16.gmra.mxu0 %v713
  %v2952 = vpop.f32.mrf.mxu0
  %v2953 = vadd.f32 %v426, %v2952
  %v2954 = vpop.f32.mrf.mxu0
  %v2955 = vadd.f32 %v426, %v2954
  %2956 = vmatmul.bf16.gmra.mxu0 %v723
  %v2957 = vpop.f32.mrf.mxu0
  %v2958 = vadd.f32 %v426, %v2957
  %v2959 = vpop.f32.mrf.mxu0
  %v2960 = vadd.f32 %v426, %v2959
  %2961 = vmatmul.bf16.gmra.mxu0 %v733
  %v2962 = vpop.f32.mrf.mxu0
  %v2963 = vadd.f32 %v426, %v2962
  %v2964 = vpop.f32.mrf.mxu0
  %v2965 = vadd.f32 %v426, %v2964
  %2966 = vmatmul.bf16.gmra.mxu0 %v743
  %v2967 = vpop.f32.mrf.mxu0
  %v2968 = vadd.f32 %v426, %v2967
  %v2969 = vpop.f32.mrf.mxu0
  %v2970 = vadd.f32 %v426, %v2969
  %2971 = vdwg.mxu0
  %2972 = vmatpush.bf16.msra.mxu0 %v1854
  %2973 = vmatpush.bf16.msra.mxu0 %v1850
  %2974 = vmatpush.bf16.msra.mxu0 %v1846
  %2975 = vmatpush.bf16.msra.mxu0 %v1842
  %2976 = vmatpush.bf16.msra.mxu0 %v1838
  %2977 = vmatpush.bf16.msra.mxu0 %v1834
  %2978 = vmatpush.bf16.msra.mxu0 %v1830
  %2979 = vmatpush.bf16.msra.mxu0 %v1826
  %2980 = vmatmul.bf16.gmra.mxu0 %v674
  %v2981 = vpop.f32.mrf.mxu0
  %v2982 = vadd.f32 %v2933, %v2981
  %v2983 = vpop.f32.mrf.mxu0
  %v2984 = vadd.f32 %v2935, %v2983
  %2985 = vmatmul.bf16.gmra.mxu0 %v684
  %v2986 = vpop.f32.mrf.mxu0
  %v2987 = vadd.f32 %v2938, %v2986
  %v2988 = vpop.f32.mrf.mxu0
  %v2989 = vadd.f32 %v2940, %v2988
  %2990 = vmatmul.bf16.gmra.mxu0 %v694
  %v2991 = vpop.f32.mrf.mxu0
  %v2992 = vadd.f32 %v2943, %v2991
  %v2993 = vpop.f32.mrf.mxu0
  %v2994 = vadd.f32 %v2945, %v2993
  %2995 = vmatmul.bf16.gmra.mxu0 %v704
  %v2996 = vpop.f32.mrf.mxu0
  %v2997 = vadd.f32 %v2948, %v2996
  %v2998 = vpop.f32.mrf.mxu0
  %v2999 = vadd.f32 %v2950, %v2998
  %3000 = vmatmul.bf16.gmra.mxu0 %v714
  %v3001 = vpop.f32.mrf.mxu0
  %v3002 = vadd.f32 %v2953, %v3001
  %v3003 = vpop.f32.mrf.mxu0
  %v3004 = vadd.f32 %v2955, %v3003
  %3005 = vmatmul.bf16.gmra.mxu0 %v724
  %v3006 = vpop.f32.mrf.mxu0
  %v3007 = vadd.f32 %v2958, %v3006
  %v3008 = vpop.f32.mrf.mxu0
  %v3009 = vadd.f32 %v2960, %v3008
  %3010 = vmatmul.bf16.gmra.mxu0 %v734
  %v3011 = vpop.f32.mrf.mxu0
  %v3012 = vadd.f32 %v2963, %v3011
  %v3013 = vpop.f32.mrf.mxu0
  %v3014 = vadd.f32 %v2965, %v3013
  %3015 = vmatmul.bf16.gmra.mxu0 %v744
  %v3016 = vpop.f32.mrf.mxu0
  %v3017 = vadd.f32 %v2968, %v3016
  %v3018 = vpop.f32.mrf.mxu0
  %v3019 = vadd.f32 %v2970, %v3018
  %3020 = vdwg.mxu0
  %3021 = vmatpush.bf16.msra.mxu0 %v1886
  %3022 = vmatpush.bf16.msra.mxu0 %v1882
  %3023 = vmatpush.bf16.msra.mxu0 %v1878
  %3024 = vmatpush.bf16.msra.mxu0 %v1874
  %3025 = vmatpush.bf16.msra.mxu0 %v1870
  %3026 = vmatpush.bf16.msra.mxu0 %v1866
  %3027 = vmatpush.bf16.msra.mxu0 %v1862
  %3028 = vmatpush.bf16.msra.mxu0 %v1858
  %3029 = vmatmul.bf16.gmra.mxu0 %v675
  %v3030 = vpop.f32.mrf.mxu0
  %v3031 = vadd.f32 %v2982, %v3030
  %v3032 = vpop.f32.mrf.mxu0
  %v3033 = vadd.f32 %v2984, %v3032
  %3034 = vmatmul.bf16.gmra.mxu0 %v685
  %v3035 = vpop.f32.mrf.mxu0
  %v3036 = vadd.f32 %v2987, %v3035
  %v3037 = vpop.f32.mrf.mxu0
  %v3038 = vadd.f32 %v2989, %v3037
  %3039 = vmatmul.bf16.gmra.mxu0 %v695
  %v3040 = vpop.f32.mrf.mxu0
  %v3041 = vadd.f32 %v2992, %v3040
  %v3042 = vpop.f32.mrf.mxu0
  %v3043 = vadd.f32 %v2994, %v3042
  %3044 = vmatmul.bf16.gmra.mxu0 %v705
  %v3045 = vpop.f32.mrf.mxu0
  %v3046 = vadd.f32 %v2997, %v3045
  %v3047 = vpop.f32.mrf.mxu0
  %v3048 = vadd.f32 %v2999, %v3047
  %3049 = vmatmul.bf16.gmra.mxu0 %v715
  %v3050 = vpop.f32.mrf.mxu0
  %v3051 = vadd.f32 %v3002, %v3050
  %v3052 = vpop.f32.mrf.mxu0
  %v3053 = vadd.f32 %v3004, %v3052
  %3054 = vmatmul.bf16.gmra.mxu0 %v725
  %v3055 = vpop.f32.mrf.mxu0
  %v3056 = vadd.f32 %v3007, %v3055
  %v3057 = vpop.f32.mrf.mxu0
  %v3058 = vadd.f32 %v3009, %v3057
  %3059 = vmatmul.bf16.gmra.mxu0 %v735
  %v3060 = vpop.f32.mrf.mxu0
  %v3061 = vadd.f32 %v3012, %v3060
  %v3062 = vpop.f32.mrf.mxu0
  %v3063 = vadd.f32 %v3014, %v3062
  %3064 = vmatmul.bf16.gmra.mxu0 %v745
  %v3065 = vpop.f32.mrf.mxu0
  %v3066 = vadd.f32 %v3017, %v3065
  %v3067 = vpop.f32.mrf.mxu0
  %v3068 = vadd.f32 %v3019, %v3067
  %3069 = vdwg.mxu0
  %3070 = vmatpush.bf16.msra.mxu0 %v1918
  %3071 = vmatpush.bf16.msra.mxu0 %v1914
  %3072 = vmatpush.bf16.msra.mxu0 %v1910
  %3073 = vmatpush.bf16.msra.mxu0 %v1906
  %3074 = vmatpush.bf16.msra.mxu0 %v1902
  %3075 = vmatpush.bf16.msra.mxu0 %v1898
  %3076 = vmatpush.bf16.msra.mxu0 %v1894
  %3077 = vmatpush.bf16.msra.mxu0 %v1890
  %3078 = vmatmul.bf16.gmra.mxu0 %v676
  %v3079 = vpop.f32.mrf.mxu0
  %v3080 = vadd.f32 %v3031, %v3079
  %v3081 = vpop.f32.mrf.mxu0
  %v3082 = vadd.f32 %v3033, %v3081
  %3083 = vmatmul.bf16.gmra.mxu0 %v686
  %v3084 = vpop.f32.mrf.mxu0
  %v3085 = vadd.f32 %v3036, %v3084
  %v3086 = vpop.f32.mrf.mxu0
  %v3087 = vadd.f32 %v3038, %v3086
  %3088 = vmatmul.bf16.gmra.mxu0 %v696
  %v3089 = vpop.f32.mrf.mxu0
  %v3090 = vadd.f32 %v3041, %v3089
  %v3091 = vpop.f32.mrf.mxu0
  %v3092 = vadd.f32 %v3043, %v3091
  %3093 = vmatmul.bf16.gmra.mxu0 %v706
  %v3094 = vpop.f32.mrf.mxu0
  %v3095 = vadd.f32 %v3046, %v3094
  %v3096 = vpop.f32.mrf.mxu0
  %v3097 = vadd.f32 %v3048, %v3096
  %3098 = vmatmul.bf16.gmra.mxu0 %v716
  %v3099 = vpop.f32.mrf.mxu0
  %v3100 = vadd.f32 %v3051, %v3099
  %v3101 = vpop.f32.mrf.mxu0
  %v3102 = vadd.f32 %v3053, %v3101
  %3103 = vmatmul.bf16.gmra.mxu0 %v726
  %v3104 = vpop.f32.mrf.mxu0
  %v3105 = vadd.f32 %v3056, %v3104
  %v3106 = vpop.f32.mrf.mxu0
  %v3107 = vadd.f32 %v3058, %v3106
  %3108 = vmatmul.bf16.gmra.mxu0 %v736
  %v3109 = vpop.f32.mrf.mxu0
  %v3110 = vadd.f32 %v3061, %v3109
  %v3111 = vpop.f32.mrf.mxu0
  %v3112 = vadd.f32 %v3063, %v3111
  %3113 = vmatmul.bf16.gmra.mxu0 %v746
  %v3114 = vpop.f32.mrf.mxu0
  %v3115 = vadd.f32 %v3066, %v3114
  %v3116 = vpop.f32.mrf.mxu0
  %v3117 = vadd.f32 %v3068, %v3116
  %3118 = vdwg.mxu0
  %3119 = vmatpush.bf16.msra.mxu0 %v1950
  %3120 = vmatpush.bf16.msra.mxu0 %v1946
  %3121 = vmatpush.bf16.msra.mxu0 %v1942
  %3122 = vmatpush.bf16.msra.mxu0 %v1938
  %3123 = vmatpush.bf16.msra.mxu0 %v1934
  %3124 = vmatpush.bf16.msra.mxu0 %v1930
  %3125 = vmatpush.bf16.msra.mxu0 %v1926
  %3126 = vmatpush.bf16.msra.mxu0 %v1922
  %3127 = vmatmul.bf16.gmra.mxu0 %v677
  %v3128 = vpop.f32.mrf.mxu0
  %v3129 = vadd.f32 %v3080, %v3128
  %v3130 = vpop.f32.mrf.mxu0
  %v3131 = vadd.f32 %v3082, %v3130
  %3132 = vmatmul.bf16.gmra.mxu0 %v687
  %v3133 = vpop.f32.mrf.mxu0
  %v3134 = vadd.f32 %v3085, %v3133
  %v3135 = vpop.f32.mrf.mxu0
  %v3136 = vadd.f32 %v3087, %v3135
  %3137 = vmatmul.bf16.gmra.mxu0 %v697
  %v3138 = vpop.f32.mrf.mxu0
  %v3139 = vadd.f32 %v3090, %v3138
  %v3140 = vpop.f32.mrf.mxu0
  %v3141 = vadd.f32 %v3092, %v3140
  %3142 = vmatmul.bf16.gmra.mxu0 %v707
  %v3143 = vpop.f32.mrf.mxu0
  %v3144 = vadd.f32 %v3095, %v3143
  %v3145 = vpop.f32.mrf.mxu0
  %v3146 = vadd.f32 %v3097, %v3145
  %3147 = vmatmul.bf16.gmra.mxu0 %v717
  %v3148 = vpop.f32.mrf.mxu0
  %v3149 = vadd.f32 %v3100, %v3148
  %v3150 = vpop.f32.mrf.mxu0
  %v3151 = vadd.f32 %v3102, %v3150
  %3152 = vmatmul.bf16.gmra.mxu0 %v727
  %v3153 = vpop.f32.mrf.mxu0
  %v3154 = vadd.f32 %v3105, %v3153
  %v3155 = vpop.f32.mrf.mxu0
  %v3156 = vadd.f32 %v3107, %v3155
  %3157 = vmatmul.bf16.gmra.mxu0 %v737
  %v3158 = vpop.f32.mrf.mxu0
  %v3159 = vadd.f32 %v3110, %v3158
  %v3160 = vpop.f32.mrf.mxu0
  %v3161 = vadd.f32 %v3112, %v3160
  %3162 = vmatmul.bf16.gmra.mxu0 %v747
  %v3163 = vpop.f32.mrf.mxu0
  %v3164 = vadd.f32 %v3115, %v3163
  %v3165 = vpop.f32.mrf.mxu0
  %v3166 = vadd.f32 %v3117, %v3165
  %3167 = vdwg.mxu0
  %3168 = vmatpush.bf16.msra.mxu0 %v1982
  %3169 = vmatpush.bf16.msra.mxu0 %v1978
  %3170 = vmatpush.bf16.msra.mxu0 %v1974
  %3171 = vmatpush.bf16.msra.mxu0 %v1970
  %3172 = vmatpush.bf16.msra.mxu0 %v1966
  %3173 = vmatpush.bf16.msra.mxu0 %v1962
  %3174 = vmatpush.bf16.msra.mxu0 %v1958
  %3175 = vmatpush.bf16.msra.mxu0 %v1954
  %3176 = vmatmul.bf16.gmra.mxu0 %v678
  %v3177 = vpop.f32.mrf.mxu0
  %v3178 = vadd.f32 %v3129, %v3177
  %v3179 = vpop.f32.mrf.mxu0
  %v3180 = vadd.f32 %v3131, %v3179
  %3181 = vmatmul.bf16.gmra.mxu0 %v688
  %v3182 = vpop.f32.mrf.mxu0
  %v3183 = vadd.f32 %v3134, %v3182
  %v3184 = vpop.f32.mrf.mxu0
  %v3185 = vadd.f32 %v3136, %v3184
  %3186 = vmatmul.bf16.gmra.mxu0 %v698
  %v3187 = vpop.f32.mrf.mxu0
  %v3188 = vadd.f32 %v3139, %v3187
  %v3189 = vpop.f32.mrf.mxu0
  %v3190 = vadd.f32 %v3141, %v3189
  %3191 = vmatmul.bf16.gmra.mxu0 %v708
  %v3192 = vpop.f32.mrf.mxu0
  %v3193 = vadd.f32 %v3144, %v3192
  %v3194 = vpop.f32.mrf.mxu0
  %v3195 = vadd.f32 %v3146, %v3194
  %3196 = vmatmul.bf16.gmra.mxu0 %v718
  %v3197 = vpop.f32.mrf.mxu0
  %v3198 = vadd.f32 %v3149, %v3197
  %v3199 = vpop.f32.mrf.mxu0
  %v3200 = vadd.f32 %v3151, %v3199
  %3201 = vmatmul.bf16.gmra.mxu0 %v728
  %v3202 = vpop.f32.mrf.mxu0
  %v3203 = vadd.f32 %v3154, %v3202
  %v3204 = vpop.f32.mrf.mxu0
  %v3205 = vadd.f32 %v3156, %v3204
  %3206 = vmatmul.bf16.gmra.mxu0 %v738
  %v3207 = vpop.f32.mrf.mxu0
  %v3208 = vadd.f32 %v3159, %v3207
  %v3209 = vpop.f32.mrf.mxu0
  %v3210 = vadd.f32 %v3161, %v3209
  %3211 = vmatmul.bf16.gmra.mxu0 %v748
  %v3212 = vpop.f32.mrf.mxu0
  %v3213 = vadd.f32 %v3164, %v3212
  %v3214 = vpop.f32.mrf.mxu0
  %v3215 = vadd.f32 %v3166, %v3214
  %3216 = vdwg.mxu0
  %3217 = vmatpush.bf16.msra.mxu0 %v2014
  %3218 = vmatpush.bf16.msra.mxu0 %v2010
  %3219 = vmatpush.bf16.msra.mxu0 %v2006
  %3220 = vmatpush.bf16.msra.mxu0 %v2002
  %3221 = vmatpush.bf16.msra.mxu0 %v1998
  %3222 = vmatpush.bf16.msra.mxu0 %v1994
  %3223 = vmatpush.bf16.msra.mxu0 %v1990
  %3224 = vmatpush.bf16.msra.mxu0 %v1986
  %3225 = vmatmul.bf16.gmra.mxu0 %v679
  %v3226 = vpop.f32.mrf.mxu0
  %v3227 = vadd.f32 %v3178, %v3226
  %v3228 = vpop.f32.mrf.mxu0
  %v3229 = vadd.f32 %v3180, %v3228
  %3230 = vmatmul.bf16.gmra.mxu0 %v689
  %v3231 = vpop.f32.mrf.mxu0
  %v3232 = vadd.f32 %v3183, %v3231
  %v3233 = vpop.f32.mrf.mxu0
  %v3234 = vadd.f32 %v3185, %v3233
  %3235 = vmatmul.bf16.gmra.mxu0 %v699
  %v3236 = vpop.f32.mrf.mxu0
  %v3237 = vadd.f32 %v3188, %v3236
  %v3238 = vpop.f32.mrf.mxu0
  %v3239 = vadd.f32 %v3190, %v3238
  %3240 = vmatmul.bf16.gmra.mxu0 %v709
  %v3241 = vpop.f32.mrf.mxu0
  %v3242 = vadd.f32 %v3193, %v3241
  %v3243 = vpop.f32.mrf.mxu0
  %v3244 = vadd.f32 %v3195, %v3243
  %3245 = vmatmul.bf16.gmra.mxu0 %v719
  %v3246 = vpop.f32.mrf.mxu0
  %v3247 = vadd.f32 %v3198, %v3246
  %v3248 = vpop.f32.mrf.mxu0
  %v3249 = vadd.f32 %v3200, %v3248
  %3250 = vmatmul.bf16.gmra.mxu0 %v729
  %v3251 = vpop.f32.mrf.mxu0
  %v3252 = vadd.f32 %v3203, %v3251
  %v3253 = vpop.f32.mrf.mxu0
  %v3254 = vadd.f32 %v3205, %v3253
  %3255 = vmatmul.bf16.gmra.mxu0 %v739
  %v3256 = vpop.f32.mrf.mxu0
  %v3257 = vadd.f32 %v3208, %v3256
  %v3258 = vpop.f32.mrf.mxu0
  %v3259 = vadd.f32 %v3210, %v3258
  %3260 = vmatmul.bf16.gmra.mxu0 %v749
  %v3261 = vpop.f32.mrf.mxu0
  %v3262 = vadd.f32 %v3213, %v3261
  %v3263 = vpop.f32.mrf.mxu0
  %v3264 = vadd.f32 %v3215, %v3263
  %3265 = vdwg.mxu0
  %3266 = vmatpush.bf16.msra.mxu0 %v2046
  %3267 = vmatpush.bf16.msra.mxu0 %v2042
  %3268 = vmatpush.bf16.msra.mxu0 %v2038
  %3269 = vmatpush.bf16.msra.mxu0 %v2034
  %3270 = vmatpush.bf16.msra.mxu0 %v2030
  %3271 = vmatpush.bf16.msra.mxu0 %v2026
  %3272 = vmatpush.bf16.msra.mxu0 %v2022
  %3273 = vmatpush.bf16.msra.mxu0 %v2018
  %3274 = vmatmul.bf16.gmra.mxu0 %v680
  %v3275 = vpop.f32.mrf.mxu0
  %v3276 = vadd.f32 %v3227, %v3275
  %v3277 = vpop.f32.mrf.mxu0
  %v3278 = vadd.f32 %v3229, %v3277
  %3279 = vmatmul.bf16.gmra.mxu0 %v690
  %v3280 = vpop.f32.mrf.mxu0
  %v3281 = vadd.f32 %v3232, %v3280
  %v3282 = vpop.f32.mrf.mxu0
  %v3283 = vadd.f32 %v3234, %v3282
  %3284 = vmatmul.bf16.gmra.mxu0 %v700
  %v3285 = vpop.f32.mrf.mxu0
  %v3286 = vadd.f32 %v3237, %v3285
  %v3287 = vpop.f32.mrf.mxu0
  %v3288 = vadd.f32 %v3239, %v3287
  %3289 = vmatmul.bf16.gmra.mxu0 %v710
  %v3290 = vpop.f32.mrf.mxu0
  %v3291 = vadd.f32 %v3242, %v3290
  %v3292 = vpop.f32.mrf.mxu0
  %v3293 = vadd.f32 %v3244, %v3292
  %3294 = vmatmul.bf16.gmra.mxu0 %v720
  %v3295 = vpop.f32.mrf.mxu0
  %v3296 = vadd.f32 %v3247, %v3295
  %v3297 = vpop.f32.mrf.mxu0
  %v3298 = vadd.f32 %v3249, %v3297
  %3299 = vmatmul.bf16.gmra.mxu0 %v730
  %v3300 = vpop.f32.mrf.mxu0
  %v3301 = vadd.f32 %v3252, %v3300
  %v3302 = vpop.f32.mrf.mxu0
  %v3303 = vadd.f32 %v3254, %v3302
  %3304 = vmatmul.bf16.gmra.mxu0 %v740
  %v3305 = vpop.f32.mrf.mxu0
  %v3306 = vadd.f32 %v3257, %v3305
  %v3307 = vpop.f32.mrf.mxu0
  %v3308 = vadd.f32 %v3259, %v3307
  %3309 = vmatmul.bf16.gmra.mxu0 %v750
  %v3310 = vpop.f32.mrf.mxu0
  %v3311 = vadd.f32 %v3262, %v3310
  %v3312 = vpop.f32.mrf.mxu0
  %v3313 = vadd.f32 %v3264, %v3312
  %3314 = vdwg.mxu0
  %3315 = vmatpush.bf16.msra.mxu0 %v2078
  %3316 = vmatpush.bf16.msra.mxu0 %v2074
  %3317 = vmatpush.bf16.msra.mxu0 %v2070
  %3318 = vmatpush.bf16.msra.mxu0 %v2066
  %3319 = vmatpush.bf16.msra.mxu0 %v2062
  %3320 = vmatpush.bf16.msra.mxu0 %v2058
  %3321 = vmatpush.bf16.msra.mxu0 %v2054
  %3322 = vmatpush.bf16.msra.mxu0 %v2050
  %3323 = vmatmul.bf16.gmra.mxu0 %v681
  %v3324 = vpop.f32.mrf.mxu0
  %v3325 = vadd.f32 %v3276, %v3324
  %v3326 = vpop.f32.mrf.mxu0
  %v3327 = vadd.f32 %v3278, %v3326
  %3328 = vmatmul.bf16.gmra.mxu0 %v691
  %v3329 = vpop.f32.mrf.mxu0
  %v3330 = vadd.f32 %v3281, %v3329
  %v3331 = vpop.f32.mrf.mxu0
  %v3332 = vadd.f32 %v3283, %v3331
  %3333 = vmatmul.bf16.gmra.mxu0 %v701
  %v3334 = vpop.f32.mrf.mxu0
  %v3335 = vadd.f32 %v3286, %v3334
  %v3336 = vpop.f32.mrf.mxu0
  %v3337 = vadd.f32 %v3288, %v3336
  %3338 = vmatmul.bf16.gmra.mxu0 %v711
  %v3339 = vpop.f32.mrf.mxu0
  %v3340 = vadd.f32 %v3291, %v3339
  %v3341 = vpop.f32.mrf.mxu0
  %v3342 = vadd.f32 %v3293, %v3341
  %3343 = vmatmul.bf16.gmra.mxu0 %v721
  %v3344 = vpop.f32.mrf.mxu0
  %v3345 = vadd.f32 %v3296, %v3344
  %v3346 = vpop.f32.mrf.mxu0
  %v3347 = vadd.f32 %v3298, %v3346
  %3348 = vmatmul.bf16.gmra.mxu0 %v731
  %v3349 = vpop.f32.mrf.mxu0
  %v3350 = vadd.f32 %v3301, %v3349
  %v3351 = vpop.f32.mrf.mxu0
  %v3352 = vadd.f32 %v3303, %v3351
  %3353 = vmatmul.bf16.gmra.mxu0 %v741
  %v3354 = vpop.f32.mrf.mxu0
  %v3355 = vadd.f32 %v3306, %v3354
  %v3356 = vpop.f32.mrf.mxu0
  %v3357 = vadd.f32 %v3308, %v3356
  %3358 = vmatmul.bf16.gmra.mxu0 %v751
  %v3359 = vpop.f32.mrf.mxu0
  %v3360 = vadd.f32 %v3311, %v3359
  %v3361 = vpop.f32.mrf.mxu0
  %v3362 = vadd.f32 %v3313, %v3361
  %3363 = vdwg.mxu0
  %3364 = vmatpush.bf16.msra.mxu0 %v2110
  %3365 = vmatpush.bf16.msra.mxu0 %v2106
  %3366 = vmatpush.bf16.msra.mxu0 %v2102
  %3367 = vmatpush.bf16.msra.mxu0 %v2098
  %3368 = vmatpush.bf16.msra.mxu0 %v2094
  %3369 = vmatpush.bf16.msra.mxu0 %v2090
  %3370 = vmatpush.bf16.msra.mxu0 %v2086
  %3371 = vmatpush.bf16.msra.mxu0 %v2082
  %3372 = vmatmul.bf16.gmra.mxu0 %v682
  %v3373 = vpop.f32.mrf.mxu0
  %v3374 = vadd.f32 %v3325, %v3373
  %v3375 = vpop.f32.mrf.mxu0
  %v3376 = vadd.f32 %v3327, %v3375
  %3377 = vmatmul.bf16.gmra.mxu0 %v692
  %v3378 = vpop.f32.mrf.mxu0
  %v3379 = vadd.f32 %v3330, %v3378
  %v3380 = vpop.f32.mrf.mxu0
  %v3381 = vadd.f32 %v3332, %v3380
  %3382 = vmatmul.bf16.gmra.mxu0 %v702
  %v3383 = vpop.f32.mrf.mxu0
  %v3384 = vadd.f32 %v3335, %v3383
  %v3385 = vpop.f32.mrf.mxu0
  %v3386 = vadd.f32 %v3337, %v3385
  %3387 = vmatmul.bf16.gmra.mxu0 %v712
  %v3388 = vpop.f32.mrf.mxu0
  %v3389 = vadd.f32 %v3340, %v3388
  %v3390 = vpop.f32.mrf.mxu0
  %v3391 = vadd.f32 %v3342, %v3390
  %3392 = vmatmul.bf16.gmra.mxu0 %v722
  %v3393 = vpop.f32.mrf.mxu0
  %v3394 = vadd.f32 %v3345, %v3393
  %v3395 = vpop.f32.mrf.mxu0
  %v3396 = vadd.f32 %v3347, %v3395
  %3397 = vmatmul.bf16.gmra.mxu0 %v732
  %v3398 = vpop.f32.mrf.mxu0
  %v3399 = vadd.f32 %v3350, %v3398
  %v3400 = vpop.f32.mrf.mxu0
  %v3401 = vadd.f32 %v3352, %v3400
  %3402 = vmatmul.bf16.gmra.mxu0 %v742
  %v3403 = vpop.f32.mrf.mxu0
  %v3404 = vadd.f32 %v3355, %v3403
  %v3405 = vpop.f32.mrf.mxu0
  %v3406 = vadd.f32 %v3357, %v3405
  %3407 = vmatmul.bf16.gmra.mxu0 %v752
  %v3408 = vpop.f32.mrf.mxu0
  %v3409 = vadd.f32 %v3360, %v3408
  %v3410 = vpop.f32.mrf.mxu0
  %v3411 = vadd.f32 %v3362, %v3410
  %3412 = vdwg.mxu0
  %3413 = vmatpush.bf16.msra.mxu0 %v1823
  %3414 = vmatpush.bf16.msra.mxu0 %v1819
  %3415 = vmatpush.bf16.msra.mxu0 %v1815
  %3416 = vmatpush.bf16.msra.mxu0 %v1811
  %3417 = vmatpush.bf16.msra.mxu0 %v1807
  %3418 = vmatpush.bf16.msra.mxu0 %v1803
  %3419 = vmatpush.bf16.msra.mxu0 %v1799
  %3420 = vmatpush.bf16.msra.mxu0 %v1795
  %3421 = vmatmul.bf16.gmra.mxu0 %v673
  %v3422 = vpop.f32.mrf.mxu0
  %v3423 = vadd.f32 %v427, %v3422
  %v3424 = vpop.f32.mrf.mxu0
  %v3425 = vadd.f32 %v427, %v3424
  %3426 = vmatmul.bf16.gmra.mxu0 %v683
  %v3427 = vpop.f32.mrf.mxu0
  %v3428 = vadd.f32 %v427, %v3427
  %v3429 = vpop.f32.mrf.mxu0
  %v3430 = vadd.f32 %v427, %v3429
  %3431 = vmatmul.bf16.gmra.mxu0 %v693
  %v3432 = vpop.f32.mrf.mxu0
  %v3433 = vadd.f32 %v427, %v3432
  %v3434 = vpop.f32.mrf.mxu0
  %v3435 = vadd.f32 %v427, %v3434
  %3436 = vmatmul.bf16.gmra.mxu0 %v703
  %v3437 = vpop.f32.mrf.mxu0
  %v3438 = vadd.f32 %v427, %v3437
  %v3439 = vpop.f32.mrf.mxu0
  %v3440 = vadd.f32 %v427, %v3439
  %3441 = vmatmul.bf16.gmra.mxu0 %v713
  %v3442 = vpop.f32.mrf.mxu0
  %v3443 = vadd.f32 %v427, %v3442
  %v3444 = vpop.f32.mrf.mxu0
  %v3445 = vadd.f32 %v427, %v3444
  %3446 = vmatmul.bf16.gmra.mxu0 %v723
  %v3447 = vpop.f32.mrf.mxu0
  %v3448 = vadd.f32 %v427, %v3447
  %v3449 = vpop.f32.mrf.mxu0
  %v3450 = vadd.f32 %v427, %v3449
  %3451 = vmatmul.bf16.gmra.mxu0 %v733
  %v3452 = vpop.f32.mrf.mxu0
  %v3453 = vadd.f32 %v427, %v3452
  %v3454 = vpop.f32.mrf.mxu0
  %v3455 = vadd.f32 %v427, %v3454
  %3456 = vmatmul.bf16.gmra.mxu0 %v743
  %v3457 = vpop.f32.mrf.mxu0
  %v3458 = vadd.f32 %v427, %v3457
  %v3459 = vpop.f32.mrf.mxu0
  %v3460 = vadd.f32 %v427, %v3459
  %3461 = vdwg.mxu0
  %3462 = vmatpush.bf16.msra.mxu0 %v1855
  %3463 = vmatpush.bf16.msra.mxu0 %v1851
  %3464 = vmatpush.bf16.msra.mxu0 %v1847
  %3465 = vmatpush.bf16.msra.mxu0 %v1843
  %3466 = vmatpush.bf16.msra.mxu0 %v1839
  %3467 = vmatpush.bf16.msra.mxu0 %v1835
  %3468 = vmatpush.bf16.msra.mxu0 %v1831
  %3469 = vmatpush.bf16.msra.mxu0 %v1827
  %3470 = vmatmul.bf16.gmra.mxu0 %v674
  %v3471 = vpop.f32.mrf.mxu0
  %v3472 = vadd.f32 %v3423, %v3471
  %v3473 = vpop.f32.mrf.mxu0
  %v3474 = vadd.f32 %v3425, %v3473
  %3475 = vmatmul.bf16.gmra.mxu0 %v684
  %v3476 = vpop.f32.mrf.mxu0
  %v3477 = vadd.f32 %v3428, %v3476
  %v3478 = vpop.f32.mrf.mxu0
  %v3479 = vadd.f32 %v3430, %v3478
  %3480 = vmatmul.bf16.gmra.mxu0 %v694
  %v3481 = vpop.f32.mrf.mxu0
  %v3482 = vadd.f32 %v3433, %v3481
  %v3483 = vpop.f32.mrf.mxu0
  %v3484 = vadd.f32 %v3435, %v3483
  %3485 = vmatmul.bf16.gmra.mxu0 %v704
  %v3486 = vpop.f32.mrf.mxu0
  %v3487 = vadd.f32 %v3438, %v3486
  %v3488 = vpop.f32.mrf.mxu0
  %v3489 = vadd.f32 %v3440, %v3488
  %3490 = vmatmul.bf16.gmra.mxu0 %v714
  %v3491 = vpop.f32.mrf.mxu0
  %v3492 = vadd.f32 %v3443, %v3491
  %v3493 = vpop.f32.mrf.mxu0
  %v3494 = vadd.f32 %v3445, %v3493
  %3495 = vmatmul.bf16.gmra.mxu0 %v724
  %v3496 = vpop.f32.mrf.mxu0
  %v3497 = vadd.f32 %v3448, %v3496
  %v3498 = vpop.f32.mrf.mxu0
  %v3499 = vadd.f32 %v3450, %v3498
  %3500 = vmatmul.bf16.gmra.mxu0 %v734
  %v3501 = vpop.f32.mrf.mxu0
  %v3502 = vadd.f32 %v3453, %v3501
  %v3503 = vpop.f32.mrf.mxu0
  %v3504 = vadd.f32 %v3455, %v3503
  %3505 = vmatmul.bf16.gmra.mxu0 %v744
  %v3506 = vpop.f32.mrf.mxu0
  %v3507 = vadd.f32 %v3458, %v3506
  %v3508 = vpop.f32.mrf.mxu0
  %v3509 = vadd.f32 %v3460, %v3508
  %3510 = vdwg.mxu0
  %3511 = vmatpush.bf16.msra.mxu0 %v1887
  %3512 = vmatpush.bf16.msra.mxu0 %v1883
  %3513 = vmatpush.bf16.msra.mxu0 %v1879
  %3514 = vmatpush.bf16.msra.mxu0 %v1875
  %3515 = vmatpush.bf16.msra.mxu0 %v1871
  %3516 = vmatpush.bf16.msra.mxu0 %v1867
  %3517 = vmatpush.bf16.msra.mxu0 %v1863
  %3518 = vmatpush.bf16.msra.mxu0 %v1859
  %3519 = vmatmul.bf16.gmra.mxu0 %v675
  %v3520 = vpop.f32.mrf.mxu0
  %v3521 = vadd.f32 %v3472, %v3520
  %v3522 = vpop.f32.mrf.mxu0
  %v3523 = vadd.f32 %v3474, %v3522
  %3524 = vmatmul.bf16.gmra.mxu0 %v685
  %v3525 = vpop.f32.mrf.mxu0
  %v3526 = vadd.f32 %v3477, %v3525
  %v3527 = vpop.f32.mrf.mxu0
  %v3528 = vadd.f32 %v3479, %v3527
  %3529 = vmatmul.bf16.gmra.mxu0 %v695
  %v3530 = vpop.f32.mrf.mxu0
  %v3531 = vadd.f32 %v3482, %v3530
  %v3532 = vpop.f32.mrf.mxu0
  %v3533 = vadd.f32 %v3484, %v3532
  %3534 = vmatmul.bf16.gmra.mxu0 %v705
  %v3535 = vpop.f32.mrf.mxu0
  %v3536 = vadd.f32 %v3487, %v3535
  %v3537 = vpop.f32.mrf.mxu0
  %v3538 = vadd.f32 %v3489, %v3537
  %3539 = vmatmul.bf16.gmra.mxu0 %v715
  %v3540 = vpop.f32.mrf.mxu0
  %v3541 = vadd.f32 %v3492, %v3540
  %v3542 = vpop.f32.mrf.mxu0
  %v3543 = vadd.f32 %v3494, %v3542
  %3544 = vmatmul.bf16.gmra.mxu0 %v725
  %v3545 = vpop.f32.mrf.mxu0
  %v3546 = vadd.f32 %v3497, %v3545
  %v3547 = vpop.f32.mrf.mxu0
  %v3548 = vadd.f32 %v3499, %v3547
  %3549 = vmatmul.bf16.gmra.mxu0 %v735
  %v3550 = vpop.f32.mrf.mxu0
  %v3551 = vadd.f32 %v3502, %v3550
  %v3552 = vpop.f32.mrf.mxu0
  %v3553 = vadd.f32 %v3504, %v3552
  %3554 = vmatmul.bf16.gmra.mxu0 %v745
  %v3555 = vpop.f32.mrf.mxu0
  %v3556 = vadd.f32 %v3507, %v3555
  %v3557 = vpop.f32.mrf.mxu0
  %v3558 = vadd.f32 %v3509, %v3557
  %3559 = vdwg.mxu0
  %3560 = vmatpush.bf16.msra.mxu0 %v1919
  %3561 = vmatpush.bf16.msra.mxu0 %v1915
  %3562 = vmatpush.bf16.msra.mxu0 %v1911
  %3563 = vmatpush.bf16.msra.mxu0 %v1907
  %3564 = vmatpush.bf16.msra.mxu0 %v1903
  %3565 = vmatpush.bf16.msra.mxu0 %v1899
  %3566 = vmatpush.bf16.msra.mxu0 %v1895
  %3567 = vmatpush.bf16.msra.mxu0 %v1891
  %3568 = vmatmul.bf16.gmra.mxu0 %v676
  %v3569 = vpop.f32.mrf.mxu0
  %v3570 = vadd.f32 %v3521, %v3569
  %v3571 = vpop.f32.mrf.mxu0
  %v3572 = vadd.f32 %v3523, %v3571
  %3573 = vmatmul.bf16.gmra.mxu0 %v686
  %v3574 = vpop.f32.mrf.mxu0
  %v3575 = vadd.f32 %v3526, %v3574
  %v3576 = vpop.f32.mrf.mxu0
  %v3577 = vadd.f32 %v3528, %v3576
  %3578 = vmatmul.bf16.gmra.mxu0 %v696
  %v3579 = vpop.f32.mrf.mxu0
  %v3580 = vadd.f32 %v3531, %v3579
  %v3581 = vpop.f32.mrf.mxu0
  %v3582 = vadd.f32 %v3533, %v3581
  %3583 = vmatmul.bf16.gmra.mxu0 %v706
  %v3584 = vpop.f32.mrf.mxu0
  %v3585 = vadd.f32 %v3536, %v3584
  %v3586 = vpop.f32.mrf.mxu0
  %v3587 = vadd.f32 %v3538, %v3586
  %3588 = vmatmul.bf16.gmra.mxu0 %v716
  %v3589 = vpop.f32.mrf.mxu0
  %v3590 = vadd.f32 %v3541, %v3589
  %v3591 = vpop.f32.mrf.mxu0
  %v3592 = vadd.f32 %v3543, %v3591
  %3593 = vmatmul.bf16.gmra.mxu0 %v726
  %v3594 = vpop.f32.mrf.mxu0
  %v3595 = vadd.f32 %v3546, %v3594
  %v3596 = vpop.f32.mrf.mxu0
  %v3597 = vadd.f32 %v3548, %v3596
  %3598 = vmatmul.bf16.gmra.mxu0 %v736
  %v3599 = vpop.f32.mrf.mxu0
  %v3600 = vadd.f32 %v3551, %v3599
  %v3601 = vpop.f32.mrf.mxu0
  %v3602 = vadd.f32 %v3553, %v3601
  %3603 = vmatmul.bf16.gmra.mxu0 %v746
  %v3604 = vpop.f32.mrf.mxu0
  %v3605 = vadd.f32 %v3556, %v3604
  %v3606 = vpop.f32.mrf.mxu0
  %v3607 = vadd.f32 %v3558, %v3606
  %3608 = vdwg.mxu0
  %3609 = vmatpush.bf16.msra.mxu0 %v1951
  %3610 = vmatpush.bf16.msra.mxu0 %v1947
  %3611 = vmatpush.bf16.msra.mxu0 %v1943
  %3612 = vmatpush.bf16.msra.mxu0 %v1939
  %3613 = vmatpush.bf16.msra.mxu0 %v1935
  %3614 = vmatpush.bf16.msra.mxu0 %v1931
  %3615 = vmatpush.bf16.msra.mxu0 %v1927
  %3616 = vmatpush.bf16.msra.mxu0 %v1923
  %3617 = vmatmul.bf16.gmra.mxu0 %v677
  %v3618 = vpop.f32.mrf.mxu0
  %v3619 = vadd.f32 %v3570, %v3618
  %v3620 = vpop.f32.mrf.mxu0
  %v3621 = vadd.f32 %v3572, %v3620
  %3622 = vmatmul.bf16.gmra.mxu0 %v687
  %v3623 = vpop.f32.mrf.mxu0
  %v3624 = vadd.f32 %v3575, %v3623
  %v3625 = vpop.f32.mrf.mxu0
  %v3626 = vadd.f32 %v3577, %v3625
  %3627 = vmatmul.bf16.gmra.mxu0 %v697
  %v3628 = vpop.f32.mrf.mxu0
  %v3629 = vadd.f32 %v3580, %v3628
  %v3630 = vpop.f32.mrf.mxu0
  %v3631 = vadd.f32 %v3582, %v3630
  %3632 = vmatmul.bf16.gmra.mxu0 %v707
  %v3633 = vpop.f32.mrf.mxu0
  %v3634 = vadd.f32 %v3585, %v3633
  %v3635 = vpop.f32.mrf.mxu0
  %v3636 = vadd.f32 %v3587, %v3635
  %3637 = vmatmul.bf16.gmra.mxu0 %v717
  %v3638 = vpop.f32.mrf.mxu0
  %v3639 = vadd.f32 %v3590, %v3638
  %v3640 = vpop.f32.mrf.mxu0
  %v3641 = vadd.f32 %v3592, %v3640
  %3642 = vmatmul.bf16.gmra.mxu0 %v727
  %v3643 = vpop.f32.mrf.mxu0
  %v3644 = vadd.f32 %v3595, %v3643
  %v3645 = vpop.f32.mrf.mxu0
  %v3646 = vadd.f32 %v3597, %v3645
  %3647 = vmatmul.bf16.gmra.mxu0 %v737
  %v3648 = vpop.f32.mrf.mxu0
  %v3649 = vadd.f32 %v3600, %v3648
  %v3650 = vpop.f32.mrf.mxu0
  %v3651 = vadd.f32 %v3602, %v3650
  %3652 = vmatmul.bf16.gmra.mxu0 %v747
  %v3653 = vpop.f32.mrf.mxu0
  %v3654 = vadd.f32 %v3605, %v3653
  %v3655 = vpop.f32.mrf.mxu0
  %v3656 = vadd.f32 %v3607, %v3655
  %3657 = vdwg.mxu0
  %3658 = vmatpush.bf16.msra.mxu0 %v1983
  %3659 = vmatpush.bf16.msra.mxu0 %v1979
  %3660 = vmatpush.bf16.msra.mxu0 %v1975
  %3661 = vmatpush.bf16.msra.mxu0 %v1971
  %3662 = vmatpush.bf16.msra.mxu0 %v1967
  %3663 = vmatpush.bf16.msra.mxu0 %v1963
  %3664 = vmatpush.bf16.msra.mxu0 %v1959
  %3665 = vmatpush.bf16.msra.mxu0 %v1955
  %3666 = vmatmul.bf16.gmra.mxu0 %v678
  %v3667 = vpop.f32.mrf.mxu0
  %v3668 = vadd.f32 %v3619, %v3667
  %v3669 = vpop.f32.mrf.mxu0
  %v3670 = vadd.f32 %v3621, %v3669
  %3671 = vmatmul.bf16.gmra.mxu0 %v688
  %v3672 = vpop.f32.mrf.mxu0
  %v3673 = vadd.f32 %v3624, %v3672
  %v3674 = vpop.f32.mrf.mxu0
  %v3675 = vadd.f32 %v3626, %v3674
  %3676 = vmatmul.bf16.gmra.mxu0 %v698
  %v3677 = vpop.f32.mrf.mxu0
  %v3678 = vadd.f32 %v3629, %v3677
  %v3679 = vpop.f32.mrf.mxu0
  %v3680 = vadd.f32 %v3631, %v3679
  %3681 = vmatmul.bf16.gmra.mxu0 %v708
  %v3682 = vpop.f32.mrf.mxu0
  %v3683 = vadd.f32 %v3634, %v3682
  %v3684 = vpop.f32.mrf.mxu0
  %v3685 = vadd.f32 %v3636, %v3684
  %3686 = vmatmul.bf16.gmra.mxu0 %v718
  %v3687 = vpop.f32.mrf.mxu0
  %v3688 = vadd.f32 %v3639, %v3687
  %v3689 = vpop.f32.mrf.mxu0
  %v3690 = vadd.f32 %v3641, %v3689
  %3691 = vmatmul.bf16.gmra.mxu0 %v728
  %v3692 = vpop.f32.mrf.mxu0
  %v3693 = vadd.f32 %v3644, %v3692
  %v3694 = vpop.f32.mrf.mxu0
  %v3695 = vadd.f32 %v3646, %v3694
  %3696 = vmatmul.bf16.gmra.mxu0 %v738
  %v3697 = vpop.f32.mrf.mxu0
  %v3698 = vadd.f32 %v3649, %v3697
  %v3699 = vpop.f32.mrf.mxu0
  %v3700 = vadd.f32 %v3651, %v3699
  %3701 = vmatmul.bf16.gmra.mxu0 %v748
  %v3702 = vpop.f32.mrf.mxu0
  %v3703 = vadd.f32 %v3654, %v3702
  %v3704 = vpop.f32.mrf.mxu0
  %v3705 = vadd.f32 %v3656, %v3704
  %3706 = vdwg.mxu0
  %3707 = vmatpush.bf16.msra.mxu0 %v2015
  %3708 = vmatpush.bf16.msra.mxu0 %v2011
  %3709 = vmatpush.bf16.msra.mxu0 %v2007
  %3710 = vmatpush.bf16.msra.mxu0 %v2003
  %3711 = vmatpush.bf16.msra.mxu0 %v1999
  %3712 = vmatpush.bf16.msra.mxu0 %v1995
  %3713 = vmatpush.bf16.msra.mxu0 %v1991
  %3714 = vmatpush.bf16.msra.mxu0 %v1987
  %3715 = vmatmul.bf16.gmra.mxu0 %v679
  %v3716 = vpop.f32.mrf.mxu0
  %v3717 = vadd.f32 %v3668, %v3716
  %v3718 = vpop.f32.mrf.mxu0
  %v3719 = vadd.f32 %v3670, %v3718
  %3720 = vmatmul.bf16.gmra.mxu0 %v689
  %v3721 = vpop.f32.mrf.mxu0
  %v3722 = vadd.f32 %v3673, %v3721
  %v3723 = vpop.f32.mrf.mxu0
  %v3724 = vadd.f32 %v3675, %v3723
  %3725 = vmatmul.bf16.gmra.mxu0 %v699
  %v3726 = vpop.f32.mrf.mxu0
  %v3727 = vadd.f32 %v3678, %v3726
  %v3728 = vpop.f32.mrf.mxu0
  %v3729 = vadd.f32 %v3680, %v3728
  %3730 = vmatmul.bf16.gmra.mxu0 %v709
  %v3731 = vpop.f32.mrf.mxu0
  %v3732 = vadd.f32 %v3683, %v3731
  %v3733 = vpop.f32.mrf.mxu0
  %v3734 = vadd.f32 %v3685, %v3733
  %3735 = vmatmul.bf16.gmra.mxu0 %v719
  %v3736 = vpop.f32.mrf.mxu0
  %v3737 = vadd.f32 %v3688, %v3736
  %v3738 = vpop.f32.mrf.mxu0
  %v3739 = vadd.f32 %v3690, %v3738
  %3740 = vmatmul.bf16.gmra.mxu0 %v729
  %v3741 = vpop.f32.mrf.mxu0
  %v3742 = vadd.f32 %v3693, %v3741
  %v3743 = vpop.f32.mrf.mxu0
  %v3744 = vadd.f32 %v3695, %v3743
  %3745 = vmatmul.bf16.gmra.mxu0 %v739
  %v3746 = vpop.f32.mrf.mxu0
  %v3747 = vadd.f32 %v3698, %v3746
  %v3748 = vpop.f32.mrf.mxu0
  %v3749 = vadd.f32 %v3700, %v3748
  %3750 = vmatmul.bf16.gmra.mxu0 %v749
  %v3751 = vpop.f32.mrf.mxu0
  %v3752 = vadd.f32 %v3703, %v3751
  %v3753 = vpop.f32.mrf.mxu0
  %v3754 = vadd.f32 %v3705, %v3753
  %3755 = vdwg.mxu0
  %3756 = vmatpush.bf16.msra.mxu0 %v2047
  %3757 = vmatpush.bf16.msra.mxu0 %v2043
  %3758 = vmatpush.bf16.msra.mxu0 %v2039
  %3759 = vmatpush.bf16.msra.mxu0 %v2035
  %3760 = vmatpush.bf16.msra.mxu0 %v2031
  %3761 = vmatpush.bf16.msra.mxu0 %v2027
  %3762 = vmatpush.bf16.msra.mxu0 %v2023
  %3763 = vmatpush.bf16.msra.mxu0 %v2019
  %3764 = vmatmul.bf16.gmra.mxu0 %v680
  %v3765 = vpop.f32.mrf.mxu0
  %v3766 = vadd.f32 %v3717, %v3765
  %v3767 = vpop.f32.mrf.mxu0
  %v3768 = vadd.f32 %v3719, %v3767
  %3769 = vmatmul.bf16.gmra.mxu0 %v690
  %v3770 = vpop.f32.mrf.mxu0
  %v3771 = vadd.f32 %v3722, %v3770
  %v3772 = vpop.f32.mrf.mxu0
  %v3773 = vadd.f32 %v3724, %v3772
  %3774 = vmatmul.bf16.gmra.mxu0 %v700
  %v3775 = vpop.f32.mrf.mxu0
  %v3776 = vadd.f32 %v3727, %v3775
  %v3777 = vpop.f32.mrf.mxu0
  %v3778 = vadd.f32 %v3729, %v3777
  %3779 = vmatmul.bf16.gmra.mxu0 %v710
  %v3780 = vpop.f32.mrf.mxu0
  %v3781 = vadd.f32 %v3732, %v3780
  %v3782 = vpop.f32.mrf.mxu0
  %v3783 = vadd.f32 %v3734, %v3782
  %3784 = vmatmul.bf16.gmra.mxu0 %v720
  %v3785 = vpop.f32.mrf.mxu0
  %v3786 = vadd.f32 %v3737, %v3785
  %v3787 = vpop.f32.mrf.mxu0
  %v3788 = vadd.f32 %v3739, %v3787
  %3789 = vmatmul.bf16.gmra.mxu0 %v730
  %v3790 = vpop.f32.mrf.mxu0
  %v3791 = vadd.f32 %v3742, %v3790
  %v3792 = vpop.f32.mrf.mxu0
  %v3793 = vadd.f32 %v3744, %v3792
  %3794 = vmatmul.bf16.gmra.mxu0 %v740
  %v3795 = vpop.f32.mrf.mxu0
  %v3796 = vadd.f32 %v3747, %v3795
  %v3797 = vpop.f32.mrf.mxu0
  %v3798 = vadd.f32 %v3749, %v3797
  %3799 = vmatmul.bf16.gmra.mxu0 %v750
  %v3800 = vpop.f32.mrf.mxu0
  %v3801 = vadd.f32 %v3752, %v3800
  %v3802 = vpop.f32.mrf.mxu0
  %v3803 = vadd.f32 %v3754, %v3802
  %3804 = vdwg.mxu0
  %3805 = vmatpush.bf16.msra.mxu0 %v2079
  %3806 = vmatpush.bf16.msra.mxu0 %v2075
  %3807 = vmatpush.bf16.msra.mxu0 %v2071
  %3808 = vmatpush.bf16.msra.mxu0 %v2067
  %3809 = vmatpush.bf16.msra.mxu0 %v2063
  %3810 = vmatpush.bf16.msra.mxu0 %v2059
  %3811 = vmatpush.bf16.msra.mxu0 %v2055
  %3812 = vmatpush.bf16.msra.mxu0 %v2051
  %3813 = vmatmul.bf16.gmra.mxu0 %v681
  %v3814 = vpop.f32.mrf.mxu0
  %v3815 = vadd.f32 %v3766, %v3814
  %v3816 = vpop.f32.mrf.mxu0
  %v3817 = vadd.f32 %v3768, %v3816
  %3818 = vmatmul.bf16.gmra.mxu0 %v691
  %v3819 = vpop.f32.mrf.mxu0
  %v3820 = vadd.f32 %v3771, %v3819
  %v3821 = vpop.f32.mrf.mxu0
  %v3822 = vadd.f32 %v3773, %v3821
  %3823 = vmatmul.bf16.gmra.mxu0 %v701
  %v3824 = vpop.f32.mrf.mxu0
  %v3825 = vadd.f32 %v3776, %v3824
  %v3826 = vpop.f32.mrf.mxu0
  %v3827 = vadd.f32 %v3778, %v3826
  %3828 = vmatmul.bf16.gmra.mxu0 %v711
  %v3829 = vpop.f32.mrf.mxu0
  %v3830 = vadd.f32 %v3781, %v3829
  %v3831 = vpop.f32.mrf.mxu0
  %v3832 = vadd.f32 %v3783, %v3831
  %3833 = vmatmul.bf16.gmra.mxu0 %v721
  %v3834 = vpop.f32.mrf.mxu0
  %v3835 = vadd.f32 %v3786, %v3834
  %v3836 = vpop.f32.mrf.mxu0
  %v3837 = vadd.f32 %v3788, %v3836
  %3838 = vmatmul.bf16.gmra.mxu0 %v731
  %v3839 = vpop.f32.mrf.mxu0
  %v3840 = vadd.f32 %v3791, %v3839
  %v3841 = vpop.f32.mrf.mxu0
  %v3842 = vadd.f32 %v3793, %v3841
  %3843 = vmatmul.bf16.gmra.mxu0 %v741
  %v3844 = vpop.f32.mrf.mxu0
  %v3845 = vadd.f32 %v3796, %v3844
  %v3846 = vpop.f32.mrf.mxu0
  %v3847 = vadd.f32 %v3798, %v3846
  %3848 = vmatmul.bf16.gmra.mxu0 %v751
  %v3849 = vpop.f32.mrf.mxu0
  %v3850 = vadd.f32 %v3801, %v3849
  %v3851 = vpop.f32.mrf.mxu0
  %v3852 = vadd.f32 %v3803, %v3851
  %3853 = vdwg.mxu0
  %3854 = vmatpush.bf16.msra.mxu0 %v2111
  %3855 = vmatpush.bf16.msra.mxu0 %v2107
  %3856 = vmatpush.bf16.msra.mxu0 %v2103
  %3857 = vmatpush.bf16.msra.mxu0 %v2099
  %3858 = vmatpush.bf16.msra.mxu0 %v2095
  %3859 = vmatpush.bf16.msra.mxu0 %v2091
  %3860 = vmatpush.bf16.msra.mxu0 %v2087
  %3861 = vmatpush.bf16.msra.mxu0 %v2083
  %3862 = vmatmul.bf16.gmra.mxu0 %v682
  %v3863 = vpop.f32.mrf.mxu0
  %v3864 = vadd.f32 %v3815, %v3863
  %v3865 = vpop.f32.mrf.mxu0
  %v3866 = vadd.f32 %v3817, %v3865
  %3867 = vmatmul.bf16.gmra.mxu0 %v692
  %v3868 = vpop.f32.mrf.mxu0
  %v3869 = vadd.f32 %v3820, %v3868
  %v3870 = vpop.f32.mrf.mxu0
  %v3871 = vadd.f32 %v3822, %v3870
  %3872 = vmatmul.bf16.gmra.mxu0 %v702
  %v3873 = vpop.f32.mrf.mxu0
  %v3874 = vadd.f32 %v3825, %v3873
  %v3875 = vpop.f32.mrf.mxu0
  %v3876 = vadd.f32 %v3827, %v3875
  %3877 = vmatmul.bf16.gmra.mxu0 %v712
  %v3878 = vpop.f32.mrf.mxu0
  %v3879 = vadd.f32 %v3830, %v3878
  %v3880 = vpop.f32.mrf.mxu0
  %v3881 = vadd.f32 %v3832, %v3880
  %3882 = vmatmul.bf16.gmra.mxu0 %v722
  %v3883 = vpop.f32.mrf.mxu0
  %v3884 = vadd.f32 %v3835, %v3883
  %v3885 = vpop.f32.mrf.mxu0
  %v3886 = vadd.f32 %v3837, %v3885
  %3887 = vmatmul.bf16.gmra.mxu0 %v732
  %v3888 = vpop.f32.mrf.mxu0
  %v3889 = vadd.f32 %v3840, %v3888
  %v3890 = vpop.f32.mrf.mxu0
  %v3891 = vadd.f32 %v3842, %v3890
  %3892 = vmatmul.bf16.gmra.mxu0 %v742
  %v3893 = vpop.f32.mrf.mxu0
  %v3894 = vadd.f32 %v3845, %v3893
  %v3895 = vpop.f32.mrf.mxu0
  %v3896 = vadd.f32 %v3847, %v3895
  %3897 = vmatmul.bf16.gmra.mxu0 %v752
  %v3898 = vpop.f32.mrf.mxu0
  %v3899 = vadd.f32 %v3850, %v3898
  %v3900 = vpop.f32.mrf.mxu0
  %v3901 = vadd.f32 %v3852, %v3900
  %3902 = vdwg.mxu0
  %3903 = vmatpush.bf16.msra.mxu0 %v1824
  %3904 = vmatpush.bf16.msra.mxu0 %v1820
  %3905 = vmatpush.bf16.msra.mxu0 %v1816
  %3906 = vmatpush.bf16.msra.mxu0 %v1812
  %3907 = vmatpush.bf16.msra.mxu0 %v1808
  %3908 = vmatpush.bf16.msra.mxu0 %v1804
  %3909 = vmatpush.bf16.msra.mxu0 %v1800
  %3910 = vmatpush.bf16.msra.mxu0 %v1796
  %3911 = vmatmul.bf16.gmra.mxu0 %v673
  %v3912 = vpop.f32.mrf.mxu0
  %v3913 = vadd.f32 %v428, %v3912
  %v3914 = vpop.f32.mrf.mxu0
  %v3915 = vadd.f32 %v428, %v3914
  %3916 = vmatmul.bf16.gmra.mxu0 %v683
  %v3917 = vpop.f32.mrf.mxu0
  %v3918 = vadd.f32 %v428, %v3917
  %v3919 = vpop.f32.mrf.mxu0
  %v3920 = vadd.f32 %v428, %v3919
  %3921 = vmatmul.bf16.gmra.mxu0 %v693
  %v3922 = vpop.f32.mrf.mxu0
  %v3923 = vadd.f32 %v428, %v3922
  %v3924 = vpop.f32.mrf.mxu0
  %v3925 = vadd.f32 %v428, %v3924
  %3926 = vmatmul.bf16.gmra.mxu0 %v703
  %v3927 = vpop.f32.mrf.mxu0
  %v3928 = vadd.f32 %v428, %v3927
  %v3929 = vpop.f32.mrf.mxu0
  %v3930 = vadd.f32 %v428, %v3929
  %3931 = vmatmul.bf16.gmra.mxu0 %v713
  %v3932 = vpop.f32.mrf.mxu0
  %v3933 = vadd.f32 %v428, %v3932
  %v3934 = vpop.f32.mrf.mxu0
  %v3935 = vadd.f32 %v428, %v3934
  %3936 = vmatmul.bf16.gmra.mxu0 %v723
  %v3937 = vpop.f32.mrf.mxu0
  %v3938 = vadd.f32 %v428, %v3937
  %v3939 = vpop.f32.mrf.mxu0
  %v3940 = vadd.f32 %v428, %v3939
  %3941 = vmatmul.bf16.gmra.mxu0 %v733
  %v3942 = vpop.f32.mrf.mxu0
  %v3943 = vadd.f32 %v428, %v3942
  %v3944 = vpop.f32.mrf.mxu0
  %v3945 = vadd.f32 %v428, %v3944
  %3946 = vmatmul.bf16.gmra.mxu0 %v743
  %v3947 = vpop.f32.mrf.mxu0
  %v3948 = vadd.f32 %v428, %v3947
  %v3949 = vpop.f32.mrf.mxu0
  %v3950 = vadd.f32 %v428, %v3949
  %3951 = vdwg.mxu0
  %3952 = vmatpush.bf16.msra.mxu0 %v1856
  %3953 = vmatpush.bf16.msra.mxu0 %v1852
  %3954 = vmatpush.bf16.msra.mxu0 %v1848
  %3955 = vmatpush.bf16.msra.mxu0 %v1844
  %3956 = vmatpush.bf16.msra.mxu0 %v1840
  %3957 = vmatpush.bf16.msra.mxu0 %v1836
  %3958 = vmatpush.bf16.msra.mxu0 %v1832
  %3959 = vmatpush.bf16.msra.mxu0 %v1828
  %3960 = vmatmul.bf16.gmra.mxu0 %v674
  %v3961 = vpop.f32.mrf.mxu0
  %v3962 = vadd.f32 %v3913, %v3961
  %v3963 = vpop.f32.mrf.mxu0
  %v3964 = vadd.f32 %v3915, %v3963
  %3965 = vmatmul.bf16.gmra.mxu0 %v684
  %v3966 = vpop.f32.mrf.mxu0
  %v3967 = vadd.f32 %v3918, %v3966
  %v3968 = vpop.f32.mrf.mxu0
  %v3969 = vadd.f32 %v3920, %v3968
  %3970 = vmatmul.bf16.gmra.mxu0 %v694
  %v3971 = vpop.f32.mrf.mxu0
  %v3972 = vadd.f32 %v3923, %v3971
  %v3973 = vpop.f32.mrf.mxu0
  %v3974 = vadd.f32 %v3925, %v3973
  %3975 = vmatmul.bf16.gmra.mxu0 %v704
  %v3976 = vpop.f32.mrf.mxu0
  %v3977 = vadd.f32 %v3928, %v3976
  %v3978 = vpop.f32.mrf.mxu0
  %v3979 = vadd.f32 %v3930, %v3978
  %3980 = vmatmul.bf16.gmra.mxu0 %v714
  %v3981 = vpop.f32.mrf.mxu0
  %v3982 = vadd.f32 %v3933, %v3981
  %v3983 = vpop.f32.mrf.mxu0
  %v3984 = vadd.f32 %v3935, %v3983
  %3985 = vmatmul.bf16.gmra.mxu0 %v724
  %v3986 = vpop.f32.mrf.mxu0
  %v3987 = vadd.f32 %v3938, %v3986
  %v3988 = vpop.f32.mrf.mxu0
  %v3989 = vadd.f32 %v3940, %v3988
  %3990 = vmatmul.bf16.gmra.mxu0 %v734
  %v3991 = vpop.f32.mrf.mxu0
  %v3992 = vadd.f32 %v3943, %v3991
  %v3993 = vpop.f32.mrf.mxu0
  %v3994 = vadd.f32 %v3945, %v3993
  %3995 = vmatmul.bf16.gmra.mxu0 %v744
  %v3996 = vpop.f32.mrf.mxu0
  %v3997 = vadd.f32 %v3948, %v3996
  %v3998 = vpop.f32.mrf.mxu0
  %v3999 = vadd.f32 %v3950, %v3998
  %4000 = vdwg.mxu0
  %4001 = vmatpush.bf16.msra.mxu0 %v1888
  %4002 = vmatpush.bf16.msra.mxu0 %v1884
  %4003 = vmatpush.bf16.msra.mxu0 %v1880
  %4004 = vmatpush.bf16.msra.mxu0 %v1876
  %4005 = vmatpush.bf16.msra.mxu0 %v1872
  %4006 = vmatpush.bf16.msra.mxu0 %v1868
  %4007 = vmatpush.bf16.msra.mxu0 %v1864
  %4008 = vmatpush.bf16.msra.mxu0 %v1860
  %4009 = vmatmul.bf16.gmra.mxu0 %v675
  %v4010 = vpop.f32.mrf.mxu0
  %v4011 = vadd.f32 %v3962, %v4010
  %v4012 = vpop.f32.mrf.mxu0
  %v4013 = vadd.f32 %v3964, %v4012
  %4014 = vmatmul.bf16.gmra.mxu0 %v685
  %v4015 = vpop.f32.mrf.mxu0
  %v4016 = vadd.f32 %v3967, %v4015
  %v4017 = vpop.f32.mrf.mxu0
  %v4018 = vadd.f32 %v3969, %v4017
  %4019 = vmatmul.bf16.gmra.mxu0 %v695
  %v4020 = vpop.f32.mrf.mxu0
  %v4021 = vadd.f32 %v3972, %v4020
  %v4022 = vpop.f32.mrf.mxu0
  %v4023 = vadd.f32 %v3974, %v4022
  %4024 = vmatmul.bf16.gmra.mxu0 %v705
  %v4025 = vpop.f32.mrf.mxu0
  %v4026 = vadd.f32 %v3977, %v4025
  %v4027 = vpop.f32.mrf.mxu0
  %v4028 = vadd.f32 %v3979, %v4027
  %4029 = vmatmul.bf16.gmra.mxu0 %v715
  %v4030 = vpop.f32.mrf.mxu0
  %v4031 = vadd.f32 %v3982, %v4030
  %v4032 = vpop.f32.mrf.mxu0
  %v4033 = vadd.f32 %v3984, %v4032
  %4034 = vmatmul.bf16.gmra.mxu0 %v725
  %v4035 = vpop.f32.mrf.mxu0
  %v4036 = vadd.f32 %v3987, %v4035
  %v4037 = vpop.f32.mrf.mxu0
  %v4038 = vadd.f32 %v3989, %v4037
  %4039 = vmatmul.bf16.gmra.mxu0 %v735
  %v4040 = vpop.f32.mrf.mxu0
  %v4041 = vadd.f32 %v3992, %v4040
  %v4042 = vpop.f32.mrf.mxu0
  %v4043 = vadd.f32 %v3994, %v4042
  %4044 = vmatmul.bf16.gmra.mxu0 %v745
  %v4045 = vpop.f32.mrf.mxu0
  %v4046 = vadd.f32 %v3997, %v4045
  %v4047 = vpop.f32.mrf.mxu0
  %v4048 = vadd.f32 %v3999, %v4047
  %4049 = vdwg.mxu0
  %4050 = vmatpush.bf16.msra.mxu0 %v1920
  %4051 = vmatpush.bf16.msra.mxu0 %v1916
  %4052 = vmatpush.bf16.msra.mxu0 %v1912
  %4053 = vmatpush.bf16.msra.mxu0 %v1908
  %4054 = vmatpush.bf16.msra.mxu0 %v1904
  %4055 = vmatpush.bf16.msra.mxu0 %v1900
  %4056 = vmatpush.bf16.msra.mxu0 %v1896
  %4057 = vmatpush.bf16.msra.mxu0 %v1892
  %4058 = vmatmul.bf16.gmra.mxu0 %v676
  %v4059 = vpop.f32.mrf.mxu0
  %v4060 = vadd.f32 %v4011, %v4059
  %v4061 = vpop.f32.mrf.mxu0
  %v4062 = vadd.f32 %v4013, %v4061
  %4063 = vmatmul.bf16.gmra.mxu0 %v686
  %v4064 = vpop.f32.mrf.mxu0
  %v4065 = vadd.f32 %v4016, %v4064
  %v4066 = vpop.f32.mrf.mxu0
  %v4067 = vadd.f32 %v4018, %v4066
  %4068 = vmatmul.bf16.gmra.mxu0 %v696
  %v4069 = vpop.f32.mrf.mxu0
  %v4070 = vadd.f32 %v4021, %v4069
  %v4071 = vpop.f32.mrf.mxu0
  %v4072 = vadd.f32 %v4023, %v4071
  %4073 = vmatmul.bf16.gmra.mxu0 %v706
  %v4074 = vpop.f32.mrf.mxu0
  %v4075 = vadd.f32 %v4026, %v4074
  %v4076 = vpop.f32.mrf.mxu0
  %v4077 = vadd.f32 %v4028, %v4076
  %4078 = vmatmul.bf16.gmra.mxu0 %v716
  %v4079 = vpop.f32.mrf.mxu0
  %v4080 = vadd.f32 %v4031, %v4079
  %v4081 = vpop.f32.mrf.mxu0
  %v4082 = vadd.f32 %v4033, %v4081
  %4083 = vmatmul.bf16.gmra.mxu0 %v726
  %v4084 = vpop.f32.mrf.mxu0
  %v4085 = vadd.f32 %v4036, %v4084
  %v4086 = vpop.f32.mrf.mxu0
  %v4087 = vadd.f32 %v4038, %v4086
  %4088 = vmatmul.bf16.gmra.mxu0 %v736
  %v4089 = vpop.f32.mrf.mxu0
  %v4090 = vadd.f32 %v4041, %v4089
  %v4091 = vpop.f32.mrf.mxu0
  %v4092 = vadd.f32 %v4043, %v4091
  %4093 = vmatmul.bf16.gmra.mxu0 %v746
  %v4094 = vpop.f32.mrf.mxu0
  %v4095 = vadd.f32 %v4046, %v4094
  %v4096 = vpop.f32.mrf.mxu0
  %v4097 = vadd.f32 %v4048, %v4096
  %4098 = vdwg.mxu0
  %4099 = vmatpush.bf16.msra.mxu0 %v1952
  %4100 = vmatpush.bf16.msra.mxu0 %v1948
  %4101 = vmatpush.bf16.msra.mxu0 %v1944
  %4102 = vmatpush.bf16.msra.mxu0 %v1940
  %4103 = vmatpush.bf16.msra.mxu0 %v1936
  %4104 = vmatpush.bf16.msra.mxu0 %v1932
  %4105 = vmatpush.bf16.msra.mxu0 %v1928
  %4106 = vmatpush.bf16.msra.mxu0 %v1924
  %4107 = vmatmul.bf16.gmra.mxu0 %v677
  %v4108 = vpop.f32.mrf.mxu0
  %v4109 = vadd.f32 %v4060, %v4108
  %v4110 = vpop.f32.mrf.mxu0
  %v4111 = vadd.f32 %v4062, %v4110
  %4112 = vmatmul.bf16.gmra.mxu0 %v687
  %v4113 = vpop.f32.mrf.mxu0
  %v4114 = vadd.f32 %v4065, %v4113
  %v4115 = vpop.f32.mrf.mxu0
  %v4116 = vadd.f32 %v4067, %v4115
  %4117 = vmatmul.bf16.gmra.mxu0 %v697
  %v4118 = vpop.f32.mrf.mxu0
  %v4119 = vadd.f32 %v4070, %v4118
  %v4120 = vpop.f32.mrf.mxu0
  %v4121 = vadd.f32 %v4072, %v4120
  %4122 = vmatmul.bf16.gmra.mxu0 %v707
  %v4123 = vpop.f32.mrf.mxu0
  %v4124 = vadd.f32 %v4075, %v4123
  %v4125 = vpop.f32.mrf.mxu0
  %v4126 = vadd.f32 %v4077, %v4125
  %4127 = vmatmul.bf16.gmra.mxu0 %v717
  %v4128 = vpop.f32.mrf.mxu0
  %v4129 = vadd.f32 %v4080, %v4128
  %v4130 = vpop.f32.mrf.mxu0
  %v4131 = vadd.f32 %v4082, %v4130
  %4132 = vmatmul.bf16.gmra.mxu0 %v727
  %v4133 = vpop.f32.mrf.mxu0
  %v4134 = vadd.f32 %v4085, %v4133
  %v4135 = vpop.f32.mrf.mxu0
  %v4136 = vadd.f32 %v4087, %v4135
  %4137 = vmatmul.bf16.gmra.mxu0 %v737
  %v4138 = vpop.f32.mrf.mxu0
  %v4139 = vadd.f32 %v4090, %v4138
  %v4140 = vpop.f32.mrf.mxu0
  %v4141 = vadd.f32 %v4092, %v4140
  %4142 = vmatmul.bf16.gmra.mxu0 %v747
  %v4143 = vpop.f32.mrf.mxu0
  %v4144 = vadd.f32 %v4095, %v4143
  %v4145 = vpop.f32.mrf.mxu0
  %v4146 = vadd.f32 %v4097, %v4145
  %4147 = vdwg.mxu0
  %4148 = vmatpush.bf16.msra.mxu0 %v1984
  %4149 = vmatpush.bf16.msra.mxu0 %v1980
  %4150 = vmatpush.bf16.msra.mxu0 %v1976
  %4151 = vmatpush.bf16.msra.mxu0 %v1972
  %4152 = vmatpush.bf16.msra.mxu0 %v1968
  %4153 = vmatpush.bf16.msra.mxu0 %v1964
  %4154 = vmatpush.bf16.msra.mxu0 %v1960
  %4155 = vmatpush.bf16.msra.mxu0 %v1956
  %4156 = vmatmul.bf16.gmra.mxu0 %v678
  %v4157 = vpop.f32.mrf.mxu0
  %v4158 = vadd.f32 %v4109, %v4157
  %v4159 = vpop.f32.mrf.mxu0
  %v4160 = vadd.f32 %v4111, %v4159
  %4161 = vmatmul.bf16.gmra.mxu0 %v688
  %v4162 = vpop.f32.mrf.mxu0
  %v4163 = vadd.f32 %v4114, %v4162
  %v4164 = vpop.f32.mrf.mxu0
  %v4165 = vadd.f32 %v4116, %v4164
  %4166 = vmatmul.bf16.gmra.mxu0 %v698
  %v4167 = vpop.f32.mrf.mxu0
  %v4168 = vadd.f32 %v4119, %v4167
  %v4169 = vpop.f32.mrf.mxu0
  %v4170 = vadd.f32 %v4121, %v4169
  %4171 = vmatmul.bf16.gmra.mxu0 %v708
  %v4172 = vpop.f32.mrf.mxu0
  %v4173 = vadd.f32 %v4124, %v4172
  %v4174 = vpop.f32.mrf.mxu0
  %v4175 = vadd.f32 %v4126, %v4174
  %4176 = vmatmul.bf16.gmra.mxu0 %v718
  %v4177 = vpop.f32.mrf.mxu0
  %v4178 = vadd.f32 %v4129, %v4177
  %v4179 = vpop.f32.mrf.mxu0
  %v4180 = vadd.f32 %v4131, %v4179
  %4181 = vmatmul.bf16.gmra.mxu0 %v728
  %v4182 = vpop.f32.mrf.mxu0
  %v4183 = vadd.f32 %v4134, %v4182
  %v4184 = vpop.f32.mrf.mxu0
  %v4185 = vadd.f32 %v4136, %v4184
  %4186 = vmatmul.bf16.gmra.mxu0 %v738
  %v4187 = vpop.f32.mrf.mxu0
  %v4188 = vadd.f32 %v4139, %v4187
  %v4189 = vpop.f32.mrf.mxu0
  %v4190 = vadd.f32 %v4141, %v4189
  %4191 = vmatmul.bf16.gmra.mxu0 %v748
  %v4192 = vpop.f32.mrf.mxu0
  %v4193 = vadd.f32 %v4144, %v4192
  %v4194 = vpop.f32.mrf.mxu0
  %v4195 = vadd.f32 %v4146, %v4194
  %4196 = vdwg.mxu0
  %4197 = vmatpush.bf16.msra.mxu0 %v2016
  %4198 = vmatpush.bf16.msra.mxu0 %v2012
  %4199 = vmatpush.bf16.msra.mxu0 %v2008
  %4200 = vmatpush.bf16.msra.mxu0 %v2004
  %4201 = vmatpush.bf16.msra.mxu0 %v2000
  %4202 = vmatpush.bf16.msra.mxu0 %v1996
  %4203 = vmatpush.bf16.msra.mxu0 %v1992
  %4204 = vmatpush.bf16.msra.mxu0 %v1988
  %4205 = vmatmul.bf16.gmra.mxu0 %v679
  %v4206 = vpop.f32.mrf.mxu0
  %v4207 = vadd.f32 %v4158, %v4206
  %v4208 = vpop.f32.mrf.mxu0
  %v4209 = vadd.f32 %v4160, %v4208
  %4210 = vmatmul.bf16.gmra.mxu0 %v689
  %v4211 = vpop.f32.mrf.mxu0
  %v4212 = vadd.f32 %v4163, %v4211
  %v4213 = vpop.f32.mrf.mxu0
  %v4214 = vadd.f32 %v4165, %v4213
  %4215 = vmatmul.bf16.gmra.mxu0 %v699
  %v4216 = vpop.f32.mrf.mxu0
  %v4217 = vadd.f32 %v4168, %v4216
  %v4218 = vpop.f32.mrf.mxu0
  %v4219 = vadd.f32 %v4170, %v4218
  %4220 = vmatmul.bf16.gmra.mxu0 %v709
  %v4221 = vpop.f32.mrf.mxu0
  %v4222 = vadd.f32 %v4173, %v4221
  %v4223 = vpop.f32.mrf.mxu0
  %v4224 = vadd.f32 %v4175, %v4223
  %4225 = vmatmul.bf16.gmra.mxu0 %v719
  %v4226 = vpop.f32.mrf.mxu0
  %v4227 = vadd.f32 %v4178, %v4226
  %v4228 = vpop.f32.mrf.mxu0
  %v4229 = vadd.f32 %v4180, %v4228
  %4230 = vmatmul.bf16.gmra.mxu0 %v729
  %v4231 = vpop.f32.mrf.mxu0
  %v4232 = vadd.f32 %v4183, %v4231
  %v4233 = vpop.f32.mrf.mxu0
  %v4234 = vadd.f32 %v4185, %v4233
  %4235 = vmatmul.bf16.gmra.mxu0 %v739
  %v4236 = vpop.f32.mrf.mxu0
  %v4237 = vadd.f32 %v4188, %v4236
  %v4238 = vpop.f32.mrf.mxu0
  %v4239 = vadd.f32 %v4190, %v4238
  %4240 = vmatmul.bf16.gmra.mxu0 %v749
  %v4241 = vpop.f32.mrf.mxu0
  %v4242 = vadd.f32 %v4193, %v4241
  %v4243 = vpop.f32.mrf.mxu0
  %v4244 = vadd.f32 %v4195, %v4243
  %4245 = vdwg.mxu0
  %4246 = vmatpush.bf16.msra.mxu0 %v2048
  %4247 = vmatpush.bf16.msra.mxu0 %v2044
  %4248 = vmatpush.bf16.msra.mxu0 %v2040
  %4249 = vmatpush.bf16.msra.mxu0 %v2036
  %4250 = vmatpush.bf16.msra.mxu0 %v2032
  %4251 = vmatpush.bf16.msra.mxu0 %v2028
  %4252 = vmatpush.bf16.msra.mxu0 %v2024
  %4253 = vmatpush.bf16.msra.mxu0 %v2020
  %4254 = vmatmul.bf16.gmra.mxu0 %v680
  %v4255 = vpop.f32.mrf.mxu0
  %v4256 = vadd.f32 %v4207, %v4255
  %v4257 = vpop.f32.mrf.mxu0
  %v4258 = vadd.f32 %v4209, %v4257
  %4259 = vmatmul.bf16.gmra.mxu0 %v690
  %v4260 = vpop.f32.mrf.mxu0
  %v4261 = vadd.f32 %v4212, %v4260
  %v4262 = vpop.f32.mrf.mxu0
  %v4263 = vadd.f32 %v4214, %v4262
  %4264 = vmatmul.bf16.gmra.mxu0 %v700
  %v4265 = vpop.f32.mrf.mxu0
  %v4266 = vadd.f32 %v4217, %v4265
  %v4267 = vpop.f32.mrf.mxu0
  %v4268 = vadd.f32 %v4219, %v4267
  %4269 = vmatmul.bf16.gmra.mxu0 %v710
  %v4270 = vpop.f32.mrf.mxu0
  %v4271 = vadd.f32 %v4222, %v4270
  %v4272 = vpop.f32.mrf.mxu0
  %v4273 = vadd.f32 %v4224, %v4272
  %4274 = vmatmul.bf16.gmra.mxu0 %v720
  %v4275 = vpop.f32.mrf.mxu0
  %v4276 = vadd.f32 %v4227, %v4275
  %v4277 = vpop.f32.mrf.mxu0
  %v4278 = vadd.f32 %v4229, %v4277
  %4279 = vmatmul.bf16.gmra.mxu0 %v730
  %v4280 = vpop.f32.mrf.mxu0
  %v4281 = vadd.f32 %v4232, %v4280
  %v4282 = vpop.f32.mrf.mxu0
  %v4283 = vadd.f32 %v4234, %v4282
  %4284 = vmatmul.bf16.gmra.mxu0 %v740
  %v4285 = vpop.f32.mrf.mxu0
  %v4286 = vadd.f32 %v4237, %v4285
  %v4287 = vpop.f32.mrf.mxu0
  %v4288 = vadd.f32 %v4239, %v4287
  %4289 = vmatmul.bf16.gmra.mxu0 %v750
  %v4290 = vpop.f32.mrf.mxu0
  %v4291 = vadd.f32 %v4242, %v4290
  %v4292 = vpop.f32.mrf.mxu0
  %v4293 = vadd.f32 %v4244, %v4292
  %4294 = vdwg.mxu0
  %4295 = vmatpush.bf16.msra.mxu0 %v2080
  %4296 = vmatpush.bf16.msra.mxu0 %v2076
  %4297 = vmatpush.bf16.msra.mxu0 %v2072
  %4298 = vmatpush.bf16.msra.mxu0 %v2068
  %4299 = vmatpush.bf16.msra.mxu0 %v2064
  %4300 = vmatpush.bf16.msra.mxu0 %v2060
  %4301 = vmatpush.bf16.msra.mxu0 %v2056
  %4302 = vmatpush.bf16.msra.mxu0 %v2052
  %4303 = vmatmul.bf16.gmra.mxu0 %v681
  %v4304 = vpop.f32.mrf.mxu0
  %v4305 = vadd.f32 %v4256, %v4304
  %v4306 = vpop.f32.mrf.mxu0
  %v4307 = vadd.f32 %v4258, %v4306
  %4308 = vmatmul.bf16.gmra.mxu0 %v691
  %v4309 = vpop.f32.mrf.mxu0
  %v4310 = vadd.f32 %v4261, %v4309
  %v4311 = vpop.f32.mrf.mxu0
  %v4312 = vadd.f32 %v4263, %v4311
  %4313 = vmatmul.bf16.gmra.mxu0 %v701
  %v4314 = vpop.f32.mrf.mxu0
  %v4315 = vadd.f32 %v4266, %v4314
  %v4316 = vpop.f32.mrf.mxu0
  %v4317 = vadd.f32 %v4268, %v4316
  %4318 = vmatmul.bf16.gmra.mxu0 %v711
  %v4319 = vpop.f32.mrf.mxu0
  %v4320 = vadd.f32 %v4271, %v4319
  %v4321 = vpop.f32.mrf.mxu0
  %v4322 = vadd.f32 %v4273, %v4321
  %4323 = vmatmul.bf16.gmra.mxu0 %v721
  %v4324 = vpop.f32.mrf.mxu0
  %v4325 = vadd.f32 %v4276, %v4324
  %v4326 = vpop.f32.mrf.mxu0
  %v4327 = vadd.f32 %v4278, %v4326
  %4328 = vmatmul.bf16.gmra.mxu0 %v731
  %v4329 = vpop.f32.mrf.mxu0
  %v4330 = vadd.f32 %v4281, %v4329
  %v4331 = vpop.f32.mrf.mxu0
  %v4332 = vadd.f32 %v4283, %v4331
  %4333 = vmatmul.bf16.gmra.mxu0 %v741
  %v4334 = vpop.f32.mrf.mxu0
  %v4335 = vadd.f32 %v4286, %v4334
  %v4336 = vpop.f32.mrf.mxu0
  %v4337 = vadd.f32 %v4288, %v4336
  %4338 = vmatmul.bf16.gmra.mxu0 %v751
  %v4339 = vpop.f32.mrf.mxu0
  %v4340 = vadd.f32 %v4291, %v4339
  %v4341 = vpop.f32.mrf.mxu0
  %v4342 = vadd.f32 %v4293, %v4341
  %4343 = vdwg.mxu0
  %4344 = vmatpush.bf16.msra.mxu0 %v2112
  %4345 = vmatpush.bf16.msra.mxu0 %v2108
  %4346 = vmatpush.bf16.msra.mxu0 %v2104
  %4347 = vmatpush.bf16.msra.mxu0 %v2100
  %4348 = vmatpush.bf16.msra.mxu0 %v2096
  %4349 = vmatpush.bf16.msra.mxu0 %v2092
  %4350 = vmatpush.bf16.msra.mxu0 %v2088
  %4351 = vmatpush.bf16.msra.mxu0 %v2084
  %4352 = vmatmul.bf16.gmra.mxu0 %v682
  %v4353 = vpop.f32.mrf.mxu0
  %v4354 = vadd.f32 %v4305, %v4353
  %v4355 = vpop.f32.mrf.mxu0
  %v4356 = vadd.f32 %v4307, %v4355
  %4357 = vmatmul.bf16.gmra.mxu0 %v692
  %v4358 = vpop.f32.mrf.mxu0
  %v4359 = vadd.f32 %v4310, %v4358
  %v4360 = vpop.f32.mrf.mxu0
  %v4361 = vadd.f32 %v4312, %v4360
  %4362 = vmatmul.bf16.gmra.mxu0 %v702
  %v4363 = vpop.f32.mrf.mxu0
  %v4364 = vadd.f32 %v4315, %v4363
  %v4365 = vpop.f32.mrf.mxu0
  %v4366 = vadd.f32 %v4317, %v4365
  %4367 = vmatmul.bf16.gmra.mxu0 %v712
  %v4368 = vpop.f32.mrf.mxu0
  %v4369 = vadd.f32 %v4320, %v4368
  %v4370 = vpop.f32.mrf.mxu0
  %v4371 = vadd.f32 %v4322, %v4370
  %4372 = vmatmul.bf16.gmra.mxu0 %v722
  %v4373 = vpop.f32.mrf.mxu0
  %v4374 = vadd.f32 %v4325, %v4373
  %v4375 = vpop.f32.mrf.mxu0
  %v4376 = vadd.f32 %v4327, %v4375
  %4377 = vmatmul.bf16.gmra.mxu0 %v732
  %v4378 = vpop.f32.mrf.mxu0
  %v4379 = vadd.f32 %v4330, %v4378
  %v4380 = vpop.f32.mrf.mxu0
  %v4381 = vadd.f32 %v4332, %v4380
  %4382 = vmatmul.bf16.gmra.mxu0 %v742
  %v4383 = vpop.f32.mrf.mxu0
  %v4384 = vadd.f32 %v4335, %v4383
  %v4385 = vpop.f32.mrf.mxu0
  %v4386 = vadd.f32 %v4337, %v4385
  %4387 = vmatmul.bf16.gmra.mxu0 %v752
  %v4388 = vpop.f32.mrf.mxu0
  %v4389 = vadd.f32 %v4340, %v4388
  %v4390 = vpop.f32.mrf.mxu0
  %v4391 = vadd.f32 %v4342, %v4390
  %4392 = vdwg.mxu0
  %v4393 = vmax.f32 %v2884, 0.0
  %v4394 = vmax.f32 %v3374, 0.0
  %v4395 = vmax.f32 %v3864, 0.0
  %v4396 = vmax.f32 %v4354, 0.0
  %v4397 = vmax.f32 %v2886, 0.0
  %v4398 = vmax.f32 %v3376, 0.0
  %v4399 = vmax.f32 %v3866, 0.0
  %v4400 = vmax.f32 %v4356, 0.0
  %v4401 = vmax.f32 %v2889, 0.0
  %v4402 = vmax.f32 %v3379, 0.0
  %v4403 = vmax.f32 %v3869, 0.0
  %v4404 = vmax.f32 %v4359, 0.0
  %v4405 = vmax.f32 %v2891, 0.0
  %v4406 = vmax.f32 %v3381, 0.0
  %v4407 = vmax.f32 %v3871, 0.0
  %v4408 = vmax.f32 %v4361, 0.0
  %v4409 = vmax.f32 %v2894, 0.0
  %v4410 = vmax.f32 %v3384, 0.0
  %v4411 = vmax.f32 %v3874, 0.0
  %v4412 = vmax.f32 %v4364, 0.0
  %v4413 = vmax.f32 %v2896, 0.0
  %v4414 = vmax.f32 %v3386, 0.0
  %v4415 = vmax.f32 %v3876, 0.0
  %v4416 = vmax.f32 %v4366, 0.0
  %v4417 = vmax.f32 %v2899, 0.0
  %v4418 = vmax.f32 %v3389, 0.0
  %v4419 = vmax.f32 %v3879, 0.0
  %v4420 = vmax.f32 %v4369, 0.0
  %v4421 = vmax.f32 %v2901, 0.0
  %v4422 = vmax.f32 %v3391, 0.0
  %v4423 = vmax.f32 %v3881, 0.0
  %v4424 = vmax.f32 %v4371, 0.0
  %v4425 = vmax.f32 %v2904, 0.0
  %v4426 = vmax.f32 %v3394, 0.0
  %v4427 = vmax.f32 %v3884, 0.0
  %v4428 = vmax.f32 %v4374, 0.0
  %v4429 = vmax.f32 %v2906, 0.0
  %v4430 = vmax.f32 %v3396, 0.0
  %v4431 = vmax.f32 %v3886, 0.0
  %v4432 = vmax.f32 %v4376, 0.0
  %v4433 = vmax.f32 %v2909, 0.0
  %v4434 = vmax.f32 %v3399, 0.0
  %v4435 = vmax.f32 %v3889, 0.0
  %v4436 = vmax.f32 %v4379, 0.0
  %v4437 = vmax.f32 %v2911, 0.0
  %v4438 = vmax.f32 %v3401, 0.0
  %v4439 = vmax.f32 %v3891, 0.0
  %v4440 = vmax.f32 %v4381, 0.0
  %v4441 = vmax.f32 %v2914, 0.0
  %v4442 = vmax.f32 %v3404, 0.0
  %v4443 = vmax.f32 %v3894, 0.0
  %v4444 = vmax.f32 %v4384, 0.0
  %v4445 = vmax.f32 %v2916, 0.0
  %v4446 = vmax.f32 %v3406, 0.0
  %v4447 = vmax.f32 %v3896, 0.0
  %v4448 = vmax.f32 %v4386, 0.0
  %v4449 = vmax.f32 %v2919, 0.0
  %v4450 = vmax.f32 %v3409, 0.0
  %v4451 = vmax.f32 %v3899, 0.0
  %v4452 = vmax.f32 %v4389, 0.0
  %v4453 = vmax.f32 %v2921, 0.0
  %v4454 = vmax.f32 %v3411, 0.0
  %v4455 = vmax.f32 %v3901, 0.0
  %v4456 = vmax.f32 %v4391, 0.0
  %v4457 = vpack.c.bf16 %v4397, %v4393
  %v4458 = vpack.c.bf16 %v4398, %v4394
  %v4459 = vpack.c.bf16 %v4399, %v4395
  %v4460 = vpack.c.bf16 %v4400, %v4396
  %v4461 = vpack.c.bf16 %v4405, %v4401
  %v4462 = vpack.c.bf16 %v4406, %v4402
  %v4463 = vpack.c.bf16 %v4407, %v4403
  %v4464 = vpack.c.bf16 %v4408, %v4404
  %v4465 = vpack.c.bf16 %v4413, %v4409
  %v4466 = vpack.c.bf16 %v4414, %v4410
  %v4467 = vpack.c.bf16 %v4415, %v4411
  %v4468 = vpack.c.bf16 %v4416, %v4412
  %v4469 = vpack.c.bf16 %v4421, %v4417
  %v4470 = vpack.c.bf16 %v4422, %v4418
  %v4471 = vpack.c.bf16 %v4423, %v4419
  %v4472 = vpack.c.bf16 %v4424, %v4420
  %v4473 = vpack.c.bf16 %v4429, %v4425
  %v4474 = vpack.c.bf16 %v4430, %v4426
  %v4475 = vpack.c.bf16 %v4431, %v4427
  %v4476 = vpack.c.bf16 %v4432, %v4428
  %v4477 = vpack.c.bf16 %v4437, %v4433
  %v4478 = vpack.c.bf16 %v4438, %v4434
  %v4479 = vpack.c.bf16 %v4439, %v4435
  %v4480 = vpack.c.bf16 %v4440, %v4436
  %v4481 = vpack.c.bf16 %v4445, %v4441
  %v4482 = vpack.c.bf16 %v4446, %v4442
  %v4483 = vpack.c.bf16 %v4447, %v4443
  %v4484 = vpack.c.bf16 %v4448, %v4444
  %v4485 = vpack.c.bf16 %v4453, %v4449
  %v4486 = vpack.c.bf16 %v4454, %v4450
  %v4487 = vpack.c.bf16 %v4455, %v4451
  %v4488 = vpack.c.bf16 %v4456, %v4452
  %v4489 = vld [vmem:[%s3] sm:$0xf]
  %v4490 = vld [vmem:[%s3 + $0x4] sm:$0xf]
  %v4491 = vld [vmem:[%s3 + $0x8] sm:$0xf]
  %v4492 = vld [vmem:[%s3 + $0xc] sm:$0xf]
  %v4493 = vld [vmem:[%s3 + $0x10] sm:$0xf]
  %v4494 = vld [vmem:[%s3 + $0x14] sm:$0xf]
  %v4495 = vld [vmem:[%s3 + $0x18] sm:$0xf]
  %v4496 = vld [vmem:[%s3 + $0x1c] sm:$0xf]
  %v4497 = vld [vmem:[%s3 + $0x20] sm:$0xf]
  %v4498 = vld [vmem:[%s3 + $0x24] sm:$0xf]
  %v4499 = vld [vmem:[%s3 + $0x28] sm:$0xf]
  %v4500 = vld [vmem:[%s3 + $0x2c] sm:$0xf]
  %v4501 = vld [vmem:[%s3 + $0x30] sm:$0xf]
  %v4502 = vld [vmem:[%s3 + $0x34] sm:$0xf]
  %v4503 = vld [vmem:[%s3 + $0x38] sm:$0xf]
  %v4504 = vld [vmem:[%s3 + $0x3c] sm:$0xf]
  %v4505 = vld [vmem:[%s3 + $0x40] sm:$0xf]
  %v4506 = vld [vmem:[%s3 + $0x44] sm:$0xf]
  %v4507 = vld [vmem:[%s3 + $0x48] sm:$0xf]
  %v4508 = vld [vmem:[%s3 + $0x4c] sm:$0xf]
  %v4509 = vld [vmem:[%s3 + $0x50] sm:$0xf]
  %v4510 = vld [vmem:[%s3 + $0x54] sm:$0xf]
  %v4511 = vld [vmem:[%s3 + $0x58] sm:$0xf]
  %v4512 = vld [vmem:[%s3 + $0x5c] sm:$0xf]
  %v4513 = vld [vmem:[%s3 + $0x60] sm:$0xf]
  %v4514 = vld [vmem:[%s3 + $0x64] sm:$0xf]
  %v4515 = vld [vmem:[%s3 + $0x68] sm:$0xf]
  %v4516 = vld [vmem:[%s3 + $0x6c] sm:$0xf]
  %v4517 = vld [vmem:[%s3 + $0x70] sm:$0xf]
  %v4518 = vld [vmem:[%s3 + $0x74] sm:$0xf]
  %v4519 = vld [vmem:[%s3 + $0x78] sm:$0xf]
  %v4520 = vld [vmem:[%s3 + $0x7c] sm:$0xf]
  %v4521 = vld [vmem:[%s3 + $0x80] sm:$0xf]
  %v4522 = vld [vmem:[%s3 + $0x84] sm:$0xf]
  %v4523 = vld [vmem:[%s3 + $0x88] sm:$0xf]
  %v4524 = vld [vmem:[%s3 + $0x8c] sm:$0xf]
  %v4525 = vld [vmem:[%s3 + $0x90] sm:$0xf]
  %v4526 = vld [vmem:[%s3 + $0x94] sm:$0xf]
  %v4527 = vld [vmem:[%s3 + $0x98] sm:$0xf]
  %v4528 = vld [vmem:[%s3 + $0x9c] sm:$0xf]
  %v4529 = vld [vmem:[%s3 + $0xa0] sm:$0xf]
  %v4530 = vld [vmem:[%s3 + $0xa4] sm:$0xf]
  %v4531 = vld [vmem:[%s3 + $0xa8] sm:$0xf]
  %v4532 = vld [vmem:[%s3 + $0xac] sm:$0xf]
  %v4533 = vld [vmem:[%s3 + $0xb0] sm:$0xf]
  %v4534 = vld [vmem:[%s3 + $0xb4] sm:$0xf]
  %v4535 = vld [vmem:[%s3 + $0xb8] sm:$0xf]
  %v4536 = vld [vmem:[%s3 + $0xbc] sm:$0xf]
  %v4537 = vld [vmem:[%s3 + $0xc0] sm:$0xf]
  %v4538 = vld [vmem:[%s3 + $0xc4] sm:$0xf]
  %v4539 = vld [vmem:[%s3 + $0xc8] sm:$0xf]
  %v4540 = vld [vmem:[%s3 + $0xcc] sm:$0xf]
  %v4541 = vld [vmem:[%s3 + $0xd0] sm:$0xf]
  %v4542 = vld [vmem:[%s3 + $0xd4] sm:$0xf]
  %v4543 = vld [vmem:[%s3 + $0xd8] sm:$0xf]
  %v4544 = vld [vmem:[%s3 + $0xdc] sm:$0xf]
  %v4545 = vld [vmem:[%s3 + $0xe0] sm:$0xf]
  %v4546 = vld [vmem:[%s3 + $0xe4] sm:$0xf]
  %v4547 = vld [vmem:[%s3 + $0xe8] sm:$0xf]
  %v4548 = vld [vmem:[%s3 + $0xec] sm:$0xf]
  %v4549 = vld [vmem:[%s3 + $0xf0] sm:$0xf]
  %v4550 = vld [vmem:[%s3 + $0xf4] sm:$0xf]
  %v4551 = vld [vmem:[%s3 + $0xf8] sm:$0xf]
  %v4552 = vld [vmem:[%s3 + $0xfc] sm:$0xf]
  %v4553 = vld [vmem:[%s4] sm:$0x1]
  %v4555 = vperm.slane %v4553, 0
  %v4621 = vunpack.c.l.b16 %v4489
  %v4622 = vunpack.c.l.b16 %v4490
  %v4623 = vunpack.c.l.b16 %v4491
  %v4624 = vunpack.c.l.b16 %v4492
  %v4625 = vunpack.c.l.b16 %v4493
  %v4626 = vunpack.c.l.b16 %v4494
  %v4627 = vunpack.c.l.b16 %v4495
  %v4628 = vunpack.c.l.b16 %v4496
  %v4629 = vunpack.c.l.b16 %v4497
  %v4630 = vunpack.c.l.b16 %v4498
  %v4631 = vunpack.c.l.b16 %v4499
  %v4632 = vunpack.c.l.b16 %v4500
  %v4633 = vunpack.c.l.b16 %v4501
  %v4634 = vunpack.c.l.b16 %v4502
  %v4635 = vunpack.c.l.b16 %v4503
  %v4636 = vunpack.c.l.b16 %v4504
  %v4637 = vunpack.c.l.b16 %v4505
  %v4638 = vunpack.c.l.b16 %v4506
  %v4639 = vunpack.c.l.b16 %v4507
  %v4640 = vunpack.c.l.b16 %v4508
  %v4641 = vunpack.c.l.b16 %v4509
  %v4642 = vunpack.c.l.b16 %v4510
  %v4643 = vunpack.c.l.b16 %v4511
  %v4644 = vunpack.c.l.b16 %v4512
  %v4645 = vunpack.c.l.b16 %v4513
  %v4646 = vunpack.c.l.b16 %v4514
  %v4647 = vunpack.c.l.b16 %v4515
  %v4648 = vunpack.c.l.b16 %v4516
  %v4649 = vunpack.c.l.b16 %v4517
  %v4650 = vunpack.c.l.b16 %v4518
  %v4651 = vunpack.c.l.b16 %v4519
  %v4652 = vunpack.c.l.b16 %v4520
  %v4653 = vunpack.c.l.b16 %v4521
  %v4654 = vunpack.c.l.b16 %v4522
  %v4655 = vunpack.c.l.b16 %v4523
  %v4656 = vunpack.c.l.b16 %v4524
  %v4657 = vunpack.c.l.b16 %v4525
  %v4658 = vunpack.c.l.b16 %v4526
  %v4659 = vunpack.c.l.b16 %v4527
  %v4660 = vunpack.c.l.b16 %v4528
  %v4661 = vunpack.c.l.b16 %v4529
  %v4662 = vunpack.c.l.b16 %v4530
  %v4663 = vunpack.c.l.b16 %v4531
  %v4664 = vunpack.c.l.b16 %v4532
  %v4665 = vunpack.c.l.b16 %v4533
  %v4666 = vunpack.c.l.b16 %v4534
  %v4667 = vunpack.c.l.b16 %v4535
  %v4668 = vunpack.c.l.b16 %v4536
  %v4669 = vunpack.c.l.b16 %v4537
  %v4670 = vunpack.c.l.b16 %v4538
  %v4671 = vunpack.c.l.b16 %v4539
  %v4672 = vunpack.c.l.b16 %v4540
  %v4673 = vunpack.c.l.b16 %v4541
  %v4674 = vunpack.c.l.b16 %v4542
  %v4675 = vunpack.c.l.b16 %v4543
  %v4676 = vunpack.c.l.b16 %v4544
  %v4677 = vunpack.c.l.b16 %v4545
  %v4678 = vunpack.c.l.b16 %v4546
  %v4679 = vunpack.c.l.b16 %v4547
  %v4680 = vunpack.c.l.b16 %v4548
  %v4681 = vunpack.c.l.b16 %v4549
  %v4682 = vunpack.c.l.b16 %v4550
  %v4683 = vunpack.c.l.b16 %v4551
  %v4684 = vunpack.c.l.b16 %v4552
  %v4685 = vpack.c.b16 %v4622, %v4621
  %v4686 = vpack.c.b16 %v4624, %v4623
  %v4687 = vpack.c.b16 %v4626, %v4625
  %v4688 = vpack.c.b16 %v4628, %v4627
  %v4689 = vpack.c.b16 %v4630, %v4629
  %v4690 = vpack.c.b16 %v4632, %v4631
  %v4691 = vpack.c.b16 %v4634, %v4633
  %v4692 = vpack.c.b16 %v4636, %v4635
  %v4693 = vpack.c.b16 %v4638, %v4637
  %v4694 = vpack.c.b16 %v4640, %v4639
  %v4695 = vpack.c.b16 %v4642, %v4641
  %v4696 = vpack.c.b16 %v4644, %v4643
  %v4697 = vpack.c.b16 %v4646, %v4645
  %v4698 = vpack.c.b16 %v4648, %v4647
  %v4699 = vpack.c.b16 %v4650, %v4649
  %v4700 = vpack.c.b16 %v4652, %v4651
  %v4701 = vpack.c.b16 %v4654, %v4653
  %v4702 = vpack.c.b16 %v4656, %v4655
  %v4703 = vpack.c.b16 %v4658, %v4657
  %v4704 = vpack.c.b16 %v4660, %v4659
  %v4705 = vpack.c.b16 %v4662, %v4661
  %v4706 = vpack.c.b16 %v4664, %v4663
  %v4707 = vpack.c.b16 %v4666, %v4665
  %v4708 = vpack.c.b16 %v4668, %v4667
  %v4709 = vpack.c.b16 %v4670, %v4669
  %v4710 = vpack.c.b16 %v4672, %v4671
  %v4711 = vpack.c.b16 %v4674, %v4673
  %v4712 = vpack.c.b16 %v4676, %v4675
  %v4713 = vpack.c.b16 %v4678, %v4677
  %v4714 = vpack.c.b16 %v4680, %v4679
  %v4715 = vpack.c.b16 %v4682, %v4681
  %v4716 = vpack.c.b16 %v4684, %v4683
  %4749 = vmatpush.bf16.msra.mxu0 %v4692
  %4750 = vmatpush.bf16.msra.mxu0 %v4691
  %4751 = vmatpush.bf16.msra.mxu0 %v4690
  %4752 = vmatpush.bf16.msra.mxu0 %v4689
  %4753 = vmatpush.bf16.msra.mxu0 %v4688
  %4754 = vmatpush.bf16.msra.mxu0 %v4687
  %4755 = vmatpush.bf16.msra.mxu0 %v4686
  %4756 = vmatpush.bf16.msra.mxu0 %v4685
  %4757 = vmatmul.bf16.gmra.mxu0 %v4457
  %v4758 = vpop.f32.mrf.mxu0
  %v4759 = vadd.f32 %v4555, %v4758
  %v4760 = vpop.f32.mrf.mxu0
  %v4761 = vadd.f32 %v4555, %v4760
  %4762 = vmatmul.bf16.gmra.mxu0 %v4461
  %v4763 = vpop.f32.mrf.mxu0
  %v4764 = vadd.f32 %v4555, %v4763
  %v4765 = vpop.f32.mrf.mxu0
  %v4766 = vadd.f32 %v4555, %v4765
  %4767 = vmatmul.bf16.gmra.mxu0 %v4465
  %v4768 = vpop.f32.mrf.mxu0
  %v4769 = vadd.f32 %v4555, %v4768
  %v4770 = vpop.f32.mrf.mxu0
  %v4771 = vadd.f32 %v4555, %v4770
  %4772 = vmatmul.bf16.gmra.mxu0 %v4469
  %v4773 = vpop.f32.mrf.mxu0
  %v4774 = vadd.f32 %v4555, %v4773
  %v4775 = vpop.f32.mrf.mxu0
  %v4776 = vadd.f32 %v4555, %v4775
  %4777 = vmatmul.bf16.gmra.mxu0 %v4473
  %v4778 = vpop.f32.mrf.mxu0
  %v4779 = vadd.f32 %v4555, %v4778
  %v4780 = vpop.f32.mrf.mxu0
  %v4781 = vadd.f32 %v4555, %v4780
  %4782 = vmatmul.bf16.gmra.mxu0 %v4477
  %v4783 = vpop.f32.mrf.mxu0
  %v4784 = vadd.f32 %v4555, %v4783
  %v4785 = vpop.f32.mrf.mxu0
  %v4786 = vadd.f32 %v4555, %v4785
  %4787 = vmatmul.bf16.gmra.mxu0 %v4481
  %v4788 = vpop.f32.mrf.mxu0
  %v4789 = vadd.f32 %v4555, %v4788
  %v4790 = vpop.f32.mrf.mxu0
  %v4791 = vadd.f32 %v4555, %v4790
  %4792 = vmatmul.bf16.gmra.mxu0 %v4485
  %v4793 = vpop.f32.mrf.mxu0
  %v4794 = vadd.f32 %v4555, %v4793
  %v4795 = vpop.f32.mrf.mxu0
  %v4796 = vadd.f32 %v4555, %v4795
  %4797 = vdwg.mxu0
  %4798 = vmatpush.bf16.msra.mxu0 %v4700
  %4799 = vmatpush.bf16.msra.mxu0 %v4699
  %4800 = vmatpush.bf16.msra.mxu0 %v4698
  %4801 = vmatpush.bf16.msra.mxu0 %v4697
  %4802 = vmatpush.bf16.msra.mxu0 %v4696
  %4803 = vmatpush.bf16.msra.mxu0 %v4695
  %4804 = vmatpush.bf16.msra.mxu0 %v4694
  %4805 = vmatpush.bf16.msra.mxu0 %v4693
  %4806 = vmatmul.bf16.gmra.mxu0 %v4458
  %v4807 = vpop.f32.mrf.mxu0
  %v4808 = vadd.f32 %v4759, %v4807
  %v4809 = vpop.f32.mrf.mxu0
  %v4810 = vadd.f32 %v4761, %v4809
  %4811 = vmatmul.bf16.gmra.mxu0 %v4462
  %v4812 = vpop.f32.mrf.mxu0
  %v4813 = vadd.f32 %v4764, %v4812
  %v4814 = vpop.f32.mrf.mxu0
  %v4815 = vadd.f32 %v4766, %v4814
  %4816 = vmatmul.bf16.gmra.mxu0 %v4466
  %v4817 = vpop.f32.mrf.mxu0
  %v4818 = vadd.f32 %v4769, %v4817
  %v4819 = vpop.f32.mrf.mxu0
  %v4820 = vadd.f32 %v4771, %v4819
  %4821 = vmatmul.bf16.gmra.mxu0 %v4470
  %v4822 = vpop.f32.mrf.mxu0
  %v4823 = vadd.f32 %v4774, %v4822
  %v4824 = vpop.f32.mrf.mxu0
  %v4825 = vadd.f32 %v4776, %v4824
  %4826 = vmatmul.bf16.gmra.mxu0 %v4474
  %v4827 = vpop.f32.mrf.mxu0
  %v4828 = vadd.f32 %v4779, %v4827
  %v4829 = vpop.f32.mrf.mxu0
  %v4830 = vadd.f32 %v4781, %v4829
  %4831 = vmatmul.bf16.gmra.mxu0 %v4478
  %v4832 = vpop.f32.mrf.mxu0
  %v4833 = vadd.f32 %v4784, %v4832
  %v4834 = vpop.f32.mrf.mxu0
  %v4835 = vadd.f32 %v4786, %v4834
  %4836 = vmatmul.bf16.gmra.mxu0 %v4482
  %v4837 = vpop.f32.mrf.mxu0
  %v4838 = vadd.f32 %v4789, %v4837
  %v4839 = vpop.f32.mrf.mxu0
  %v4840 = vadd.f32 %v4791, %v4839
  %4841 = vmatmul.bf16.gmra.mxu0 %v4486
  %v4842 = vpop.f32.mrf.mxu0
  %v4843 = vadd.f32 %v4794, %v4842
  %v4844 = vpop.f32.mrf.mxu0
  %v4845 = vadd.f32 %v4796, %v4844
  %4846 = vdwg.mxu0
  %4847 = vmatpush.bf16.msra.mxu0 %v4708
  %4848 = vmatpush.bf16.msra.mxu0 %v4707
  %4849 = vmatpush.bf16.msra.mxu0 %v4706
  %4850 = vmatpush.bf16.msra.mxu0 %v4705
  %4851 = vmatpush.bf16.msra.mxu0 %v4704
  %4852 = vmatpush.bf16.msra.mxu0 %v4703
  %4853 = vmatpush.bf16.msra.mxu0 %v4702
  %4854 = vmatpush.bf16.msra.mxu0 %v4701
  %4855 = vmatmul.bf16.gmra.mxu0 %v4459
  %v4856 = vpop.f32.mrf.mxu0
  %v4857 = vadd.f32 %v4808, %v4856
  %v4858 = vpop.f32.mrf.mxu0
  %v4859 = vadd.f32 %v4810, %v4858
  %4860 = vmatmul.bf16.gmra.mxu0 %v4463
  %v4861 = vpop.f32.mrf.mxu0
  %v4862 = vadd.f32 %v4813, %v4861
  %v4863 = vpop.f32.mrf.mxu0
  %v4864 = vadd.f32 %v4815, %v4863
  %4865 = vmatmul.bf16.gmra.mxu0 %v4467
  %v4866 = vpop.f32.mrf.mxu0
  %v4867 = vadd.f32 %v4818, %v4866
  %v4868 = vpop.f32.mrf.mxu0
  %v4869 = vadd.f32 %v4820, %v4868
  %4870 = vmatmul.bf16.gmra.mxu0 %v4471
  %v4871 = vpop.f32.mrf.mxu0
  %v4872 = vadd.f32 %v4823, %v4871
  %v4873 = vpop.f32.mrf.mxu0
  %v4874 = vadd.f32 %v4825, %v4873
  %4875 = vmatmul.bf16.gmra.mxu0 %v4475
  %v4876 = vpop.f32.mrf.mxu0
  %v4877 = vadd.f32 %v4828, %v4876
  %v4878 = vpop.f32.mrf.mxu0
  %v4879 = vadd.f32 %v4830, %v4878
  %4880 = vmatmul.bf16.gmra.mxu0 %v4479
  %v4881 = vpop.f32.mrf.mxu0
  %v4882 = vadd.f32 %v4833, %v4881
  %v4883 = vpop.f32.mrf.mxu0
  %v4884 = vadd.f32 %v4835, %v4883
  %4885 = vmatmul.bf16.gmra.mxu0 %v4483
  %v4886 = vpop.f32.mrf.mxu0
  %v4887 = vadd.f32 %v4838, %v4886
  %v4888 = vpop.f32.mrf.mxu0
  %v4889 = vadd.f32 %v4840, %v4888
  %4890 = vmatmul.bf16.gmra.mxu0 %v4487
  %v4891 = vpop.f32.mrf.mxu0
  %v4892 = vadd.f32 %v4843, %v4891
  %v4893 = vpop.f32.mrf.mxu0
  %v4894 = vadd.f32 %v4845, %v4893
  %4895 = vdwg.mxu0
  %4896 = vmatpush.bf16.msra.mxu0 %v4716
  %4897 = vmatpush.bf16.msra.mxu0 %v4715
  %4898 = vmatpush.bf16.msra.mxu0 %v4714
  %4899 = vmatpush.bf16.msra.mxu0 %v4713
  %4900 = vmatpush.bf16.msra.mxu0 %v4712
  %4901 = vmatpush.bf16.msra.mxu0 %v4711
  %4902 = vmatpush.bf16.msra.mxu0 %v4710
  %4903 = vmatpush.bf16.msra.mxu0 %v4709
  %4904 = vmatmul.bf16.gmra.mxu0 %v4460
  %v4905 = vpop.f32.mrf.mxu0
  %v4906 = vadd.f32 %v4857, %v4905
  %v4907 = vpop.f32.mrf.mxu0
  %v4908 = vadd.f32 %v4859, %v4907
  %4909 = vmatmul.bf16.gmra.mxu0 %v4464
  %v4910 = vpop.f32.mrf.mxu0
  %v4911 = vadd.f32 %v4862, %v4910
  %v4912 = vpop.f32.mrf.mxu0
  %v4913 = vadd.f32 %v4864, %v4912
  %4914 = vmatmul.bf16.gmra.mxu0 %v4468
  %v4915 = vpop.f32.mrf.mxu0
  %v4916 = vadd.f32 %v4867, %v4915
  %v4917 = vpop.f32.mrf.mxu0
  %v4918 = vadd.f32 %v4869, %v4917
  %4919 = vmatmul.bf16.gmra.mxu0 %v4472
  %v4920 = vpop.f32.mrf.mxu0
  %v4921 = vadd.f32 %v4872, %v4920
  %v4922 = vpop.f32.mrf.mxu0
  %v4923 = vadd.f32 %v4874, %v4922
  %4924 = vmatmul.bf16.gmra.mxu0 %v4476
  %v4925 = vpop.f32.mrf.mxu0
  %v4926 = vadd.f32 %v4877, %v4925
  %v4927 = vpop.f32.mrf.mxu0
  %v4928 = vadd.f32 %v4879, %v4927
  %4929 = vmatmul.bf16.gmra.mxu0 %v4480
  %v4930 = vpop.f32.mrf.mxu0
  %v4931 = vadd.f32 %v4882, %v4930
  %v4932 = vpop.f32.mrf.mxu0
  %v4933 = vadd.f32 %v4884, %v4932
  %4934 = vmatmul.bf16.gmra.mxu0 %v4484
  %v4935 = vpop.f32.mrf.mxu0
  %v4936 = vadd.f32 %v4887, %v4935
  %v4937 = vpop.f32.mrf.mxu0
  %v4938 = vadd.f32 %v4889, %v4937
  %4939 = vmatmul.bf16.gmra.mxu0 %v4488
  %v4940 = vpop.f32.mrf.mxu0
  %v4941 = vadd.f32 %v4892, %v4940
  %v4942 = vpop.f32.mrf.mxu0
  %v4943 = vadd.f32 %v4894, %v4942
  %4944 = vdwg.mxu0
  %v4945 = vmax.f32 %v4906, 0.0
  %v4946 = vmax.f32 %v4908, 0.0
  %v4947 = vmax.f32 %v4911, 0.0
  %v4948 = vmax.f32 %v4913, 0.0
  %v4949 = vmax.f32 %v4916, 0.0
  %v4950 = vmax.f32 %v4918, 0.0
  %v4951 = vmax.f32 %v4921, 0.0
  %v4952 = vmax.f32 %v4923, 0.0
  %v4953 = vmax.f32 %v4926, 0.0
  %v4954 = vmax.f32 %v4928, 0.0
  %v4955 = vmax.f32 %v4931, 0.0
  %v4956 = vmax.f32 %v4933, 0.0
  %v4957 = vmax.f32 %v4936, 0.0
  %v4958 = vmax.f32 %v4938, 0.0
  %v4959 = vmax.f32 %v4941, 0.0
  %v4960 = vmax.f32 %v4943, 0.0
  %v4961 = vpack.c.bf16 %v4946, %v4945
  %v4962 = vpack.c.bf16 %v4948, %v4947
  %v4963 = vpack.c.bf16 %v4950, %v4949
  %v4964 = vpack.c.bf16 %v4952, %v4951
  %v4965 = vpack.c.bf16 %v4954, %v4953
  %v4966 = vpack.c.bf16 %v4956, %v4955
  %v4967 = vpack.c.bf16 %v4958, %v4957
  %v4968 = vpack.c.bf16 %v4960, %v4959
  %v4969 = vld [vmem:[%s5] sm:$0x1]
  %vm4970 = vcmask 523264
  %v4972 = vsel %vm4970, %v4969, 0
  %v4975 = vsel %vm4970, %v4961, 0
  %v4978 = vsel %vm4970, %v4962, 0
  %v4981 = vsel %vm4970, %v4963, 0
  %v4984 = vsel %vm4970, %v4964, 0
  %v4987 = vsel %vm4970, %v4965, 0
  %v4990 = vsel %vm4970, %v4966, 0
  %v4993 = vsel %vm4970, %v4967, 0
  %v4996 = vsel %vm4970, %v4968, 0
  %4998 = vmatpush.bf16.xpose.msra.mxu0 %v4996
  %4999 = vmatpush.bf16.xpose.msra.mxu0 %v4993
  %5000 = vmatpush.bf16.xpose.msra.mxu0 %v4990
  %5001 = vmatpush.bf16.xpose.msra.mxu0 %v4987
  %5002 = vmatpush.bf16.xpose.msra.mxu0 %v4984
  %5003 = vmatpush.bf16.xpose.msra.mxu0 %v4981
  %5004 = vmatpush.bf16.xpose.msra.mxu0 %v4978
  %5005 = vmatpush.bf16.xpose.msra.mxu0 %v4975
  %5006 = vmatmul.bf16.gmra.mxu0 %v4972
  %v5007 = vpop.f32.mrf.mxu0
  %v5008 = vadd.f32 0.0, %v5007
  %v5009 = vpop.f32.mrf.mxu0
  %5010 = vdwg.mxu0
  %5011 = vst [vmem:[%s6] sm:$0x1] %v5008
  // Predicated region
  $region26: #{meta_polypv2_forward.7} parent=0 // pred_check
    _
  $region27: #{meta_polypv2_forward.7} parent=0 // pred_check_branch
    %5013 = sbr.rel (0) target = $region29
  $region28: #{meta_polypv2_forward.7} parent=0 // pred_region
    _
  $region29: #{meta_polypv2_forward.7} parent=0 // pred_fallthru
    _
  // Predicated region
  $region30: #{meta_polypv2_forward.7} parent=0 // pred_check
    _
  $region31: #{meta_polypv2_forward.7} parent=0 // pred_check_branch
    %5015 = sbr.rel (0) target = $region33
  $region32: #{meta_polypv2_forward.7} parent=0 // pred_region
    _
  $region33: #{meta_polypv2_forward.7} parent=0 // pred_fallthru
    _

</llo_original>
